<compile_context>
chip_gen: v7x
topology: tpu7x:2x2x1
jax: 0.10.0
libtpu: 0.0.40
codegen_flags: <defaults>
</compile_context>

<pallas_src>
import functools

import numpy as np
import jax
import jax.numpy as jnp
from jax import lax
from jax.experimental import pallas as pl
from jax.experimental.pallas import tpu as pltpu

C_PAD = 128      # channel axis padded to full lane width
HEAD_PAD = 128   # head hidden / logit lane width (fc1 is exactly 128 wide)


# ----------------------------------------------------------------------------
# Fused kernel: one grid step per batch element (parallel -> 2 TCs on v7x).
# ----------------------------------------------------------------------------
def _fused_kernel(x_ref,
                  cw1_ref, cw2_ref, tmat_ref,
                  wt1_ref, l1w1_ref, l1b1_ref, l1w2_ref, l1b2_ref,
                  wt2_ref, l2w1_ref, l2b1_ref, l2w2_ref, l2b2_ref,
                  f1w_ref, f1b_ref, f2w_ref, f2b_ref, f3w_ref, f3b_ref,
                  o_ref,
                  pad_ref, patch_ref,
                  *, H, W, C_real, C_pad):
    HW = H * W
    f32 = jnp.float32

    # zero only the 1-wide halo of the conv padding scratch (interior is
    # fully overwritten before every use)
    pad_ref[0:1, :, :] = jnp.zeros((1, W + 2, C_pad), f32)
    pad_ref[H + 1:H + 2, :, :] = jnp.zeros((1, W + 2, C_pad), f32)
    pad_ref[:, 0:1, :] = jnp.zeros((H + 2, 1, C_pad), f32)
    pad_ref[:, W + 1:W + 2, :] = jnp.zeros((H + 2, 1, C_pad), f32)

    x = x_ref[0].astype(f32)                       # (H, W, C_pad), padded chans are 0
    xf = x.reshape(HW, C_pad)

    # ---- CBAM channel attention (shared MLP, hidden dim C//16 == 1) --------
    w1 = cw1_ref[...]                              # (1, C_pad)
    w2 = cw2_ref[...]                              # (1, C_pad)
    avg_c = jnp.mean(xf, axis=0, keepdims=True)    # (1, C_pad)
    max_c = jnp.max(xf, axis=0, keepdims=True)     # (1, C_pad)
    h_avg = jnp.maximum(jnp.sum(avg_c * w1, axis=1, keepdims=True), 0.0)   # (1,1)
    h_max = jnp.maximum(jnp.sum(max_c * w1, axis=1, keepdims=True), 0.0)   # (1,1)
    ch_att = jax.nn.sigmoid((h_avg + h_max) * w2)  # (1, C_pad)
    xf = xf * ch_att

    # ---- CBAM spatial attention: 7x7 conv as one precomputed matmul --------
    lane = lax.broadcasted_iota(jnp.int32, (HW, C_pad), 1)
    sp_avg = jnp.sum(xf, axis=1, keepdims=True) * (1.0 / C_real)           # (HW, 1)
    sp_max = jnp.max(jnp.where(lane < C_real, xf, -1e30), axis=1,
                     keepdims=True)                                        # (HW, 1)
    spcat = jnp.concatenate([sp_avg, sp_max], axis=0)                      # (2*HW, 1)
    sp_att = jax.nn.sigmoid(jnp.dot(tmat_ref[...], spcat,
                                    preferred_element_type=f32))           # (HW, 1)
    xf = xf * sp_att

    # ---- TTConvLayer: im2col 3x3 conv (BN folded) + channel mix + relu -----
    def tt_layer(act, wt_ref, w1t_ref, b1_ref, w2t_ref, b2_ref):
        pad_ref[1:1 + H, 1:1 + W, :] = act.reshape(H, W, C_pad)
        for t in range(9):
            ky, kx = t // 3, t % 3
            sl = pad_ref[ky:ky + H, kx:kx + W, :]                # (H, W, C_pad)
            patch_ref[:, t * C_pad:(t + 1) * C_pad] = (
                sl.reshape(HW, C_pad).astype(patch_ref.dtype))
        # conv + folded BN scale (bias/shift folded into mix1 bias)
        y = jnp.dot(patch_ref[...], wt_ref[...],
                    preferred_element_type=f32)                  # (HW, C_pad)
        h = jnp.maximum(jnp.dot(y, w1t_ref[...],
                                preferred_element_type=f32) + b1_ref[...], 0.0)
        z = jnp.dot(h, w2t_ref[...],
                    preferred_element_type=f32) + b2_ref[...]
        return jnp.maximum(z, 0.0)                               # trailing F.relu

    xf = tt_layer(xf, wt1_ref, l1w1_ref, l1b1_ref, l1w2_ref, l1b2_ref)
    xf = tt_layer(xf, wt2_ref, l2w1_ref, l2b1_ref, l2w2_ref, l2b2_ref)

    # ---- head: global max pool + 3-layer MLP --------------------------------
    pooled = jnp.max(xf, axis=0, keepdims=True)                  # (1, C_pad)
    h1 = jnp.maximum(jnp.dot(pooled, f1w_ref[...],
                             preferred_element_type=f32) + f1b_ref[...], 0.0)
    h2 = jnp.maximum(jnp.dot(h1, f2w_ref[...],
                             preferred_element_type=f32) + f2b_ref[...], 0.0)
    logits = jnp.dot(h2, f3w_ref[...],
                     preferred_element_type=f32) + f3b_ref[...]  # (1, HEAD_PAD)
    o_ref[...] = jnp.broadcast_to(logits.reshape(1, 1, HEAD_PAD), (1, 8, HEAD_PAD))


def enhanced_ttconv_forward(x, kp):
    B, H, W, C = x.shape
    C_pad = kp["C_pad"]
    num_labels = kp["num_labels"]
    # one-time lane padding of the tiny input (everything else stays in VMEM)
    x_pad = jnp.pad(x, ((0, 0), (0, 0), (0, 0), (0, C_pad - C)))

    kern = functools.partial(_fused_kernel, H=H, W=W, C_real=C, C_pad=C_pad)

    def full(shape):
        return pl.BlockSpec(shape, lambda b, _n=len(shape): (0,) * _n)

    out = pl.pallas_call(
        kern,
        out_shape=jax.ShapeDtypeStruct((B, 8, HEAD_PAD), jnp.float32),
        grid=(B,),
        in_specs=[
            pl.BlockSpec((1, H, W, C_pad), lambda b: (b, 0, 0, 0)),
            full((1, C_pad)), full((1, C_pad)),
            full((H * W, 2 * H * W)),
            # tt layer 1
            full((9 * C_pad, C_pad)), full((C_pad, C_pad)), full((1, C_pad)),
            full((C_pad, C_pad)), full((1, C_pad)),
            # tt layer 2
            full((9 * C_pad, C_pad)), full((C_pad, C_pad)), full((1, C_pad)),
            full((C_pad, C_pad)), full((1, C_pad)),
            # head
            full((C_pad, HEAD_PAD)), full((1, HEAD_PAD)),
            full((HEAD_PAD, HEAD_PAD)), full((1, HEAD_PAD)),
            full((HEAD_PAD, HEAD_PAD)), full((1, HEAD_PAD)),
        ],
        out_specs=pl.BlockSpec((1, 8, HEAD_PAD), lambda b: (b, 0, 0)),
        scratch_shapes=[
            pltpu.VMEM((H + 2, W + 2, C_pad), jnp.float32),      # conv padding
            pltpu.VMEM((H * W, 9 * C_pad), jnp.bfloat16),        # im2col patch
        ],
        compiler_params=pltpu.CompilerParams(
            dimension_semantics=("parallel",)),
    )(x_pad, kp["cbam_w1"], kp["cbam_w2"], kp["tmatT"],
      *kp["tt1"], *kp["tt2"], *kp["head"])
    return out[:, 0, :num_labels]


# ----------------------------------------------------------------------------
# Parameter init (PyTorch-shaped) and kernel-friendly packing.
# ----------------------------------------------------------------------------
def init_params(key, C=25, num_labels=10):
    assert C // 16 == 1, "CBAM packing assumes hidden dim C // reduction_ratio == 1"
    keys = list(jax.random.split(key, 40))
    it = iter(keys)

    def nrm(shape, scale=0.1):
        return (scale * jax.random.normal(next(it), shape)).astype(jnp.float32)

    def tt_params():
        return dict(
            convw=nrm((C, C, 3, 3), 0.05), convb=nrm((C,), 0.05),
            gamma=(1.0 + nrm((C,), 0.05)), beta=nrm((C,), 0.05),
            rmean=nrm((C,), 0.05), rvar=(1.0 + jnp.abs(nrm((C,), 0.1))),
            mix1w=nrm((C, C), 0.1), mix1b=nrm((C,), 0.05),
            mix2w=nrm((C, C), 0.1), mix2b=nrm((C,), 0.05),
        )

    return {
        "cbam_w1": nrm((C // 16, C)),        # Linear(C, C//16, bias=False).weight
        "cbam_w2": nrm((C, C // 16)),        # Linear(C//16, C, bias=False).weight
        "cbam_conv": nrm((1, 2, 7, 7)),      # Conv2d(2, 1, 7, bias=False).weight
        "tt1": tt_params(),
        "tt2": tt_params(),
        "fc1w": nrm((128, C)), "fc1b": nrm((128,), 0.05),
        "fc2w": nrm((64, 128)), "fc2b": nrm((64,), 0.05),
        "fc3w": nrm((num_labels, 64)), "fc3b": nrm((num_labels,), 0.05),
    }


def kernel_params(p, H, W, C_pad=C_PAD, eps=1e-5):
    C = p["fc1w"].shape[1]
    num_labels = p["fc3w"].shape[0]
    assert p["cbam_w1"].shape[0] == 1, "CBAM packing assumes hidden dim 1"

    def padto(a, shape):
        pads = [(0, s - d) for d, s in zip(a.shape, shape)]
        return jnp.pad(a.astype(jnp.float32), pads)

    # channel-attention MLP rows (hidden dim 1)
    cbam_w1 = padto(p["cbam_w1"].reshape(1, C), (1, C_pad))
    cbam_w2 = padto(p["cbam_w2"].reshape(1, C), (1, C_pad))

    # 7x7 spatial-attention conv (over [avg, max]) as a (H*W, 2*H*W) operator
    K = np.asarray(p["cbam_conv"], np.float32)[0]            # (2, 7, 7)
    HW = H * W
    kh = K.shape[1] // 2
    T = np.zeros((HW, 2 * HW), np.float32)
    for m in range(2):
        for ky in range(K.shape[1]):
            for kx in range(K.shape[2]):
                wgt = K[m, ky, kx]
                for h in range(H):
                    ih = h + ky - kh
                    if not (0 <= ih < H):
                        continue
                    for wcol in range(W):
                        iw = wcol + kx - kh
                        if 0 <= iw < W:
                            T[h * W + wcol, m * HW + ih * W + iw] += wgt
    tmatT = jnp.asarray(T)

    def tt_pack(tp):
        scale = tp["gamma"] / jnp.sqrt(tp["rvar"] + eps)     # (C,)
        shift = tp["beta"] - tp["rmean"] * scale
        # conv weight (Cout,Cin,3,3) -> taps (ky,kx,Cin,Cout), BN scale folded in
        wt = jnp.transpose(tp["convw"], (2, 3, 1, 0)) * scale[None, None, None, :]
        wt_full = jnp.zeros((9, C_pad, C_pad), jnp.float32)
        wt_full = wt_full.at[:, :C, :C].set(wt.reshape(9, C, C))
        wt_full = wt_full.reshape(9 * C_pad, C_pad).astype(jnp.bfloat16)
        # conv bias + BN shift folded through mix1 into its bias
        b_eff = scale * tp["convb"] + shift                  # (C,)
        b1_eff = tp["mix1b"] + b_eff @ tp["mix1w"].T         # (C,)
        return (wt_full,
                padto(tp["mix1w"].T, (C_pad, C_pad)), padto(b1_eff.reshape(1, C), (1, C_pad)),
                padto(tp["mix2w"].T, (C_pad, C_pad)), padto(tp["mix2b"].reshape(1, C), (1, C_pad)))

    head = (
        padto(p["fc1w"].T, (C_pad, HEAD_PAD)), p["fc1b"].reshape(1, HEAD_PAD).astype(jnp.float32),
        padto(p["fc2w"].T, (HEAD_PAD, HEAD_PAD)), padto(p["fc2b"].reshape(1, 64), (1, HEAD_PAD)),
        padto(p["fc3w"].T, (HEAD_PAD, HEAD_PAD)), padto(p["fc3b"].reshape(1, num_labels), (1, HEAD_PAD)),
    )

    return {"C_pad": C_pad, "num_labels": num_labels,
            "cbam_w1": cbam_w1, "cbam_w2": cbam_w2, "tmatT": tmatT,
            "tt1": tt_pack(p["tt1"]), "tt2": tt_pack(p["tt2"]), "head": head}


# ----------------------------------------------------------------------------
# Plain-JAX reference (eval-mode semantics) for a correctness check.
# ----------------------------------------------------------------------------
def reference_forward(x, p, eps=1e-5):
    xc = jnp.transpose(x, (0, 3, 1, 2))                       # NCHW
    avg = jnp.mean(xc, axis=(2, 3))
    mx = jnp.max(xc, axis=(2, 3))

    def mlp(v):
        h = jnp.maximum(v @ p["cbam_w1"].T, 0.0)
        return h @ p["cbam_w2"].T

    ch_att = jax.nn.sigmoid(mlp(avg) + mlp(mx))[:, :, None, None]
    xc = xc * ch_att
    sp_in = jnp.concatenate([jnp.mean(xc, axis=1, keepdims=True),
                             jnp.max(xc, axis=1, keepdims=True)], axis=1)
    sp = lax.conv_general_dilated(sp_in, p["cbam_conv"], (1, 1), "SAME",
                                  dimension_numbers=("NCHW", "OIHW", "NCHW"))
    xc = xc * jax.nn.sigmoid(sp)
    x = jnp.transpose(xc, (0, 2, 3, 1))

    for name in ("tt1", "tt2"):
        tp = p[name]
        xc = jnp.transpose(x, (0, 3, 1, 2))
        y = lax.conv_general_dilated(xc, tp["convw"], (1, 1), "SAME",
                                     dimension_numbers=("NCHW", "OIHW", "NCHW"))
        y = y + tp["convb"][None, :, None, None]
        scale = tp["gamma"] / jnp.sqrt(tp["rvar"] + eps)
        shift = tp["beta"] - tp["rmean"] * scale
        y = y * scale[None, :, None, None] + shift[None, :, None, None]
        Bq, Co, Ho, Wo = y.shape
        yf = y.reshape(Bq, Co, Ho * Wo)
        h = jnp.maximum(jnp.einsum("oc,bct->bot", tp["mix1w"], yf)
                        + tp["mix1b"][None, :, None], 0.0)
        yf = jnp.einsum("oc,bct->bot", tp["mix2w"], h) + tp["mix2b"][None, :, None]
        y = yf.reshape(Bq, Co, Ho, Wo)
        x = jnp.maximum(jnp.transpose(y, (0, 2, 3, 1)), 0.0)

    pooled = jnp.max(x, axis=(1, 2))
    h1 = jnp.maximum(pooled @ p["fc1w"].T + p["fc1b"], 0.0)
    h2 = jnp.maximum(h1 @ p["fc2w"].T + p["fc2b"], 0.0)
    return h2 @ p["fc3w"].T + p["fc3b"]


if __name__ == "__main__":
    B, H, W, C, num_labels = 2, 16, 16, 25, 10
    key = jax.random.PRNGKey(0)
    k_x, k_p = jax.random.split(key)
    x = jax.random.normal(k_x, (B, H, W, C), dtype=jnp.float32)   # NHWC input

    params = init_params(k_p, C=C, num_labels=num_labels)
    kp = kernel_params(params, H=H, W=W)

    fwd = jax.jit(lambda xv: enhanced_ttconv_forward(xv, kp))
    out = jax.block_until_ready(fwd(x))

    ref = jax.block_until_ready(reference_forward(x, params))
    assert out.shape == (B, num_labels)
    assert bool(jnp.all(jnp.isfinite(out)))
    # conv matmuls run in bf16 (f32 accumulation) -> slightly looser tolerance
    np.testing.assert_allclose(np.asarray(out), np.asarray(ref), rtol=5e-2, atol=5e-2)

    print("KERNEL_OK")
</pallas_src>

<mosaic_0001>
module attributes {stable_mosaic.version = 11 : i64} {
  func.func @_fused_kernel(%arg0: i32, %arg1: memref<1x16x16x128xf32, #tpu.memory_space<vmem>>, %arg2: memref<1x128xf32, #tpu.memory_space<vmem>>, %arg3: memref<1x128xf32, #tpu.memory_space<vmem>>, %arg4: memref<256x512xf32, #tpu.memory_space<vmem>>, %arg5: memref<1152x128xbf16, #tpu.memory_space<vmem>>, %arg6: memref<128x128xf32, #tpu.memory_space<vmem>>, %arg7: memref<1x128xf32, #tpu.memory_space<vmem>>, %arg8: memref<128x128xf32, #tpu.memory_space<vmem>>, %arg9: memref<1x128xf32, #tpu.memory_space<vmem>>, %arg10: memref<1152x128xbf16, #tpu.memory_space<vmem>>, %arg11: memref<128x128xf32, #tpu.memory_space<vmem>>, %arg12: memref<1x128xf32, #tpu.memory_space<vmem>>, %arg13: memref<128x128xf32, #tpu.memory_space<vmem>>, %arg14: memref<1x128xf32, #tpu.memory_space<vmem>>, %arg15: memref<128x128xf32, #tpu.memory_space<vmem>>, %arg16: memref<1x128xf32, #tpu.memory_space<vmem>>, %arg17: memref<128x128xf32, #tpu.memory_space<vmem>>, %arg18: memref<1x128xf32, #tpu.memory_space<vmem>>, %arg19: memref<128x128xf32, #tpu.memory_space<vmem>>, %arg20: memref<1x128xf32, #tpu.memory_space<vmem>>, %arg21: memref<1x8x128xf32, #tpu.memory_space<vmem>>, %arg22: memref<18x18x128xf32, #tpu.memory_space<vmem>>, %arg23: memref<256x1152xbf16, #tpu.memory_space<vmem>>) attributes {dimension_semantics = [#tpu.dimension_semantics<parallel>], iteration_bounds = array<i64: 2>, scalar_prefetch = 0 : i64, scratch_operands = 2 : i64, tpu.core_type = #tpu.core_type<tc>, window_params = [{transform_indices = @transform_0, window_bounds = array<i64: 1, 16, 16, 128>}, {pipeline_mode = #tpu.pipeline_mode<synchronous>, transform_indices = @transform_1, window_bounds = array<i64: 1, 128>}, {pipeline_mode = #tpu.pipeline_mode<synchronous>, transform_indices = @transform_2, window_bounds = array<i64: 1, 128>}, {pipeline_mode = #tpu.pipeline_mode<synchronous>, transform_indices = @transform_3, window_bounds = array<i64: 256, 512>}, {pipeline_mode = #tpu.pipeline_mode<synchronous>, transform_indices = @transform_4, window_bounds = array<i64: 1152, 128>}, {pipeline_mode = #tpu.pipeline_mode<synchronous>, transform_indices = @transform_5, window_bounds = array<i64: 128, 128>}, {pipeline_mode = #tpu.pipeline_mode<synchronous>, transform_indices = @transform_6, window_bounds = array<i64: 1, 128>}, {pipeline_mode = #tpu.pipeline_mode<synchronous>, transform_indices = @transform_7, window_bounds = array<i64: 128, 128>}, {pipeline_mode = #tpu.pipeline_mode<synchronous>, transform_indices = @transform_8, window_bounds = array<i64: 1, 128>}, {pipeline_mode = #tpu.pipeline_mode<synchronous>, transform_indices = @transform_9, window_bounds = array<i64: 1152, 128>}, {pipeline_mode = #tpu.pipeline_mode<synchronous>, transform_indices = @transform_10, window_bounds = array<i64: 128, 128>}, {pipeline_mode = #tpu.pipeline_mode<synchronous>, transform_indices = @transform_11, window_bounds = array<i64: 1, 128>}, {pipeline_mode = #tpu.pipeline_mode<synchronous>, transform_indices = @transform_12, window_bounds = array<i64: 128, 128>}, {pipeline_mode = #tpu.pipeline_mode<synchronous>, transform_indices = @transform_13, window_bounds = array<i64: 1, 128>}, {pipeline_mode = #tpu.pipeline_mode<synchronous>, transform_indices = @transform_14, window_bounds = array<i64: 128, 128>}, {pipeline_mode = #tpu.pipeline_mode<synchronous>, transform_indices = @transform_15, window_bounds = array<i64: 1, 128>}, {pipeline_mode = #tpu.pipeline_mode<synchronous>, transform_indices = @transform_16, window_bounds = array<i64: 128, 128>}, {pipeline_mode = #tpu.pipeline_mode<synchronous>, transform_indices = @transform_17, window_bounds = array<i64: 1, 128>}, {pipeline_mode = #tpu.pipeline_mode<synchronous>, transform_indices = @transform_18, window_bounds = array<i64: 128, 128>}, {pipeline_mode = #tpu.pipeline_mode<synchronous>, transform_indices = @transform_19, window_bounds = array<i64: 1, 128>}, {transform_indices = @transform_20, window_bounds = array<i64: 1, 8, 128>}]} {
    %cst = arith.constant 0.000000e+00 : f32
    %0 = vector.broadcast %cst : f32 to vector<1x18x128xf32>
    %c0 = arith.constant 0 : index
    %c0_0 = arith.constant 0 : index
    %c0_1 = arith.constant 0 : index
    %1 = vector.load %arg22[%c0, %c0_0, %c0_1] : memref<18x18x128xf32, #tpu.memory_space<vmem>>, vector<1x18x128xf32>
    tpu.vector_store %arg22[%c0, %c0_0, %c0_1], %0 {strides = array<i32>} : memref<18x18x128xf32, #tpu.memory_space<vmem>>, vector<1x18x128xf32>,
    %cst_2 = arith.constant 0.000000e+00 : f32
    %2 = vector.broadcast %cst_2 : f32 to vector<1x18x128xf32>
    %c17 = arith.constant 17 : index
    %c0_3 = arith.constant 0 : index
    %c0_4 = arith.constant 0 : index
    %3 = vector.load %arg22[%c17, %c0_3, %c0_4] : memref<18x18x128xf32, #tpu.memory_space<vmem>>, vector<1x18x128xf32>
    tpu.vector_store %arg22[%c17, %c0_3, %c0_4], %2 {strides = array<i32>} : memref<18x18x128xf32, #tpu.memory_space<vmem>>, vector<1x18x128xf32>,
    %cst_5 = arith.constant 0.000000e+00 : f32
    %4 = vector.broadcast %cst_5 : f32 to vector<18x1x128xf32>
    %c0_6 = arith.constant 0 : index
    %c0_7 = arith.constant 0 : index
    %c0_8 = arith.constant 0 : index
    %5 = vector.load %arg22[%c0_6, %c0_7, %c0_8] : memref<18x18x128xf32, #tpu.memory_space<vmem>>, vector<18x1x128xf32>
    tpu.vector_store %arg22[%c0_6, %c0_7, %c0_8], %4 {strides = array<i32>} : memref<18x18x128xf32, #tpu.memory_space<vmem>>, vector<18x1x128xf32>,
    %cst_9 = arith.constant 0.000000e+00 : f32
    %6 = vector.broadcast %cst_9 : f32 to vector<18x1x128xf32>
    %c0_10 = arith.constant 0 : index
    %c17_11 = arith.constant 17 : index
    %c0_12 = arith.constant 0 : index
    %7 = vector.load %arg22[%c0_10, %c17_11, %c0_12] : memref<18x18x128xf32, #tpu.memory_space<vmem>>, vector<18x1x128xf32>
    tpu.vector_store %arg22[%c0_10, %c17_11, %c0_12], %6 {strides = array<i32>} : memref<18x18x128xf32, #tpu.memory_space<vmem>>, vector<18x1x128xf32>,
    %c0_13 = arith.constant 0 : index
    %c0_14 = arith.constant 0 : index
    %c0_15 = arith.constant 0 : index
    %c0_16 = arith.constant 0 : index
    %8 = vector.load %arg1[%c0_13, %c0_14, %c0_15, %c0_16] : memref<1x16x16x128xf32, #tpu.memory_space<vmem>>, vector<1x16x16x128xf32>
    %9 = vector.shape_cast %8 : vector<1x16x16x128xf32> to vector<16x16x128xf32>
    %10 = vector.shape_cast %9 : vector<16x16x128xf32> to vector<256x128xf32>
    %c0_17 = arith.constant 0 : index
    %c0_18 = arith.constant 0 : index
    %11 = vector.load %arg2[%c0_17, %c0_18] : memref<1x128xf32, #tpu.memory_space<vmem>>, vector<1x128xf32>
    %c0_19 = arith.constant 0 : index
    %c0_20 = arith.constant 0 : index
    %12 = vector.load %arg3[%c0_19, %c0_20] : memref<1x128xf32, #tpu.memory_space<vmem>>, vector<1x128xf32>
    %cst_21 = arith.constant dense<0.000000e+00> : vector<128xf32>
    %13 = vector.multi_reduction <add>, %10, %cst_21 [0] : vector<256x128xf32> to vector<128xf32>
    %14 = vector.shape_cast %13 : vector<128xf32> to vector<1x128xf32>
    %cst_22 = arith.constant 2.560000e+02 : f32
    %15 = vector.broadcast %cst_22 : f32 to vector<1x128xf32>
    %16 = arith.divf %14, %15 : vector<1x128xf32>
    %cst_23 = arith.constant dense<0xFF800000> : vector<128xf32>
    %17 = vector.multi_reduction <maximumf>, %10, %cst_23 [0] : vector<256x128xf32> to vector<128xf32>
    %18 = vector.shape_cast %17 : vector<128xf32> to vector<1x128xf32>
    %19 = arith.mulf %16, %11 : vector<1x128xf32>
    %cst_24 = arith.constant dense<0.000000e+00> : vector<1xf32>
    %20 = vector.multi_reduction <add>, %19, %cst_24 [1] : vector<1x128xf32> to vector<1xf32>
    %21 = vector.shape_cast %20 : vector<1xf32> to vector<1x1xf32>
    %cst_25 = arith.constant 0.000000e+00 : f32
    %22 = vector.broadcast %cst_25 : f32 to vector<1x1xf32>
    %23 = arith.maximumf %21, %22 : vector<1x1xf32>
    %24 = arith.mulf %18, %11 : vector<1x128xf32>
    %cst_26 = arith.constant dense<0.000000e+00> : vector<1xf32>
    %25 = vector.multi_reduction <add>, %24, %cst_26 [1] : vector<1x128xf32> to vector<1xf32>
    %26 = vector.shape_cast %25 : vector<1xf32> to vector<1x1xf32>
    %cst_27 = arith.constant 0.000000e+00 : f32
    %27 = vector.broadcast %cst_27 : f32 to vector<1x1xf32>
    %28 = arith.maximumf %26, %27 : vector<1x1xf32>
    %29 = arith.addf %23, %28 : vector<1x1xf32>
    %30 = vector.broadcast %29 : vector<1x1xf32> to vector<1x128xf32>
    %31 = arith.mulf %30, %12 : vector<1x128xf32>
    %32 = arith.negf %31 : vector<1x128xf32>
    %33 = math.exp %32 : vector<1x128xf32>
    %cst_28 = arith.constant 1.000000e+00 : f32
    %34 = vector.broadcast %cst_28 : f32 to vector<1x128xf32>
    %35 = arith.addf %34, %33 : vector<1x128xf32>
    %36 = arith.divf %34, %35 : vector<1x128xf32>
    %37 = vector.broadcast %36 : vector<1x128xf32> to vector<256x128xf32>
    %38 = arith.mulf %10, %37 : vector<256x128xf32>
    %39 = tpu.iota {dimensions = array<i32: 1>} : vector<256x128xi32>
    %cst_29 = arith.constant dense<0.000000e+00> : vector<256xf32>
    %40 = vector.multi_reduction <add>, %38, %cst_29 [1] : vector<256x128xf32> to vector<256xf32>
    %41 = vector.shape_cast %40 : vector<256xf32> to vector<256x1xf32>
    %cst_30 = arith.constant 4.000000e-02 : f32
    %42 = vector.broadcast %cst_30 : f32 to vector<256x1xf32>
    %43 = arith.mulf %41, %42 : vector<256x1xf32>
    %c25_i32 = arith.constant 25 : i32
    %44 = vector.broadcast %c25_i32 : i32 to vector<256x128xi32>
    %45 = arith.cmpi slt, %39, %44 : vector<256x128xi32>
    %cst_31 = arith.constant -1.000000e+30 : f32
    %46 = vector.broadcast %cst_31 : f32 to vector<256x128xf32>
    %47 = arith.select %45, %38, %46 : vector<256x128xi1>, vector<256x128xf32>
    %cst_32 = arith.constant dense<0xFF800000> : vector<256xf32>
    %48 = vector.multi_reduction <maximumf>, %47, %cst_32 [1] : vector<256x128xf32> to vector<256xf32>
    %49 = vector.shape_cast %48 : vector<256xf32> to vector<256x1xf32>
    %50 = tpu.concatenate %43, %49 in 0 : vector<256x1xf32>, vector<256x1xf32> -> vector<512x1xf32>
    %c0_33 = arith.constant 0 : index
    %c0_34 = arith.constant 0 : index
    %51 = vector.load %arg4[%c0_33, %c0_34] : memref<256x512xf32, #tpu.memory_space<vmem>>, vector<256x512xf32>
    %cst_35 = arith.constant dense<0.000000e+00> : vector<256x1xf32>
    %52 = tpu.matmul %51, %50, %cst_35 {dimension_numbers = #tpu.dot_dimension_numbers<[1], [0], [0], [1], [0, 0, 1, 1], [], []>} : vector<256x512xf32>, vector<512x1xf32>, vector<256x1xf32> -> vector<256x1xf32>
    %53 = arith.negf %52 : vector<256x1xf32>
    %54 = math.exp %53 : vector<256x1xf32>
    %cst_36 = arith.constant 1.000000e+00 : f32
    %55 = vector.broadcast %cst_36 : f32 to vector<256x1xf32>
    %56 = arith.addf %55, %54 : vector<256x1xf32>
    %57 = arith.divf %55, %56 : vector<256x1xf32>
    %58 = vector.broadcast %57 : vector<256x1xf32> to vector<256x128xf32>
    %59 = arith.mulf %38, %58 : vector<256x128xf32>
    %60 = vector.shape_cast %59 : vector<256x128xf32> to vector<16x16x128xf32>
    %c1 = arith.constant 1 : index
    %c1_37 = arith.constant 1 : index
    %c0_38 = arith.constant 0 : index
    %61 = vector.load %arg22[%c1, %c1_37, %c0_38] : memref<18x18x128xf32, #tpu.memory_space<vmem>>, vector<16x16x128xf32>
    tpu.vector_store %arg22[%c1, %c1_37, %c0_38], %60 {strides = array<i32>} : memref<18x18x128xf32, #tpu.memory_space<vmem>>, vector<16x16x128xf32>,
    %c0_39 = arith.constant 0 : index
    %c0_40 = arith.constant 0 : index
    %c0_41 = arith.constant 0 : index
    %62 = vector.load %arg22[%c0_39, %c0_40, %c0_41] : memref<18x18x128xf32, #tpu.memory_space<vmem>>, vector<16x16x128xf32>
    %63 = vector.shape_cast %62 : vector<16x16x128xf32> to vector<256x128xf32>
    %64 = arith.truncf %63 : vector<256x128xf32> to vector<256x128xbf16>
    %c0_42 = arith.constant 0 : index
    %c0_43 = arith.constant 0 : index
    %65 = vector.load %arg23[%c0_42, %c0_43] : memref<256x1152xbf16, #tpu.memory_space<vmem>>, vector<256x128xbf16>
    tpu.vector_store %arg23[%c0_42, %c0_43], %64 {strides = array<i32>} : memref<256x1152xbf16, #tpu.memory_space<vmem>>, vector<256x128xbf16>,
    %c0_44 = arith.constant 0 : index
    %c1_45 = arith.constant 1 : index
    %c0_46 = arith.constant 0 : index
    %66 = vector.load %arg22[%c0_44, %c1_45, %c0_46] : memref<18x18x128xf32, #tpu.memory_space<vmem>>, vector<16x16x128xf32>
    %67 = vector.shape_cast %66 : vector<16x16x128xf32> to vector<256x128xf32>
    %68 = arith.truncf %67 : vector<256x128xf32> to vector<256x128xbf16>
    %c0_47 = arith.constant 0 : index
    %c128 = arith.constant 128 : index
    %69 = vector.load %arg23[%c0_47, %c128] : memref<256x1152xbf16, #tpu.memory_space<vmem>>, vector<256x128xbf16>
    tpu.vector_store %arg23[%c0_47, %c128], %68 {strides = array<i32>} : memref<256x1152xbf16, #tpu.memory_space<vmem>>, vector<256x128xbf16>,
    %c0_48 = arith.constant 0 : index
    %c2 = arith.constant 2 : index
    %c0_49 = arith.constant 0 : index
    %70 = vector.load %arg22[%c0_48, %c2, %c0_49] : memref<18x18x128xf32, #tpu.memory_space<vmem>>, vector<16x16x128xf32>
    %71 = vector.shape_cast %70 : vector<16x16x128xf32> to vector<256x128xf32>
    %72 = arith.truncf %71 : vector<256x128xf32> to vector<256x128xbf16>
    %c0_50 = arith.constant 0 : index
    %c256 = arith.constant 256 : index
    %73 = vector.load %arg23[%c0_50, %c256] : memref<256x1152xbf16, #tpu.memory_space<vmem>>, vector<256x128xbf16>
    tpu.vector_store %arg23[%c0_50, %c256], %72 {strides = array<i32>} : memref<256x1152xbf16, #tpu.memory_space<vmem>>, vector<256x128xbf16>,
    %c1_51 = arith.constant 1 : index
    %c0_52 = arith.constant 0 : index
    %c0_53 = arith.constant 0 : index
    %74 = vector.load %arg22[%c1_51, %c0_52, %c0_53] : memref<18x18x128xf32, #tpu.memory_space<vmem>>, vector<16x16x128xf32>
    %75 = vector.shape_cast %74 : vector<16x16x128xf32> to vector<256x128xf32>
    %76 = arith.truncf %75 : vector<256x128xf32> to vector<256x128xbf16>
    %c0_54 = arith.constant 0 : index
    %c384 = arith.constant 384 : index
    %77 = vector.load %arg23[%c0_54, %c384] : memref<256x1152xbf16, #tpu.memory_space<vmem>>, vector<256x128xbf16>
    tpu.vector_store %arg23[%c0_54, %c384], %76 {strides = array<i32>} : memref<256x1152xbf16, #tpu.memory_space<vmem>>, vector<256x128xbf16>,
    %c1_55 = arith.constant 1 : index
    %c1_56 = arith.constant 1 : index
    %c0_57 = arith.constant 0 : index
    %78 = vector.load %arg22[%c1_55, %c1_56, %c0_57] : memref<18x18x128xf32, #tpu.memory_space<vmem>>, vector<16x16x128xf32>
    %79 = vector.shape_cast %78 : vector<16x16x128xf32> to vector<256x128xf32>
    %80 = arith.truncf %79 : vector<256x128xf32> to vector<256x128xbf16>
    %c0_58 = arith.constant 0 : index
    %c512 = arith.constant 512 : index
    %81 = vector.load %arg23[%c0_58, %c512] : memref<256x1152xbf16, #tpu.memory_space<vmem>>, vector<256x128xbf16>
    tpu.vector_store %arg23[%c0_58, %c512], %80 {strides = array<i32>} : memref<256x1152xbf16, #tpu.memory_space<vmem>>, vector<256x128xbf16>,
    %c1_59 = arith.constant 1 : index
    %c2_60 = arith.constant 2 : index
    %c0_61 = arith.constant 0 : index
    %82 = vector.load %arg22[%c1_59, %c2_60, %c0_61] : memref<18x18x128xf32, #tpu.memory_space<vmem>>, vector<16x16x128xf32>
    %83 = vector.shape_cast %82 : vector<16x16x128xf32> to vector<256x128xf32>
    %84 = arith.truncf %83 : vector<256x128xf32> to vector<256x128xbf16>
    %c0_62 = arith.constant 0 : index
    %c640 = arith.constant 640 : index
    %85 = vector.load %arg23[%c0_62, %c640] : memref<256x1152xbf16, #tpu.memory_space<vmem>>, vector<256x128xbf16>
    tpu.vector_store %arg23[%c0_62, %c640], %84 {strides = array<i32>} : memref<256x1152xbf16, #tpu.memory_space<vmem>>, vector<256x128xbf16>,
    %c2_63 = arith.constant 2 : index
    %c0_64 = arith.constant 0 : index
    %c0_65 = arith.constant 0 : index
    %86 = vector.load %arg22[%c2_63, %c0_64, %c0_65] : memref<18x18x128xf32, #tpu.memory_space<vmem>>, vector<16x16x128xf32>
    %87 = vector.shape_cast %86 : vector<16x16x128xf32> to vector<256x128xf32>
    %88 = arith.truncf %87 : vector<256x128xf32> to vector<256x128xbf16>
    %c0_66 = arith.constant 0 : index
    %c768 = arith.constant 768 : index
    %89 = vector.load %arg23[%c0_66, %c768] : memref<256x1152xbf16, #tpu.memory_space<vmem>>, vector<256x128xbf16>
    tpu.vector_store %arg23[%c0_66, %c768], %88 {strides = array<i32>} : memref<256x1152xbf16, #tpu.memory_space<vmem>>, vector<256x128xbf16>,
    %c2_67 = arith.constant 2 : index
    %c1_68 = arith.constant 1 : index
    %c0_69 = arith.constant 0 : index
    %90 = vector.load %arg22[%c2_67, %c1_68, %c0_69] : memref<18x18x128xf32, #tpu.memory_space<vmem>>, vector<16x16x128xf32>
    %91 = vector.shape_cast %90 : vector<16x16x128xf32> to vector<256x128xf32>
    %92 = arith.truncf %91 : vector<256x128xf32> to vector<256x128xbf16>
    %c0_70 = arith.constant 0 : index
    %c896 = arith.constant 896 : index
    %93 = vector.load %arg23[%c0_70, %c896] : memref<256x1152xbf16, #tpu.memory_space<vmem>>, vector<256x128xbf16>
    tpu.vector_store %arg23[%c0_70, %c896], %92 {strides = array<i32>} : memref<256x1152xbf16, #tpu.memory_space<vmem>>, vector<256x128xbf16>,
    %c2_71 = arith.constant 2 : index
    %c2_72 = arith.constant 2 : index
    %c0_73 = arith.constant 0 : index
    %94 = vector.load %arg22[%c2_71, %c2_72, %c0_73] : memref<18x18x128xf32, #tpu.memory_space<vmem>>, vector<16x16x128xf32>
    %95 = vector.shape_cast %94 : vector<16x16x128xf32> to vector<256x128xf32>
    %96 = arith.truncf %95 : vector<256x128xf32> to vector<256x128xbf16>
    %c0_74 = arith.constant 0 : index
    %c1024 = arith.constant 1024 : index
    %97 = vector.load %arg23[%c0_74, %c1024] : memref<256x1152xbf16, #tpu.memory_space<vmem>>, vector<256x128xbf16>
    tpu.vector_store %arg23[%c0_74, %c1024], %96 {strides = array<i32>} : memref<256x1152xbf16, #tpu.memory_space<vmem>>, vector<256x128xbf16>,
    %c0_75 = arith.constant 0 : index
    %c0_76 = arith.constant 0 : index
    %98 = vector.load %arg23[%c0_75, %c0_76] : memref<256x1152xbf16, #tpu.memory_space<vmem>>, vector<256x1152xbf16>
    %c0_77 = arith.constant 0 : index
    %c0_78 = arith.constant 0 : index
    %99 = vector.load %arg5[%c0_77, %c0_78] : memref<1152x128xbf16, #tpu.memory_space<vmem>>, vector<1152x128xbf16>
    %cst_79 = arith.constant dense<0.000000e+00> : vector<256x128xf32>
    %100 = tpu.matmul %98, %99, %cst_79 {dimension_numbers = #tpu.dot_dimension_numbers<[1], [0], [0], [1], [0, 0, 1, 1], [], []>} : vector<256x1152xbf16>, vector<1152x128xbf16>, vector<256x128xf32> -> vector<256x128xf32>
    %c0_80 = arith.constant 0 : index
    %c0_81 = arith.constant 0 : index
    %101 = vector.load %arg6[%c0_80, %c0_81] : memref<128x128xf32, #tpu.memory_space<vmem>>, vector<128x128xf32>
    %cst_82 = arith.constant dense<0.000000e+00> : vector<256x128xf32>
    %102 = tpu.matmul %100, %101, %cst_82 {dimension_numbers = #tpu.dot_dimension_numbers<[1], [0], [0], [1], [0, 0, 1, 1], [], []>} : vector<256x128xf32>, vector<128x128xf32>, vector<256x128xf32> -> vector<256x128xf32>
    %c0_83 = arith.constant 0 : index
    %c0_84 = arith.constant 0 : index
    %103 = vector.load %arg7[%c0_83, %c0_84] : memref<1x128xf32, #tpu.memory_space<vmem>>, vector<1x128xf32>
    %104 = vector.broadcast %103 : vector<1x128xf32> to vector<256x128xf32>
    %105 = arith.addf %102, %104 : vector<256x128xf32>
    %cst_85 = arith.constant 0.000000e+00 : f32
    %106 = vector.broadcast %cst_85 : f32 to vector<256x128xf32>
    %107 = arith.maximumf %105, %106 : vector<256x128xf32>
    %c0_86 = arith.constant 0 : index
    %c0_87 = arith.constant 0 : index
    %108 = vector.load %arg8[%c0_86, %c0_87] : memref<128x128xf32, #tpu.memory_space<vmem>>, vector<128x128xf32>
    %cst_88 = arith.constant dense<0.000000e+00> : vector<256x128xf32>
    %109 = tpu.matmul %107, %108, %cst_88 {dimension_numbers = #tpu.dot_dimension_numbers<[1], [0], [0], [1], [0, 0, 1, 1], [], []>} : vector<256x128xf32>, vector<128x128xf32>, vector<256x128xf32> -> vector<256x128xf32>
    %c0_89 = arith.constant 0 : index
    %c0_90 = arith.constant 0 : index
    %110 = vector.load %arg9[%c0_89, %c0_90] : memref<1x128xf32, #tpu.memory_space<vmem>>, vector<1x128xf32>
    %111 = vector.broadcast %110 : vector<1x128xf32> to vector<256x128xf32>
    %112 = arith.addf %109, %111 : vector<256x128xf32>
    %cst_91 = arith.constant 0.000000e+00 : f32
    %113 = vector.broadcast %cst_91 : f32 to vector<256x128xf32>
    %114 = arith.maximumf %112, %113 : vector<256x128xf32>
    %115 = vector.shape_cast %114 : vector<256x128xf32> to vector<16x16x128xf32>
    %c1_92 = arith.constant 1 : index
    %c1_93 = arith.constant 1 : index
    %c0_94 = arith.constant 0 : index
    %116 = vector.load %arg22[%c1_92, %c1_93, %c0_94] : memref<18x18x128xf32, #tpu.memory_space<vmem>>, vector<16x16x128xf32>
    tpu.vector_store %arg22[%c1_92, %c1_93, %c0_94], %115 {strides = array<i32>} : memref<18x18x128xf32, #tpu.memory_space<vmem>>, vector<16x16x128xf32>,
    %c0_95 = arith.constant 0 : index
    %c0_96 = arith.constant 0 : index
    %c0_97 = arith.constant 0 : index
    %117 = vector.load %arg22[%c0_95, %c0_96, %c0_97] : memref<18x18x128xf32, #tpu.memory_space<vmem>>, vector<16x16x128xf32>
    %118 = vector.shape_cast %117 : vector<16x16x128xf32> to vector<256x128xf32>
    %119 = arith.truncf %118 : vector<256x128xf32> to vector<256x128xbf16>
    %c0_98 = arith.constant 0 : index
    %c0_99 = arith.constant 0 : index
    %120 = vector.load %arg23[%c0_98, %c0_99] : memref<256x1152xbf16, #tpu.memory_space<vmem>>, vector<256x128xbf16>
    tpu.vector_store %arg23[%c0_98, %c0_99], %119 {strides = array<i32>} : memref<256x1152xbf16, #tpu.memory_space<vmem>>, vector<256x128xbf16>,
    %c0_100 = arith.constant 0 : index
    %c1_101 = arith.constant 1 : index
    %c0_102 = arith.constant 0 : index
    %121 = vector.load %arg22[%c0_100, %c1_101, %c0_102] : memref<18x18x128xf32, #tpu.memory_space<vmem>>, vector<16x16x128xf32>
    %122 = vector.shape_cast %121 : vector<16x16x128xf32> to vector<256x128xf32>
    %123 = arith.truncf %122 : vector<256x128xf32> to vector<256x128xbf16>
    %c0_103 = arith.constant 0 : index
    %c128_104 = arith.constant 128 : index
    %124 = vector.load %arg23[%c0_103, %c128_104] : memref<256x1152xbf16, #tpu.memory_space<vmem>>, vector<256x128xbf16>
    tpu.vector_store %arg23[%c0_103, %c128_104], %123 {strides = array<i32>} : memref<256x1152xbf16, #tpu.memory_space<vmem>>, vector<256x128xbf16>,
    %c0_105 = arith.constant 0 : index
    %c2_106 = arith.constant 2 : index
    %c0_107 = arith.constant 0 : index
    %125 = vector.load %arg22[%c0_105, %c2_106, %c0_107] : memref<18x18x128xf32, #tpu.memory_space<vmem>>, vector<16x16x128xf32>
    %126 = vector.shape_cast %125 : vector<16x16x128xf32> to vector<256x128xf32>
    %127 = arith.truncf %126 : vector<256x128xf32> to vector<256x128xbf16>
    %c0_108 = arith.constant 0 : index
    %c256_109 = arith.constant 256 : index
    %128 = vector.load %arg23[%c0_108, %c256_109] : memref<256x1152xbf16, #tpu.memory_space<vmem>>, vector<256x128xbf16>
    tpu.vector_store %arg23[%c0_108, %c256_109], %127 {strides = array<i32>} : memref<256x1152xbf16, #tpu.memory_space<vmem>>, vector<256x128xbf16>,
    %c1_110 = arith.constant 1 : index
    %c0_111 = arith.constant 0 : index
    %c0_112 = arith.constant 0 : index
    %129 = vector.load %arg22[%c1_110, %c0_111, %c0_112] : memref<18x18x128xf32, #tpu.memory_space<vmem>>, vector<16x16x128xf32>
    %130 = vector.shape_cast %129 : vector<16x16x128xf32> to vector<256x128xf32>
    %131 = arith.truncf %130 : vector<256x128xf32> to vector<256x128xbf16>
    %c0_113 = arith.constant 0 : index
    %c384_114 = arith.constant 384 : index
    %132 = vector.load %arg23[%c0_113, %c384_114] : memref<256x1152xbf16, #tpu.memory_space<vmem>>, vector<256x128xbf16>
    tpu.vector_store %arg23[%c0_113, %c384_114], %131 {strides = array<i32>} : memref<256x1152xbf16, #tpu.memory_space<vmem>>, vector<256x128xbf16>,
    %c1_115 = arith.constant 1 : index
    %c1_116 = arith.constant 1 : index
    %c0_117 = arith.constant 0 : index
    %133 = vector.load %arg22[%c1_115, %c1_116, %c0_117] : memref<18x18x128xf32, #tpu.memory_space<vmem>>, vector<16x16x128xf32>
    %134 = vector.shape_cast %133 : vector<16x16x128xf32> to vector<256x128xf32>
    %135 = arith.truncf %134 : vector<256x128xf32> to vector<256x128xbf16>
    %c0_118 = arith.constant 0 : index
    %c512_119 = arith.constant 512 : index
    %136 = vector.load %arg23[%c0_118, %c512_119] : memref<256x1152xbf16, #tpu.memory_space<vmem>>, vector<256x128xbf16>
    tpu.vector_store %arg23[%c0_118, %c512_119], %135 {strides = array<i32>} : memref<256x1152xbf16, #tpu.memory_space<vmem>>, vector<256x128xbf16>,
    %c1_120 = arith.constant 1 : index
    %c2_121 = arith.constant 2 : index
    %c0_122 = arith.constant 0 : index
    %137 = vector.load %arg22[%c1_120, %c2_121, %c0_122] : memref<18x18x128xf32, #tpu.memory_space<vmem>>, vector<16x16x128xf32>
    %138 = vector.shape_cast %137 : vector<16x16x128xf32> to vector<256x128xf32>
    %139 = arith.truncf %138 : vector<256x128xf32> to vector<256x128xbf16>
    %c0_123 = arith.constant 0 : index
    %c640_124 = arith.constant 640 : index
    %140 = vector.load %arg23[%c0_123, %c640_124] : memref<256x1152xbf16, #tpu.memory_space<vmem>>, vector<256x128xbf16>
    tpu.vector_store %arg23[%c0_123, %c640_124], %139 {strides = array<i32>} : memref<256x1152xbf16, #tpu.memory_space<vmem>>, vector<256x128xbf16>,
    %c2_125 = arith.constant 2 : index
    %c0_126 = arith.constant 0 : index
    %c0_127 = arith.constant 0 : index
    %141 = vector.load %arg22[%c2_125, %c0_126, %c0_127] : memref<18x18x128xf32, #tpu.memory_space<vmem>>, vector<16x16x128xf32>
    %142 = vector.shape_cast %141 : vector<16x16x128xf32> to vector<256x128xf32>
    %143 = arith.truncf %142 : vector<256x128xf32> to vector<256x128xbf16>
    %c0_128 = arith.constant 0 : index
    %c768_129 = arith.constant 768 : index
    %144 = vector.load %arg23[%c0_128, %c768_129] : memref<256x1152xbf16, #tpu.memory_space<vmem>>, vector<256x128xbf16>
    tpu.vector_store %arg23[%c0_128, %c768_129], %143 {strides = array<i32>} : memref<256x1152xbf16, #tpu.memory_space<vmem>>, vector<256x128xbf16>,
    %c2_130 = arith.constant 2 : index
    %c1_131 = arith.constant 1 : index
    %c0_132 = arith.constant 0 : index
    %145 = vector.load %arg22[%c2_130, %c1_131, %c0_132] : memref<18x18x128xf32, #tpu.memory_space<vmem>>, vector<16x16x128xf32>
    %146 = vector.shape_cast %145 : vector<16x16x128xf32> to vector<256x128xf32>
    %147 = arith.truncf %146 : vector<256x128xf32> to vector<256x128xbf16>
    %c0_133 = arith.constant 0 : index
    %c896_134 = arith.constant 896 : index
    %148 = vector.load %arg23[%c0_133, %c896_134] : memref<256x1152xbf16, #tpu.memory_space<vmem>>, vector<256x128xbf16>
    tpu.vector_store %arg23[%c0_133, %c896_134], %147 {strides = array<i32>} : memref<256x1152xbf16, #tpu.memory_space<vmem>>, vector<256x128xbf16>,
    %c2_135 = arith.constant 2 : index
    %c2_136 = arith.constant 2 : index
    %c0_137 = arith.constant 0 : index
    %149 = vector.load %arg22[%c2_135, %c2_136, %c0_137] : memref<18x18x128xf32, #tpu.memory_space<vmem>>, vector<16x16x128xf32>
    %150 = vector.shape_cast %149 : vector<16x16x128xf32> to vector<256x128xf32>
    %151 = arith.truncf %150 : vector<256x128xf32> to vector<256x128xbf16>
    %c0_138 = arith.constant 0 : index
    %c1024_139 = arith.constant 1024 : index
    %152 = vector.load %arg23[%c0_138, %c1024_139] : memref<256x1152xbf16, #tpu.memory_space<vmem>>, vector<256x128xbf16>
    tpu.vector_store %arg23[%c0_138, %c1024_139], %151 {strides = array<i32>} : memref<256x1152xbf16, #tpu.memory_space<vmem>>, vector<256x128xbf16>,
    %c0_140 = arith.constant 0 : index
    %c0_141 = arith.constant 0 : index
    %153 = vector.load %arg23[%c0_140, %c0_141] : memref<256x1152xbf16, #tpu.memory_space<vmem>>, vector<256x1152xbf16>
    %c0_142 = arith.constant 0 : index
    %c0_143 = arith.constant 0 : index
    %154 = vector.load %arg10[%c0_142, %c0_143] : memref<1152x128xbf16, #tpu.memory_space<vmem>>, vector<1152x128xbf16>
    %cst_144 = arith.constant dense<0.000000e+00> : vector<256x128xf32>
    %155 = tpu.matmul %153, %154, %cst_144 {dimension_numbers = #tpu.dot_dimension_numbers<[1], [0], [0], [1], [0, 0, 1, 1], [], []>} : vector<256x1152xbf16>, vector<1152x128xbf16>, vector<256x128xf32> -> vector<256x128xf32>
    %c0_145 = arith.constant 0 : index
    %c0_146 = arith.constant 0 : index
    %156 = vector.load %arg11[%c0_145, %c0_146] : memref<128x128xf32, #tpu.memory_space<vmem>>, vector<128x128xf32>
    %cst_147 = arith.constant dense<0.000000e+00> : vector<256x128xf32>
    %157 = tpu.matmul %155, %156, %cst_147 {dimension_numbers = #tpu.dot_dimension_numbers<[1], [0], [0], [1], [0, 0, 1, 1], [], []>} : vector<256x128xf32>, vector<128x128xf32>, vector<256x128xf32> -> vector<256x128xf32>
    %c0_148 = arith.constant 0 : index
    %c0_149 = arith.constant 0 : index
    %158 = vector.load %arg12[%c0_148, %c0_149] : memref<1x128xf32, #tpu.memory_space<vmem>>, vector<1x128xf32>
    %159 = vector.broadcast %158 : vector<1x128xf32> to vector<256x128xf32>
    %160 = arith.addf %157, %159 : vector<256x128xf32>
    %cst_150 = arith.constant 0.000000e+00 : f32
    %161 = vector.broadcast %cst_150 : f32 to vector<256x128xf32>
    %162 = arith.maximumf %160, %161 : vector<256x128xf32>
    %c0_151 = arith.constant 0 : index
    %c0_152 = arith.constant 0 : index
    %163 = vector.load %arg13[%c0_151, %c0_152] : memref<128x128xf32, #tpu.memory_space<vmem>>, vector<128x128xf32>
    %cst_153 = arith.constant dense<0.000000e+00> : vector<256x128xf32>
    %164 = tpu.matmul %162, %163, %cst_153 {dimension_numbers = #tpu.dot_dimension_numbers<[1], [0], [0], [1], [0, 0, 1, 1], [], []>} : vector<256x128xf32>, vector<128x128xf32>, vector<256x128xf32> -> vector<256x128xf32>
    %c0_154 = arith.constant 0 : index
    %c0_155 = arith.constant 0 : index
    %165 = vector.load %arg14[%c0_154, %c0_155] : memref<1x128xf32, #tpu.memory_space<vmem>>, vector<1x128xf32>
    %166 = vector.broadcast %165 : vector<1x128xf32> to vector<256x128xf32>
    %167 = arith.addf %164, %166 : vector<256x128xf32>
    %cst_156 = arith.constant 0.000000e+00 : f32
    %168 = vector.broadcast %cst_156 : f32 to vector<256x128xf32>
    %169 = arith.maximumf %167, %168 : vector<256x128xf32>
    %cst_157 = arith.constant dense<0xFF800000> : vector<128xf32>
    %170 = vector.multi_reduction <maximumf>, %169, %cst_157 [0] : vector<256x128xf32> to vector<128xf32>
    %171 = vector.shape_cast %170 : vector<128xf32> to vector<1x128xf32>
    %c0_158 = arith.constant 0 : index
    %c0_159 = arith.constant 0 : index
    %172 = vector.load %arg15[%c0_158, %c0_159] : memref<128x128xf32, #tpu.memory_space<vmem>>, vector<128x128xf32>
    %cst_160 = arith.constant dense<0.000000e+00> : vector<1x128xf32>
    %173 = tpu.matmul %171, %172, %cst_160 {dimension_numbers = #tpu.dot_dimension_numbers<[1], [0], [0], [1], [0, 0, 1, 1], [], []>} : vector<1x128xf32>, vector<128x128xf32>, vector<1x128xf32> -> vector<1x128xf32>
    %c0_161 = arith.constant 0 : index
    %c0_162 = arith.constant 0 : index
    %174 = vector.load %arg16[%c0_161, %c0_162] : memref<1x128xf32, #tpu.memory_space<vmem>>, vector<1x128xf32>
    %175 = arith.addf %173, %174 : vector<1x128xf32>
    %cst_163 = arith.constant 0.000000e+00 : f32
    %176 = vector.broadcast %cst_163 : f32 to vector<1x128xf32>
    %177 = arith.maximumf %175, %176 : vector<1x128xf32>
    %c0_164 = arith.constant 0 : index
    %c0_165 = arith.constant 0 : index
    %178 = vector.load %arg17[%c0_164, %c0_165] : memref<128x128xf32, #tpu.memory_space<vmem>>, vector<128x128xf32>
    %cst_166 = arith.constant dense<0.000000e+00> : vector<1x128xf32>
    %179 = tpu.matmul %177, %178, %cst_166 {dimension_numbers = #tpu.dot_dimension_numbers<[1], [0], [0], [1], [0, 0, 1, 1], [], []>} : vector<1x128xf32>, vector<128x128xf32>, vector<1x128xf32> -> vector<1x128xf32>
    %c0_167 = arith.constant 0 : index
    %c0_168 = arith.constant 0 : index
    %180 = vector.load %arg18[%c0_167, %c0_168] : memref<1x128xf32, #tpu.memory_space<vmem>>, vector<1x128xf32>
    %181 = arith.addf %179, %180 : vector<1x128xf32>
    %cst_169 = arith.constant 0.000000e+00 : f32
    %182 = vector.broadcast %cst_169 : f32 to vector<1x128xf32>
    %183 = arith.maximumf %181, %182 : vector<1x128xf32>
    %c0_170 = arith.constant 0 : index
    %c0_171 = arith.constant 0 : index
    %184 = vector.load %arg19[%c0_170, %c0_171] : memref<128x128xf32, #tpu.memory_space<vmem>>, vector<128x128xf32>
    %cst_172 = arith.constant dense<0.000000e+00> : vector<1x128xf32>
    %185 = tpu.matmul %183, %184, %cst_172 {dimension_numbers = #tpu.dot_dimension_numbers<[1], [0], [0], [1], [0, 0, 1, 1], [], []>} : vector<1x128xf32>, vector<128x128xf32>, vector<1x128xf32> -> vector<1x128xf32>
    %c0_173 = arith.constant 0 : index
    %c0_174 = arith.constant 0 : index
    %186 = vector.load %arg20[%c0_173, %c0_174] : memref<1x128xf32, #tpu.memory_space<vmem>>, vector<1x128xf32>
    %187 = arith.addf %185, %186 : vector<1x128xf32>
    %188 = vector.shape_cast %187 : vector<1x128xf32> to vector<1x1x128xf32>
    %189 = vector.shape_cast %188 : vector<1x1x128xf32> to vector<1x1x128xf32>
    %190 = vector.broadcast %189 : vector<1x1x128xf32> to vector<1x8x128xf32>
    %c0_175 = arith.constant 0 : index
    %c0_176 = arith.constant 0 : index
    %c0_177 = arith.constant 0 : index
    %191 = vector.load %arg21[%c0_175, %c0_176, %c0_177] : memref<1x8x128xf32, #tpu.memory_space<vmem>>, vector<1x8x128xf32>
    tpu.vector_store %arg21[%c0_175, %c0_176, %c0_177], %190 {strides = array<i32>} : memref<1x8x128xf32, #tpu.memory_space<vmem>>, vector<1x8x128xf32>,
    return
  }
  func.func @transform_0(%arg0: i32) -> (i32, i32, i32, i32) {
    %c0_i32 = arith.constant 0 : i32
    %c0_i32_0 = arith.constant 0 : i32
    %c0_i32_1 = arith.constant 0 : i32
    %c0_i32_2 = arith.constant 0 : i32
    return %arg0, %c0_i32, %c0_i32_0, %c0_i32_1 : i32, i32, i32, i32
  }
  func.func @transform_1(%arg0: i32) -> (i32, i32) {
    %c0_i32 = arith.constant 0 : i32
    %c0_i32_0 = arith.constant 0 : i32
    %c0_i32_1 = arith.constant 0 : i32
    return %c0_i32, %c0_i32_0 : i32, i32
  }
  func.func @transform_2(%arg0: i32) -> (i32, i32) {
    %c0_i32 = arith.constant 0 : i32
    %c0_i32_0 = arith.constant 0 : i32
    %c0_i32_1 = arith.constant 0 : i32
    return %c0_i32, %c0_i32_0 : i32, i32
  }
  func.func @transform_3(%arg0: i32) -> (i32, i32) {
    %c0_i32 = arith.constant 0 : i32
    %c0_i32_0 = arith.constant 0 : i32
    %c0_i32_1 = arith.constant 0 : i32
    return %c0_i32, %c0_i32_0 : i32, i32
  }
  func.func @transform_4(%arg0: i32) -> (i32, i32) {
    %c0_i32 = arith.constant 0 : i32
    %c0_i32_0 = arith.constant 0 : i32
    %c0_i32_1 = arith.constant 0 : i32
    return %c0_i32, %c0_i32_0 : i32, i32
  }
  func.func @transform_5(%arg0: i32) -> (i32, i32) {
    %c0_i32 = arith.constant 0 : i32
    %c0_i32_0 = arith.constant 0 : i32
    %c0_i32_1 = arith.constant 0 : i32
    return %c0_i32, %c0_i32_0 : i32, i32
  }
  func.func @transform_6(%arg0: i32) -> (i32, i32) {
    %c0_i32 = arith.constant 0 : i32
    %c0_i32_0 = arith.constant 0 : i32
    %c0_i32_1 = arith.constant 0 : i32
    return %c0_i32, %c0_i32_0 : i32, i32
  }
  func.func @transform_7(%arg0: i32) -> (i32, i32) {
    %c0_i32 = arith.constant 0 : i32
    %c0_i32_0 = arith.constant 0 : i32
    %c0_i32_1 = arith.constant 0 : i32
    return %c0_i32, %c0_i32_0 : i32, i32
  }
  func.func @transform_8(%arg0: i32) -> (i32, i32) {
    %c0_i32 = arith.constant 0 : i32
    %c0_i32_0 = arith.constant 0 : i32
    %c0_i32_1 = arith.constant 0 : i32
    return %c0_i32, %c0_i32_0 : i32, i32
  }
  func.func @transform_9(%arg0: i32) -> (i32, i32) {
    %c0_i32 = arith.constant 0 : i32
    %c0_i32_0 = arith.constant 0 : i32
    %c0_i32_1 = arith.constant 0 : i32
    return %c0_i32, %c0_i32_0 : i32, i32
  }
  func.func @transform_10(%arg0: i32) -> (i32, i32) {
    %c0_i32 = arith.constant 0 : i32
    %c0_i32_0 = arith.constant 0 : i32
    %c0_i32_1 = arith.constant 0 : i32
    return %c0_i32, %c0_i32_0 : i32, i32
  }
  func.func @transform_11(%arg0: i32) -> (i32, i32) {
    %c0_i32 = arith.constant 0 : i32
    %c0_i32_0 = arith.constant 0 : i32
    %c0_i32_1 = arith.constant 0 : i32
    return %c0_i32, %c0_i32_0 : i32, i32
  }
  func.func @transform_12(%arg0: i32) -> (i32, i32) {
    %c0_i32 = arith.constant 0 : i32
    %c0_i32_0 = arith.constant 0 : i32
    %c0_i32_1 = arith.constant 0 : i32
    return %c0_i32, %c0_i32_0 : i32, i32
  }
  func.func @transform_13(%arg0: i32) -> (i32, i32) {
    %c0_i32 = arith.constant 0 : i32
    %c0_i32_0 = arith.constant 0 : i32
    %c0_i32_1 = arith.constant 0 : i32
    return %c0_i32, %c0_i32_0 : i32, i32
  }
  func.func @transform_14(%arg0: i32) -> (i32, i32) {
    %c0_i32 = arith.constant 0 : i32
    %c0_i32_0 = arith.constant 0 : i32
    %c0_i32_1 = arith.constant 0 : i32
    return %c0_i32, %c0_i32_0 : i32, i32
  }
  func.func @transform_15(%arg0: i32) -> (i32, i32) {
    %c0_i32 = arith.constant 0 : i32
    %c0_i32_0 = arith.constant 0 : i32
    %c0_i32_1 = arith.constant 0 : i32
    return %c0_i32, %c0_i32_0 : i32, i32
  }
  func.func @transform_16(%arg0: i32) -> (i32, i32) {
    %c0_i32 = arith.constant 0 : i32
    %c0_i32_0 = arith.constant 0 : i32
    %c0_i32_1 = arith.constant 0 : i32
    return %c0_i32, %c0_i32_0 : i32, i32
  }
  func.func @transform_17(%arg0: i32) -> (i32, i32) {
    %c0_i32 = arith.constant 0 : i32
    %c0_i32_0 = arith.constant 0 : i32
    %c0_i32_1 = arith.constant 0 : i32
    return %c0_i32, %c0_i32_0 : i32, i32
  }
  func.func @transform_18(%arg0: i32) -> (i32, i32) {
    %c0_i32 = arith.constant 0 : i32
    %c0_i32_0 = arith.constant 0 : i32
    %c0_i32_1 = arith.constant 0 : i32
    return %c0_i32, %c0_i32_0 : i32, i32
  }
  func.func @transform_19(%arg0: i32) -> (i32, i32) {
    %c0_i32 = arith.constant 0 : i32
    %c0_i32_0 = arith.constant 0 : i32
    %c0_i32_1 = arith.constant 0 : i32
    return %c0_i32, %c0_i32_0 : i32, i32
  }
  func.func @transform_20(%arg0: i32) -> (i32, i32, i32) {
    %c0_i32 = arith.constant 0 : i32
    %c0_i32_0 = arith.constant 0 : i32
    %c0_i32_1 = arith.constant 0 : i32
    return %arg0, %c0_i32, %c0_i32_0 : i32, i32, i32
  }
}

</mosaic_0001>

<llo_original>
// kernel: _lambda_.1
$region0: #{_lambda_.1}
  #allocation0 [shape = 'u32[]', space=smem, size = 0x4, offset = 0x4, fixed_abs, tag = 'smem constant byte address 0x4 - core index']
  #allocation1 [shape = 'u32[144,128]{1,0:T(1,128)}', space=vmem, size = 0x12000, scoped, tag = 'internal scratch']
  #allocation2 [shape = 'f32[18,18,128]{2,1,0:T(8,128)}', space=vmem, size = 0x36000, scoped, tag = 'scratch operand']
  #allocation3 [shape = 'bf16[256,1152]{1,0:T(16,128)(2,1)}', space=vmem, size = 0x90000, scoped, tag = 'scratch operand']
  %s0 = inlined_call_operand.vmem [shape: f32[2,16,16,128], index: 0, kind: input, shape index: {}]
  %s1 = inlined_call_operand.vmem [shape: f32[1,128], index: 1, kind: input, shape index: {}]
  %s2 = inlined_call_operand.vmem [shape: f32[1,128], index: 2, kind: input, shape index: {}]
  %s3 = inlined_call_operand.vmem [shape: f32[256,512], index: 3, kind: input, shape index: {}]
  %s4 = inlined_call_operand.hbm [shape: bf16[1152,128], index: 4, kind: input, shape index: {}]
  %s5 = inlined_call_operand.hbm [shape: f32[128,128], index: 5, kind: input, shape index: {}]
  %s6 = inlined_call_operand.vmem [shape: f32[1,128], index: 6, kind: input, shape index: {}]
  %s7 = inlined_call_operand.hbm [shape: f32[128,128], index: 7, kind: input, shape index: {}]
  %s8 = inlined_call_operand.vmem [shape: f32[1,128], index: 8, kind: input, shape index: {}]
  %s9 = inlined_call_operand.hbm [shape: bf16[1152,128], index: 9, kind: input, shape index: {}]
  %s10 = inlined_call_operand.hbm [shape: f32[128,128], index: 10, kind: input, shape index: {}]
  %s11 = inlined_call_operand.vmem [shape: f32[1,128], index: 11, kind: input, shape index: {}]
  %s12 = inlined_call_operand.hbm [shape: f32[128,128], index: 12, kind: input, shape index: {}]
  %s13 = inlined_call_operand.vmem [shape: f32[1,128], index: 13, kind: input, shape index: {}]
  %s14 = inlined_call_operand.hbm [shape: f32[128,128], index: 14, kind: input, shape index: {}]
  %s15 = inlined_call_operand.vmem [shape: f32[1,128], index: 15, kind: input, shape index: {}]
  %s16 = inlined_call_operand.hbm [shape: f32[128,128], index: 16, kind: input, shape index: {}]
  %s17 = inlined_call_operand.vmem [shape: f32[1,128], index: 17, kind: input, shape index: {}]
  %s18 = inlined_call_operand.hbm [shape: f32[128,128], index: 18, kind: input, shape index: {}]
  %s19 = inlined_call_operand.vmem [shape: f32[1,128], index: 19, kind: input, shape index: {}]
  %s20 = inlined_call_operand.vmem [shape: f32[2,8,128], index: 20, kind: output, shape index: {}]
  %s21 = sld [smem:[#allocation0]]
  $region149: #{_lambda_.1} parent=0
    _
  %s23 = ssub.s32 1, %s21
  %s24 = scalar_select 0, %s23, %s21
  $region1: #{_lambda_.1} parent=0
    #allocation4 [shape = 'u8[294912]{0}', space=vmem, size = 0x48000, scoped, tag = 'input window, operand 4, single buffered']
    #allocation5 [shape = 's32[2]{0}', space=sflag, size = 0x8, scoped, tag = 'scoped memory for _lambda_.1']
    #allocation6 [shape = 'u8[65536]{0}', space=vmem, size = 0x10000, scoped, tag = 'input window, operand 5, single buffered']
    #allocation7 [shape = 's32[1]{0}', space=sflag, size = 0x4, scoped, tag = 'scoped memory for _lambda_.1']
    #allocation8 [shape = 'u8[65536]{0}', space=vmem, size = 0x10000, scoped, tag = 'input window, operand 7, single buffered']
    #allocation9 [shape = 'u8[294912]{0}', space=vmem, size = 0x48000, scoped, tag = 'input window, operand 9, single buffered']
    #allocation10 [shape = 's32[1]{0}', space=sflag, size = 0x4, scoped, tag = 'scoped memory for _lambda_.1']
    #allocation11 [shape = 'u8[65536]{0}', space=vmem, size = 0x10000, scoped, tag = 'input window, operand 10, single buffered']
    #allocation12 [shape = 'u8[65536]{0}', space=vmem, size = 0x10000, scoped, tag = 'input window, operand 12, single buffered']
    #allocation13 [shape = 's32[1]{0}', space=sflag, size = 0x4, scoped, tag = 'scoped memory for _lambda_.1']
    #allocation14 [shape = 'u8[65536]{0}', space=vmem, size = 0x10000, scoped, tag = 'input window, operand 14, single buffered']
    #allocation15 [shape = 'u8[65536]{0}', space=vmem, size = 0x10000, scoped, tag = 'input window, operand 16, single buffered']
    #allocation16 [shape = 's32[1]{0}', space=sflag, size = 0x4, scoped, tag = 'scoped memory for _lambda_.1']
    #allocation17 [shape = 'u8[65536]{0}', space=vmem, size = 0x10000, scoped, tag = 'input window, operand 18, single buffered']
    %25 = vsyncpa [#allocation5], 0
    %26 = vsyncpa [#allocation7], 0
    %27 = vsyncpa [#allocation10], 0
    %28 = vsyncpa [#allocation13], 0
    %29 = vsyncpa [#allocation16], 0
    loop: start=0, step=1, limit=4
    $region2: #{_lambda_.1} parent=1 // loop_pre_header
      _
    $region3: #{_lambda_.1} parent=1 // loop_header
      %s31 = sphi 0, %s35
      %p32 = scmp.ge.s32.totalorder %s31, 4
      %s41 = sphi 0, %s43
      %s44 = sphi 0, %s41
      %s45 = sphi 0, %s44
      %s61 = sphi 0, %s45
      %s65 = sphi 0, %s65
      %s67 = sphi 0, %s65
      %s68 = sphi 0, %s67
      %s82 = sphi 0, %s68
      %s86 = sphi 0, %s86
      %s88 = sphi 0, %s86
      %s89 = sphi 0, %s88
      %s103 = sphi 0, %s89
      %s107 = sphi 0, %s107
      %s109 = sphi 0, %s107
      %s110 = sphi 0, %s109
      %s124 = sphi 0, %s110
      %s128 = sphi 0, %s128
      %s130 = sphi 0, %s128
      %s131 = sphi 0, %s130
      %s145 = sphi 0, %s131
      %s149 = sphi 0, %s149
      %s151 = sphi 0, %s149
      %s152 = sphi 0, %s151
      %s166 = sphi 0, %s152
      %s170 = sphi 0, %s170
      %s172 = sphi 0, %s170
      %s173 = sphi 0, %s172
      %s187 = sphi 0, %s173
      %s191 = sphi 0, %s191
      %s193 = sphi 0, %s191
      %s194 = sphi 0, %s193
      %s208 = sphi 0, %s194
      %s212 = sphi 0, %s212
      %s214 = sphi 0, %s212
      %s215 = sphi 0, %s214
      %s229 = sphi 0, %s215
      %s233 = sphi 0, %s233
      %s235 = sphi 0, %s233
      %s236 = sphi 0, %s235
      %s250 = sphi 0, %s236
      %s254 = sphi 0, %s254
      %s256 = sphi 0, %s254
      %s257 = sphi 0, %s256
      %s271 = sphi 0, %s257
      %s275 = sphi 0, %s275
      %s277 = sphi 0, %s275
      %s278 = sphi 0, %s277
      %s292 = sphi 0, %s278
      %s296 = sphi 0, %s296
      %s298 = sphi 0, %s296
      %s299 = sphi 0, %s298
      %s313 = sphi 0, %s299
      %s317 = sphi 0, %s317
      %s319 = sphi 0, %s317
      %s320 = sphi 0, %s319
      %s334 = sphi 0, %s320
      %s338 = sphi 0, %s338
      %s340 = sphi 0, %s338
      %s341 = sphi 0, %s340
      %s355 = sphi 0, %s341
      %s359 = sphi 0, %s359
      %s361 = sphi 0, %s359
      %s362 = sphi 0, %s361
      %s376 = sphi 0, %s362
      %s380 = sphi 0, %s380
      %s382 = sphi 0, %s380
      %s383 = sphi 0, %s382
      %s397 = sphi 0, %s383
      %s401 = sphi 0, %s401
      %s403 = sphi 0, %s401
      %s404 = sphi 0, %s403
      %s418 = sphi 0, %s404
      %s422 = sphi 0, %s422
      %s424 = sphi 0, %s422
      %s425 = sphi 0, %s424
      %s439 = sphi 0, %s425
      %s443 = sphi 0, %s443
      %s445 = sphi 0, %s443
      %s446 = sphi 0, %s445
      %s460 = sphi 0, %s446
      %s466 = sphi 0, %s468
      %s469 = sphi 0, %s466
      %s470 = sphi 0, %s469
      %s486 = sphi 0, %s470
    $region4: #{_lambda_.1} parent=1 // loop_header_branch
      %34 = sbr.rel (%p32) target = $region8
    $region5: #{_lambda_.1} parent=1 // loop_body
      %s36 = ssub.s32 %s31, 1
      %s37 = ssub.s32 %s31, 2
      %s38 = sadd.s32 %s31, 1
      %s39 = ssub.s32 %s31, %s38
      %p40 = scmp.eq.s32.totalorder %s39, 0
      %s42 = sadd.s32 %s41, 1
      %s43 = scalar_select %p40, %s41, %s42
      %p46 = pneg %p40
      %p47 = scmp.eq.s32.totalorder %s31, 1
      %p48 = por %p46, %p47
      %p49 = scmp.ne.s32.totalorder %s41, %s44
      %p50 = scmp.eq.s32.totalorder %s31, 0
      %p51 = por %p49, %p50
      %p52 = scmp.ne.s32.totalorder %s41, %s44
      %p53 = scmp.eq.s32.totalorder %s36, 1
      %p54 = por %p52, %p53
      %p55 = scmp.ne.s32.totalorder %s44, %s45
      %p56 = scmp.eq.s32.totalorder %s36, 0
      %p57 = por %p55, %p56
      %p58 = scmp.ne.s32.totalorder %s44, %s45
      %p59 = scmp.eq.s32.totalorder %s37, 1
      %p60 = por %p58, %p59
      %p62 = scmp.ne.s32.totalorder %s45, %s61
      %p63 = scmp.eq.s32.totalorder %s37, 0
      %p64 = por %p62, %p63
      %s66 = sadd.s32 %s65, 1
      %p69 = scmp.eq.s32.totalorder %s31, 1
      %p70 = scmp.ne.s32.totalorder %s65, %s67
      %p71 = scmp.eq.s32.totalorder %s31, 0
      %p72 = por %p70, %p71
      %p73 = scmp.ne.s32.totalorder %s65, %s67
      %p74 = scmp.eq.s32.totalorder %s36, 1
      %p75 = por %p73, %p74
      %p76 = scmp.ne.s32.totalorder %s67, %s68
      %p77 = scmp.eq.s32.totalorder %s36, 0
      %p78 = por %p76, %p77
      %p79 = scmp.ne.s32.totalorder %s67, %s68
      %p80 = scmp.eq.s32.totalorder %s37, 1
      %p81 = por %p79, %p80
      %p83 = scmp.ne.s32.totalorder %s68, %s82
      %p84 = scmp.eq.s32.totalorder %s37, 0
      %p85 = por %p83, %p84
      %s87 = sadd.s32 %s86, 1
      %p90 = scmp.eq.s32.totalorder %s31, 1
      %p91 = scmp.ne.s32.totalorder %s86, %s88
      %p92 = scmp.eq.s32.totalorder %s31, 0
      %p93 = por %p91, %p92
      %p94 = scmp.ne.s32.totalorder %s86, %s88
      %p95 = scmp.eq.s32.totalorder %s36, 1
      %p96 = por %p94, %p95
      %p97 = scmp.ne.s32.totalorder %s88, %s89
      %p98 = scmp.eq.s32.totalorder %s36, 0
      %p99 = por %p97, %p98
      %p100 = scmp.ne.s32.totalorder %s88, %s89
      %p101 = scmp.eq.s32.totalorder %s37, 1
      %p102 = por %p100, %p101
      %p104 = scmp.ne.s32.totalorder %s89, %s103
      %p105 = scmp.eq.s32.totalorder %s37, 0
      %p106 = por %p104, %p105
      %s108 = sadd.s32 %s107, 1
      %p111 = scmp.eq.s32.totalorder %s31, 1
      %p112 = scmp.ne.s32.totalorder %s107, %s109
      %p113 = scmp.eq.s32.totalorder %s31, 0
      %p114 = por %p112, %p113
      %p115 = scmp.ne.s32.totalorder %s107, %s109
      %p116 = scmp.eq.s32.totalorder %s36, 1
      %p117 = por %p115, %p116
      %p118 = scmp.ne.s32.totalorder %s109, %s110
      %p119 = scmp.eq.s32.totalorder %s36, 0
      %p120 = por %p118, %p119
      %p121 = scmp.ne.s32.totalorder %s109, %s110
      %p122 = scmp.eq.s32.totalorder %s37, 1
      %p123 = por %p121, %p122
      %p125 = scmp.ne.s32.totalorder %s110, %s124
      %p126 = scmp.eq.s32.totalorder %s37, 0
      %p127 = por %p125, %p126
      %s129 = sadd.s32 %s128, 1
      %p132 = scmp.eq.s32.totalorder %s31, 1
      %p133 = scmp.ne.s32.totalorder %s128, %s130
      %p134 = scmp.eq.s32.totalorder %s31, 0
      %p135 = por %p133, %p134
      %p136 = scmp.ne.s32.totalorder %s128, %s130
      %p137 = scmp.eq.s32.totalorder %s36, 1
      %p138 = por %p136, %p137
      %p139 = scmp.ne.s32.totalorder %s130, %s131
      %p140 = scmp.eq.s32.totalorder %s36, 0
      %p141 = por %p139, %p140
      %p142 = scmp.ne.s32.totalorder %s130, %s131
      %p143 = scmp.eq.s32.totalorder %s37, 1
      %p144 = por %p142, %p143
      %p146 = scmp.ne.s32.totalorder %s131, %s145
      %p147 = scmp.eq.s32.totalorder %s37, 0
      %p148 = por %p146, %p147
      %s150 = sadd.s32 %s149, 1
      %p153 = scmp.eq.s32.totalorder %s31, 1
      %p154 = scmp.ne.s32.totalorder %s149, %s151
      %p155 = scmp.eq.s32.totalorder %s31, 0
      %p156 = por %p154, %p155
      %p157 = scmp.ne.s32.totalorder %s149, %s151
      %p158 = scmp.eq.s32.totalorder %s36, 1
      %p159 = por %p157, %p158
      %p160 = scmp.ne.s32.totalorder %s151, %s152
      %p161 = scmp.eq.s32.totalorder %s36, 0
      %p162 = por %p160, %p161
      %p163 = scmp.ne.s32.totalorder %s151, %s152
      %p164 = scmp.eq.s32.totalorder %s37, 1
      %p165 = por %p163, %p164
      %p167 = scmp.ne.s32.totalorder %s152, %s166
      %p168 = scmp.eq.s32.totalorder %s37, 0
      %p169 = por %p167, %p168
      %s171 = sadd.s32 %s170, 1
      %p174 = scmp.eq.s32.totalorder %s31, 1
      %p175 = scmp.ne.s32.totalorder %s170, %s172
      %p176 = scmp.eq.s32.totalorder %s31, 0
      %p177 = por %p175, %p176
      %p178 = scmp.ne.s32.totalorder %s170, %s172
      %p179 = scmp.eq.s32.totalorder %s36, 1
      %p180 = por %p178, %p179
      %p181 = scmp.ne.s32.totalorder %s172, %s173
      %p182 = scmp.eq.s32.totalorder %s36, 0
      %p183 = por %p181, %p182
      %p184 = scmp.ne.s32.totalorder %s172, %s173
      %p185 = scmp.eq.s32.totalorder %s37, 1
      %p186 = por %p184, %p185
      %p188 = scmp.ne.s32.totalorder %s173, %s187
      %p189 = scmp.eq.s32.totalorder %s37, 0
      %p190 = por %p188, %p189
      %s192 = sadd.s32 %s191, 1
      %p195 = scmp.eq.s32.totalorder %s31, 1
      %p196 = scmp.ne.s32.totalorder %s191, %s193
      %p197 = scmp.eq.s32.totalorder %s31, 0
      %p198 = por %p196, %p197
      %p199 = scmp.ne.s32.totalorder %s191, %s193
      %p200 = scmp.eq.s32.totalorder %s36, 1
      %p201 = por %p199, %p200
      %p202 = scmp.ne.s32.totalorder %s193, %s194
      %p203 = scmp.eq.s32.totalorder %s36, 0
      %p204 = por %p202, %p203
      %p205 = scmp.ne.s32.totalorder %s193, %s194
      %p206 = scmp.eq.s32.totalorder %s37, 1
      %p207 = por %p205, %p206
      %p209 = scmp.ne.s32.totalorder %s194, %s208
      %p210 = scmp.eq.s32.totalorder %s37, 0
      %p211 = por %p209, %p210
      %s213 = sadd.s32 %s212, 1
      %p216 = scmp.eq.s32.totalorder %s31, 1
      %p217 = scmp.ne.s32.totalorder %s212, %s214
      %p218 = scmp.eq.s32.totalorder %s31, 0
      %p219 = por %p217, %p218
      %p220 = scmp.ne.s32.totalorder %s212, %s214
      %p221 = scmp.eq.s32.totalorder %s36, 1
      %p222 = por %p220, %p221
      %p223 = scmp.ne.s32.totalorder %s214, %s215
      %p224 = scmp.eq.s32.totalorder %s36, 0
      %p225 = por %p223, %p224
      %p226 = scmp.ne.s32.totalorder %s214, %s215
      %p227 = scmp.eq.s32.totalorder %s37, 1
      %p228 = por %p226, %p227
      %p230 = scmp.ne.s32.totalorder %s215, %s229
      %p231 = scmp.eq.s32.totalorder %s37, 0
      %p232 = por %p230, %p231
      %s234 = sadd.s32 %s233, 1
      %p237 = scmp.eq.s32.totalorder %s31, 1
      %p238 = scmp.ne.s32.totalorder %s233, %s235
      %p239 = scmp.eq.s32.totalorder %s31, 0
      %p240 = por %p238, %p239
      %p241 = scmp.ne.s32.totalorder %s233, %s235
      %p242 = scmp.eq.s32.totalorder %s36, 1
      %p243 = por %p241, %p242
      %p244 = scmp.ne.s32.totalorder %s235, %s236
      %p245 = scmp.eq.s32.totalorder %s36, 0
      %p246 = por %p244, %p245
      %p247 = scmp.ne.s32.totalorder %s235, %s236
      %p248 = scmp.eq.s32.totalorder %s37, 1
      %p249 = por %p247, %p248
      %p251 = scmp.ne.s32.totalorder %s236, %s250
      %p252 = scmp.eq.s32.totalorder %s37, 0
      %p253 = por %p251, %p252
      %s255 = sadd.s32 %s254, 1
      %p258 = scmp.eq.s32.totalorder %s31, 1
      %p259 = scmp.ne.s32.totalorder %s254, %s256
      %p260 = scmp.eq.s32.totalorder %s31, 0
      %p261 = por %p259, %p260
      %p262 = scmp.ne.s32.totalorder %s254, %s256
      %p263 = scmp.eq.s32.totalorder %s36, 1
      %p264 = por %p262, %p263
      %p265 = scmp.ne.s32.totalorder %s256, %s257
      %p266 = scmp.eq.s32.totalorder %s36, 0
      %p267 = por %p265, %p266
      %p268 = scmp.ne.s32.totalorder %s256, %s257
      %p269 = scmp.eq.s32.totalorder %s37, 1
      %p270 = por %p268, %p269
      %p272 = scmp.ne.s32.totalorder %s257, %s271
      %p273 = scmp.eq.s32.totalorder %s37, 0
      %p274 = por %p272, %p273
      %s276 = sadd.s32 %s275, 1
      %p279 = scmp.eq.s32.totalorder %s31, 1
      %p280 = scmp.ne.s32.totalorder %s275, %s277
      %p281 = scmp.eq.s32.totalorder %s31, 0
      %p282 = por %p280, %p281
      %p283 = scmp.ne.s32.totalorder %s275, %s277
      %p284 = scmp.eq.s32.totalorder %s36, 1
      %p285 = por %p283, %p284
      %p286 = scmp.ne.s32.totalorder %s277, %s278
      %p287 = scmp.eq.s32.totalorder %s36, 0
      %p288 = por %p286, %p287
      %p289 = scmp.ne.s32.totalorder %s277, %s278
      %p290 = scmp.eq.s32.totalorder %s37, 1
      %p291 = por %p289, %p290
      %p293 = scmp.ne.s32.totalorder %s278, %s292
      %p294 = scmp.eq.s32.totalorder %s37, 0
      %p295 = por %p293, %p294
      %s297 = sadd.s32 %s296, 1
      %p300 = scmp.eq.s32.totalorder %s31, 1
      %p301 = scmp.ne.s32.totalorder %s296, %s298
      %p302 = scmp.eq.s32.totalorder %s31, 0
      %p303 = por %p301, %p302
      %p304 = scmp.ne.s32.totalorder %s296, %s298
      %p305 = scmp.eq.s32.totalorder %s36, 1
      %p306 = por %p304, %p305
      %p307 = scmp.ne.s32.totalorder %s298, %s299
      %p308 = scmp.eq.s32.totalorder %s36, 0
      %p309 = por %p307, %p308
      %p310 = scmp.ne.s32.totalorder %s298, %s299
      %p311 = scmp.eq.s32.totalorder %s37, 1
      %p312 = por %p310, %p311
      %p314 = scmp.ne.s32.totalorder %s299, %s313
      %p315 = scmp.eq.s32.totalorder %s37, 0
      %p316 = por %p314, %p315
      %s318 = sadd.s32 %s317, 1
      %p321 = scmp.eq.s32.totalorder %s31, 1
      %p322 = scmp.ne.s32.totalorder %s317, %s319
      %p323 = scmp.eq.s32.totalorder %s31, 0
      %p324 = por %p322, %p323
      %p325 = scmp.ne.s32.totalorder %s317, %s319
      %p326 = scmp.eq.s32.totalorder %s36, 1
      %p327 = por %p325, %p326
      %p328 = scmp.ne.s32.totalorder %s319, %s320
      %p329 = scmp.eq.s32.totalorder %s36, 0
      %p330 = por %p328, %p329
      %p331 = scmp.ne.s32.totalorder %s319, %s320
      %p332 = scmp.eq.s32.totalorder %s37, 1
      %p333 = por %p331, %p332
      %p335 = scmp.ne.s32.totalorder %s320, %s334
      %p336 = scmp.eq.s32.totalorder %s37, 0
      %p337 = por %p335, %p336
      %s339 = sadd.s32 %s338, 1
      %p342 = scmp.eq.s32.totalorder %s31, 1
      %p343 = scmp.ne.s32.totalorder %s338, %s340
      %p344 = scmp.eq.s32.totalorder %s31, 0
      %p345 = por %p343, %p344
      %p346 = scmp.ne.s32.totalorder %s338, %s340
      %p347 = scmp.eq.s32.totalorder %s36, 1
      %p348 = por %p346, %p347
      %p349 = scmp.ne.s32.totalorder %s340, %s341
      %p350 = scmp.eq.s32.totalorder %s36, 0
      %p351 = por %p349, %p350
      %p352 = scmp.ne.s32.totalorder %s340, %s341
      %p353 = scmp.eq.s32.totalorder %s37, 1
      %p354 = por %p352, %p353
      %p356 = scmp.ne.s32.totalorder %s341, %s355
      %p357 = scmp.eq.s32.totalorder %s37, 0
      %p358 = por %p356, %p357
      %s360 = sadd.s32 %s359, 1
      %p363 = scmp.eq.s32.totalorder %s31, 1
      %p364 = scmp.ne.s32.totalorder %s359, %s361
      %p365 = scmp.eq.s32.totalorder %s31, 0
      %p366 = por %p364, %p365
      %p367 = scmp.ne.s32.totalorder %s359, %s361
      %p368 = scmp.eq.s32.totalorder %s36, 1
      %p369 = por %p367, %p368
      %p370 = scmp.ne.s32.totalorder %s361, %s362
      %p371 = scmp.eq.s32.totalorder %s36, 0
      %p372 = por %p370, %p371
      %p373 = scmp.ne.s32.totalorder %s361, %s362
      %p374 = scmp.eq.s32.totalorder %s37, 1
      %p375 = por %p373, %p374
      %p377 = scmp.ne.s32.totalorder %s362, %s376
      %p378 = scmp.eq.s32.totalorder %s37, 0
      %p379 = por %p377, %p378
      %s381 = sadd.s32 %s380, 1
      %p384 = scmp.eq.s32.totalorder %s31, 1
      %p385 = scmp.ne.s32.totalorder %s380, %s382
      %p386 = scmp.eq.s32.totalorder %s31, 0
      %p387 = por %p385, %p386
      %p388 = scmp.ne.s32.totalorder %s380, %s382
      %p389 = scmp.eq.s32.totalorder %s36, 1
      %p390 = por %p388, %p389
      %p391 = scmp.ne.s32.totalorder %s382, %s383
      %p392 = scmp.eq.s32.totalorder %s36, 0
      %p393 = por %p391, %p392
      %p394 = scmp.ne.s32.totalorder %s382, %s383
      %p395 = scmp.eq.s32.totalorder %s37, 1
      %p396 = por %p394, %p395
      %p398 = scmp.ne.s32.totalorder %s383, %s397
      %p399 = scmp.eq.s32.totalorder %s37, 0
      %p400 = por %p398, %p399
      %s402 = sadd.s32 %s401, 1
      %p405 = scmp.eq.s32.totalorder %s31, 1
      %p406 = scmp.ne.s32.totalorder %s401, %s403
      %p407 = scmp.eq.s32.totalorder %s31, 0
      %p408 = por %p406, %p407
      %p409 = scmp.ne.s32.totalorder %s401, %s403
      %p410 = scmp.eq.s32.totalorder %s36, 1
      %p411 = por %p409, %p410
      %p412 = scmp.ne.s32.totalorder %s403, %s404
      %p413 = scmp.eq.s32.totalorder %s36, 0
      %p414 = por %p412, %p413
      %p415 = scmp.ne.s32.totalorder %s403, %s404
      %p416 = scmp.eq.s32.totalorder %s37, 1
      %p417 = por %p415, %p416
      %p419 = scmp.ne.s32.totalorder %s404, %s418
      %p420 = scmp.eq.s32.totalorder %s37, 0
      %p421 = por %p419, %p420
      %s423 = sadd.s32 %s422, 1
      %p426 = scmp.eq.s32.totalorder %s31, 1
      %p427 = scmp.ne.s32.totalorder %s422, %s424
      %p428 = scmp.eq.s32.totalorder %s31, 0
      %p429 = por %p427, %p428
      %p430 = scmp.ne.s32.totalorder %s422, %s424
      %p431 = scmp.eq.s32.totalorder %s36, 1
      %p432 = por %p430, %p431
      %p433 = scmp.ne.s32.totalorder %s424, %s425
      %p434 = scmp.eq.s32.totalorder %s36, 0
      %p435 = por %p433, %p434
      %p436 = scmp.ne.s32.totalorder %s424, %s425
      %p437 = scmp.eq.s32.totalorder %s37, 1
      %p438 = por %p436, %p437
      %p440 = scmp.ne.s32.totalorder %s425, %s439
      %p441 = scmp.eq.s32.totalorder %s37, 0
      %p442 = por %p440, %p441
      %s444 = sadd.s32 %s443, 1
      %p447 = scmp.eq.s32.totalorder %s31, 1
      %p448 = scmp.ne.s32.totalorder %s443, %s445
      %p449 = scmp.eq.s32.totalorder %s31, 0
      %p450 = por %p448, %p449
      %p451 = scmp.ne.s32.totalorder %s443, %s445
      %p452 = scmp.eq.s32.totalorder %s36, 1
      %p453 = por %p451, %p452
      %p454 = scmp.ne.s32.totalorder %s445, %s446
      %p455 = scmp.eq.s32.totalorder %s36, 0
      %p456 = por %p454, %p455
      %p457 = scmp.ne.s32.totalorder %s445, %s446
      %p458 = scmp.eq.s32.totalorder %s37, 1
      %p459 = por %p457, %p458
      %p461 = scmp.ne.s32.totalorder %s446, %s460
      %p462 = scmp.eq.s32.totalorder %s37, 0
      %p463 = por %p461, %p462
      %s464 = ssub.s32 %s31, %s38
      %p465 = scmp.eq.s32.totalorder %s464, 0
      %s467 = sadd.s32 %s466, 1
      %s468 = scalar_select %p465, %s466, %s467
      %p471 = pneg %p465
      %p472 = scmp.eq.s32.totalorder %s31, 1
      %p473 = por %p471, %p472
      %p474 = scmp.ne.s32.totalorder %s466, %s469
      %p475 = scmp.eq.s32.totalorder %s31, 0
      %p476 = por %p474, %p475
      %p477 = scmp.ne.s32.totalorder %s466, %s469
      %p478 = scmp.eq.s32.totalorder %s36, 1
      %p479 = por %p477, %p478
      %p480 = scmp.ne.s32.totalorder %s469, %s470
      %p481 = scmp.eq.s32.totalorder %s36, 0
      %p482 = por %p480, %p481
      %p483 = scmp.ne.s32.totalorder %s469, %s470
      %p484 = scmp.eq.s32.totalorder %s37, 1
      %p485 = por %p483, %p484
      %p487 = scmp.ne.s32.totalorder %s470, %s486
      %p488 = scmp.eq.s32.totalorder %s37, 0
      %p489 = por %p487, %p488
      %p490 = scmp.le.s32.totalorder 1, %s31
      %p491 = scmp.lt.s32.totalorder %s31, 3
      %p492 = pnand %p490, %p491
      %p493 = pneg %p492
      // Predicated region
      $region9: #{_lambda_.1} parent=5 // pred_check
        _
      $region10: #{_lambda_.1} parent=5 // pred_check_branch
        %495 = sbr.rel (%p492) target = $region12
      $region11: #{_lambda_.1} parent=5 // pred_region
        %s496 = ssub.s32 %s31, 1
        // Predicated region
        $region13: #{_lambda_.1} parent=11 // pred_check
          %p497 = pneg %p78
        $region14: #{_lambda_.1} parent=11 // pred_check_branch
          %499 = sbr.rel (%p497) target = $region16
        $region15: #{_lambda_.1} parent=11 // pred_region
          _
        $region16: #{_lambda_.1} parent=11 // pred_fallthru
          _
        // Predicated region
        $region17: #{_lambda_.1} parent=11 // pred_check
          %p500 = pneg %p99
        $region18: #{_lambda_.1} parent=11 // pred_check_branch
          %502 = sbr.rel (%p500) target = $region20
        $region19: #{_lambda_.1} parent=11 // pred_region
          _
        $region20: #{_lambda_.1} parent=11 // pred_fallthru
          _
        // Predicated region
        $region21: #{_lambda_.1} parent=11 // pred_check
          %p503 = pneg %p120
        $region22: #{_lambda_.1} parent=11 // pred_check_branch
          %505 = sbr.rel (%p503) target = $region24
        $region23: #{_lambda_.1} parent=11 // pred_region
          _
        $region24: #{_lambda_.1} parent=11 // pred_fallthru
          _
        // Predicated region
        $region25: #{_lambda_.1} parent=11 // pred_check
          %p506 = pneg %p141
        $region26: #{_lambda_.1} parent=11 // pred_check_branch
          %508 = sbr.rel (%p506) target = $region28
        $region27: #{_lambda_.1} parent=11 // pred_region
          %s510 = ssub.s32 9216, 9216
          %511 = vsyncadd [#allocation5], %s510
          %s512 = sshll.u32 [#allocation4], 4
          %s513 = int_to_ptr.vmem [resolvable:$true] %s512
          %518 = dma.hbm_to_vmem [thread:$0]  %s4, 9216, %s513, [#allocation5], 64, 64, 4
        $region28: #{_lambda_.1} parent=11 // pred_fallthru
          _
        // Predicated region
        $region29: #{_lambda_.1} parent=11 // pred_check
          %p519 = pneg %p162
        $region30: #{_lambda_.1} parent=11 // pred_check_branch
          %521 = sbr.rel (%p519) target = $region32
        $region31: #{_lambda_.1} parent=11 // pred_region
          %s523 = ssub.s32 2048, 2048
          %524 = vsyncadd [#allocation7], %s523
          %s525 = sshll.u32 [#allocation6], 4
          %s526 = int_to_ptr.vmem [resolvable:$true] %s525
          %531 = dma.hbm_to_vmem [thread:$0]  %s5, 2048, %s526, [#allocation7], 128, 128, 8
        $region32: #{_lambda_.1} parent=11 // pred_fallthru
          _
        // Predicated region
        $region33: #{_lambda_.1} parent=11 // pred_check
          %p532 = pneg %p183
        $region34: #{_lambda_.1} parent=11 // pred_check_branch
          %534 = sbr.rel (%p532) target = $region36
        $region35: #{_lambda_.1} parent=11 // pred_region
          _
        $region36: #{_lambda_.1} parent=11 // pred_fallthru
          _
        // Predicated region
        $region37: #{_lambda_.1} parent=11 // pred_check
          %p535 = pneg %p204
        $region38: #{_lambda_.1} parent=11 // pred_check_branch
          %537 = sbr.rel (%p535) target = $region40
        $region39: #{_lambda_.1} parent=11 // pred_region
          %s539 = ssub.s32 2048, 2048
          %540 = vsyncadd [#allocation7], %s539
          %s541 = sshll.u32 [#allocation8], 4
          %s542 = int_to_ptr.vmem [resolvable:$true] %s541
          %547 = dma.hbm_to_vmem [thread:$0]  %s7, 2048, %s542, [#allocation7], 128, 128, 8
        $region40: #{_lambda_.1} parent=11 // pred_fallthru
          _
        // Predicated region
        $region41: #{_lambda_.1} parent=11 // pred_check
          %p548 = pneg %p225
        $region42: #{_lambda_.1} parent=11 // pred_check_branch
          %550 = sbr.rel (%p548) target = $region44
        $region43: #{_lambda_.1} parent=11 // pred_region
          _
        $region44: #{_lambda_.1} parent=11 // pred_fallthru
          _
        // Predicated region
        $region45: #{_lambda_.1} parent=11 // pred_check
          %p551 = pneg %p246
        $region46: #{_lambda_.1} parent=11 // pred_check_branch
          %553 = sbr.rel (%p551) target = $region48
        $region47: #{_lambda_.1} parent=11 // pred_region
          %s555 = ssub.s32 9216, 9216
          %556 = vsyncadd [#allocation10], %s555
          %s557 = sshll.u32 [#allocation9], 4
          %s558 = int_to_ptr.vmem [resolvable:$true] %s557
          %563 = dma.hbm_to_vmem [thread:$0]  %s9, 9216, %s558, [#allocation10], 64, 64, 4
        $region48: #{_lambda_.1} parent=11 // pred_fallthru
          _
        // Predicated region
        $region49: #{_lambda_.1} parent=11 // pred_check
          %p564 = pneg %p267
        $region50: #{_lambda_.1} parent=11 // pred_check_branch
          %566 = sbr.rel (%p564) target = $region52
        $region51: #{_lambda_.1} parent=11 // pred_region
          %s568 = ssub.s32 2048, 2048
          %569 = vsyncadd [#allocation10], %s568
          %s570 = sshll.u32 [#allocation11], 4
          %s571 = int_to_ptr.vmem [resolvable:$true] %s570
          %576 = dma.hbm_to_vmem [thread:$0]  %s10, 2048, %s571, [#allocation10], 128, 128, 8
        $region52: #{_lambda_.1} parent=11 // pred_fallthru
          _
        // Predicated region
        $region53: #{_lambda_.1} parent=11 // pred_check
          %p577 = pneg %p288
        $region54: #{_lambda_.1} parent=11 // pred_check_branch
          %579 = sbr.rel (%p577) target = $region56
        $region55: #{_lambda_.1} parent=11 // pred_region
          _
        $region56: #{_lambda_.1} parent=11 // pred_fallthru
          _
        // Predicated region
        $region57: #{_lambda_.1} parent=11 // pred_check
          %p580 = pneg %p309
        $region58: #{_lambda_.1} parent=11 // pred_check_branch
          %582 = sbr.rel (%p580) target = $region60
        $region59: #{_lambda_.1} parent=11 // pred_region
          %s584 = ssub.s32 2048, 2048
          %585 = vsyncadd [#allocation13], %s584
          %s586 = sshll.u32 [#allocation12], 4
          %s587 = int_to_ptr.vmem [resolvable:$true] %s586
          %592 = dma.hbm_to_vmem [thread:$0]  %s12, 2048, %s587, [#allocation13], 128, 128, 8
        $region60: #{_lambda_.1} parent=11 // pred_fallthru
          _
        // Predicated region
        $region61: #{_lambda_.1} parent=11 // pred_check
          %p593 = pneg %p330
        $region62: #{_lambda_.1} parent=11 // pred_check_branch
          %595 = sbr.rel (%p593) target = $region64
        $region63: #{_lambda_.1} parent=11 // pred_region
          _
        $region64: #{_lambda_.1} parent=11 // pred_fallthru
          _
        // Predicated region
        $region65: #{_lambda_.1} parent=11 // pred_check
          %p596 = pneg %p351
        $region66: #{_lambda_.1} parent=11 // pred_check_branch
          %598 = sbr.rel (%p596) target = $region68
        $region67: #{_lambda_.1} parent=11 // pred_region
          %s600 = ssub.s32 2048, 2048
          %601 = vsyncadd [#allocation13], %s600
          %s602 = sshll.u32 [#allocation14], 4
          %s603 = int_to_ptr.vmem [resolvable:$true] %s602
          %608 = dma.hbm_to_vmem [thread:$0]  %s14, 2048, %s603, [#allocation13], 128, 128, 8
        $region68: #{_lambda_.1} parent=11 // pred_fallthru
          _
        // Predicated region
        $region69: #{_lambda_.1} parent=11 // pred_check
          %p609 = pneg %p372
        $region70: #{_lambda_.1} parent=11 // pred_check_branch
          %611 = sbr.rel (%p609) target = $region72
        $region71: #{_lambda_.1} parent=11 // pred_region
          _
        $region72: #{_lambda_.1} parent=11 // pred_fallthru
          _
        // Predicated region
        $region73: #{_lambda_.1} parent=11 // pred_check
          %p612 = pneg %p393
        $region74: #{_lambda_.1} parent=11 // pred_check_branch
          %614 = sbr.rel (%p612) target = $region76
        $region75: #{_lambda_.1} parent=11 // pred_region
          %s616 = ssub.s32 2048, 2048
          %617 = vsyncadd [#allocation16], %s616
          %s618 = sshll.u32 [#allocation15], 4
          %s619 = int_to_ptr.vmem [resolvable:$true] %s618
          %624 = dma.hbm_to_vmem [thread:$0]  %s16, 2048, %s619, [#allocation16], 128, 128, 8
        $region76: #{_lambda_.1} parent=11 // pred_fallthru
          _
        // Predicated region
        $region77: #{_lambda_.1} parent=11 // pred_check
          %p625 = pneg %p414
        $region78: #{_lambda_.1} parent=11 // pred_check_branch
          %627 = sbr.rel (%p625) target = $region80
        $region79: #{_lambda_.1} parent=11 // pred_region
          _
        $region80: #{_lambda_.1} parent=11 // pred_fallthru
          _
        // Predicated region
        $region81: #{_lambda_.1} parent=11 // pred_check
          %p628 = pneg %p435
        $region82: #{_lambda_.1} parent=11 // pred_check_branch
          %630 = sbr.rel (%p628) target = $region84
        $region83: #{_lambda_.1} parent=11 // pred_region
          %s632 = ssub.s32 2048, 2048
          %633 = vsyncadd [#allocation16], %s632
          %s634 = sshll.u32 [#allocation17], 4
          %s635 = int_to_ptr.vmem [resolvable:$true] %s634
          %640 = dma.hbm_to_vmem [thread:$0]  %s18, 2048, %s635, [#allocation16], 128, 128, 8
        $region84: #{_lambda_.1} parent=11 // pred_fallthru
          _
        // Predicated region
        $region85: #{_lambda_.1} parent=11 // pred_check
          %p641 = pneg %p456
        $region86: #{_lambda_.1} parent=11 // pred_check_branch
          %643 = sbr.rel (%p641) target = $region88
        $region87: #{_lambda_.1} parent=11 // pred_region
          _
        $region88: #{_lambda_.1} parent=11 // pred_fallthru
          _
      $region12: #{_lambda_.1} parent=5 // pred_fallthru
        _
      %p644 = scmp.lt.s32.totalorder %s31, 2
      // Predicated region
      $region89: #{_lambda_.1} parent=5 // pred_check
        %p645 = pneg %p644
      $region90: #{_lambda_.1} parent=5 // pred_check_branch
        %647 = sbr.rel (%p645) target = $region92
      $region91: #{_lambda_.1} parent=5 // pred_region
        // Predicated region
        $region93: #{_lambda_.1} parent=91 // pred_check
          %p648 = pneg %p51
        $region94: #{_lambda_.1} parent=91 // pred_check_branch
          %650 = sbr.rel (%p648) target = $region96
        $region95: #{_lambda_.1} parent=91 // pred_region
          %p651 = scmp.lt.s32.totalorder %s31, 1
          %s652 = scalar_select %p651, %s31, 1
          %s653 = smul.addr %s652, 32
          %s654 = smul.addr %s653, 8
          %s655 = scalar_lea.vmem %s0, %s654
        $region96: #{_lambda_.1} parent=91 // pred_fallthru
          _
      $region92: #{_lambda_.1} parent=5 // pred_fallthru
        _
      %p656 = scmp.le.s32.totalorder 1, %s31
      %p657 = scmp.lt.s32.totalorder %s31, 3
      %p658 = pnand %p656, %p657
      %p659 = pneg %p658
      // Predicated region
      $region97: #{_lambda_.1} parent=5 // pred_check
        _
      $region98: #{_lambda_.1} parent=5 // pred_check_branch
        %661 = sbr.rel (%p658) target = $region100
      $region99: #{_lambda_.1} parent=5 // pred_region
        %s662 = ssub.s32 %s31, 1
        // Predicated region
        $region101: #{_lambda_.1} parent=99 // pred_check
          %p663 = pneg %p141
        $region102: #{_lambda_.1} parent=99 // pred_check_branch
          %665 = sbr.rel (%p663) target = $region104
        $region103: #{_lambda_.1} parent=99 // pred_region
          %666 = dma.done [#allocation5], 9216
        $region104: #{_lambda_.1} parent=99 // pred_fallthru
          _
        // Predicated region
        $region105: #{_lambda_.1} parent=99 // pred_check
          %p667 = pneg %p162
        $region106: #{_lambda_.1} parent=99 // pred_check_branch
          %669 = sbr.rel (%p667) target = $region108
        $region107: #{_lambda_.1} parent=99 // pred_region
          %670 = dma.done [#allocation7], 2048
        $region108: #{_lambda_.1} parent=99 // pred_fallthru
          _
        // Predicated region
        $region109: #{_lambda_.1} parent=99 // pred_check
          %p671 = pneg %p204
        $region110: #{_lambda_.1} parent=99 // pred_check_branch
          %673 = sbr.rel (%p671) target = $region112
        $region111: #{_lambda_.1} parent=99 // pred_region
          %674 = dma.done [#allocation7], 2048
        $region112: #{_lambda_.1} parent=99 // pred_fallthru
          _
        // Predicated region
        $region113: #{_lambda_.1} parent=99 // pred_check
          %p675 = pneg %p246
        $region114: #{_lambda_.1} parent=99 // pred_check_branch
          %677 = sbr.rel (%p675) target = $region116
        $region115: #{_lambda_.1} parent=99 // pred_region
          %678 = dma.done [#allocation10], 9216
        $region116: #{_lambda_.1} parent=99 // pred_fallthru
          _
        // Predicated region
        $region117: #{_lambda_.1} parent=99 // pred_check
          %p679 = pneg %p267
        $region118: #{_lambda_.1} parent=99 // pred_check_branch
          %681 = sbr.rel (%p679) target = $region120
        $region119: #{_lambda_.1} parent=99 // pred_region
          %682 = dma.done [#allocation10], 2048
        $region120: #{_lambda_.1} parent=99 // pred_fallthru
          _
        // Predicated region
        $region121: #{_lambda_.1} parent=99 // pred_check
          %p683 = pneg %p309
        $region122: #{_lambda_.1} parent=99 // pred_check_branch
          %685 = sbr.rel (%p683) target = $region124
        $region123: #{_lambda_.1} parent=99 // pred_region
          %686 = dma.done [#allocation13], 2048
        $region124: #{_lambda_.1} parent=99 // pred_fallthru
          _
        // Predicated region
        $region125: #{_lambda_.1} parent=99 // pred_check
          %p687 = pneg %p351
        $region126: #{_lambda_.1} parent=99 // pred_check_branch
          %689 = sbr.rel (%p687) target = $region128
        $region127: #{_lambda_.1} parent=99 // pred_region
          %690 = dma.done [#allocation13], 2048
        $region128: #{_lambda_.1} parent=99 // pred_fallthru
          _
        // Predicated region
        $region129: #{_lambda_.1} parent=99 // pred_check
          %p691 = pneg %p393
        $region130: #{_lambda_.1} parent=99 // pred_check_branch
          %693 = sbr.rel (%p691) target = $region132
        $region131: #{_lambda_.1} parent=99 // pred_region
          %694 = dma.done [#allocation16], 2048
        $region132: #{_lambda_.1} parent=99 // pred_fallthru
          _
        // Predicated region
        $region133: #{_lambda_.1} parent=99 // pred_check
          %p695 = pneg %p435
        $region134: #{_lambda_.1} parent=99 // pred_check_branch
          %697 = sbr.rel (%p695) target = $region136
        $region135: #{_lambda_.1} parent=99 // pred_region
          %698 = dma.done [#allocation16], 2048
        $region136: #{_lambda_.1} parent=99 // pred_fallthru
          _
        %p699 = scmp.lt.s32.totalorder %s36, 1
        %s700 = scalar_select %p699, %s36, 1
        %s701 = smul.addr %s700, 32
        %s702 = smul.addr %s701, 8
        %s703 = scalar_lea.vmem %s0, %s702
        %p704 = pneg %p57
        %p705 = pneg %p54
        %p706 = pneg %p78
        %p707 = pneg %p75
        %p708 = pneg %p99
        %p709 = pneg %p96
        %p710 = pneg %p120
        %p711 = pneg %p117
        %p712 = pneg %p141
        %p713 = pneg %p138
        %p714 = pneg %p162
        %p715 = pneg %p159
        %p716 = pneg %p183
        %p717 = pneg %p180
        %p718 = pneg %p204
        %p719 = pneg %p201
        %p720 = pneg %p225
        %p721 = pneg %p222
        %p722 = pneg %p246
        %p723 = pneg %p243
        %p724 = pneg %p267
        %p725 = pneg %p264
        %p726 = pneg %p288
        %p727 = pneg %p285
        %p728 = pneg %p309
        %p729 = pneg %p306
        %p730 = pneg %p330
        %p731 = pneg %p327
        %p732 = pneg %p351
        %p733 = pneg %p348
        %p734 = pneg %p372
        %p735 = pneg %p369
        %p736 = pneg %p393
        %p737 = pneg %p390
        %p738 = pneg %p414
        %p739 = pneg %p411
        %p740 = pneg %p435
        %p741 = pneg %p432
        %p742 = pneg %p456
        %p743 = pneg %p453
        %p744 = pneg %p482
        %p745 = pneg %p479
        %p746 = scmp.lt.s32.totalorder %s36, 1
        %s747 = scalar_select %p746, %s36, 1
        %s748 = smul.addr %s747, 8
        %s749 = scalar_lea.vmem %s20, %s748
        %p750 = scmp.lt.s32.totalorder %s36, 1
        %s751 = scalar_select %p750, %s36, 1
        %s752 = smul.addr %s751, 32
        %s753 = smul.addr %s752, 8
        %s754 = scalar_lea.vmem %s0, %s753
        %p755 = scmp.lt.s32.totalorder %s36, 1
        %s756 = scalar_select %p755, %s36, 1
        %s757 = smul.addr %s756, 8
        %s758 = scalar_lea.vmem %s20, %s757
        %760 = vst [vmem:[#allocation2] sm:$0xff] 0.0
        %761 = vst [vmem:[#allocation2 + $0x8] sm:$0xff] 0.0
        %762 = vst [vmem:[#allocation2 + $0x10] sm:$0x3] 0.0
        %s763 = scalar_lea.vmem [#allocation2], 408
        %764 = vst [vmem:[%s763] sm:$0xff] 0.0
        %765 = vst [vmem:[%s763 + $0x8] sm:$0xff] 0.0
        %766 = vst [vmem:[%s763 + $0x10] sm:$0x3] 0.0
        %767 = vst [vmem:[#allocation2] sm:$0x1] 0.0
        %768 = vst [vmem:[#allocation2 + $0x18] sm:$0x1] 0.0
        %769 = vst [vmem:[#allocation2 + $0x30] sm:$0x1] 0.0
        %770 = vst [vmem:[#allocation2 + $0x48] sm:$0x1] 0.0
        %771 = vst [vmem:[#allocation2 + $0x60] sm:$0x1] 0.0
        %772 = vst [vmem:[#allocation2 + $0x78] sm:$0x1] 0.0
        %773 = vst [vmem:[#allocation2 + $0x90] sm:$0x1] 0.0
        %774 = vst [vmem:[#allocation2 + $0xa8] sm:$0x1] 0.0
        %775 = vst [vmem:[#allocation2 + $0xc0] sm:$0x1] 0.0
        %776 = vst [vmem:[#allocation2 + $0xd8] sm:$0x1] 0.0
        %777 = vst [vmem:[#allocation2 + $0xf0] sm:$0x1] 0.0
        %778 = vst [vmem:[#allocation2 + $0x108] sm:$0x1] 0.0
        %779 = vst [vmem:[#allocation2 + $0x120] sm:$0x1] 0.0
        %780 = vst [vmem:[#allocation2 + $0x138] sm:$0x1] 0.0
        %781 = vst [vmem:[#allocation2 + $0x150] sm:$0x1] 0.0
        %782 = vst [vmem:[#allocation2 + $0x168] sm:$0x1] 0.0
        %783 = vst [vmem:[#allocation2 + $0x180] sm:$0x1] 0.0
        %784 = vst [vmem:[#allocation2 + $0x198] sm:$0x1] 0.0
        %785 = vst [vmem:[#allocation2 + $0x11] sm:$0x1] 0.0
        %786 = vst [vmem:[#allocation2 + $0x29] sm:$0x1] 0.0
        %787 = vst [vmem:[#allocation2 + $0x41] sm:$0x1] 0.0
        %788 = vst [vmem:[#allocation2 + $0x59] sm:$0x1] 0.0
        %789 = vst [vmem:[#allocation2 + $0x71] sm:$0x1] 0.0
        %790 = vst [vmem:[#allocation2 + $0x89] sm:$0x1] 0.0
        %791 = vst [vmem:[#allocation2 + $0xa1] sm:$0x1] 0.0
        %792 = vst [vmem:[#allocation2 + $0xb9] sm:$0x1] 0.0
        %793 = vst [vmem:[#allocation2 + $0xd1] sm:$0x1] 0.0
        %794 = vst [vmem:[#allocation2 + $0xe9] sm:$0x1] 0.0
        %795 = vst [vmem:[#allocation2 + $0x101] sm:$0x1] 0.0
        %796 = vst [vmem:[#allocation2 + $0x119] sm:$0x1] 0.0
        %797 = vst [vmem:[#allocation2 + $0x131] sm:$0x1] 0.0
        %798 = vst [vmem:[#allocation2 + $0x149] sm:$0x1] 0.0
        %799 = vst [vmem:[#allocation2 + $0x161] sm:$0x1] 0.0
        %800 = vst [vmem:[#allocation2 + $0x179] sm:$0x1] 0.0
        %801 = vst [vmem:[#allocation2 + $0x191] sm:$0x1] 0.0
        %802 = vst [vmem:[#allocation2 + $0x1a9] sm:$0x1] 0.0
        %v803 = vld [vmem:[%s754] sm:$0xff]
        %v804 = vld [vmem:[%s754 + $0x8] sm:$0xff]
        %v805 = vld [vmem:[%s754 + $0x10] sm:$0xff]
        %v806 = vld [vmem:[%s754 + $0x18] sm:$0xff]
        %v807 = vld [vmem:[%s754 + $0x20] sm:$0xff]
        %v808 = vld [vmem:[%s754 + $0x28] sm:$0xff]
        %v809 = vld [vmem:[%s754 + $0x30] sm:$0xff]
        %v810 = vld [vmem:[%s754 + $0x38] sm:$0xff]
        %v811 = vld [vmem:[%s754 + $0x40] sm:$0xff]
        %v812 = vld [vmem:[%s754 + $0x48] sm:$0xff]
        %v813 = vld [vmem:[%s754 + $0x50] sm:$0xff]
        %v814 = vld [vmem:[%s754 + $0x58] sm:$0xff]
        %v815 = vld [vmem:[%s754 + $0x60] sm:$0xff]
        %v816 = vld [vmem:[%s754 + $0x68] sm:$0xff]
        %v817 = vld [vmem:[%s754 + $0x70] sm:$0xff]
        %v818 = vld [vmem:[%s754 + $0x78] sm:$0xff]
        %v819 = vld [vmem:[%s754 + $0x80] sm:$0xff]
        %v820 = vld [vmem:[%s754 + $0x88] sm:$0xff]
        %v821 = vld [vmem:[%s754 + $0x90] sm:$0xff]
        %v822 = vld [vmem:[%s754 + $0x98] sm:$0xff]
        %v823 = vld [vmem:[%s754 + $0xa0] sm:$0xff]
        %v824 = vld [vmem:[%s754 + $0xa8] sm:$0xff]
        %v825 = vld [vmem:[%s754 + $0xb0] sm:$0xff]
        %v826 = vld [vmem:[%s754 + $0xb8] sm:$0xff]
        %v827 = vld [vmem:[%s754 + $0xc0] sm:$0xff]
        %v828 = vld [vmem:[%s754 + $0xc8] sm:$0xff]
        %v829 = vld [vmem:[%s754 + $0xd0] sm:$0xff]
        %v830 = vld [vmem:[%s754 + $0xd8] sm:$0xff]
        %v831 = vld [vmem:[%s754 + $0xe0] sm:$0xff]
        %v832 = vld [vmem:[%s754 + $0xe8] sm:$0xff]
        %v833 = vld [vmem:[%s754 + $0xf0] sm:$0xff]
        %v834 = vld [vmem:[%s754 + $0xf8] sm:$0xff]
        %v835 = vld [vmem:[%s1] sm:$0x1]
        %v836 = vld [vmem:[%s2] sm:$0x1]
        %v837 = vadd.f32 %v803, %v804
        %v838 = vadd.f32 %v837, %v805
        %v839 = vadd.f32 %v838, %v806
        %v840 = vadd.f32 %v839, %v807
        %v841 = vadd.f32 %v840, %v808
        %v842 = vadd.f32 %v841, %v809
        %v843 = vadd.f32 %v842, %v810
        %v844 = vadd.f32 %v843, %v811
        %v845 = vadd.f32 %v844, %v812
        %v846 = vadd.f32 %v845, %v813
        %v847 = vadd.f32 %v846, %v814
        %v848 = vadd.f32 %v847, %v815
        %v849 = vadd.f32 %v848, %v816
        %v850 = vadd.f32 %v849, %v817
        %v851 = vadd.f32 %v850, %v818
        %v852 = vadd.f32 %v851, %v819
        %v853 = vadd.f32 %v852, %v820
        %v854 = vadd.f32 %v853, %v821
        %v855 = vadd.f32 %v854, %v822
        %v856 = vadd.f32 %v855, %v823
        %v857 = vadd.f32 %v856, %v824
        %v858 = vadd.f32 %v857, %v825
        %v859 = vadd.f32 %v858, %v826
        %v860 = vadd.f32 %v859, %v827
        %v861 = vadd.f32 %v860, %v828
        %v862 = vadd.f32 %v861, %v829
        %v863 = vadd.f32 %v862, %v830
        %v864 = vadd.f32 %v863, %v831
        %v865 = vadd.f32 %v864, %v832
        %v866 = vadd.f32 %v865, %v833
        %v867 = vadd.f32 %v866, %v834
        %v868 = vrot.slane %v867, 4
        %v869 = vadd.f32 %v867, %v868
        %v870 = vrot.slane %v869, 2
        %v871 = vadd.f32 %v869, %v870
        %v872 = vrot.slane %v871, 1
        %v873 = vadd.f32 %v871, %v872
        %v874 = vrcp.pop 256.0
        %v875 = vmul.f32 %v873, %v874
        %v876 = vmax.f32 %v803, %v807
        %v877 = vmax.f32 %v804, %v808
        %v878 = vmax.f32 %v805, %v809
        %v879 = vmax.f32 %v806, %v810
        %v880 = vmax.f32 %v876, %v811
        %v881 = vmax.f32 %v877, %v812
        %v882 = vmax.f32 %v878, %v813
        %v883 = vmax.f32 %v879, %v814
        %v884 = vmax.f32 %v880, %v815
        %v885 = vmax.f32 %v881, %v816
        %v886 = vmax.f32 %v882, %v817
        %v887 = vmax.f32 %v883, %v818
        %v888 = vmax.f32 %v884, %v819
        %v889 = vmax.f32 %v885, %v820
        %v890 = vmax.f32 %v886, %v821
        %v891 = vmax.f32 %v887, %v822
        %v892 = vmax.f32 %v888, %v823
        %v893 = vmax.f32 %v889, %v824
        %v894 = vmax.f32 %v890, %v825
        %v895 = vmax.f32 %v891, %v826
        %v896 = vmax.f32 %v892, %v827
        %v897 = vmax.f32 %v893, %v828
        %v898 = vmax.f32 %v894, %v829
        %v899 = vmax.f32 %v895, %v830
        %v900 = vmax.f32 %v896, %v831
        %v901 = vmax.f32 %v897, %v832
        %v902 = vmax.f32 %v898, %v833
        %v903 = vmax.f32 %v899, %v834
        %v904 = vmax.f32 %v900, %v901
        %v905 = vmax.f32 %v902, %v903
        %v906 = vmax.f32 %v904, %v905
        %v907 = vrot.slane %v906, 4
        %v908 = vmax.f32 %v906, %v907
        %v909 = vrot.slane %v908, 2
        %v910 = vmax.f32 %v908, %v909
        %v911 = vrot.slane %v910, 1
        %v912 = vmax.f32 %v910, %v911
        %v913 = vmul.f32 %v875, %v835
        %vm914 = vcmask 1040384
        %v915 = vsel %vm914, %v913, 0.0
        %916 = vadd.xlane.f32.xlu0 %v915
        %v917 = vpop.xlane.xlu0 %916
        %v918 = vmax.f32 %v917, 0.0
        %v919 = vmul.f32 %v912, %v835
        %v920 = vsel %vm914, %v919, 0.0
        %921 = vadd.xlane.f32.xlu0 %v920
        %v922 = vpop.xlane.xlu0 %921
        %v923 = vmax.f32 %v922, 0.0
        %v924 = vadd.f32 %v918, %v923
        %v925 = vmul.f32 %v924, %v836
        %v926 = vxor.u32 %v925, 2147483648
        %v927 = vmul.f32 %v926, 1.442695
        %v928 = vpow.pop %v927
        %v929 = vadd.f32 %v928, 1.0
        %v930 = vrcp.pop %v929
        %v931 = vmul.f32 1.0, %v930
        %v932 = vlaneseq
        %v933 = vshrl.u32 %v932, 7
        %v934 = vsub.s32 0, %v933
        %v935 = vrot.slane %v931, %v934
        %v936 = vmul.f32 %v803, %v935
        %v937 = vmul.f32 %v804, %v935
        %v938 = vmul.f32 %v805, %v935
        %v939 = vmul.f32 %v806, %v935
        %v940 = vmul.f32 %v807, %v935
        %v941 = vmul.f32 %v808, %v935
        %v942 = vmul.f32 %v809, %v935
        %v943 = vmul.f32 %v810, %v935
        %v944 = vmul.f32 %v811, %v935
        %v945 = vmul.f32 %v812, %v935
        %v946 = vmul.f32 %v813, %v935
        %v947 = vmul.f32 %v814, %v935
        %v948 = vmul.f32 %v815, %v935
        %v949 = vmul.f32 %v816, %v935
        %v950 = vmul.f32 %v817, %v935
        %v951 = vmul.f32 %v818, %v935
        %v952 = vmul.f32 %v819, %v935
        %v953 = vmul.f32 %v820, %v935
        %v954 = vmul.f32 %v821, %v935
        %v955 = vmul.f32 %v822, %v935
        %v956 = vmul.f32 %v823, %v935
        %v957 = vmul.f32 %v824, %v935
        %v958 = vmul.f32 %v825, %v935
        %v959 = vmul.f32 %v826, %v935
        %v960 = vmul.f32 %v827, %v935
        %v961 = vmul.f32 %v828, %v935
        %v962 = vmul.f32 %v829, %v935
        %v963 = vmul.f32 %v830, %v935
        %v964 = vmul.f32 %v831, %v935
        %v965 = vmul.f32 %v832, %v935
        %v966 = vmul.f32 %v833, %v935
        %v967 = vmul.f32 %v834, %v935
        %v968 = vlaneseq
        %v969 = vand.u32 %v968, 127
        %970 = vadd.xlane.f32.xlu0 %v936
        %v971 = vpop.xlane.xlu0 %970
        %972 = vadd.xlane.f32.xlu0 %v937
        %v973 = vpop.xlane.xlu0 %972
        %974 = vadd.xlane.f32.xlu0 %v938
        %v975 = vpop.xlane.xlu0 %974
        %976 = vadd.xlane.f32.xlu0 %v939
        %v977 = vpop.xlane.xlu0 %976
        %978 = vadd.xlane.f32.xlu0 %v940
        %v979 = vpop.xlane.xlu0 %978
        %980 = vadd.xlane.f32.xlu0 %v941
        %v981 = vpop.xlane.xlu0 %980
        %982 = vadd.xlane.f32.xlu0 %v942
        %v983 = vpop.xlane.xlu0 %982
        %984 = vadd.xlane.f32.xlu0 %v943
        %v985 = vpop.xlane.xlu0 %984
        %986 = vadd.xlane.f32.xlu0 %v944
        %v987 = vpop.xlane.xlu0 %986
        %988 = vadd.xlane.f32.xlu0 %v945
        %v989 = vpop.xlane.xlu0 %988
        %990 = vadd.xlane.f32.xlu0 %v946
        %v991 = vpop.xlane.xlu0 %990
        %992 = vadd.xlane.f32.xlu0 %v947
        %v993 = vpop.xlane.xlu0 %992
        %994 = vadd.xlane.f32.xlu0 %v948
        %v995 = vpop.xlane.xlu0 %994
        %996 = vadd.xlane.f32.xlu0 %v949
        %v997 = vpop.xlane.xlu0 %996
        %998 = vadd.xlane.f32.xlu0 %v950
        %v999 = vpop.xlane.xlu0 %998
        %1000 = vadd.xlane.f32.xlu0 %v951
        %v1001 = vpop.xlane.xlu0 %1000
        %1002 = vadd.xlane.f32.xlu0 %v952
        %v1003 = vpop.xlane.xlu0 %1002
        %1004 = vadd.xlane.f32.xlu0 %v953
        %v1005 = vpop.xlane.xlu0 %1004
        %1006 = vadd.xlane.f32.xlu0 %v954
        %v1007 = vpop.xlane.xlu0 %1006
        %1008 = vadd.xlane.f32.xlu0 %v955
        %v1009 = vpop.xlane.xlu0 %1008
        %1010 = vadd.xlane.f32.xlu0 %v956
        %v1011 = vpop.xlane.xlu0 %1010
        %1012 = vadd.xlane.f32.xlu0 %v957
        %v1013 = vpop.xlane.xlu0 %1012
        %1014 = vadd.xlane.f32.xlu0 %v958
        %v1015 = vpop.xlane.xlu0 %1014
        %1016 = vadd.xlane.f32.xlu0 %v959
        %v1017 = vpop.xlane.xlu0 %1016
        %1018 = vadd.xlane.f32.xlu0 %v960
        %v1019 = vpop.xlane.xlu0 %1018
        %1020 = vadd.xlane.f32.xlu0 %v961
        %v1021 = vpop.xlane.xlu0 %1020
        %1022 = vadd.xlane.f32.xlu0 %v962
        %v1023 = vpop.xlane.xlu0 %1022
        %1024 = vadd.xlane.f32.xlu0 %v963
        %v1025 = vpop.xlane.xlu0 %1024
        %1026 = vadd.xlane.f32.xlu0 %v964
        %v1027 = vpop.xlane.xlu0 %1026
        %1028 = vadd.xlane.f32.xlu0 %v965
        %v1029 = vpop.xlane.xlu0 %1028
        %1030 = vadd.xlane.f32.xlu0 %v966
        %v1031 = vpop.xlane.xlu0 %1030
        %1032 = vadd.xlane.f32.xlu0 %v967
        %v1033 = vpop.xlane.xlu0 %1032
        %v1034 = vmul.f32 %v971, 0.04
        %v1035 = vmul.f32 %v973, 0.04
        %v1036 = vmul.f32 %v975, 0.04
        %v1037 = vmul.f32 %v977, 0.04
        %v1038 = vmul.f32 %v979, 0.04
        %v1039 = vmul.f32 %v981, 0.04
        %v1040 = vmul.f32 %v983, 0.04
        %v1041 = vmul.f32 %v985, 0.04
        %v1042 = vmul.f32 %v987, 0.04
        %v1043 = vmul.f32 %v989, 0.04
        %v1044 = vmul.f32 %v991, 0.04
        %v1045 = vmul.f32 %v993, 0.04
        %v1046 = vmul.f32 %v995, 0.04
        %v1047 = vmul.f32 %v997, 0.04
        %v1048 = vmul.f32 %v999, 0.04
        %v1049 = vmul.f32 %v1001, 0.04
        %v1050 = vmul.f32 %v1003, 0.04
        %v1051 = vmul.f32 %v1005, 0.04
        %v1052 = vmul.f32 %v1007, 0.04
        %v1053 = vmul.f32 %v1009, 0.04
        %v1054 = vmul.f32 %v1011, 0.04
        %v1055 = vmul.f32 %v1013, 0.04
        %v1056 = vmul.f32 %v1015, 0.04
        %v1057 = vmul.f32 %v1017, 0.04
        %v1058 = vmul.f32 %v1019, 0.04
        %v1059 = vmul.f32 %v1021, 0.04
        %v1060 = vmul.f32 %v1023, 0.04
        %v1061 = vmul.f32 %v1025, 0.04
        %v1062 = vmul.f32 %v1027, 0.04
        %v1063 = vmul.f32 %v1029, 0.04
        %v1064 = vmul.f32 %v1031, 0.04
        %v1065 = vmul.f32 %v1033, 0.04
        %vm1066 = vcmp.lt.s32.totalorder %v969, 25
        %v1067 = vsel %vm1066, %v936, -1e+30
        %v1068 = vsel %vm1066, %v937, -1e+30
        %v1069 = vsel %vm1066, %v938, -1e+30
        %v1070 = vsel %vm1066, %v939, -1e+30
        %v1071 = vsel %vm1066, %v940, -1e+30
        %v1072 = vsel %vm1066, %v941, -1e+30
        %v1073 = vsel %vm1066, %v942, -1e+30
        %v1074 = vsel %vm1066, %v943, -1e+30
        %v1075 = vsel %vm1066, %v944, -1e+30
        %v1076 = vsel %vm1066, %v945, -1e+30
        %v1077 = vsel %vm1066, %v946, -1e+30
        %v1078 = vsel %vm1066, %v947, -1e+30
        %v1079 = vsel %vm1066, %v948, -1e+30
        %v1080 = vsel %vm1066, %v949, -1e+30
        %v1081 = vsel %vm1066, %v950, -1e+30
        %v1082 = vsel %vm1066, %v951, -1e+30
        %v1083 = vsel %vm1066, %v952, -1e+30
        %v1084 = vsel %vm1066, %v953, -1e+30
        %v1085 = vsel %vm1066, %v954, -1e+30
        %v1086 = vsel %vm1066, %v955, -1e+30
        %v1087 = vsel %vm1066, %v956, -1e+30
        %v1088 = vsel %vm1066, %v957, -1e+30
        %v1089 = vsel %vm1066, %v958, -1e+30
        %v1090 = vsel %vm1066, %v959, -1e+30
        %v1091 = vsel %vm1066, %v960, -1e+30
        %v1092 = vsel %vm1066, %v961, -1e+30
        %v1093 = vsel %vm1066, %v962, -1e+30
        %v1094 = vsel %vm1066, %v963, -1e+30
        %v1095 = vsel %vm1066, %v964, -1e+30
        %v1096 = vsel %vm1066, %v965, -1e+30
        %v1097 = vsel %vm1066, %v966, -1e+30
        %v1098 = vsel %vm1066, %v967, -1e+30
        %1099 = vmax.xlane.f32.xlu0 %v1067
        %v1100 = vpop.xlane.xlu0 %1099
        %1101 = vmax.xlane.f32.xlu0 %v1068
        %v1102 = vpop.xlane.xlu0 %1101
        %1103 = vmax.xlane.f32.xlu0 %v1069
        %v1104 = vpop.xlane.xlu0 %1103
        %1105 = vmax.xlane.f32.xlu0 %v1070
        %v1106 = vpop.xlane.xlu0 %1105
        %1107 = vmax.xlane.f32.xlu0 %v1071
        %v1108 = vpop.xlane.xlu0 %1107
        %1109 = vmax.xlane.f32.xlu0 %v1072
        %v1110 = vpop.xlane.xlu0 %1109
        %1111 = vmax.xlane.f32.xlu0 %v1073
        %v1112 = vpop.xlane.xlu0 %1111
        %1113 = vmax.xlane.f32.xlu0 %v1074
        %v1114 = vpop.xlane.xlu0 %1113
        %1115 = vmax.xlane.f32.xlu0 %v1075
        %v1116 = vpop.xlane.xlu0 %1115
        %1117 = vmax.xlane.f32.xlu0 %v1076
        %v1118 = vpop.xlane.xlu0 %1117
        %1119 = vmax.xlane.f32.xlu0 %v1077
        %v1120 = vpop.xlane.xlu0 %1119
        %1121 = vmax.xlane.f32.xlu0 %v1078
        %v1122 = vpop.xlane.xlu0 %1121
        %1123 = vmax.xlane.f32.xlu0 %v1079
        %v1124 = vpop.xlane.xlu0 %1123
        %1125 = vmax.xlane.f32.xlu0 %v1080
        %v1126 = vpop.xlane.xlu0 %1125
        %1127 = vmax.xlane.f32.xlu0 %v1081
        %v1128 = vpop.xlane.xlu0 %1127
        %1129 = vmax.xlane.f32.xlu0 %v1082
        %v1130 = vpop.xlane.xlu0 %1129
        %1131 = vmax.xlane.f32.xlu0 %v1083
        %v1132 = vpop.xlane.xlu0 %1131
        %1133 = vmax.xlane.f32.xlu0 %v1084
        %v1134 = vpop.xlane.xlu0 %1133
        %1135 = vmax.xlane.f32.xlu0 %v1085
        %v1136 = vpop.xlane.xlu0 %1135
        %1137 = vmax.xlane.f32.xlu0 %v1086
        %v1138 = vpop.xlane.xlu0 %1137
        %1139 = vmax.xlane.f32.xlu0 %v1087
        %v1140 = vpop.xlane.xlu0 %1139
        %1141 = vmax.xlane.f32.xlu0 %v1088
        %v1142 = vpop.xlane.xlu0 %1141
        %1143 = vmax.xlane.f32.xlu0 %v1089
        %v1144 = vpop.xlane.xlu0 %1143
        %1145 = vmax.xlane.f32.xlu0 %v1090
        %v1146 = vpop.xlane.xlu0 %1145
        %1147 = vmax.xlane.f32.xlu0 %v1091
        %v1148 = vpop.xlane.xlu0 %1147
        %1149 = vmax.xlane.f32.xlu0 %v1092
        %v1150 = vpop.xlane.xlu0 %1149
        %1151 = vmax.xlane.f32.xlu0 %v1093
        %v1152 = vpop.xlane.xlu0 %1151
        %1153 = vmax.xlane.f32.xlu0 %v1094
        %v1154 = vpop.xlane.xlu0 %1153
        %1155 = vmax.xlane.f32.xlu0 %v1095
        %v1156 = vpop.xlane.xlu0 %1155
        %1157 = vmax.xlane.f32.xlu0 %v1096
        %v1158 = vpop.xlane.xlu0 %1157
        %1159 = vmax.xlane.f32.xlu0 %v1097
        %v1160 = vpop.xlane.xlu0 %1159
        %1161 = vmax.xlane.f32.xlu0 %v1098
        %v1162 = vpop.xlane.xlu0 %1161
        %v1163 = vld [vmem:[%s3] sm:$0xff]
        %v1164 = vld [vmem:[%s3 + $0x8] sm:$0xff]
        %v1165 = vld [vmem:[%s3 + $0x10] sm:$0xff]
        %v1166 = vld [vmem:[%s3 + $0x18] sm:$0xff]
        %v1167 = vld [vmem:[%s3 + $0x20] sm:$0xff]
        %v1168 = vld [vmem:[%s3 + $0x28] sm:$0xff]
        %v1169 = vld [vmem:[%s3 + $0x30] sm:$0xff]
        %v1170 = vld [vmem:[%s3 + $0x38] sm:$0xff]
        %v1171 = vld [vmem:[%s3 + $0x40] sm:$0xff]
        %v1172 = vld [vmem:[%s3 + $0x48] sm:$0xff]
        %v1173 = vld [vmem:[%s3 + $0x50] sm:$0xff]
        %v1174 = vld [vmem:[%s3 + $0x58] sm:$0xff]
        %v1175 = vld [vmem:[%s3 + $0x60] sm:$0xff]
        %v1176 = vld [vmem:[%s3 + $0x68] sm:$0xff]
        %v1177 = vld [vmem:[%s3 + $0x70] sm:$0xff]
        %v1178 = vld [vmem:[%s3 + $0x78] sm:$0xff]
        %v1179 = vld [vmem:[%s3 + $0x80] sm:$0xff]
        %v1180 = vld [vmem:[%s3 + $0x88] sm:$0xff]
        %v1181 = vld [vmem:[%s3 + $0x90] sm:$0xff]
        %v1182 = vld [vmem:[%s3 + $0x98] sm:$0xff]
        %v1183 = vld [vmem:[%s3 + $0xa0] sm:$0xff]
        %v1184 = vld [vmem:[%s3 + $0xa8] sm:$0xff]
        %v1185 = vld [vmem:[%s3 + $0xb0] sm:$0xff]
        %v1186 = vld [vmem:[%s3 + $0xb8] sm:$0xff]
        %v1187 = vld [vmem:[%s3 + $0xc0] sm:$0xff]
        %v1188 = vld [vmem:[%s3 + $0xc8] sm:$0xff]
        %v1189 = vld [vmem:[%s3 + $0xd0] sm:$0xff]
        %v1190 = vld [vmem:[%s3 + $0xd8] sm:$0xff]
        %v1191 = vld [vmem:[%s3 + $0xe0] sm:$0xff]
        %v1192 = vld [vmem:[%s3 + $0xe8] sm:$0xff]
        %v1193 = vld [vmem:[%s3 + $0xf0] sm:$0xff]
        %v1194 = vld [vmem:[%s3 + $0xf8] sm:$0xff]
        %v1195 = vld [vmem:[%s3 + $0x100] sm:$0xff]
        %v1196 = vld [vmem:[%s3 + $0x108] sm:$0xff]
        %v1197 = vld [vmem:[%s3 + $0x110] sm:$0xff]
        %v1198 = vld [vmem:[%s3 + $0x118] sm:$0xff]
        %v1199 = vld [vmem:[%s3 + $0x120] sm:$0xff]
        %v1200 = vld [vmem:[%s3 + $0x128] sm:$0xff]
        %v1201 = vld [vmem:[%s3 + $0x130] sm:$0xff]
        %v1202 = vld [vmem:[%s3 + $0x138] sm:$0xff]
        %v1203 = vld [vmem:[%s3 + $0x140] sm:$0xff]
        %v1204 = vld [vmem:[%s3 + $0x148] sm:$0xff]
        %v1205 = vld [vmem:[%s3 + $0x150] sm:$0xff]
        %v1206 = vld [vmem:[%s3 + $0x158] sm:$0xff]
        %v1207 = vld [vmem:[%s3 + $0x160] sm:$0xff]
        %v1208 = vld [vmem:[%s3 + $0x168] sm:$0xff]
        %v1209 = vld [vmem:[%s3 + $0x170] sm:$0xff]
        %v1210 = vld [vmem:[%s3 + $0x178] sm:$0xff]
        %v1211 = vld [vmem:[%s3 + $0x180] sm:$0xff]
        %v1212 = vld [vmem:[%s3 + $0x188] sm:$0xff]
        %v1213 = vld [vmem:[%s3 + $0x190] sm:$0xff]
        %v1214 = vld [vmem:[%s3 + $0x198] sm:$0xff]
        %v1215 = vld [vmem:[%s3 + $0x1a0] sm:$0xff]
        %v1216 = vld [vmem:[%s3 + $0x1a8] sm:$0xff]
        %v1217 = vld [vmem:[%s3 + $0x1b0] sm:$0xff]
        %v1218 = vld [vmem:[%s3 + $0x1b8] sm:$0xff]
        %v1219 = vld [vmem:[%s3 + $0x1c0] sm:$0xff]
        %v1220 = vld [vmem:[%s3 + $0x1c8] sm:$0xff]
        %v1221 = vld [vmem:[%s3 + $0x1d0] sm:$0xff]
        %v1222 = vld [vmem:[%s3 + $0x1d8] sm:$0xff]
        %v1223 = vld [vmem:[%s3 + $0x1e0] sm:$0xff]
        %v1224 = vld [vmem:[%s3 + $0x1e8] sm:$0xff]
        %v1225 = vld [vmem:[%s3 + $0x1f0] sm:$0xff]
        %v1226 = vld [vmem:[%s3 + $0x1f8] sm:$0xff]
        %v1227 = vld [vmem:[%s3 + $0x200] sm:$0xff]
        %v1228 = vld [vmem:[%s3 + $0x208] sm:$0xff]
        %v1229 = vld [vmem:[%s3 + $0x210] sm:$0xff]
        %v1230 = vld [vmem:[%s3 + $0x218] sm:$0xff]
        %v1231 = vld [vmem:[%s3 + $0x220] sm:$0xff]
        %v1232 = vld [vmem:[%s3 + $0x228] sm:$0xff]
        %v1233 = vld [vmem:[%s3 + $0x230] sm:$0xff]
        %v1234 = vld [vmem:[%s3 + $0x238] sm:$0xff]
        %v1235 = vld [vmem:[%s3 + $0x240] sm:$0xff]
        %v1236 = vld [vmem:[%s3 + $0x248] sm:$0xff]
        %v1237 = vld [vmem:[%s3 + $0x250] sm:$0xff]
        %v1238 = vld [vmem:[%s3 + $0x258] sm:$0xff]
        %v1239 = vld [vmem:[%s3 + $0x260] sm:$0xff]
        %v1240 = vld [vmem:[%s3 + $0x268] sm:$0xff]
        %v1241 = vld [vmem:[%s3 + $0x270] sm:$0xff]
        %v1242 = vld [vmem:[%s3 + $0x278] sm:$0xff]
        %v1243 = vld [vmem:[%s3 + $0x280] sm:$0xff]
        %v1244 = vld [vmem:[%s3 + $0x288] sm:$0xff]
        %v1245 = vld [vmem:[%s3 + $0x290] sm:$0xff]
        %v1246 = vld [vmem:[%s3 + $0x298] sm:$0xff]
        %v1247 = vld [vmem:[%s3 + $0x2a0] sm:$0xff]
        %v1248 = vld [vmem:[%s3 + $0x2a8] sm:$0xff]
        %v1249 = vld [vmem:[%s3 + $0x2b0] sm:$0xff]
        %v1250 = vld [vmem:[%s3 + $0x2b8] sm:$0xff]
        %v1251 = vld [vmem:[%s3 + $0x2c0] sm:$0xff]
        %v1252 = vld [vmem:[%s3 + $0x2c8] sm:$0xff]
        %v1253 = vld [vmem:[%s3 + $0x2d0] sm:$0xff]
        %v1254 = vld [vmem:[%s3 + $0x2d8] sm:$0xff]
        %v1255 = vld [vmem:[%s3 + $0x2e0] sm:$0xff]
        %v1256 = vld [vmem:[%s3 + $0x2e8] sm:$0xff]
        %v1257 = vld [vmem:[%s3 + $0x2f0] sm:$0xff]
        %v1258 = vld [vmem:[%s3 + $0x2f8] sm:$0xff]
        %v1259 = vld [vmem:[%s3 + $0x300] sm:$0xff]
        %v1260 = vld [vmem:[%s3 + $0x308] sm:$0xff]
        %v1261 = vld [vmem:[%s3 + $0x310] sm:$0xff]
        %v1262 = vld [vmem:[%s3 + $0x318] sm:$0xff]
        %v1263 = vld [vmem:[%s3 + $0x320] sm:$0xff]
        %v1264 = vld [vmem:[%s3 + $0x328] sm:$0xff]
        %v1265 = vld [vmem:[%s3 + $0x330] sm:$0xff]
        %v1266 = vld [vmem:[%s3 + $0x338] sm:$0xff]
        %v1267 = vld [vmem:[%s3 + $0x340] sm:$0xff]
        %v1268 = vld [vmem:[%s3 + $0x348] sm:$0xff]
        %v1269 = vld [vmem:[%s3 + $0x350] sm:$0xff]
        %v1270 = vld [vmem:[%s3 + $0x358] sm:$0xff]
        %v1271 = vld [vmem:[%s3 + $0x360] sm:$0xff]
        %v1272 = vld [vmem:[%s3 + $0x368] sm:$0xff]
        %v1273 = vld [vmem:[%s3 + $0x370] sm:$0xff]
        %v1274 = vld [vmem:[%s3 + $0x378] sm:$0xff]
        %v1275 = vld [vmem:[%s3 + $0x380] sm:$0xff]
        %v1276 = vld [vmem:[%s3 + $0x388] sm:$0xff]
        %v1277 = vld [vmem:[%s3 + $0x390] sm:$0xff]
        %v1278 = vld [vmem:[%s3 + $0x398] sm:$0xff]
        %v1279 = vld [vmem:[%s3 + $0x3a0] sm:$0xff]
        %v1280 = vld [vmem:[%s3 + $0x3a8] sm:$0xff]
        %v1281 = vld [vmem:[%s3 + $0x3b0] sm:$0xff]
        %v1282 = vld [vmem:[%s3 + $0x3b8] sm:$0xff]
        %v1283 = vld [vmem:[%s3 + $0x3c0] sm:$0xff]
        %v1284 = vld [vmem:[%s3 + $0x3c8] sm:$0xff]
        %v1285 = vld [vmem:[%s3 + $0x3d0] sm:$0xff]
        %v1286 = vld [vmem:[%s3 + $0x3d8] sm:$0xff]
        %v1287 = vld [vmem:[%s3 + $0x3e0] sm:$0xff]
        %v1288 = vld [vmem:[%s3 + $0x3e8] sm:$0xff]
        %v1289 = vld [vmem:[%s3 + $0x3f0] sm:$0xff]
        %v1290 = vld [vmem:[%s3 + $0x3f8] sm:$0xff]
        %1291 = vmatprep.subr.mxu0 0.0
        %1292 = vmatpush1.msra.mxu0 %v1034
        %1293 = vmatprep.subr.mxu0 0.0
        %1294 = vmatpush1.msra.mxu0 %v1035
        %1295 = vmatprep.subr.mxu0 0.0
        %1296 = vmatpush1.msra.mxu0 %v1036
        %1297 = vmatprep.subr.mxu0 0.0
        %1298 = vmatpush1.msra.mxu0 %v1037
        %1299 = vmatprep.subr.mxu0 0.0
        %1300 = vmatpush1.msra.mxu0 %v1038
        %1301 = vmatprep.subr.mxu0 0.0
        %1302 = vmatpush1.msra.mxu0 %v1039
        %1303 = vmatprep.subr.mxu0 0.0
        %1304 = vmatpush1.msra.mxu0 %v1040
        %1305 = vmatprep.subr.mxu0 0.0
        %1306 = vmatpush1.msra.mxu0 %v1041
        %1307 = vmatprep.subr.mxu0 0.0
        %1308 = vmatpush1.msra.mxu0 %v1042
        %1309 = vmatprep.subr.mxu0 0.0
        %1310 = vmatpush1.msra.mxu0 %v1043
        %1311 = vmatprep.subr.mxu0 0.0
        %1312 = vmatpush1.msra.mxu0 %v1044
        %1313 = vmatprep.subr.mxu0 0.0
        %1314 = vmatpush1.msra.mxu0 %v1045
        %1315 = vmatprep.subr.mxu0 0.0
        %1316 = vmatpush1.msra.mxu0 %v1046
        %1317 = vmatprep.subr.mxu0 0.0
        %1318 = vmatpush1.msra.mxu0 %v1047
        %1319 = vmatprep.subr.mxu0 0.0
        %1320 = vmatpush1.msra.mxu0 %v1048
        %1321 = vmatprep.subr.mxu0 0.0
        %1322 = vmatpush1.msra.mxu0 %v1049
        %1323 = vmatprep.subr.mxu0 0.0
        %1324 = vmatpush1.msra.mxu0 %v1050
        %1325 = vmatprep.subr.mxu0 0.0
        %1326 = vmatpush1.msra.mxu0 %v1051
        %1327 = vmatprep.subr.mxu0 0.0
        %1328 = vmatpush1.msra.mxu0 %v1052
        %1329 = vmatprep.subr.mxu0 0.0
        %1330 = vmatpush1.msra.mxu0 %v1053
        %1331 = vmatprep.subr.mxu0 0.0
        %1332 = vmatpush1.msra.mxu0 %v1054
        %1333 = vmatprep.subr.mxu0 0.0
        %1334 = vmatpush1.msra.mxu0 %v1055
        %1335 = vmatprep.subr.mxu0 0.0
        %1336 = vmatpush1.msra.mxu0 %v1056
        %1337 = vmatprep.subr.mxu0 0.0
        %1338 = vmatpush1.msra.mxu0 %v1057
        %1339 = vmatprep.subr.mxu0 0.0
        %1340 = vmatpush1.msra.mxu0 %v1058
        %1341 = vmatprep.subr.mxu0 0.0
        %1342 = vmatpush1.msra.mxu0 %v1059
        %1343 = vmatprep.subr.mxu0 0.0
        %1344 = vmatpush1.msra.mxu0 %v1060
        %1345 = vmatprep.subr.mxu0 0.0
        %1346 = vmatpush1.msra.mxu0 %v1061
        %1347 = vmatprep.subr.mxu0 0.0
        %1348 = vmatpush1.msra.mxu0 %v1062
        %1349 = vmatprep.subr.mxu0 0.0
        %1350 = vmatpush1.msra.mxu0 %v1063
        %1351 = vmatprep.subr.mxu0 0.0
        %1352 = vmatpush1.msra.mxu0 %v1064
        %1353 = vmatprep.subr.mxu0 0.0
        %1354 = vmatpush1.msra.mxu0 %v1065
        %1355 = vmatprep.mubr.f32.mxu0 %v1164
        %1356 = vmatmul.mubr.f32.gmra.mrb[0].mxu0 %v1163
        %v1357 = vpop.f32.mrb[0].mxu0
        %v1358 = vadd.f32 0.0, %v1357
        %v1359 = vpop.f32.mrb[0].mxu0
        %1360 = vmatprep.mubr.f32.mxu0 %v1168
        %1361 = vmatmul.mubr.f32.gmra.mrb[0].mxu0 %v1167
        %v1362 = vpop.f32.mrb[0].mxu0
        %v1363 = vadd.f32 0.0, %v1362
        %v1364 = vpop.f32.mrb[0].mxu0
        %1365 = vmatprep.mubr.f32.mxu0 %v1172
        %1366 = vmatmul.mubr.f32.gmra.mrb[0].mxu0 %v1171
        %v1367 = vpop.f32.mrb[0].mxu0
        %v1368 = vadd.f32 0.0, %v1367
        %v1369 = vpop.f32.mrb[0].mxu0
        %1370 = vmatprep.mubr.f32.mxu0 %v1176
        %1371 = vmatmul.mubr.f32.gmra.mrb[0].mxu0 %v1175
        %v1372 = vpop.f32.mrb[0].mxu0
        %v1373 = vadd.f32 0.0, %v1372
        %v1374 = vpop.f32.mrb[0].mxu0
        %1375 = vmatprep.mubr.f32.mxu0 %v1180
        %1376 = vmatmul.mubr.f32.gmra.mrb[0].mxu0 %v1179
        %v1377 = vpop.f32.mrb[0].mxu0
        %v1378 = vadd.f32 0.0, %v1377
        %v1379 = vpop.f32.mrb[0].mxu0
        %1380 = vmatprep.mubr.f32.mxu0 %v1184
        %1381 = vmatmul.mubr.f32.gmra.mrb[0].mxu0 %v1183
        %v1382 = vpop.f32.mrb[0].mxu0
        %v1383 = vadd.f32 0.0, %v1382
        %v1384 = vpop.f32.mrb[0].mxu0
        %1385 = vmatprep.mubr.f32.mxu0 %v1188
        %1386 = vmatmul.mubr.f32.gmra.mrb[0].mxu0 %v1187
        %v1387 = vpop.f32.mrb[0].mxu0
        %v1388 = vadd.f32 0.0, %v1387
        %v1389 = vpop.f32.mrb[0].mxu0
        %1390 = vmatprep.mubr.f32.mxu0 %v1192
        %1391 = vmatmul.mubr.f32.gmra.mrb[0].mxu0 %v1191
        %v1392 = vpop.f32.mrb[0].mxu0
        %v1393 = vadd.f32 0.0, %v1392
        %v1394 = vpop.f32.mrb[0].mxu0
        %1395 = vmatprep.mubr.f32.mxu0 %v1196
        %1396 = vmatmul.mubr.f32.gmra.mrb[0].mxu0 %v1195
        %v1397 = vpop.f32.mrb[0].mxu0
        %v1398 = vadd.f32 0.0, %v1397
        %v1399 = vpop.f32.mrb[0].mxu0
        %1400 = vmatprep.mubr.f32.mxu0 %v1200
        %1401 = vmatmul.mubr.f32.gmra.mrb[0].mxu0 %v1199
        %v1402 = vpop.f32.mrb[0].mxu0
        %v1403 = vadd.f32 0.0, %v1402
        %v1404 = vpop.f32.mrb[0].mxu0
        %1405 = vmatprep.mubr.f32.mxu0 %v1204
        %1406 = vmatmul.mubr.f32.gmra.mrb[0].mxu0 %v1203
        %v1407 = vpop.f32.mrb[0].mxu0
        %v1408 = vadd.f32 0.0, %v1407
        %v1409 = vpop.f32.mrb[0].mxu0
        %1410 = vmatprep.mubr.f32.mxu0 %v1208
        %1411 = vmatmul.mubr.f32.gmra.mrb[0].mxu0 %v1207
        %v1412 = vpop.f32.mrb[0].mxu0
        %v1413 = vadd.f32 0.0, %v1412
        %v1414 = vpop.f32.mrb[0].mxu0
        %1415 = vmatprep.mubr.f32.mxu0 %v1212
        %1416 = vmatmul.mubr.f32.gmra.mrb[0].mxu0 %v1211
        %v1417 = vpop.f32.mrb[0].mxu0
        %v1418 = vadd.f32 0.0, %v1417
        %v1419 = vpop.f32.mrb[0].mxu0
        %1420 = vmatprep.mubr.f32.mxu0 %v1216
        %1421 = vmatmul.mubr.f32.gmra.mrb[0].mxu0 %v1215
        %v1422 = vpop.f32.mrb[0].mxu0
        %v1423 = vadd.f32 0.0, %v1422
        %v1424 = vpop.f32.mrb[0].mxu0
        %1425 = vmatprep.mubr.f32.mxu0 %v1220
        %1426 = vmatmul.mubr.f32.gmra.mrb[0].mxu0 %v1219
        %v1427 = vpop.f32.mrb[0].mxu0
        %v1428 = vadd.f32 0.0, %v1427
        %v1429 = vpop.f32.mrb[0].mxu0
        %1430 = vmatprep.mubr.f32.mxu0 %v1224
        %1431 = vmatmul.mubr.f32.gmra.mrb[0].mxu0 %v1223
        %v1432 = vpop.f32.mrb[0].mxu0
        %v1433 = vadd.f32 0.0, %v1432
        %v1434 = vpop.f32.mrb[0].mxu0
        %1435 = vmatprep.mubr.f32.mxu0 %v1228
        %1436 = vmatmul.mubr.f32.gmra.mrb[0].mxu0 %v1227
        %v1437 = vpop.f32.mrb[0].mxu0
        %v1438 = vadd.f32 0.0, %v1437
        %v1439 = vpop.f32.mrb[0].mxu0
        %1440 = vmatprep.mubr.f32.mxu0 %v1232
        %1441 = vmatmul.mubr.f32.gmra.mrb[0].mxu0 %v1231
        %v1442 = vpop.f32.mrb[0].mxu0
        %v1443 = vadd.f32 0.0, %v1442
        %v1444 = vpop.f32.mrb[0].mxu0
        %1445 = vmatprep.mubr.f32.mxu0 %v1236
        %1446 = vmatmul.mubr.f32.gmra.mrb[0].mxu0 %v1235
        %v1447 = vpop.f32.mrb[0].mxu0
        %v1448 = vadd.f32 0.0, %v1447
        %v1449 = vpop.f32.mrb[0].mxu0
        %1450 = vmatprep.mubr.f32.mxu0 %v1240
        %1451 = vmatmul.mubr.f32.gmra.mrb[0].mxu0 %v1239
        %v1452 = vpop.f32.mrb[0].mxu0
        %v1453 = vadd.f32 0.0, %v1452
        %v1454 = vpop.f32.mrb[0].mxu0
        %1455 = vmatprep.mubr.f32.mxu0 %v1244
        %1456 = vmatmul.mubr.f32.gmra.mrb[0].mxu0 %v1243
        %v1457 = vpop.f32.mrb[0].mxu0
        %v1458 = vadd.f32 0.0, %v1457
        %v1459 = vpop.f32.mrb[0].mxu0
        %1460 = vmatprep.mubr.f32.mxu0 %v1248
        %1461 = vmatmul.mubr.f32.gmra.mrb[0].mxu0 %v1247
        %v1462 = vpop.f32.mrb[0].mxu0
        %v1463 = vadd.f32 0.0, %v1462
        %v1464 = vpop.f32.mrb[0].mxu0
        %1465 = vmatprep.mubr.f32.mxu0 %v1252
        %1466 = vmatmul.mubr.f32.gmra.mrb[0].mxu0 %v1251
        %v1467 = vpop.f32.mrb[0].mxu0
        %v1468 = vadd.f32 0.0, %v1467
        %v1469 = vpop.f32.mrb[0].mxu0
        %1470 = vmatprep.mubr.f32.mxu0 %v1256
        %1471 = vmatmul.mubr.f32.gmra.mrb[0].mxu0 %v1255
        %v1472 = vpop.f32.mrb[0].mxu0
        %v1473 = vadd.f32 0.0, %v1472
        %v1474 = vpop.f32.mrb[0].mxu0
        %1475 = vmatprep.mubr.f32.mxu0 %v1260
        %1476 = vmatmul.mubr.f32.gmra.mrb[0].mxu0 %v1259
        %v1477 = vpop.f32.mrb[0].mxu0
        %v1478 = vadd.f32 0.0, %v1477
        %v1479 = vpop.f32.mrb[0].mxu0
        %1480 = vmatprep.mubr.f32.mxu0 %v1264
        %1481 = vmatmul.mubr.f32.gmra.mrb[0].mxu0 %v1263
        %v1482 = vpop.f32.mrb[0].mxu0
        %v1483 = vadd.f32 0.0, %v1482
        %v1484 = vpop.f32.mrb[0].mxu0
        %1485 = vmatprep.mubr.f32.mxu0 %v1268
        %1486 = vmatmul.mubr.f32.gmra.mrb[0].mxu0 %v1267
        %v1487 = vpop.f32.mrb[0].mxu0
        %v1488 = vadd.f32 0.0, %v1487
        %v1489 = vpop.f32.mrb[0].mxu0
        %1490 = vmatprep.mubr.f32.mxu0 %v1272
        %1491 = vmatmul.mubr.f32.gmra.mrb[0].mxu0 %v1271
        %v1492 = vpop.f32.mrb[0].mxu0
        %v1493 = vadd.f32 0.0, %v1492
        %v1494 = vpop.f32.mrb[0].mxu0
        %1495 = vmatprep.mubr.f32.mxu0 %v1276
        %1496 = vmatmul.mubr.f32.gmra.mrb[0].mxu0 %v1275
        %v1497 = vpop.f32.mrb[0].mxu0
        %v1498 = vadd.f32 0.0, %v1497
        %v1499 = vpop.f32.mrb[0].mxu0
        %1500 = vmatprep.mubr.f32.mxu0 %v1280
        %1501 = vmatmul.mubr.f32.gmra.mrb[0].mxu0 %v1279
        %v1502 = vpop.f32.mrb[0].mxu0
        %v1503 = vadd.f32 0.0, %v1502
        %v1504 = vpop.f32.mrb[0].mxu0
        %1505 = vmatprep.mubr.f32.mxu0 %v1284
        %1506 = vmatmul.mubr.f32.gmra.mrb[0].mxu0 %v1283
        %v1507 = vpop.f32.mrb[0].mxu0
        %v1508 = vadd.f32 0.0, %v1507
        %v1509 = vpop.f32.mrb[0].mxu0
        %1510 = vmatprep.mubr.f32.mxu0 %v1288
        %1511 = vmatmul.mubr.f32.gmra.mrb[0].mxu0 %v1287
        %v1512 = vpop.f32.mrb[0].mxu0
        %v1513 = vadd.f32 0.0, %v1512
        %v1514 = vpop.f32.mrb[0].mxu0
        %1515 = vdwg.mxu0
        %1516 = vmatprep.subr.mxu0 0.0
        %1517 = vmatpush1.msra.mxu0 %v1100
        %1518 = vmatprep.subr.mxu0 0.0
        %1519 = vmatpush1.msra.mxu0 %v1102
        %1520 = vmatprep.subr.mxu0 0.0
        %1521 = vmatpush1.msra.mxu0 %v1104
        %1522 = vmatprep.subr.mxu0 0.0
        %1523 = vmatpush1.msra.mxu0 %v1106
        %1524 = vmatprep.subr.mxu0 0.0
        %1525 = vmatpush1.msra.mxu0 %v1108
        %1526 = vmatprep.subr.mxu0 0.0
        %1527 = vmatpush1.msra.mxu0 %v1110
        %1528 = vmatprep.subr.mxu0 0.0
        %1529 = vmatpush1.msra.mxu0 %v1112
        %1530 = vmatprep.subr.mxu0 0.0
        %1531 = vmatpush1.msra.mxu0 %v1114
        %1532 = vmatprep.subr.mxu0 0.0
        %1533 = vmatpush1.msra.mxu0 %v1116
        %1534 = vmatprep.subr.mxu0 0.0
        %1535 = vmatpush1.msra.mxu0 %v1118
        %1536 = vmatprep.subr.mxu0 0.0
        %1537 = vmatpush1.msra.mxu0 %v1120
        %1538 = vmatprep.subr.mxu0 0.0
        %1539 = vmatpush1.msra.mxu0 %v1122
        %1540 = vmatprep.subr.mxu0 0.0
        %1541 = vmatpush1.msra.mxu0 %v1124
        %1542 = vmatprep.subr.mxu0 0.0
        %1543 = vmatpush1.msra.mxu0 %v1126
        %1544 = vmatprep.subr.mxu0 0.0
        %1545 = vmatpush1.msra.mxu0 %v1128
        %1546 = vmatprep.subr.mxu0 0.0
        %1547 = vmatpush1.msra.mxu0 %v1130
        %1548 = vmatprep.subr.mxu0 0.0
        %1549 = vmatpush1.msra.mxu0 %v1132
        %1550 = vmatprep.subr.mxu0 0.0
        %1551 = vmatpush1.msra.mxu0 %v1134
        %1552 = vmatprep.subr.mxu0 0.0
        %1553 = vmatpush1.msra.mxu0 %v1136
        %1554 = vmatprep.subr.mxu0 0.0
        %1555 = vmatpush1.msra.mxu0 %v1138
        %1556 = vmatprep.subr.mxu0 0.0
        %1557 = vmatpush1.msra.mxu0 %v1140
        %1558 = vmatprep.subr.mxu0 0.0
        %1559 = vmatpush1.msra.mxu0 %v1142
        %1560 = vmatprep.subr.mxu0 0.0
        %1561 = vmatpush1.msra.mxu0 %v1144
        %1562 = vmatprep.subr.mxu0 0.0
        %1563 = vmatpush1.msra.mxu0 %v1146
        %1564 = vmatprep.subr.mxu0 0.0
        %1565 = vmatpush1.msra.mxu0 %v1148
        %1566 = vmatprep.subr.mxu0 0.0
        %1567 = vmatpush1.msra.mxu0 %v1150
        %1568 = vmatprep.subr.mxu0 0.0
        %1569 = vmatpush1.msra.mxu0 %v1152
        %1570 = vmatprep.subr.mxu0 0.0
        %1571 = vmatpush1.msra.mxu0 %v1154
        %1572 = vmatprep.subr.mxu0 0.0
        %1573 = vmatpush1.msra.mxu0 %v1156
        %1574 = vmatprep.subr.mxu0 0.0
        %1575 = vmatpush1.msra.mxu0 %v1158
        %1576 = vmatprep.subr.mxu0 0.0
        %1577 = vmatpush1.msra.mxu0 %v1160
        %1578 = vmatprep.subr.mxu0 0.0
        %1579 = vmatpush1.msra.mxu0 %v1162
        %1580 = vmatprep.mubr.f32.mxu0 %v1166
        %1581 = vmatmul.mubr.f32.gmra.mrb[0].mxu0 %v1165
        %v1582 = vpop.f32.mrb[0].mxu0
        %v1583 = vadd.f32 %v1358, %v1582
        %v1584 = vpop.f32.mrb[0].mxu0
        %1585 = vmatprep.mubr.f32.mxu0 %v1170
        %1586 = vmatmul.mubr.f32.gmra.mrb[0].mxu0 %v1169
        %v1587 = vpop.f32.mrb[0].mxu0
        %v1588 = vadd.f32 %v1363, %v1587
        %v1589 = vpop.f32.mrb[0].mxu0
        %1590 = vmatprep.mubr.f32.mxu0 %v1174
        %1591 = vmatmul.mubr.f32.gmra.mrb[0].mxu0 %v1173
        %v1592 = vpop.f32.mrb[0].mxu0
        %v1593 = vadd.f32 %v1368, %v1592
        %v1594 = vpop.f32.mrb[0].mxu0
        %1595 = vmatprep.mubr.f32.mxu0 %v1178
        %1596 = vmatmul.mubr.f32.gmra.mrb[0].mxu0 %v1177
        %v1597 = vpop.f32.mrb[0].mxu0
        %v1598 = vadd.f32 %v1373, %v1597
        %v1599 = vpop.f32.mrb[0].mxu0
        %1600 = vmatprep.mubr.f32.mxu0 %v1182
        %1601 = vmatmul.mubr.f32.gmra.mrb[0].mxu0 %v1181
        %v1602 = vpop.f32.mrb[0].mxu0
        %v1603 = vadd.f32 %v1378, %v1602
        %v1604 = vpop.f32.mrb[0].mxu0
        %1605 = vmatprep.mubr.f32.mxu0 %v1186
        %1606 = vmatmul.mubr.f32.gmra.mrb[0].mxu0 %v1185
        %v1607 = vpop.f32.mrb[0].mxu0
        %v1608 = vadd.f32 %v1383, %v1607
        %v1609 = vpop.f32.mrb[0].mxu0
        %1610 = vmatprep.mubr.f32.mxu0 %v1190
        %1611 = vmatmul.mubr.f32.gmra.mrb[0].mxu0 %v1189
        %v1612 = vpop.f32.mrb[0].mxu0
        %v1613 = vadd.f32 %v1388, %v1612
        %v1614 = vpop.f32.mrb[0].mxu0
        %1615 = vmatprep.mubr.f32.mxu0 %v1194
        %1616 = vmatmul.mubr.f32.gmra.mrb[0].mxu0 %v1193
        %v1617 = vpop.f32.mrb[0].mxu0
        %v1618 = vadd.f32 %v1393, %v1617
        %v1619 = vpop.f32.mrb[0].mxu0
        %1620 = vmatprep.mubr.f32.mxu0 %v1198
        %1621 = vmatmul.mubr.f32.gmra.mrb[0].mxu0 %v1197
        %v1622 = vpop.f32.mrb[0].mxu0
        %v1623 = vadd.f32 %v1398, %v1622
        %v1624 = vpop.f32.mrb[0].mxu0
        %1625 = vmatprep.mubr.f32.mxu0 %v1202
        %1626 = vmatmul.mubr.f32.gmra.mrb[0].mxu0 %v1201
        %v1627 = vpop.f32.mrb[0].mxu0
        %v1628 = vadd.f32 %v1403, %v1627
        %v1629 = vpop.f32.mrb[0].mxu0
        %1630 = vmatprep.mubr.f32.mxu0 %v1206
        %1631 = vmatmul.mubr.f32.gmra.mrb[0].mxu0 %v1205
        %v1632 = vpop.f32.mrb[0].mxu0
        %v1633 = vadd.f32 %v1408, %v1632
        %v1634 = vpop.f32.mrb[0].mxu0
        %1635 = vmatprep.mubr.f32.mxu0 %v1210
        %1636 = vmatmul.mubr.f32.gmra.mrb[0].mxu0 %v1209
        %v1637 = vpop.f32.mrb[0].mxu0
        %v1638 = vadd.f32 %v1413, %v1637
        %v1639 = vpop.f32.mrb[0].mxu0
        %1640 = vmatprep.mubr.f32.mxu0 %v1214
        %1641 = vmatmul.mubr.f32.gmra.mrb[0].mxu0 %v1213
        %v1642 = vpop.f32.mrb[0].mxu0
        %v1643 = vadd.f32 %v1418, %v1642
        %v1644 = vpop.f32.mrb[0].mxu0
        %1645 = vmatprep.mubr.f32.mxu0 %v1218
        %1646 = vmatmul.mubr.f32.gmra.mrb[0].mxu0 %v1217
        %v1647 = vpop.f32.mrb[0].mxu0
        %v1648 = vadd.f32 %v1423, %v1647
        %v1649 = vpop.f32.mrb[0].mxu0
        %1650 = vmatprep.mubr.f32.mxu0 %v1222
        %1651 = vmatmul.mubr.f32.gmra.mrb[0].mxu0 %v1221
        %v1652 = vpop.f32.mrb[0].mxu0
        %v1653 = vadd.f32 %v1428, %v1652
        %v1654 = vpop.f32.mrb[0].mxu0
        %1655 = vmatprep.mubr.f32.mxu0 %v1226
        %1656 = vmatmul.mubr.f32.gmra.mrb[0].mxu0 %v1225
        %v1657 = vpop.f32.mrb[0].mxu0
        %v1658 = vadd.f32 %v1433, %v1657
        %v1659 = vpop.f32.mrb[0].mxu0
        %1660 = vmatprep.mubr.f32.mxu0 %v1230
        %1661 = vmatmul.mubr.f32.gmra.mrb[0].mxu0 %v1229
        %v1662 = vpop.f32.mrb[0].mxu0
        %v1663 = vadd.f32 %v1438, %v1662
        %v1664 = vpop.f32.mrb[0].mxu0
        %1665 = vmatprep.mubr.f32.mxu0 %v1234
        %1666 = vmatmul.mubr.f32.gmra.mrb[0].mxu0 %v1233
        %v1667 = vpop.f32.mrb[0].mxu0
        %v1668 = vadd.f32 %v1443, %v1667
        %v1669 = vpop.f32.mrb[0].mxu0
        %1670 = vmatprep.mubr.f32.mxu0 %v1238
        %1671 = vmatmul.mubr.f32.gmra.mrb[0].mxu0 %v1237
        %v1672 = vpop.f32.mrb[0].mxu0
        %v1673 = vadd.f32 %v1448, %v1672
        %v1674 = vpop.f32.mrb[0].mxu0
        %1675 = vmatprep.mubr.f32.mxu0 %v1242
        %1676 = vmatmul.mubr.f32.gmra.mrb[0].mxu0 %v1241
        %v1677 = vpop.f32.mrb[0].mxu0
        %v1678 = vadd.f32 %v1453, %v1677
        %v1679 = vpop.f32.mrb[0].mxu0
        %1680 = vmatprep.mubr.f32.mxu0 %v1246
        %1681 = vmatmul.mubr.f32.gmra.mrb[0].mxu0 %v1245
        %v1682 = vpop.f32.mrb[0].mxu0
        %v1683 = vadd.f32 %v1458, %v1682
        %v1684 = vpop.f32.mrb[0].mxu0
        %1685 = vmatprep.mubr.f32.mxu0 %v1250
        %1686 = vmatmul.mubr.f32.gmra.mrb[0].mxu0 %v1249
        %v1687 = vpop.f32.mrb[0].mxu0
        %v1688 = vadd.f32 %v1463, %v1687
        %v1689 = vpop.f32.mrb[0].mxu0
        %1690 = vmatprep.mubr.f32.mxu0 %v1254
        %1691 = vmatmul.mubr.f32.gmra.mrb[0].mxu0 %v1253
        %v1692 = vpop.f32.mrb[0].mxu0
        %v1693 = vadd.f32 %v1468, %v1692
        %v1694 = vpop.f32.mrb[0].mxu0
        %1695 = vmatprep.mubr.f32.mxu0 %v1258
        %1696 = vmatmul.mubr.f32.gmra.mrb[0].mxu0 %v1257
        %v1697 = vpop.f32.mrb[0].mxu0
        %v1698 = vadd.f32 %v1473, %v1697
        %v1699 = vpop.f32.mrb[0].mxu0
        %1700 = vmatprep.mubr.f32.mxu0 %v1262
        %1701 = vmatmul.mubr.f32.gmra.mrb[0].mxu0 %v1261
        %v1702 = vpop.f32.mrb[0].mxu0
        %v1703 = vadd.f32 %v1478, %v1702
        %v1704 = vpop.f32.mrb[0].mxu0
        %1705 = vmatprep.mubr.f32.mxu0 %v1266
        %1706 = vmatmul.mubr.f32.gmra.mrb[0].mxu0 %v1265
        %v1707 = vpop.f32.mrb[0].mxu0
        %v1708 = vadd.f32 %v1483, %v1707
        %v1709 = vpop.f32.mrb[0].mxu0
        %1710 = vmatprep.mubr.f32.mxu0 %v1270
        %1711 = vmatmul.mubr.f32.gmra.mrb[0].mxu0 %v1269
        %v1712 = vpop.f32.mrb[0].mxu0
        %v1713 = vadd.f32 %v1488, %v1712
        %v1714 = vpop.f32.mrb[0].mxu0
        %1715 = vmatprep.mubr.f32.mxu0 %v1274
        %1716 = vmatmul.mubr.f32.gmra.mrb[0].mxu0 %v1273
        %v1717 = vpop.f32.mrb[0].mxu0
        %v1718 = vadd.f32 %v1493, %v1717
        %v1719 = vpop.f32.mrb[0].mxu0
        %1720 = vmatprep.mubr.f32.mxu0 %v1278
        %1721 = vmatmul.mubr.f32.gmra.mrb[0].mxu0 %v1277
        %v1722 = vpop.f32.mrb[0].mxu0
        %v1723 = vadd.f32 %v1498, %v1722
        %v1724 = vpop.f32.mrb[0].mxu0
        %1725 = vmatprep.mubr.f32.mxu0 %v1282
        %1726 = vmatmul.mubr.f32.gmra.mrb[0].mxu0 %v1281
        %v1727 = vpop.f32.mrb[0].mxu0
        %v1728 = vadd.f32 %v1503, %v1727
        %v1729 = vpop.f32.mrb[0].mxu0
        %1730 = vmatprep.mubr.f32.mxu0 %v1286
        %1731 = vmatmul.mubr.f32.gmra.mrb[0].mxu0 %v1285
        %v1732 = vpop.f32.mrb[0].mxu0
        %v1733 = vadd.f32 %v1508, %v1732
        %v1734 = vpop.f32.mrb[0].mxu0
        %1735 = vmatprep.mubr.f32.mxu0 %v1290
        %1736 = vmatmul.mubr.f32.gmra.mrb[0].mxu0 %v1289
        %v1737 = vpop.f32.mrb[0].mxu0
        %v1738 = vadd.f32 %v1513, %v1737
        %v1739 = vpop.f32.mrb[0].mxu0
        %1740 = vdwg.mxu0
        %v1741 = vxor.u32 %v1583, 2147483648
        %v1742 = vxor.u32 %v1588, 2147483648
        %v1743 = vxor.u32 %v1593, 2147483648
        %v1744 = vxor.u32 %v1598, 2147483648
        %v1745 = vxor.u32 %v1603, 2147483648
        %v1746 = vxor.u32 %v1608, 2147483648
        %v1747 = vxor.u32 %v1613, 2147483648
        %v1748 = vxor.u32 %v1618, 2147483648
        %v1749 = vxor.u32 %v1623, 2147483648
        %v1750 = vxor.u32 %v1628, 2147483648
        %v1751 = vxor.u32 %v1633, 2147483648
        %v1752 = vxor.u32 %v1638, 2147483648
        %v1753 = vxor.u32 %v1643, 2147483648
        %v1754 = vxor.u32 %v1648, 2147483648
        %v1755 = vxor.u32 %v1653, 2147483648
        %v1756 = vxor.u32 %v1658, 2147483648
        %v1757 = vxor.u32 %v1663, 2147483648
        %v1758 = vxor.u32 %v1668, 2147483648
        %v1759 = vxor.u32 %v1673, 2147483648
        %v1760 = vxor.u32 %v1678, 2147483648
        %v1761 = vxor.u32 %v1683, 2147483648
        %v1762 = vxor.u32 %v1688, 2147483648
        %v1763 = vxor.u32 %v1693, 2147483648
        %v1764 = vxor.u32 %v1698, 2147483648
        %v1765 = vxor.u32 %v1703, 2147483648
        %v1766 = vxor.u32 %v1708, 2147483648
        %v1767 = vxor.u32 %v1713, 2147483648
        %v1768 = vxor.u32 %v1718, 2147483648
        %v1769 = vxor.u32 %v1723, 2147483648
        %v1770 = vxor.u32 %v1728, 2147483648
        %v1771 = vxor.u32 %v1733, 2147483648
        %v1772 = vxor.u32 %v1738, 2147483648
        %v1773 = vmul.f32 %v1741, 1.442695
        %v1774 = vpow.pop %v1773
        %v1775 = vmul.f32 %v1742, 1.442695
        %v1776 = vpow.pop %v1775
        %v1777 = vmul.f32 %v1743, 1.442695
        %v1778 = vpow.pop %v1777
        %v1779 = vmul.f32 %v1744, 1.442695
        %v1780 = vpow.pop %v1779
        %v1781 = vmul.f32 %v1745, 1.442695
        %v1782 = vpow.pop %v1781
        %v1783 = vmul.f32 %v1746, 1.442695
        %v1784 = vpow.pop %v1783
        %v1785 = vmul.f32 %v1747, 1.442695
        %v1786 = vpow.pop %v1785
        %v1787 = vmul.f32 %v1748, 1.442695
        %v1788 = vpow.pop %v1787
        %v1789 = vmul.f32 %v1749, 1.442695
        %v1790 = vpow.pop %v1789
        %v1791 = vmul.f32 %v1750, 1.442695
        %v1792 = vpow.pop %v1791
        %v1793 = vmul.f32 %v1751, 1.442695
        %v1794 = vpow.pop %v1793
        %v1795 = vmul.f32 %v1752, 1.442695
        %v1796 = vpow.pop %v1795
        %v1797 = vmul.f32 %v1753, 1.442695
        %v1798 = vpow.pop %v1797
        %v1799 = vmul.f32 %v1754, 1.442695
        %v1800 = vpow.pop %v1799
        %v1801 = vmul.f32 %v1755, 1.442695
        %v1802 = vpow.pop %v1801
        %v1803 = vmul.f32 %v1756, 1.442695
        %v1804 = vpow.pop %v1803
        %v1805 = vmul.f32 %v1757, 1.442695
        %v1806 = vpow.pop %v1805
        %v1807 = vmul.f32 %v1758, 1.442695
        %v1808 = vpow.pop %v1807
        %v1809 = vmul.f32 %v1759, 1.442695
        %v1810 = vpow.pop %v1809
        %v1811 = vmul.f32 %v1760, 1.442695
        %v1812 = vpow.pop %v1811
        %v1813 = vmul.f32 %v1761, 1.442695
        %v1814 = vpow.pop %v1813
        %v1815 = vmul.f32 %v1762, 1.442695
        %v1816 = vpow.pop %v1815
        %v1817 = vmul.f32 %v1763, 1.442695
        %v1818 = vpow.pop %v1817
        %v1819 = vmul.f32 %v1764, 1.442695
        %v1820 = vpow.pop %v1819
        %v1821 = vmul.f32 %v1765, 1.442695
        %v1822 = vpow.pop %v1821
        %v1823 = vmul.f32 %v1766, 1.442695
        %v1824 = vpow.pop %v1823
        %v1825 = vmul.f32 %v1767, 1.442695
        %v1826 = vpow.pop %v1825
        %v1827 = vmul.f32 %v1768, 1.442695
        %v1828 = vpow.pop %v1827
        %v1829 = vmul.f32 %v1769, 1.442695
        %v1830 = vpow.pop %v1829
        %v1831 = vmul.f32 %v1770, 1.442695
        %v1832 = vpow.pop %v1831
        %v1833 = vmul.f32 %v1771, 1.442695
        %v1834 = vpow.pop %v1833
        %v1835 = vmul.f32 %v1772, 1.442695
        %v1836 = vpow.pop %v1835
        %v1837 = vadd.f32 %v1774, 1.0
        %v1838 = vadd.f32 %v1776, 1.0
        %v1839 = vadd.f32 %v1778, 1.0
        %v1840 = vadd.f32 %v1780, 1.0
        %v1841 = vadd.f32 %v1782, 1.0
        %v1842 = vadd.f32 %v1784, 1.0
        %v1843 = vadd.f32 %v1786, 1.0
        %v1844 = vadd.f32 %v1788, 1.0
        %v1845 = vadd.f32 %v1790, 1.0
        %v1846 = vadd.f32 %v1792, 1.0
        %v1847 = vadd.f32 %v1794, 1.0
        %v1848 = vadd.f32 %v1796, 1.0
        %v1849 = vadd.f32 %v1798, 1.0
        %v1850 = vadd.f32 %v1800, 1.0
        %v1851 = vadd.f32 %v1802, 1.0
        %v1852 = vadd.f32 %v1804, 1.0
        %v1853 = vadd.f32 %v1806, 1.0
        %v1854 = vadd.f32 %v1808, 1.0
        %v1855 = vadd.f32 %v1810, 1.0
        %v1856 = vadd.f32 %v1812, 1.0
        %v1857 = vadd.f32 %v1814, 1.0
        %v1858 = vadd.f32 %v1816, 1.0
        %v1859 = vadd.f32 %v1818, 1.0
        %v1860 = vadd.f32 %v1820, 1.0
        %v1861 = vadd.f32 %v1822, 1.0
        %v1862 = vadd.f32 %v1824, 1.0
        %v1863 = vadd.f32 %v1826, 1.0
        %v1864 = vadd.f32 %v1828, 1.0
        %v1865 = vadd.f32 %v1830, 1.0
        %v1866 = vadd.f32 %v1832, 1.0
        %v1867 = vadd.f32 %v1834, 1.0
        %v1868 = vadd.f32 %v1836, 1.0
        %v1869 = vrcp.pop %v1837
        %v1870 = vmul.f32 1.0, %v1869
        %v1871 = vrcp.pop %v1838
        %v1872 = vmul.f32 1.0, %v1871
        %v1873 = vrcp.pop %v1839
        %v1874 = vmul.f32 1.0, %v1873
        %v1875 = vrcp.pop %v1840
        %v1876 = vmul.f32 1.0, %v1875
        %v1877 = vrcp.pop %v1841
        %v1878 = vmul.f32 1.0, %v1877
        %v1879 = vrcp.pop %v1842
        %v1880 = vmul.f32 1.0, %v1879
        %v1881 = vrcp.pop %v1843
        %v1882 = vmul.f32 1.0, %v1881
        %v1883 = vrcp.pop %v1844
        %v1884 = vmul.f32 1.0, %v1883
        %v1885 = vrcp.pop %v1845
        %v1886 = vmul.f32 1.0, %v1885
        %v1887 = vrcp.pop %v1846
        %v1888 = vmul.f32 1.0, %v1887
        %v1889 = vrcp.pop %v1847
        %v1890 = vmul.f32 1.0, %v1889
        %v1891 = vrcp.pop %v1848
        %v1892 = vmul.f32 1.0, %v1891
        %v1893 = vrcp.pop %v1849
        %v1894 = vmul.f32 1.0, %v1893
        %v1895 = vrcp.pop %v1850
        %v1896 = vmul.f32 1.0, %v1895
        %v1897 = vrcp.pop %v1851
        %v1898 = vmul.f32 1.0, %v1897
        %v1899 = vrcp.pop %v1852
        %v1900 = vmul.f32 1.0, %v1899
        %v1901 = vrcp.pop %v1853
        %v1902 = vmul.f32 1.0, %v1901
        %v1903 = vrcp.pop %v1854
        %v1904 = vmul.f32 1.0, %v1903
        %v1905 = vrcp.pop %v1855
        %v1906 = vmul.f32 1.0, %v1905
        %v1907 = vrcp.pop %v1856
        %v1908 = vmul.f32 1.0, %v1907
        %v1909 = vrcp.pop %v1857
        %v1910 = vmul.f32 1.0, %v1909
        %v1911 = vrcp.pop %v1858
        %v1912 = vmul.f32 1.0, %v1911
        %v1913 = vrcp.pop %v1859
        %v1914 = vmul.f32 1.0, %v1913
        %v1915 = vrcp.pop %v1860
        %v1916 = vmul.f32 1.0, %v1915
        %v1917 = vrcp.pop %v1861
        %v1918 = vmul.f32 1.0, %v1917
        %v1919 = vrcp.pop %v1862
        %v1920 = vmul.f32 1.0, %v1919
        %v1921 = vrcp.pop %v1863
        %v1922 = vmul.f32 1.0, %v1921
        %v1923 = vrcp.pop %v1864
        %v1924 = vmul.f32 1.0, %v1923
        %v1925 = vrcp.pop %v1865
        %v1926 = vmul.f32 1.0, %v1925
        %v1927 = vrcp.pop %v1866
        %v1928 = vmul.f32 1.0, %v1927
        %v1929 = vrcp.pop %v1867
        %v1930 = vmul.f32 1.0, %v1929
        %v1931 = vrcp.pop %v1868
        %v1932 = vmul.f32 1.0, %v1931
        %1934 = vset.pattern.permute.xlu0 0
        %1935 = vperm.xlu0 %1934, %v1870
        %v1936 = vpop.permute.xlu0 %1935
        %1939 = vset.pattern.permute.xlu0 0
        %1940 = vperm.xlu0 %1939, %v1872
        %v1941 = vpop.permute.xlu0 %1940
        %1944 = vset.pattern.permute.xlu0 0
        %1945 = vperm.xlu0 %1944, %v1874
        %v1946 = vpop.permute.xlu0 %1945
        %1949 = vset.pattern.permute.xlu0 0
        %1950 = vperm.xlu0 %1949, %v1876
        %v1951 = vpop.permute.xlu0 %1950
        %1954 = vset.pattern.permute.xlu0 0
        %1955 = vperm.xlu0 %1954, %v1878
        %v1956 = vpop.permute.xlu0 %1955
        %1959 = vset.pattern.permute.xlu0 0
        %1960 = vperm.xlu0 %1959, %v1880
        %v1961 = vpop.permute.xlu0 %1960
        %1964 = vset.pattern.permute.xlu0 0
        %1965 = vperm.xlu0 %1964, %v1882
        %v1966 = vpop.permute.xlu0 %1965
        %1969 = vset.pattern.permute.xlu0 0
        %1970 = vperm.xlu0 %1969, %v1884
        %v1971 = vpop.permute.xlu0 %1970
        %1974 = vset.pattern.permute.xlu0 0
        %1975 = vperm.xlu0 %1974, %v1886
        %v1976 = vpop.permute.xlu0 %1975
        %1979 = vset.pattern.permute.xlu0 0
        %1980 = vperm.xlu0 %1979, %v1888
        %v1981 = vpop.permute.xlu0 %1980
        %1984 = vset.pattern.permute.xlu0 0
        %1985 = vperm.xlu0 %1984, %v1890
        %v1986 = vpop.permute.xlu0 %1985
        %1989 = vset.pattern.permute.xlu0 0
        %1990 = vperm.xlu0 %1989, %v1892
        %v1991 = vpop.permute.xlu0 %1990
        %1994 = vset.pattern.permute.xlu0 0
        %1995 = vperm.xlu0 %1994, %v1894
        %v1996 = vpop.permute.xlu0 %1995
        %1999 = vset.pattern.permute.xlu0 0
        %2000 = vperm.xlu0 %1999, %v1896
        %v2001 = vpop.permute.xlu0 %2000
        %2004 = vset.pattern.permute.xlu0 0
        %2005 = vperm.xlu0 %2004, %v1898
        %v2006 = vpop.permute.xlu0 %2005
        %2009 = vset.pattern.permute.xlu0 0
        %2010 = vperm.xlu0 %2009, %v1900
        %v2011 = vpop.permute.xlu0 %2010
        %2014 = vset.pattern.permute.xlu0 0
        %2015 = vperm.xlu0 %2014, %v1902
        %v2016 = vpop.permute.xlu0 %2015
        %2019 = vset.pattern.permute.xlu0 0
        %2020 = vperm.xlu0 %2019, %v1904
        %v2021 = vpop.permute.xlu0 %2020
        %2024 = vset.pattern.permute.xlu0 0
        %2025 = vperm.xlu0 %2024, %v1906
        %v2026 = vpop.permute.xlu0 %2025
        %2029 = vset.pattern.permute.xlu0 0
        %2030 = vperm.xlu0 %2029, %v1908
        %v2031 = vpop.permute.xlu0 %2030
        %2034 = vset.pattern.permute.xlu0 0
        %2035 = vperm.xlu0 %2034, %v1910
        %v2036 = vpop.permute.xlu0 %2035
        %2039 = vset.pattern.permute.xlu0 0
        %2040 = vperm.xlu0 %2039, %v1912
        %v2041 = vpop.permute.xlu0 %2040
        %2044 = vset.pattern.permute.xlu0 0
        %2045 = vperm.xlu0 %2044, %v1914
        %v2046 = vpop.permute.xlu0 %2045
        %2049 = vset.pattern.permute.xlu0 0
        %2050 = vperm.xlu0 %2049, %v1916
        %v2051 = vpop.permute.xlu0 %2050
        %2054 = vset.pattern.permute.xlu0 0
        %2055 = vperm.xlu0 %2054, %v1918
        %v2056 = vpop.permute.xlu0 %2055
        %2059 = vset.pattern.permute.xlu0 0
        %2060 = vperm.xlu0 %2059, %v1920
        %v2061 = vpop.permute.xlu0 %2060
        %2064 = vset.pattern.permute.xlu0 0
        %2065 = vperm.xlu0 %2064, %v1922
        %v2066 = vpop.permute.xlu0 %2065
        %2069 = vset.pattern.permute.xlu0 0
        %2070 = vperm.xlu0 %2069, %v1924
        %v2071 = vpop.permute.xlu0 %2070
        %2074 = vset.pattern.permute.xlu0 0
        %2075 = vperm.xlu0 %2074, %v1926
        %v2076 = vpop.permute.xlu0 %2075
        %2079 = vset.pattern.permute.xlu0 0
        %2080 = vperm.xlu0 %2079, %v1928
        %v2081 = vpop.permute.xlu0 %2080
        %2084 = vset.pattern.permute.xlu0 0
        %2085 = vperm.xlu0 %2084, %v1930
        %v2086 = vpop.permute.xlu0 %2085
        %2089 = vset.pattern.permute.xlu0 0
        %2090 = vperm.xlu0 %2089, %v1932
        %v2091 = vpop.permute.xlu0 %2090
        %v2093 = vmul.f32 %v936, %v1936
        %v2094 = vmul.f32 %v937, %v1941
        %v2095 = vmul.f32 %v938, %v1946
        %v2096 = vmul.f32 %v939, %v1951
        %v2097 = vmul.f32 %v940, %v1956
        %v2098 = vmul.f32 %v941, %v1961
        %v2099 = vmul.f32 %v942, %v1966
        %v2100 = vmul.f32 %v943, %v1971
        %v2101 = vmul.f32 %v944, %v1976
        %v2102 = vmul.f32 %v945, %v1981
        %v2103 = vmul.f32 %v946, %v1986
        %v2104 = vmul.f32 %v947, %v1991
        %v2105 = vmul.f32 %v948, %v1996
        %v2106 = vmul.f32 %v949, %v2001
        %v2107 = vmul.f32 %v950, %v2006
        %v2108 = vmul.f32 %v951, %v2011
        %v2109 = vmul.f32 %v952, %v2016
        %v2110 = vmul.f32 %v953, %v2021
        %v2111 = vmul.f32 %v954, %v2026
        %v2112 = vmul.f32 %v955, %v2031
        %v2113 = vmul.f32 %v956, %v2036
        %v2114 = vmul.f32 %v957, %v2041
        %v2115 = vmul.f32 %v958, %v2046
        %v2116 = vmul.f32 %v959, %v2051
        %v2117 = vmul.f32 %v960, %v2056
        %v2118 = vmul.f32 %v961, %v2061
        %v2119 = vmul.f32 %v962, %v2066
        %v2120 = vmul.f32 %v963, %v2071
        %v2121 = vmul.f32 %v964, %v2076
        %v2122 = vmul.f32 %v965, %v2081
        %v2123 = vmul.f32 %v966, %v2086
        %v2124 = vmul.f32 %v967, %v2091
        %s2125 = scalar_lea.vmem [#allocation2], 24
        %2126 = vst [vmem:[%s2125 + $0x1] sm:$0xff] %v2093
        %2127 = vst [vmem:[%s2125 + $0x9] sm:$0xff] %v2094
        %2128 = vst [vmem:[%s2125 + $0x19] sm:$0xff] %v2095
        %2129 = vst [vmem:[%s2125 + $0x21] sm:$0xff] %v2096
        %2130 = vst [vmem:[%s2125 + $0x31] sm:$0xff] %v2097
        %2131 = vst [vmem:[%s2125 + $0x39] sm:$0xff] %v2098
        %2132 = vst [vmem:[%s2125 + $0x49] sm:$0xff] %v2099
        %2133 = vst [vmem:[%s2125 + $0x51] sm:$0xff] %v2100
        %2134 = vst [vmem:[%s2125 + $0x61] sm:$0xff] %v2101
        %2135 = vst [vmem:[%s2125 + $0x69] sm:$0xff] %v2102
        %2136 = vst [vmem:[%s2125 + $0x79] sm:$0xff] %v2103
        %2137 = vst [vmem:[%s2125 + $0x81] sm:$0xff] %v2104
        %2138 = vst [vmem:[%s2125 + $0x91] sm:$0xff] %v2105
        %2139 = vst [vmem:[%s2125 + $0x99] sm:$0xff] %v2106
        %2140 = vst [vmem:[%s2125 + $0xa9] sm:$0xff] %v2107
        %2141 = vst [vmem:[%s2125 + $0xb1] sm:$0xff] %v2108
        %2142 = vst [vmem:[%s2125 + $0xc1] sm:$0xff] %v2109
        %2143 = vst [vmem:[%s2125 + $0xc9] sm:$0xff] %v2110
        %2144 = vst [vmem:[%s2125 + $0xd9] sm:$0xff] %v2111
        %2145 = vst [vmem:[%s2125 + $0xe1] sm:$0xff] %v2112
        %2146 = vst [vmem:[%s2125 + $0xf1] sm:$0xff] %v2113
        %2147 = vst [vmem:[%s2125 + $0xf9] sm:$0xff] %v2114
        %2148 = vst [vmem:[%s2125 + $0x109] sm:$0xff] %v2115
        %2149 = vst [vmem:[%s2125 + $0x111] sm:$0xff] %v2116
        %2150 = vst [vmem:[%s2125 + $0x121] sm:$0xff] %v2117
        %2151 = vst [vmem:[%s2125 + $0x129] sm:$0xff] %v2118
        %2152 = vst [vmem:[%s2125 + $0x139] sm:$0xff] %v2119
        %2153 = vst [vmem:[%s2125 + $0x141] sm:$0xff] %v2120
        %2154 = vst [vmem:[%s2125 + $0x151] sm:$0xff] %v2121
        %2155 = vst [vmem:[%s2125 + $0x159] sm:$0xff] %v2122
        %2156 = vst [vmem:[%s2125 + $0x169] sm:$0xff] %v2123
        %2157 = vst [vmem:[%s2125 + $0x171] sm:$0xff] %v2124
        %v2158 = vld [vmem:[#allocation2] sm:$0xff]
        %v2159 = vld [vmem:[#allocation2 + $0x8] sm:$0xff]
        %v2160 = vld [vmem:[#allocation2 + $0x18] sm:$0xff]
        %v2161 = vld [vmem:[#allocation2 + $0x20] sm:$0xff]
        %v2162 = vld [vmem:[#allocation2 + $0x30] sm:$0xff]
        %v2163 = vld [vmem:[#allocation2 + $0x38] sm:$0xff]
        %v2164 = vld [vmem:[#allocation2 + $0x48] sm:$0xff]
        %v2165 = vld [vmem:[#allocation2 + $0x50] sm:$0xff]
        %v2166 = vld [vmem:[#allocation2 + $0x60] sm:$0xff]
        %v2167 = vld [vmem:[#allocation2 + $0x68] sm:$0xff]
        %v2168 = vld [vmem:[#allocation2 + $0x78] sm:$0xff]
        %v2169 = vld [vmem:[#allocation2 + $0x80] sm:$0xff]
        %v2170 = vld [vmem:[#allocation2 + $0x90] sm:$0xff]
        %v2171 = vld [vmem:[#allocation2 + $0x98] sm:$0xff]
        %v2172 = vld [vmem:[#allocation2 + $0xa8] sm:$0xff]
        %v2173 = vld [vmem:[#allocation2 + $0xb0] sm:$0xff]
        %v2174 = vld [vmem:[#allocation2 + $0xc0] sm:$0xff]
        %v2175 = vld [vmem:[#allocation2 + $0xc8] sm:$0xff]
        %v2176 = vld [vmem:[#allocation2 + $0xd8] sm:$0xff]
        %v2177 = vld [vmem:[#allocation2 + $0xe0] sm:$0xff]
        %v2178 = vld [vmem:[#allocation2 + $0xf0] sm:$0xff]
        %v2179 = vld [vmem:[#allocation2 + $0xf8] sm:$0xff]
        %v2180 = vld [vmem:[#allocation2 + $0x108] sm:$0xff]
        %v2181 = vld [vmem:[#allocation2 + $0x110] sm:$0xff]
        %v2182 = vld [vmem:[#allocation2 + $0x120] sm:$0xff]
        %v2183 = vld [vmem:[#allocation2 + $0x128] sm:$0xff]
        %v2184 = vld [vmem:[#allocation2 + $0x138] sm:$0xff]
        %v2185 = vld [vmem:[#allocation2 + $0x140] sm:$0xff]
        %v2186 = vld [vmem:[#allocation2 + $0x150] sm:$0xff]
        %v2187 = vld [vmem:[#allocation2 + $0x158] sm:$0xff]
        %v2188 = vld [vmem:[#allocation2 + $0x168] sm:$0xff]
        %v2189 = vld [vmem:[#allocation2 + $0x170] sm:$0xff]
        %v2190 = vpack.c.bf16 %v2159, %v2158
        %v2191 = vpack.c.bf16 %v2161, %v2160
        %v2192 = vpack.c.bf16 %v2163, %v2162
        %v2193 = vpack.c.bf16 %v2165, %v2164
        %v2194 = vpack.c.bf16 %v2167, %v2166
        %v2195 = vpack.c.bf16 %v2169, %v2168
        %v2196 = vpack.c.bf16 %v2171, %v2170
        %v2197 = vpack.c.bf16 %v2173, %v2172
        %v2198 = vpack.c.bf16 %v2175, %v2174
        %v2199 = vpack.c.bf16 %v2177, %v2176
        %v2200 = vpack.c.bf16 %v2179, %v2178
        %v2201 = vpack.c.bf16 %v2181, %v2180
        %v2202 = vpack.c.bf16 %v2183, %v2182
        %v2203 = vpack.c.bf16 %v2185, %v2184
        %v2204 = vpack.c.bf16 %v2187, %v2186
        %v2205 = vpack.c.bf16 %v2189, %v2188
        %2206 = vst [vmem:[#allocation3] sm:$0xff] %v2190
        %2207 = vst [vmem:[#allocation3 + $0x48] sm:$0xff] %v2191
        %2208 = vst [vmem:[#allocation3 + $0x90] sm:$0xff] %v2192
        %2209 = vst [vmem:[#allocation3 + $0xd8] sm:$0xff] %v2193
        %2210 = vst [vmem:[#allocation3 + $0x120] sm:$0xff] %v2194
        %2211 = vst [vmem:[#allocation3 + $0x168] sm:$0xff] %v2195
        %2212 = vst [vmem:[#allocation3 + $0x1b0] sm:$0xff] %v2196
        %2213 = vst [vmem:[#allocation3 + $0x1f8] sm:$0xff] %v2197
        %2214 = vst [vmem:[#allocation3 + $0x240] sm:$0xff] %v2198
        %2215 = vst [vmem:[#allocation3 + $0x288] sm:$0xff] %v2199
        %2216 = vst [vmem:[#allocation3 + $0x2d0] sm:$0xff] %v2200
        %2217 = vst [vmem:[#allocation3 + $0x318] sm:$0xff] %v2201
        %2218 = vst [vmem:[#allocation3 + $0x360] sm:$0xff] %v2202
        %2219 = vst [vmem:[#allocation3 + $0x3a8] sm:$0xff] %v2203
        %2220 = vst [vmem:[#allocation3 + $0x3f0] sm:$0xff] %v2204
        %2221 = vst [vmem:[#allocation3 + $0x438] sm:$0xff] %v2205
        %v2222 = vld [vmem:[#allocation2 + $0x1] sm:$0xff]
        %v2223 = vld [vmem:[#allocation2 + $0x9] sm:$0xff]
        %v2224 = vld [vmem:[#allocation2 + $0x19] sm:$0xff]
        %v2225 = vld [vmem:[#allocation2 + $0x21] sm:$0xff]
        %v2226 = vld [vmem:[#allocation2 + $0x31] sm:$0xff]
        %v2227 = vld [vmem:[#allocation2 + $0x39] sm:$0xff]
        %v2228 = vld [vmem:[#allocation2 + $0x49] sm:$0xff]
        %v2229 = vld [vmem:[#allocation2 + $0x51] sm:$0xff]
        %v2230 = vld [vmem:[#allocation2 + $0x61] sm:$0xff]
        %v2231 = vld [vmem:[#allocation2 + $0x69] sm:$0xff]
        %v2232 = vld [vmem:[#allocation2 + $0x79] sm:$0xff]
        %v2233 = vld [vmem:[#allocation2 + $0x81] sm:$0xff]
        %v2234 = vld [vmem:[#allocation2 + $0x91] sm:$0xff]
        %v2235 = vld [vmem:[#allocation2 + $0x99] sm:$0xff]
        %v2236 = vld [vmem:[#allocation2 + $0xa9] sm:$0xff]
        %v2237 = vld [vmem:[#allocation2 + $0xb1] sm:$0xff]
        %v2238 = vld [vmem:[#allocation2 + $0xc1] sm:$0xff]
        %v2239 = vld [vmem:[#allocation2 + $0xc9] sm:$0xff]
        %v2240 = vld [vmem:[#allocation2 + $0xd9] sm:$0xff]
        %v2241 = vld [vmem:[#allocation2 + $0xe1] sm:$0xff]
        %v2242 = vld [vmem:[#allocation2 + $0xf1] sm:$0xff]
        %v2243 = vld [vmem:[#allocation2 + $0xf9] sm:$0xff]
        %v2244 = vld [vmem:[#allocation2 + $0x109] sm:$0xff]
        %v2245 = vld [vmem:[#allocation2 + $0x111] sm:$0xff]
        %v2246 = vld [vmem:[#allocation2 + $0x121] sm:$0xff]
        %v2247 = vld [vmem:[#allocation2 + $0x129] sm:$0xff]
        %v2248 = vld [vmem:[#allocation2 + $0x139] sm:$0xff]
        %v2249 = vld [vmem:[#allocation2 + $0x141] sm:$0xff]
        %v2250 = vld [vmem:[#allocation2 + $0x151] sm:$0xff]
        %v2251 = vld [vmem:[#allocation2 + $0x159] sm:$0xff]
        %v2252 = vld [vmem:[#allocation2 + $0x169] sm:$0xff]
        %v2253 = vld [vmem:[#allocation2 + $0x171] sm:$0xff]
        %v2254 = vpack.c.bf16 %v2223, %v2222
        %v2255 = vpack.c.bf16 %v2225, %v2224
        %v2256 = vpack.c.bf16 %v2227, %v2226
        %v2257 = vpack.c.bf16 %v2229, %v2228
        %v2258 = vpack.c.bf16 %v2231, %v2230
        %v2259 = vpack.c.bf16 %v2233, %v2232
        %v2260 = vpack.c.bf16 %v2235, %v2234
        %v2261 = vpack.c.bf16 %v2237, %v2236
        %v2262 = vpack.c.bf16 %v2239, %v2238
        %v2263 = vpack.c.bf16 %v2241, %v2240
        %v2264 = vpack.c.bf16 %v2243, %v2242
        %v2265 = vpack.c.bf16 %v2245, %v2244
        %v2266 = vpack.c.bf16 %v2247, %v2246
        %v2267 = vpack.c.bf16 %v2249, %v2248
        %v2268 = vpack.c.bf16 %v2251, %v2250
        %v2269 = vpack.c.bf16 %v2253, %v2252
        %2270 = vst [vmem:[#allocation3 + $0x8] sm:$0xff] %v2254
        %2271 = vst [vmem:[#allocation3 + $0x50] sm:$0xff] %v2255
        %2272 = vst [vmem:[#allocation3 + $0x98] sm:$0xff] %v2256
        %2273 = vst [vmem:[#allocation3 + $0xe0] sm:$0xff] %v2257
        %2274 = vst [vmem:[#allocation3 + $0x128] sm:$0xff] %v2258
        %2275 = vst [vmem:[#allocation3 + $0x170] sm:$0xff] %v2259
        %2276 = vst [vmem:[#allocation3 + $0x1b8] sm:$0xff] %v2260
        %2277 = vst [vmem:[#allocation3 + $0x200] sm:$0xff] %v2261
        %2278 = vst [vmem:[#allocation3 + $0x248] sm:$0xff] %v2262
        %2279 = vst [vmem:[#allocation3 + $0x290] sm:$0xff] %v2263
        %2280 = vst [vmem:[#allocation3 + $0x2d8] sm:$0xff] %v2264
        %2281 = vst [vmem:[#allocation3 + $0x320] sm:$0xff] %v2265
        %2282 = vst [vmem:[#allocation3 + $0x368] sm:$0xff] %v2266
        %2283 = vst [vmem:[#allocation3 + $0x3b0] sm:$0xff] %v2267
        %2284 = vst [vmem:[#allocation3 + $0x3f8] sm:$0xff] %v2268
        %2285 = vst [vmem:[#allocation3 + $0x440] sm:$0xff] %v2269
        %v2286 = vld [vmem:[#allocation2 + $0x2] sm:$0xff]
        %v2287 = vld [vmem:[#allocation2 + $0xa] sm:$0xff]
        %v2288 = vld [vmem:[#allocation2 + $0x1a] sm:$0xff]
        %v2289 = vld [vmem:[#allocation2 + $0x22] sm:$0xff]
        %v2290 = vld [vmem:[#allocation2 + $0x32] sm:$0xff]
        %v2291 = vld [vmem:[#allocation2 + $0x3a] sm:$0xff]
        %v2292 = vld [vmem:[#allocation2 + $0x4a] sm:$0xff]
        %v2293 = vld [vmem:[#allocation2 + $0x52] sm:$0xff]
        %v2294 = vld [vmem:[#allocation2 + $0x62] sm:$0xff]
        %v2295 = vld [vmem:[#allocation2 + $0x6a] sm:$0xff]
        %v2296 = vld [vmem:[#allocation2 + $0x7a] sm:$0xff]
        %v2297 = vld [vmem:[#allocation2 + $0x82] sm:$0xff]
        %v2298 = vld [vmem:[#allocation2 + $0x92] sm:$0xff]
        %v2299 = vld [vmem:[#allocation2 + $0x9a] sm:$0xff]
        %v2300 = vld [vmem:[#allocation2 + $0xaa] sm:$0xff]
        %v2301 = vld [vmem:[#allocation2 + $0xb2] sm:$0xff]
        %v2302 = vld [vmem:[#allocation2 + $0xc2] sm:$0xff]
        %v2303 = vld [vmem:[#allocation2 + $0xca] sm:$0xff]
        %v2304 = vld [vmem:[#allocation2 + $0xda] sm:$0xff]
        %v2305 = vld [vmem:[#allocation2 + $0xe2] sm:$0xff]
        %v2306 = vld [vmem:[#allocation2 + $0xf2] sm:$0xff]
        %v2307 = vld [vmem:[#allocation2 + $0xfa] sm:$0xff]
        %v2308 = vld [vmem:[#allocation2 + $0x10a] sm:$0xff]
        %v2309 = vld [vmem:[#allocation2 + $0x112] sm:$0xff]
        %v2310 = vld [vmem:[#allocation2 + $0x122] sm:$0xff]
        %v2311 = vld [vmem:[#allocation2 + $0x12a] sm:$0xff]
        %v2312 = vld [vmem:[#allocation2 + $0x13a] sm:$0xff]
        %v2313 = vld [vmem:[#allocation2 + $0x142] sm:$0xff]
        %v2314 = vld [vmem:[#allocation2 + $0x152] sm:$0xff]
        %v2315 = vld [vmem:[#allocation2 + $0x15a] sm:$0xff]
        %v2316 = vld [vmem:[#allocation2 + $0x16a] sm:$0xff]
        %v2317 = vld [vmem:[#allocation2 + $0x172] sm:$0xff]
        %v2318 = vpack.c.bf16 %v2287, %v2286
        %v2319 = vpack.c.bf16 %v2289, %v2288
        %v2320 = vpack.c.bf16 %v2291, %v2290
        %v2321 = vpack.c.bf16 %v2293, %v2292
        %v2322 = vpack.c.bf16 %v2295, %v2294
        %v2323 = vpack.c.bf16 %v2297, %v2296
        %v2324 = vpack.c.bf16 %v2299, %v2298
        %v2325 = vpack.c.bf16 %v2301, %v2300
        %v2326 = vpack.c.bf16 %v2303, %v2302
        %v2327 = vpack.c.bf16 %v2305, %v2304
        %v2328 = vpack.c.bf16 %v2307, %v2306
        %v2329 = vpack.c.bf16 %v2309, %v2308
        %v2330 = vpack.c.bf16 %v2311, %v2310
        %v2331 = vpack.c.bf16 %v2313, %v2312
        %v2332 = vpack.c.bf16 %v2315, %v2314
        %v2333 = vpack.c.bf16 %v2317, %v2316
        %2334 = vst [vmem:[#allocation3 + $0x10] sm:$0xff] %v2318
        %2335 = vst [vmem:[#allocation3 + $0x58] sm:$0xff] %v2319
        %2336 = vst [vmem:[#allocation3 + $0xa0] sm:$0xff] %v2320
        %2337 = vst [vmem:[#allocation3 + $0xe8] sm:$0xff] %v2321
        %2338 = vst [vmem:[#allocation3 + $0x130] sm:$0xff] %v2322
        %2339 = vst [vmem:[#allocation3 + $0x178] sm:$0xff] %v2323
        %2340 = vst [vmem:[#allocation3 + $0x1c0] sm:$0xff] %v2324
        %2341 = vst [vmem:[#allocation3 + $0x208] sm:$0xff] %v2325
        %2342 = vst [vmem:[#allocation3 + $0x250] sm:$0xff] %v2326
        %2343 = vst [vmem:[#allocation3 + $0x298] sm:$0xff] %v2327
        %2344 = vst [vmem:[#allocation3 + $0x2e0] sm:$0xff] %v2328
        %2345 = vst [vmem:[#allocation3 + $0x328] sm:$0xff] %v2329
        %2346 = vst [vmem:[#allocation3 + $0x370] sm:$0xff] %v2330
        %2347 = vst [vmem:[#allocation3 + $0x3b8] sm:$0xff] %v2331
        %2348 = vst [vmem:[#allocation3 + $0x400] sm:$0xff] %v2332
        %2349 = vst [vmem:[#allocation3 + $0x448] sm:$0xff] %v2333
        %v2350 = vld [vmem:[%s2125] sm:$0xff]
        %v2351 = vld [vmem:[%s2125 + $0x8] sm:$0xff]
        %v2352 = vld [vmem:[%s2125 + $0x18] sm:$0xff]
        %v2353 = vld [vmem:[%s2125 + $0x20] sm:$0xff]
        %v2354 = vld [vmem:[%s2125 + $0x30] sm:$0xff]
        %v2355 = vld [vmem:[%s2125 + $0x38] sm:$0xff]
        %v2356 = vld [vmem:[%s2125 + $0x48] sm:$0xff]
        %v2357 = vld [vmem:[%s2125 + $0x50] sm:$0xff]
        %v2358 = vld [vmem:[%s2125 + $0x60] sm:$0xff]
        %v2359 = vld [vmem:[%s2125 + $0x68] sm:$0xff]
        %v2360 = vld [vmem:[%s2125 + $0x78] sm:$0xff]
        %v2361 = vld [vmem:[%s2125 + $0x80] sm:$0xff]
        %v2362 = vld [vmem:[%s2125 + $0x90] sm:$0xff]
        %v2363 = vld [vmem:[%s2125 + $0x98] sm:$0xff]
        %v2364 = vld [vmem:[%s2125 + $0xa8] sm:$0xff]
        %v2365 = vld [vmem:[%s2125 + $0xb0] sm:$0xff]
        %v2366 = vld [vmem:[%s2125 + $0xc0] sm:$0xff]
        %v2367 = vld [vmem:[%s2125 + $0xc8] sm:$0xff]
        %v2368 = vld [vmem:[%s2125 + $0xd8] sm:$0xff]
        %v2369 = vld [vmem:[%s2125 + $0xe0] sm:$0xff]
        %v2370 = vld [vmem:[%s2125 + $0xf0] sm:$0xff]
        %v2371 = vld [vmem:[%s2125 + $0xf8] sm:$0xff]
        %v2372 = vld [vmem:[%s2125 + $0x108] sm:$0xff]
        %v2373 = vld [vmem:[%s2125 + $0x110] sm:$0xff]
        %v2374 = vld [vmem:[%s2125 + $0x120] sm:$0xff]
        %v2375 = vld [vmem:[%s2125 + $0x128] sm:$0xff]
        %v2376 = vld [vmem:[%s2125 + $0x138] sm:$0xff]
        %v2377 = vld [vmem:[%s2125 + $0x140] sm:$0xff]
        %v2378 = vld [vmem:[%s2125 + $0x150] sm:$0xff]
        %v2379 = vld [vmem:[%s2125 + $0x158] sm:$0xff]
        %v2380 = vld [vmem:[%s2125 + $0x168] sm:$0xff]
        %v2381 = vld [vmem:[%s2125 + $0x170] sm:$0xff]
        %v2382 = vpack.c.bf16 %v2351, %v2350
        %v2383 = vpack.c.bf16 %v2353, %v2352
        %v2384 = vpack.c.bf16 %v2355, %v2354
        %v2385 = vpack.c.bf16 %v2357, %v2356
        %v2386 = vpack.c.bf16 %v2359, %v2358
        %v2387 = vpack.c.bf16 %v2361, %v2360
        %v2388 = vpack.c.bf16 %v2363, %v2362
        %v2389 = vpack.c.bf16 %v2365, %v2364
        %v2390 = vpack.c.bf16 %v2367, %v2366
        %v2391 = vpack.c.bf16 %v2369, %v2368
        %v2392 = vpack.c.bf16 %v2371, %v2370
        %v2393 = vpack.c.bf16 %v2373, %v2372
        %v2394 = vpack.c.bf16 %v2375, %v2374
        %v2395 = vpack.c.bf16 %v2377, %v2376
        %v2396 = vpack.c.bf16 %v2379, %v2378
        %v2397 = vpack.c.bf16 %v2381, %v2380
        %2398 = vst [vmem:[#allocation3 + $0x18] sm:$0xff] %v2382
        %2399 = vst [vmem:[#allocation3 + $0x60] sm:$0xff] %v2383
        %2400 = vst [vmem:[#allocation3 + $0xa8] sm:$0xff] %v2384
        %2401 = vst [vmem:[#allocation3 + $0xf0] sm:$0xff] %v2385
        %2402 = vst [vmem:[#allocation3 + $0x138] sm:$0xff] %v2386
        %2403 = vst [vmem:[#allocation3 + $0x180] sm:$0xff] %v2387
        %2404 = vst [vmem:[#allocation3 + $0x1c8] sm:$0xff] %v2388
        %2405 = vst [vmem:[#allocation3 + $0x210] sm:$0xff] %v2389
        %2406 = vst [vmem:[#allocation3 + $0x258] sm:$0xff] %v2390
        %2407 = vst [vmem:[#allocation3 + $0x2a0] sm:$0xff] %v2391
        %2408 = vst [vmem:[#allocation3 + $0x2e8] sm:$0xff] %v2392
        %2409 = vst [vmem:[#allocation3 + $0x330] sm:$0xff] %v2393
        %2410 = vst [vmem:[#allocation3 + $0x378] sm:$0xff] %v2394
        %2411 = vst [vmem:[#allocation3 + $0x3c0] sm:$0xff] %v2395
        %2412 = vst [vmem:[#allocation3 + $0x408] sm:$0xff] %v2396
        %2413 = vst [vmem:[#allocation3 + $0x450] sm:$0xff] %v2397
        %v2414 = vld [vmem:[%s2125 + $0x1] sm:$0xff]
        %v2415 = vld [vmem:[%s2125 + $0x9] sm:$0xff]
        %v2416 = vld [vmem:[%s2125 + $0x19] sm:$0xff]
        %v2417 = vld [vmem:[%s2125 + $0x21] sm:$0xff]
        %v2418 = vld [vmem:[%s2125 + $0x31] sm:$0xff]
        %v2419 = vld [vmem:[%s2125 + $0x39] sm:$0xff]
        %v2420 = vld [vmem:[%s2125 + $0x49] sm:$0xff]
        %v2421 = vld [vmem:[%s2125 + $0x51] sm:$0xff]
        %v2422 = vld [vmem:[%s2125 + $0x61] sm:$0xff]
        %v2423 = vld [vmem:[%s2125 + $0x69] sm:$0xff]
        %v2424 = vld [vmem:[%s2125 + $0x79] sm:$0xff]
        %v2425 = vld [vmem:[%s2125 + $0x81] sm:$0xff]
        %v2426 = vld [vmem:[%s2125 + $0x91] sm:$0xff]
        %v2427 = vld [vmem:[%s2125 + $0x99] sm:$0xff]
        %v2428 = vld [vmem:[%s2125 + $0xa9] sm:$0xff]
        %v2429 = vld [vmem:[%s2125 + $0xb1] sm:$0xff]
        %v2430 = vld [vmem:[%s2125 + $0xc1] sm:$0xff]
        %v2431 = vld [vmem:[%s2125 + $0xc9] sm:$0xff]
        %v2432 = vld [vmem:[%s2125 + $0xd9] sm:$0xff]
        %v2433 = vld [vmem:[%s2125 + $0xe1] sm:$0xff]
        %v2434 = vld [vmem:[%s2125 + $0xf1] sm:$0xff]
        %v2435 = vld [vmem:[%s2125 + $0xf9] sm:$0xff]
        %v2436 = vld [vmem:[%s2125 + $0x109] sm:$0xff]
        %v2437 = vld [vmem:[%s2125 + $0x111] sm:$0xff]
        %v2438 = vld [vmem:[%s2125 + $0x121] sm:$0xff]
        %v2439 = vld [vmem:[%s2125 + $0x129] sm:$0xff]
        %v2440 = vld [vmem:[%s2125 + $0x139] sm:$0xff]
        %v2441 = vld [vmem:[%s2125 + $0x141] sm:$0xff]
        %v2442 = vld [vmem:[%s2125 + $0x151] sm:$0xff]
        %v2443 = vld [vmem:[%s2125 + $0x159] sm:$0xff]
        %v2444 = vld [vmem:[%s2125 + $0x169] sm:$0xff]
        %v2445 = vld [vmem:[%s2125 + $0x171] sm:$0xff]
        %v2446 = vpack.c.bf16 %v2415, %v2414
        %v2447 = vpack.c.bf16 %v2417, %v2416
        %v2448 = vpack.c.bf16 %v2419, %v2418
        %v2449 = vpack.c.bf16 %v2421, %v2420
        %v2450 = vpack.c.bf16 %v2423, %v2422
        %v2451 = vpack.c.bf16 %v2425, %v2424
        %v2452 = vpack.c.bf16 %v2427, %v2426
        %v2453 = vpack.c.bf16 %v2429, %v2428
        %v2454 = vpack.c.bf16 %v2431, %v2430
        %v2455 = vpack.c.bf16 %v2433, %v2432
        %v2456 = vpack.c.bf16 %v2435, %v2434
        %v2457 = vpack.c.bf16 %v2437, %v2436
        %v2458 = vpack.c.bf16 %v2439, %v2438
        %v2459 = vpack.c.bf16 %v2441, %v2440
        %v2460 = vpack.c.bf16 %v2443, %v2442
        %v2461 = vpack.c.bf16 %v2445, %v2444
        %2462 = vst [vmem:[#allocation3 + $0x20] sm:$0xff] %v2446
        %2463 = vst [vmem:[#allocation3 + $0x68] sm:$0xff] %v2447
        %2464 = vst [vmem:[#allocation3 + $0xb0] sm:$0xff] %v2448
        %2465 = vst [vmem:[#allocation3 + $0xf8] sm:$0xff] %v2449
        %2466 = vst [vmem:[#allocation3 + $0x140] sm:$0xff] %v2450
        %2467 = vst [vmem:[#allocation3 + $0x188] sm:$0xff] %v2451
        %2468 = vst [vmem:[#allocation3 + $0x1d0] sm:$0xff] %v2452
        %2469 = vst [vmem:[#allocation3 + $0x218] sm:$0xff] %v2453
        %2470 = vst [vmem:[#allocation3 + $0x260] sm:$0xff] %v2454
        %2471 = vst [vmem:[#allocation3 + $0x2a8] sm:$0xff] %v2455
        %2472 = vst [vmem:[#allocation3 + $0x2f0] sm:$0xff] %v2456
        %2473 = vst [vmem:[#allocation3 + $0x338] sm:$0xff] %v2457
        %2474 = vst [vmem:[#allocation3 + $0x380] sm:$0xff] %v2458
        %2475 = vst [vmem:[#allocation3 + $0x3c8] sm:$0xff] %v2459
        %2476 = vst [vmem:[#allocation3 + $0x410] sm:$0xff] %v2460
        %2477 = vst [vmem:[#allocation3 + $0x458] sm:$0xff] %v2461
        %v2478 = vld [vmem:[%s2125 + $0x2] sm:$0xff]
        %v2479 = vld [vmem:[%s2125 + $0xa] sm:$0xff]
        %v2480 = vld [vmem:[%s2125 + $0x1a] sm:$0xff]
        %v2481 = vld [vmem:[%s2125 + $0x22] sm:$0xff]
        %v2482 = vld [vmem:[%s2125 + $0x32] sm:$0xff]
        %v2483 = vld [vmem:[%s2125 + $0x3a] sm:$0xff]
        %v2484 = vld [vmem:[%s2125 + $0x4a] sm:$0xff]
        %v2485 = vld [vmem:[%s2125 + $0x52] sm:$0xff]
        %v2486 = vld [vmem:[%s2125 + $0x62] sm:$0xff]
        %v2487 = vld [vmem:[%s2125 + $0x6a] sm:$0xff]
        %v2488 = vld [vmem:[%s2125 + $0x7a] sm:$0xff]
        %v2489 = vld [vmem:[%s2125 + $0x82] sm:$0xff]
        %v2490 = vld [vmem:[%s2125 + $0x92] sm:$0xff]
        %v2491 = vld [vmem:[%s2125 + $0x9a] sm:$0xff]
        %v2492 = vld [vmem:[%s2125 + $0xaa] sm:$0xff]
        %v2493 = vld [vmem:[%s2125 + $0xb2] sm:$0xff]
        %v2494 = vld [vmem:[%s2125 + $0xc2] sm:$0xff]
        %v2495 = vld [vmem:[%s2125 + $0xca] sm:$0xff]
        %v2496 = vld [vmem:[%s2125 + $0xda] sm:$0xff]
        %v2497 = vld [vmem:[%s2125 + $0xe2] sm:$0xff]
        %v2498 = vld [vmem:[%s2125 + $0xf2] sm:$0xff]
        %v2499 = vld [vmem:[%s2125 + $0xfa] sm:$0xff]
        %v2500 = vld [vmem:[%s2125 + $0x10a] sm:$0xff]
        %v2501 = vld [vmem:[%s2125 + $0x112] sm:$0xff]
        %v2502 = vld [vmem:[%s2125 + $0x122] sm:$0xff]
        %v2503 = vld [vmem:[%s2125 + $0x12a] sm:$0xff]
        %v2504 = vld [vmem:[%s2125 + $0x13a] sm:$0xff]
        %v2505 = vld [vmem:[%s2125 + $0x142] sm:$0xff]
        %v2506 = vld [vmem:[%s2125 + $0x152] sm:$0xff]
        %v2507 = vld [vmem:[%s2125 + $0x15a] sm:$0xff]
        %v2508 = vld [vmem:[%s2125 + $0x16a] sm:$0xff]
        %v2509 = vld [vmem:[%s2125 + $0x172] sm:$0xff]
        %v2510 = vpack.c.bf16 %v2479, %v2478
        %v2511 = vpack.c.bf16 %v2481, %v2480
        %v2512 = vpack.c.bf16 %v2483, %v2482
        %v2513 = vpack.c.bf16 %v2485, %v2484
        %v2514 = vpack.c.bf16 %v2487, %v2486
        %v2515 = vpack.c.bf16 %v2489, %v2488
        %v2516 = vpack.c.bf16 %v2491, %v2490
        %v2517 = vpack.c.bf16 %v2493, %v2492
        %v2518 = vpack.c.bf16 %v2495, %v2494
        %v2519 = vpack.c.bf16 %v2497, %v2496
        %v2520 = vpack.c.bf16 %v2499, %v2498
        %v2521 = vpack.c.bf16 %v2501, %v2500
        %v2522 = vpack.c.bf16 %v2503, %v2502
        %v2523 = vpack.c.bf16 %v2505, %v2504
        %v2524 = vpack.c.bf16 %v2507, %v2506
        %v2525 = vpack.c.bf16 %v2509, %v2508
        %2526 = vst [vmem:[#allocation3 + $0x28] sm:$0xff] %v2510
        %2527 = vst [vmem:[#allocation3 + $0x70] sm:$0xff] %v2511
        %2528 = vst [vmem:[#allocation3 + $0xb8] sm:$0xff] %v2512
        %2529 = vst [vmem:[#allocation3 + $0x100] sm:$0xff] %v2513
        %2530 = vst [vmem:[#allocation3 + $0x148] sm:$0xff] %v2514
        %2531 = vst [vmem:[#allocation3 + $0x190] sm:$0xff] %v2515
        %2532 = vst [vmem:[#allocation3 + $0x1d8] sm:$0xff] %v2516
        %2533 = vst [vmem:[#allocation3 + $0x220] sm:$0xff] %v2517
        %2534 = vst [vmem:[#allocation3 + $0x268] sm:$0xff] %v2518
        %2535 = vst [vmem:[#allocation3 + $0x2b0] sm:$0xff] %v2519
        %2536 = vst [vmem:[#allocation3 + $0x2f8] sm:$0xff] %v2520
        %2537 = vst [vmem:[#allocation3 + $0x340] sm:$0xff] %v2521
        %2538 = vst [vmem:[#allocation3 + $0x388] sm:$0xff] %v2522
        %2539 = vst [vmem:[#allocation3 + $0x3d0] sm:$0xff] %v2523
        %2540 = vst [vmem:[#allocation3 + $0x418] sm:$0xff] %v2524
        %2541 = vst [vmem:[#allocation3 + $0x460] sm:$0xff] %v2525
        %s2542 = scalar_lea.vmem [#allocation2], 48
        %v2543 = vld [vmem:[%s2542] sm:$0xff]
        %v2544 = vld [vmem:[%s2542 + $0x8] sm:$0xff]
        %v2545 = vld [vmem:[%s2542 + $0x18] sm:$0xff]
        %v2546 = vld [vmem:[%s2542 + $0x20] sm:$0xff]
        %v2547 = vld [vmem:[%s2542 + $0x30] sm:$0xff]
        %v2548 = vld [vmem:[%s2542 + $0x38] sm:$0xff]
        %v2549 = vld [vmem:[%s2542 + $0x48] sm:$0xff]
        %v2550 = vld [vmem:[%s2542 + $0x50] sm:$0xff]
        %v2551 = vld [vmem:[%s2542 + $0x60] sm:$0xff]
        %v2552 = vld [vmem:[%s2542 + $0x68] sm:$0xff]
        %v2553 = vld [vmem:[%s2542 + $0x78] sm:$0xff]
        %v2554 = vld [vmem:[%s2542 + $0x80] sm:$0xff]
        %v2555 = vld [vmem:[%s2542 + $0x90] sm:$0xff]
        %v2556 = vld [vmem:[%s2542 + $0x98] sm:$0xff]
        %v2557 = vld [vmem:[%s2542 + $0xa8] sm:$0xff]
        %v2558 = vld [vmem:[%s2542 + $0xb0] sm:$0xff]
        %v2559 = vld [vmem:[%s2542 + $0xc0] sm:$0xff]
        %v2560 = vld [vmem:[%s2542 + $0xc8] sm:$0xff]
        %v2561 = vld [vmem:[%s2542 + $0xd8] sm:$0xff]
        %v2562 = vld [vmem:[%s2542 + $0xe0] sm:$0xff]
        %v2563 = vld [vmem:[%s2542 + $0xf0] sm:$0xff]
        %v2564 = vld [vmem:[%s2542 + $0xf8] sm:$0xff]
        %v2565 = vld [vmem:[%s2542 + $0x108] sm:$0xff]
        %v2566 = vld [vmem:[%s2542 + $0x110] sm:$0xff]
        %v2567 = vld [vmem:[%s2542 + $0x120] sm:$0xff]
        %v2568 = vld [vmem:[%s2542 + $0x128] sm:$0xff]
        %v2569 = vld [vmem:[%s2542 + $0x138] sm:$0xff]
        %v2570 = vld [vmem:[%s2542 + $0x140] sm:$0xff]
        %v2571 = vld [vmem:[%s2542 + $0x150] sm:$0xff]
        %v2572 = vld [vmem:[%s2542 + $0x158] sm:$0xff]
        %v2573 = vld [vmem:[%s2542 + $0x168] sm:$0xff]
        %v2574 = vld [vmem:[%s2542 + $0x170] sm:$0xff]
        %v2575 = vpack.c.bf16 %v2544, %v2543
        %v2576 = vpack.c.bf16 %v2546, %v2545
        %v2577 = vpack.c.bf16 %v2548, %v2547
        %v2578 = vpack.c.bf16 %v2550, %v2549
        %v2579 = vpack.c.bf16 %v2552, %v2551
        %v2580 = vpack.c.bf16 %v2554, %v2553
        %v2581 = vpack.c.bf16 %v2556, %v2555
        %v2582 = vpack.c.bf16 %v2558, %v2557
        %v2583 = vpack.c.bf16 %v2560, %v2559
        %v2584 = vpack.c.bf16 %v2562, %v2561
        %v2585 = vpack.c.bf16 %v2564, %v2563
        %v2586 = vpack.c.bf16 %v2566, %v2565
        %v2587 = vpack.c.bf16 %v2568, %v2567
        %v2588 = vpack.c.bf16 %v2570, %v2569
        %v2589 = vpack.c.bf16 %v2572, %v2571
        %v2590 = vpack.c.bf16 %v2574, %v2573
        %2591 = vst [vmem:[#allocation3 + $0x30] sm:$0xff] %v2575
        %2592 = vst [vmem:[#allocation3 + $0x78] sm:$0xff] %v2576
        %2593 = vst [vmem:[#allocation3 + $0xc0] sm:$0xff] %v2577
        %2594 = vst [vmem:[#allocation3 + $0x108] sm:$0xff] %v2578
        %2595 = vst [vmem:[#allocation3 + $0x150] sm:$0xff] %v2579
        %2596 = vst [vmem:[#allocation3 + $0x198] sm:$0xff] %v2580
        %2597 = vst [vmem:[#allocation3 + $0x1e0] sm:$0xff] %v2581
        %2598 = vst [vmem:[#allocation3 + $0x228] sm:$0xff] %v2582
        %2599 = vst [vmem:[#allocation3 + $0x270] sm:$0xff] %v2583
        %2600 = vst [vmem:[#allocation3 + $0x2b8] sm:$0xff] %v2584
        %2601 = vst [vmem:[#allocation3 + $0x300] sm:$0xff] %v2585
        %2602 = vst [vmem:[#allocation3 + $0x348] sm:$0xff] %v2586
        %2603 = vst [vmem:[#allocation3 + $0x390] sm:$0xff] %v2587
        %2604 = vst [vmem:[#allocation3 + $0x3d8] sm:$0xff] %v2588
        %2605 = vst [vmem:[#allocation3 + $0x420] sm:$0xff] %v2589
        %2606 = vst [vmem:[#allocation3 + $0x468] sm:$0xff] %v2590
        %v2607 = vld [vmem:[%s2542 + $0x1] sm:$0xff]
        %v2608 = vld [vmem:[%s2542 + $0x9] sm:$0xff]
        %v2609 = vld [vmem:[%s2542 + $0x19] sm:$0xff]
        %v2610 = vld [vmem:[%s2542 + $0x21] sm:$0xff]
        %v2611 = vld [vmem:[%s2542 + $0x31] sm:$0xff]
        %v2612 = vld [vmem:[%s2542 + $0x39] sm:$0xff]
        %v2613 = vld [vmem:[%s2542 + $0x49] sm:$0xff]
        %v2614 = vld [vmem:[%s2542 + $0x51] sm:$0xff]
        %v2615 = vld [vmem:[%s2542 + $0x61] sm:$0xff]
        %v2616 = vld [vmem:[%s2542 + $0x69] sm:$0xff]
        %v2617 = vld [vmem:[%s2542 + $0x79] sm:$0xff]
        %v2618 = vld [vmem:[%s2542 + $0x81] sm:$0xff]
        %v2619 = vld [vmem:[%s2542 + $0x91] sm:$0xff]
        %v2620 = vld [vmem:[%s2542 + $0x99] sm:$0xff]
        %v2621 = vld [vmem:[%s2542 + $0xa9] sm:$0xff]
        %v2622 = vld [vmem:[%s2542 + $0xb1] sm:$0xff]
        %v2623 = vld [vmem:[%s2542 + $0xc1] sm:$0xff]
        %v2624 = vld [vmem:[%s2542 + $0xc9] sm:$0xff]
        %v2625 = vld [vmem:[%s2542 + $0xd9] sm:$0xff]
        %v2626 = vld [vmem:[%s2542 + $0xe1] sm:$0xff]
        %v2627 = vld [vmem:[%s2542 + $0xf1] sm:$0xff]
        %v2628 = vld [vmem:[%s2542 + $0xf9] sm:$0xff]
        %v2629 = vld [vmem:[%s2542 + $0x109] sm:$0xff]
        %v2630 = vld [vmem:[%s2542 + $0x111] sm:$0xff]
        %v2631 = vld [vmem:[%s2542 + $0x121] sm:$0xff]
        %v2632 = vld [vmem:[%s2542 + $0x129] sm:$0xff]
        %v2633 = vld [vmem:[%s2542 + $0x139] sm:$0xff]
        %v2634 = vld [vmem:[%s2542 + $0x141] sm:$0xff]
        %v2635 = vld [vmem:[%s2542 + $0x151] sm:$0xff]
        %v2636 = vld [vmem:[%s2542 + $0x159] sm:$0xff]
        %v2637 = vld [vmem:[%s2542 + $0x169] sm:$0xff]
        %v2638 = vld [vmem:[%s2542 + $0x171] sm:$0xff]
        %v2639 = vpack.c.bf16 %v2608, %v2607
        %v2640 = vpack.c.bf16 %v2610, %v2609
        %v2641 = vpack.c.bf16 %v2612, %v2611
        %v2642 = vpack.c.bf16 %v2614, %v2613
        %v2643 = vpack.c.bf16 %v2616, %v2615
        %v2644 = vpack.c.bf16 %v2618, %v2617
        %v2645 = vpack.c.bf16 %v2620, %v2619
        %v2646 = vpack.c.bf16 %v2622, %v2621
        %v2647 = vpack.c.bf16 %v2624, %v2623
        %v2648 = vpack.c.bf16 %v2626, %v2625
        %v2649 = vpack.c.bf16 %v2628, %v2627
        %v2650 = vpack.c.bf16 %v2630, %v2629
        %v2651 = vpack.c.bf16 %v2632, %v2631
        %v2652 = vpack.c.bf16 %v2634, %v2633
        %v2653 = vpack.c.bf16 %v2636, %v2635
        %v2654 = vpack.c.bf16 %v2638, %v2637
        %2655 = vst [vmem:[#allocation3 + $0x38] sm:$0xff] %v2639
        %2656 = vst [vmem:[#allocation3 + $0x80] sm:$0xff] %v2640
        %2657 = vst [vmem:[#allocation3 + $0xc8] sm:$0xff] %v2641
        %2658 = vst [vmem:[#allocation3 + $0x110] sm:$0xff] %v2642
        %2659 = vst [vmem:[#allocation3 + $0x158] sm:$0xff] %v2643
        %2660 = vst [vmem:[#allocation3 + $0x1a0] sm:$0xff] %v2644
        %2661 = vst [vmem:[#allocation3 + $0x1e8] sm:$0xff] %v2645
        %2662 = vst [vmem:[#allocation3 + $0x230] sm:$0xff] %v2646
        %2663 = vst [vmem:[#allocation3 + $0x278] sm:$0xff] %v2647
        %2664 = vst [vmem:[#allocation3 + $0x2c0] sm:$0xff] %v2648
        %2665 = vst [vmem:[#allocation3 + $0x308] sm:$0xff] %v2649
        %2666 = vst [vmem:[#allocation3 + $0x350] sm:$0xff] %v2650
        %2667 = vst [vmem:[#allocation3 + $0x398] sm:$0xff] %v2651
        %2668 = vst [vmem:[#allocation3 + $0x3e0] sm:$0xff] %v2652
        %2669 = vst [vmem:[#allocation3 + $0x428] sm:$0xff] %v2653
        %2670 = vst [vmem:[#allocation3 + $0x470] sm:$0xff] %v2654
        %v2671 = vld [vmem:[%s2542 + $0x2] sm:$0xff]
        %v2672 = vld [vmem:[%s2542 + $0xa] sm:$0xff]
        %v2673 = vld [vmem:[%s2542 + $0x1a] sm:$0xff]
        %v2674 = vld [vmem:[%s2542 + $0x22] sm:$0xff]
        %v2675 = vld [vmem:[%s2542 + $0x32] sm:$0xff]
        %v2676 = vld [vmem:[%s2542 + $0x3a] sm:$0xff]
        %v2677 = vld [vmem:[%s2542 + $0x4a] sm:$0xff]
        %v2678 = vld [vmem:[%s2542 + $0x52] sm:$0xff]
        %v2679 = vld [vmem:[%s2542 + $0x62] sm:$0xff]
        %v2680 = vld [vmem:[%s2542 + $0x6a] sm:$0xff]
        %v2681 = vld [vmem:[%s2542 + $0x7a] sm:$0xff]
        %v2682 = vld [vmem:[%s2542 + $0x82] sm:$0xff]
        %v2683 = vld [vmem:[%s2542 + $0x92] sm:$0xff]
        %v2684 = vld [vmem:[%s2542 + $0x9a] sm:$0xff]
        %v2685 = vld [vmem:[%s2542 + $0xaa] sm:$0xff]
        %v2686 = vld [vmem:[%s2542 + $0xb2] sm:$0xff]
        %v2687 = vld [vmem:[%s2542 + $0xc2] sm:$0xff]
        %v2688 = vld [vmem:[%s2542 + $0xca] sm:$0xff]
        %v2689 = vld [vmem:[%s2542 + $0xda] sm:$0xff]
        %v2690 = vld [vmem:[%s2542 + $0xe2] sm:$0xff]
        %v2691 = vld [vmem:[%s2542 + $0xf2] sm:$0xff]
        %v2692 = vld [vmem:[%s2542 + $0xfa] sm:$0xff]
        %v2693 = vld [vmem:[%s2542 + $0x10a] sm:$0xff]
        %v2694 = vld [vmem:[%s2542 + $0x112] sm:$0xff]
        %v2695 = vld [vmem:[%s2542 + $0x122] sm:$0xff]
        %v2696 = vld [vmem:[%s2542 + $0x12a] sm:$0xff]
        %v2697 = vld [vmem:[%s2542 + $0x13a] sm:$0xff]
        %v2698 = vld [vmem:[%s2542 + $0x142] sm:$0xff]
        %v2699 = vld [vmem:[%s2542 + $0x152] sm:$0xff]
        %v2700 = vld [vmem:[%s2542 + $0x15a] sm:$0xff]
        %v2701 = vld [vmem:[%s2542 + $0x16a] sm:$0xff]
        %v2702 = vld [vmem:[%s2542 + $0x172] sm:$0xff]
        %v2703 = vpack.c.bf16 %v2672, %v2671
        %v2704 = vpack.c.bf16 %v2674, %v2673
        %v2705 = vpack.c.bf16 %v2676, %v2675
        %v2706 = vpack.c.bf16 %v2678, %v2677
        %v2707 = vpack.c.bf16 %v2680, %v2679
        %v2708 = vpack.c.bf16 %v2682, %v2681
        %v2709 = vpack.c.bf16 %v2684, %v2683
        %v2710 = vpack.c.bf16 %v2686, %v2685
        %v2711 = vpack.c.bf16 %v2688, %v2687
        %v2712 = vpack.c.bf16 %v2690, %v2689
        %v2713 = vpack.c.bf16 %v2692, %v2691
        %v2714 = vpack.c.bf16 %v2694, %v2693
        %v2715 = vpack.c.bf16 %v2696, %v2695
        %v2716 = vpack.c.bf16 %v2698, %v2697
        %v2717 = vpack.c.bf16 %v2700, %v2699
        %v2718 = vpack.c.bf16 %v2702, %v2701
        %2719 = vst [vmem:[#allocation3 + $0x40] sm:$0xff] %v2703
        %2720 = vst [vmem:[#allocation3 + $0x88] sm:$0xff] %v2704
        %2721 = vst [vmem:[#allocation3 + $0xd0] sm:$0xff] %v2705
        %2722 = vst [vmem:[#allocation3 + $0x118] sm:$0xff] %v2706
        %2723 = vst [vmem:[#allocation3 + $0x160] sm:$0xff] %v2707
        %2724 = vst [vmem:[#allocation3 + $0x1a8] sm:$0xff] %v2708
        %2725 = vst [vmem:[#allocation3 + $0x1f0] sm:$0xff] %v2709
        %2726 = vst [vmem:[#allocation3 + $0x238] sm:$0xff] %v2710
        %2727 = vst [vmem:[#allocation3 + $0x280] sm:$0xff] %v2711
        %2728 = vst [vmem:[#allocation3 + $0x2c8] sm:$0xff] %v2712
        %2729 = vst [vmem:[#allocation3 + $0x310] sm:$0xff] %v2713
        %2730 = vst [vmem:[#allocation3 + $0x358] sm:$0xff] %v2714
        %2731 = vst [vmem:[#allocation3 + $0x3a0] sm:$0xff] %v2715
        %2732 = vst [vmem:[#allocation3 + $0x3e8] sm:$0xff] %v2716
        %2733 = vst [vmem:[#allocation3 + $0x430] sm:$0xff] %v2717
        %2734 = vst [vmem:[#allocation3 + $0x478] sm:$0xff] %v2718
        %v2735 = vld [vmem:[#allocation3] sm:$0xff]
        %v2736 = vld [vmem:[#allocation3 + $0x8] sm:$0xff]
        %v2737 = vld [vmem:[#allocation3 + $0x10] sm:$0xff]
        %v2738 = vld [vmem:[#allocation3 + $0x18] sm:$0xff]
        %v2739 = vld [vmem:[#allocation3 + $0x20] sm:$0xff]
        %v2740 = vld [vmem:[#allocation3 + $0x28] sm:$0xff]
        %v2741 = vld [vmem:[#allocation3 + $0x30] sm:$0xff]
        %v2742 = vld [vmem:[#allocation3 + $0x38] sm:$0xff]
        %v2743 = vld [vmem:[#allocation3 + $0x40] sm:$0xff]
        %v2744 = vld [vmem:[#allocation3 + $0x48] sm:$0xff]
        %v2745 = vld [vmem:[#allocation3 + $0x50] sm:$0xff]
        %v2746 = vld [vmem:[#allocation3 + $0x58] sm:$0xff]
        %v2747 = vld [vmem:[#allocation3 + $0x60] sm:$0xff]
        %v2748 = vld [vmem:[#allocation3 + $0x68] sm:$0xff]
        %v2749 = vld [vmem:[#allocation3 + $0x70] sm:$0xff]
        %v2750 = vld [vmem:[#allocation3 + $0x78] sm:$0xff]
        %v2751 = vld [vmem:[#allocation3 + $0x80] sm:$0xff]
        %v2752 = vld [vmem:[#allocation3 + $0x88] sm:$0xff]
        %v2753 = vld [vmem:[#allocation3 + $0x90] sm:$0xff]
        %v2754 = vld [vmem:[#allocation3 + $0x98] sm:$0xff]
        %v2755 = vld [vmem:[#allocation3 + $0xa0] sm:$0xff]
        %v2756 = vld [vmem:[#allocation3 + $0xa8] sm:$0xff]
        %v2757 = vld [vmem:[#allocation3 + $0xb0] sm:$0xff]
        %v2758 = vld [vmem:[#allocation3 + $0xb8] sm:$0xff]
        %v2759 = vld [vmem:[#allocation3 + $0xc0] sm:$0xff]
        %v2760 = vld [vmem:[#allocation3 + $0xc8] sm:$0xff]
        %v2761 = vld [vmem:[#allocation3 + $0xd0] sm:$0xff]
        %v2762 = vld [vmem:[#allocation3 + $0xd8] sm:$0xff]
        %v2763 = vld [vmem:[#allocation3 + $0xe0] sm:$0xff]
        %v2764 = vld [vmem:[#allocation3 + $0xe8] sm:$0xff]
        %v2765 = vld [vmem:[#allocation3 + $0xf0] sm:$0xff]
        %v2766 = vld [vmem:[#allocation3 + $0xf8] sm:$0xff]
        %v2767 = vld [vmem:[#allocation3 + $0x100] sm:$0xff]
        %v2768 = vld [vmem:[#allocation3 + $0x108] sm:$0xff]
        %v2769 = vld [vmem:[#allocation3 + $0x110] sm:$0xff]
        %v2770 = vld [vmem:[#allocation3 + $0x118] sm:$0xff]
        %v2771 = vld [vmem:[#allocation3 + $0x120] sm:$0xff]
        %v2772 = vld [vmem:[#allocation3 + $0x128] sm:$0xff]
        %v2773 = vld [vmem:[#allocation3 + $0x130] sm:$0xff]
        %v2774 = vld [vmem:[#allocation3 + $0x138] sm:$0xff]
        %v2775 = vld [vmem:[#allocation3 + $0x140] sm:$0xff]
        %v2776 = vld [vmem:[#allocation3 + $0x148] sm:$0xff]
        %v2777 = vld [vmem:[#allocation3 + $0x150] sm:$0xff]
        %v2778 = vld [vmem:[#allocation3 + $0x158] sm:$0xff]
        %v2779 = vld [vmem:[#allocation3 + $0x160] sm:$0xff]
        %v2780 = vld [vmem:[#allocation3 + $0x168] sm:$0xff]
        %v2781 = vld [vmem:[#allocation3 + $0x170] sm:$0xff]
        %v2782 = vld [vmem:[#allocation3 + $0x178] sm:$0xff]
        %v2783 = vld [vmem:[#allocation3 + $0x180] sm:$0xff]
        %v2784 = vld [vmem:[#allocation3 + $0x188] sm:$0xff]
        %v2785 = vld [vmem:[#allocation3 + $0x190] sm:$0xff]
        %v2786 = vld [vmem:[#allocation3 + $0x198] sm:$0xff]
        %v2787 = vld [vmem:[#allocation3 + $0x1a0] sm:$0xff]
        %v2788 = vld [vmem:[#allocation3 + $0x1a8] sm:$0xff]
        %v2789 = vld [vmem:[#allocation3 + $0x1b0] sm:$0xff]
        %v2790 = vld [vmem:[#allocation3 + $0x1b8] sm:$0xff]
        %v2791 = vld [vmem:[#allocation3 + $0x1c0] sm:$0xff]
        %v2792 = vld [vmem:[#allocation3 + $0x1c8] sm:$0xff]
        %v2793 = vld [vmem:[#allocation3 + $0x1d0] sm:$0xff]
        %v2794 = vld [vmem:[#allocation3 + $0x1d8] sm:$0xff]
        %v2795 = vld [vmem:[#allocation3 + $0x1e0] sm:$0xff]
        %v2796 = vld [vmem:[#allocation3 + $0x1e8] sm:$0xff]
        %v2797 = vld [vmem:[#allocation3 + $0x1f0] sm:$0xff]
        %v2798 = vld [vmem:[#allocation3 + $0x1f8] sm:$0xff]
        %v2799 = vld [vmem:[#allocation3 + $0x200] sm:$0xff]
        %v2800 = vld [vmem:[#allocation3 + $0x208] sm:$0xff]
        %v2801 = vld [vmem:[#allocation3 + $0x210] sm:$0xff]
        %v2802 = vld [vmem:[#allocation3 + $0x218] sm:$0xff]
        %v2803 = vld [vmem:[#allocation3 + $0x220] sm:$0xff]
        %v2804 = vld [vmem:[#allocation3 + $0x228] sm:$0xff]
        %v2805 = vld [vmem:[#allocation3 + $0x230] sm:$0xff]
        %v2806 = vld [vmem:[#allocation3 + $0x238] sm:$0xff]
        %v2807 = vld [vmem:[#allocation3 + $0x240] sm:$0xff]
        %v2808 = vld [vmem:[#allocation3 + $0x248] sm:$0xff]
        %v2809 = vld [vmem:[#allocation3 + $0x250] sm:$0xff]
        %v2810 = vld [vmem:[#allocation3 + $0x258] sm:$0xff]
        %v2811 = vld [vmem:[#allocation3 + $0x260] sm:$0xff]
        %v2812 = vld [vmem:[#allocation3 + $0x268] sm:$0xff]
        %v2813 = vld [vmem:[#allocation3 + $0x270] sm:$0xff]
        %v2814 = vld [vmem:[#allocation3 + $0x278] sm:$0xff]
        %v2815 = vld [vmem:[#allocation3 + $0x280] sm:$0xff]
        %v2816 = vld [vmem:[#allocation3 + $0x288] sm:$0xff]
        %v2817 = vld [vmem:[#allocation3 + $0x290] sm:$0xff]
        %v2818 = vld [vmem:[#allocation3 + $0x298] sm:$0xff]
        %v2819 = vld [vmem:[#allocation3 + $0x2a0] sm:$0xff]
        %v2820 = vld [vmem:[#allocation3 + $0x2a8] sm:$0xff]
        %v2821 = vld [vmem:[#allocation3 + $0x2b0] sm:$0xff]
        %v2822 = vld [vmem:[#allocation3 + $0x2b8] sm:$0xff]
        %v2823 = vld [vmem:[#allocation3 + $0x2c0] sm:$0xff]
        %v2824 = vld [vmem:[#allocation3 + $0x2c8] sm:$0xff]
        %v2825 = vld [vmem:[#allocation3 + $0x2d0] sm:$0xff]
        %v2826 = vld [vmem:[#allocation3 + $0x2d8] sm:$0xff]
        %v2827 = vld [vmem:[#allocation3 + $0x2e0] sm:$0xff]
        %v2828 = vld [vmem:[#allocation3 + $0x2e8] sm:$0xff]
        %v2829 = vld [vmem:[#allocation3 + $0x2f0] sm:$0xff]
        %v2830 = vld [vmem:[#allocation3 + $0x2f8] sm:$0xff]
        %v2831 = vld [vmem:[#allocation3 + $0x300] sm:$0xff]
        %v2832 = vld [vmem:[#allocation3 + $0x308] sm:$0xff]
        %v2833 = vld [vmem:[#allocation3 + $0x310] sm:$0xff]
        %v2834 = vld [vmem:[#allocation3 + $0x318] sm:$0xff]
        %v2835 = vld [vmem:[#allocation3 + $0x320] sm:$0xff]
        %v2836 = vld [vmem:[#allocation3 + $0x328] sm:$0xff]
        %v2837 = vld [vmem:[#allocation3 + $0x330] sm:$0xff]
        %v2838 = vld [vmem:[#allocation3 + $0x338] sm:$0xff]
        %v2839 = vld [vmem:[#allocation3 + $0x340] sm:$0xff]
        %v2840 = vld [vmem:[#allocation3 + $0x348] sm:$0xff]
        %v2841 = vld [vmem:[#allocation3 + $0x350] sm:$0xff]
        %v2842 = vld [vmem:[#allocation3 + $0x358] sm:$0xff]
        %v2843 = vld [vmem:[#allocation3 + $0x360] sm:$0xff]
        %v2844 = vld [vmem:[#allocation3 + $0x368] sm:$0xff]
        %v2845 = vld [vmem:[#allocation3 + $0x370] sm:$0xff]
        %v2846 = vld [vmem:[#allocation3 + $0x378] sm:$0xff]
        %v2847 = vld [vmem:[#allocation3 + $0x380] sm:$0xff]
        %v2848 = vld [vmem:[#allocation3 + $0x388] sm:$0xff]
        %v2849 = vld [vmem:[#allocation3 + $0x390] sm:$0xff]
        %v2850 = vld [vmem:[#allocation3 + $0x398] sm:$0xff]
        %v2851 = vld [vmem:[#allocation3 + $0x3a0] sm:$0xff]
        %v2852 = vld [vmem:[#allocation3 + $0x3a8] sm:$0xff]
        %v2853 = vld [vmem:[#allocation3 + $0x3b0] sm:$0xff]
        %v2854 = vld [vmem:[#allocation3 + $0x3b8] sm:$0xff]
        %v2855 = vld [vmem:[#allocation3 + $0x3c0] sm:$0xff]
        %v2856 = vld [vmem:[#allocation3 + $0x3c8] sm:$0xff]
        %v2857 = vld [vmem:[#allocation3 + $0x3d0] sm:$0xff]
        %v2858 = vld [vmem:[#allocation3 + $0x3d8] sm:$0xff]
        %v2859 = vld [vmem:[#allocation3 + $0x3e0] sm:$0xff]
        %v2860 = vld [vmem:[#allocation3 + $0x3e8] sm:$0xff]
        %v2861 = vld [vmem:[#allocation3 + $0x3f0] sm:$0xff]
        %v2862 = vld [vmem:[#allocation3 + $0x3f8] sm:$0xff]
        %v2863 = vld [vmem:[#allocation3 + $0x400] sm:$0xff]
        %v2864 = vld [vmem:[#allocation3 + $0x408] sm:$0xff]
        %v2865 = vld [vmem:[#allocation3 + $0x410] sm:$0xff]
        %v2866 = vld [vmem:[#allocation3 + $0x418] sm:$0xff]
        %v2867 = vld [vmem:[#allocation3 + $0x420] sm:$0xff]
        %v2868 = vld [vmem:[#allocation3 + $0x428] sm:$0xff]
        %v2869 = vld [vmem:[#allocation3 + $0x430] sm:$0xff]
        %v2870 = vld [vmem:[#allocation3 + $0x438] sm:$0xff]
        %v2871 = vld [vmem:[#allocation3 + $0x440] sm:$0xff]
        %v2872 = vld [vmem:[#allocation3 + $0x448] sm:$0xff]
        %v2873 = vld [vmem:[#allocation3 + $0x450] sm:$0xff]
        %v2874 = vld [vmem:[#allocation3 + $0x458] sm:$0xff]
        %v2875 = vld [vmem:[#allocation3 + $0x460] sm:$0xff]
        %v2876 = vld [vmem:[#allocation3 + $0x468] sm:$0xff]
        %v2877 = vld [vmem:[#allocation3 + $0x470] sm:$0xff]
        %v2878 = vld [vmem:[#allocation3 + $0x478] sm:$0xff]
        %v2879 = vld [vmem:[#allocation4] sm:$0xf]
        %v2880 = vld [vmem:[#allocation4 + $0x4] sm:$0xf]
        %v2881 = vld [vmem:[#allocation4 + $0x8] sm:$0xf]
        %v2882 = vld [vmem:[#allocation4 + $0xc] sm:$0xf]
        %v2883 = vld [vmem:[#allocation4 + $0x10] sm:$0xf]
        %v2884 = vld [vmem:[#allocation4 + $0x14] sm:$0xf]
        %v2885 = vld [vmem:[#allocation4 + $0x18] sm:$0xf]
        %v2886 = vld [vmem:[#allocation4 + $0x1c] sm:$0xf]
        %v2887 = vld [vmem:[#allocation4 + $0x20] sm:$0xf]
        %v2888 = vld [vmem:[#allocation4 + $0x24] sm:$0xf]
        %v2889 = vld [vmem:[#allocation4 + $0x28] sm:$0xf]
        %v2890 = vld [vmem:[#allocation4 + $0x2c] sm:$0xf]
        %v2891 = vld [vmem:[#allocation4 + $0x30] sm:$0xf]
        %v2892 = vld [vmem:[#allocation4 + $0x34] sm:$0xf]
        %v2893 = vld [vmem:[#allocation4 + $0x38] sm:$0xf]
        %v2894 = vld [vmem:[#allocation4 + $0x3c] sm:$0xf]
        %v2895 = vld [vmem:[#allocation4 + $0x40] sm:$0xf]
        %v2896 = vld [vmem:[#allocation4 + $0x44] sm:$0xf]
        %v2897 = vld [vmem:[#allocation4 + $0x48] sm:$0xf]
        %v2898 = vld [vmem:[#allocation4 + $0x4c] sm:$0xf]
        %v2899 = vld [vmem:[#allocation4 + $0x50] sm:$0xf]
        %v2900 = vld [vmem:[#allocation4 + $0x54] sm:$0xf]
        %v2901 = vld [vmem:[#allocation4 + $0x58] sm:$0xf]
        %v2902 = vld [vmem:[#allocation4 + $0x5c] sm:$0xf]
        %v2903 = vld [vmem:[#allocation4 + $0x60] sm:$0xf]
        %v2904 = vld [vmem:[#allocation4 + $0x64] sm:$0xf]
        %v2905 = vld [vmem:[#allocation4 + $0x68] sm:$0xf]
        %v2906 = vld [vmem:[#allocation4 + $0x6c] sm:$0xf]
        %v2907 = vld [vmem:[#allocation4 + $0x70] sm:$0xf]
        %v2908 = vld [vmem:[#allocation4 + $0x74] sm:$0xf]
        %v2909 = vld [vmem:[#allocation4 + $0x78] sm:$0xf]
        %v2910 = vld [vmem:[#allocation4 + $0x7c] sm:$0xf]
        %v2911 = vld [vmem:[#allocation4 + $0x80] sm:$0xf]
        %v2912 = vld [vmem:[#allocation4 + $0x84] sm:$0xf]
        %v2913 = vld [vmem:[#allocation4 + $0x88] sm:$0xf]
        %v2914 = vld [vmem:[#allocation4 + $0x8c] sm:$0xf]
        %v2915 = vld [vmem:[#allocation4 + $0x90] sm:$0xf]
        %v2916 = vld [vmem:[#allocation4 + $0x94] sm:$0xf]
        %v2917 = vld [vmem:[#allocation4 + $0x98] sm:$0xf]
        %v2918 = vld [vmem:[#allocation4 + $0x9c] sm:$0xf]
        %v2919 = vld [vmem:[#allocation4 + $0xa0] sm:$0xf]
        %v2920 = vld [vmem:[#allocation4 + $0xa4] sm:$0xf]
        %v2921 = vld [vmem:[#allocation4 + $0xa8] sm:$0xf]
        %v2922 = vld [vmem:[#allocation4 + $0xac] sm:$0xf]
        %v2923 = vld [vmem:[#allocation4 + $0xb0] sm:$0xf]
        %v2924 = vld [vmem:[#allocation4 + $0xb4] sm:$0xf]
        %v2925 = vld [vmem:[#allocation4 + $0xb8] sm:$0xf]
        %v2926 = vld [vmem:[#allocation4 + $0xbc] sm:$0xf]
        %v2927 = vld [vmem:[#allocation4 + $0xc0] sm:$0xf]
        %v2928 = vld [vmem:[#allocation4 + $0xc4] sm:$0xf]
        %v2929 = vld [vmem:[#allocation4 + $0xc8] sm:$0xf]
        %v2930 = vld [vmem:[#allocation4 + $0xcc] sm:$0xf]
        %v2931 = vld [vmem:[#allocation4 + $0xd0] sm:$0xf]
        %v2932 = vld [vmem:[#allocation4 + $0xd4] sm:$0xf]
        %v2933 = vld [vmem:[#allocation4 + $0xd8] sm:$0xf]
        %v2934 = vld [vmem:[#allocation4 + $0xdc] sm:$0xf]
        %v2935 = vld [vmem:[#allocation4 + $0xe0] sm:$0xf]
        %v2936 = vld [vmem:[#allocation4 + $0xe4] sm:$0xf]
        %v2937 = vld [vmem:[#allocation4 + $0xe8] sm:$0xf]
        %v2938 = vld [vmem:[#allocation4 + $0xec] sm:$0xf]
        %v2939 = vld [vmem:[#allocation4 + $0xf0] sm:$0xf]
        %v2940 = vld [vmem:[#allocation4 + $0xf4] sm:$0xf]
        %v2941 = vld [vmem:[#allocation4 + $0xf8] sm:$0xf]
        %v2942 = vld [vmem:[#allocation4 + $0xfc] sm:$0xf]
        %v2943 = vld [vmem:[#allocation4 + $0x100] sm:$0xf]
        %v2944 = vld [vmem:[#allocation4 + $0x104] sm:$0xf]
        %v2945 = vld [vmem:[#allocation4 + $0x108] sm:$0xf]
        %v2946 = vld [vmem:[#allocation4 + $0x10c] sm:$0xf]
        %v2947 = vld [vmem:[#allocation4 + $0x110] sm:$0xf]
        %v2948 = vld [vmem:[#allocation4 + $0x114] sm:$0xf]
        %v2949 = vld [vmem:[#allocation4 + $0x118] sm:$0xf]
        %v2950 = vld [vmem:[#allocation4 + $0x11c] sm:$0xf]
        %v2951 = vld [vmem:[#allocation4 + $0x120] sm:$0xf]
        %v2952 = vld [vmem:[#allocation4 + $0x124] sm:$0xf]
        %v2953 = vld [vmem:[#allocation4 + $0x128] sm:$0xf]
        %v2954 = vld [vmem:[#allocation4 + $0x12c] sm:$0xf]
        %v2955 = vld [vmem:[#allocation4 + $0x130] sm:$0xf]
        %v2956 = vld [vmem:[#allocation4 + $0x134] sm:$0xf]
        %v2957 = vld [vmem:[#allocation4 + $0x138] sm:$0xf]
        %v2958 = vld [vmem:[#allocation4 + $0x13c] sm:$0xf]
        %v2959 = vld [vmem:[#allocation4 + $0x140] sm:$0xf]
        %v2960 = vld [vmem:[#allocation4 + $0x144] sm:$0xf]
        %v2961 = vld [vmem:[#allocation4 + $0x148] sm:$0xf]
        %v2962 = vld [vmem:[#allocation4 + $0x14c] sm:$0xf]
        %v2963 = vld [vmem:[#allocation4 + $0x150] sm:$0xf]
        %v2964 = vld [vmem:[#allocation4 + $0x154] sm:$0xf]
        %v2965 = vld [vmem:[#allocation4 + $0x158] sm:$0xf]
        %v2966 = vld [vmem:[#allocation4 + $0x15c] sm:$0xf]
        %v2967 = vld [vmem:[#allocation4 + $0x160] sm:$0xf]
        %v2968 = vld [vmem:[#allocation4 + $0x164] sm:$0xf]
        %v2969 = vld [vmem:[#allocation4 + $0x168] sm:$0xf]
        %v2970 = vld [vmem:[#allocation4 + $0x16c] sm:$0xf]
        %v2971 = vld [vmem:[#allocation4 + $0x170] sm:$0xf]
        %v2972 = vld [vmem:[#allocation4 + $0x174] sm:$0xf]
        %v2973 = vld [vmem:[#allocation4 + $0x178] sm:$0xf]
        %v2974 = vld [vmem:[#allocation4 + $0x17c] sm:$0xf]
        %v2975 = vld [vmem:[#allocation4 + $0x180] sm:$0xf]
        %v2976 = vld [vmem:[#allocation4 + $0x184] sm:$0xf]
        %v2977 = vld [vmem:[#allocation4 + $0x188] sm:$0xf]
        %v2978 = vld [vmem:[#allocation4 + $0x18c] sm:$0xf]
        %v2979 = vld [vmem:[#allocation4 + $0x190] sm:$0xf]
        %v2980 = vld [vmem:[#allocation4 + $0x194] sm:$0xf]
        %v2981 = vld [vmem:[#allocation4 + $0x198] sm:$0xf]
        %v2982 = vld [vmem:[#allocation4 + $0x19c] sm:$0xf]
        %v2983 = vld [vmem:[#allocation4 + $0x1a0] sm:$0xf]
        %v2984 = vld [vmem:[#allocation4 + $0x1a4] sm:$0xf]
        %v2985 = vld [vmem:[#allocation4 + $0x1a8] sm:$0xf]
        %v2986 = vld [vmem:[#allocation4 + $0x1ac] sm:$0xf]
        %v2987 = vld [vmem:[#allocation4 + $0x1b0] sm:$0xf]
        %v2988 = vld [vmem:[#allocation4 + $0x1b4] sm:$0xf]
        %v2989 = vld [vmem:[#allocation4 + $0x1b8] sm:$0xf]
        %v2990 = vld [vmem:[#allocation4 + $0x1bc] sm:$0xf]
        %v2991 = vld [vmem:[#allocation4 + $0x1c0] sm:$0xf]
        %v2992 = vld [vmem:[#allocation4 + $0x1c4] sm:$0xf]
        %v2993 = vld [vmem:[#allocation4 + $0x1c8] sm:$0xf]
        %v2994 = vld [vmem:[#allocation4 + $0x1cc] sm:$0xf]
        %v2995 = vld [vmem:[#allocation4 + $0x1d0] sm:$0xf]
        %v2996 = vld [vmem:[#allocation4 + $0x1d4] sm:$0xf]
        %v2997 = vld [vmem:[#allocation4 + $0x1d8] sm:$0xf]
        %v2998 = vld [vmem:[#allocation4 + $0x1dc] sm:$0xf]
        %v2999 = vld [vmem:[#allocation4 + $0x1e0] sm:$0xf]
        %v3000 = vld [vmem:[#allocation4 + $0x1e4] sm:$0xf]
        %v3001 = vld [vmem:[#allocation4 + $0x1e8] sm:$0xf]
        %v3002 = vld [vmem:[#allocation4 + $0x1ec] sm:$0xf]
        %v3003 = vld [vmem:[#allocation4 + $0x1f0] sm:$0xf]
        %v3004 = vld [vmem:[#allocation4 + $0x1f4] sm:$0xf]
        %v3005 = vld [vmem:[#allocation4 + $0x1f8] sm:$0xf]
        %v3006 = vld [vmem:[#allocation4 + $0x1fc] sm:$0xf]
        %v3007 = vld [vmem:[#allocation4 + $0x200] sm:$0xf]
        %v3008 = vld [vmem:[#allocation4 + $0x204] sm:$0xf]
        %v3009 = vld [vmem:[#allocation4 + $0x208] sm:$0xf]
        %v3010 = vld [vmem:[#allocation4 + $0x20c] sm:$0xf]
        %v3011 = vld [vmem:[#allocation4 + $0x210] sm:$0xf]
        %v3012 = vld [vmem:[#allocation4 + $0x214] sm:$0xf]
        %v3013 = vld [vmem:[#allocation4 + $0x218] sm:$0xf]
        %v3014 = vld [vmem:[#allocation4 + $0x21c] sm:$0xf]
        %v3015 = vld [vmem:[#allocation4 + $0x220] sm:$0xf]
        %v3016 = vld [vmem:[#allocation4 + $0x224] sm:$0xf]
        %v3017 = vld [vmem:[#allocation4 + $0x228] sm:$0xf]
        %v3018 = vld [vmem:[#allocation4 + $0x22c] sm:$0xf]
        %v3019 = vld [vmem:[#allocation4 + $0x230] sm:$0xf]
        %v3020 = vld [vmem:[#allocation4 + $0x234] sm:$0xf]
        %v3021 = vld [vmem:[#allocation4 + $0x238] sm:$0xf]
        %v3022 = vld [vmem:[#allocation4 + $0x23c] sm:$0xf]
        %v3167 = vunpack.c.l.b16 %v2879
        %v3168 = vunpack.c.l.b16 %v2880
        %v3169 = vunpack.c.l.b16 %v2881
        %v3170 = vunpack.c.l.b16 %v2882
        %v3171 = vunpack.c.l.b16 %v2883
        %v3172 = vunpack.c.l.b16 %v2884
        %v3173 = vunpack.c.l.b16 %v2885
        %v3174 = vunpack.c.l.b16 %v2886
        %v3175 = vunpack.c.l.b16 %v2887
        %v3176 = vunpack.c.l.b16 %v2888
        %v3177 = vunpack.c.l.b16 %v2889
        %v3178 = vunpack.c.l.b16 %v2890
        %v3179 = vunpack.c.l.b16 %v2891
        %v3180 = vunpack.c.l.b16 %v2892
        %v3181 = vunpack.c.l.b16 %v2893
        %v3182 = vunpack.c.l.b16 %v2894
        %v3183 = vunpack.c.l.b16 %v2895
        %v3184 = vunpack.c.l.b16 %v2896
        %v3185 = vunpack.c.l.b16 %v2897
        %v3186 = vunpack.c.l.b16 %v2898
        %v3187 = vunpack.c.l.b16 %v2899
        %v3188 = vunpack.c.l.b16 %v2900
        %v3189 = vunpack.c.l.b16 %v2901
        %v3190 = vunpack.c.l.b16 %v2902
        %v3191 = vunpack.c.l.b16 %v2903
        %v3192 = vunpack.c.l.b16 %v2904
        %v3193 = vunpack.c.l.b16 %v2905
        %v3194 = vunpack.c.l.b16 %v2906
        %v3195 = vunpack.c.l.b16 %v2907
        %v3196 = vunpack.c.l.b16 %v2908
        %v3197 = vunpack.c.l.b16 %v2909
        %v3198 = vunpack.c.l.b16 %v2910
        %v3199 = vunpack.c.l.b16 %v2911
        %v3200 = vunpack.c.l.b16 %v2912
        %v3201 = vunpack.c.l.b16 %v2913
        %v3202 = vunpack.c.l.b16 %v2914
        %v3203 = vunpack.c.l.b16 %v2915
        %v3204 = vunpack.c.l.b16 %v2916
        %v3205 = vunpack.c.l.b16 %v2917
        %v3206 = vunpack.c.l.b16 %v2918
        %v3207 = vunpack.c.l.b16 %v2919
        %v3208 = vunpack.c.l.b16 %v2920
        %v3209 = vunpack.c.l.b16 %v2921
        %v3210 = vunpack.c.l.b16 %v2922
        %v3211 = vunpack.c.l.b16 %v2923
        %v3212 = vunpack.c.l.b16 %v2924
        %v3213 = vunpack.c.l.b16 %v2925
        %v3214 = vunpack.c.l.b16 %v2926
        %v3215 = vunpack.c.l.b16 %v2927
        %v3216 = vunpack.c.l.b16 %v2928
        %v3217 = vunpack.c.l.b16 %v2929
        %v3218 = vunpack.c.l.b16 %v2930
        %v3219 = vunpack.c.l.b16 %v2931
        %v3220 = vunpack.c.l.b16 %v2932
        %v3221 = vunpack.c.l.b16 %v2933
        %v3222 = vunpack.c.l.b16 %v2934
        %v3223 = vunpack.c.l.b16 %v2935
        %v3224 = vunpack.c.l.b16 %v2936
        %v3225 = vunpack.c.l.b16 %v2937
        %v3226 = vunpack.c.l.b16 %v2938
        %v3227 = vunpack.c.l.b16 %v2939
        %v3228 = vunpack.c.l.b16 %v2940
        %v3229 = vunpack.c.l.b16 %v2941
        %v3230 = vunpack.c.l.b16 %v2942
        %v3231 = vunpack.c.l.b16 %v2943
        %v3232 = vunpack.c.l.b16 %v2944
        %v3233 = vunpack.c.l.b16 %v2945
        %v3234 = vunpack.c.l.b16 %v2946
        %v3235 = vunpack.c.l.b16 %v2947
        %v3236 = vunpack.c.l.b16 %v2948
        %v3237 = vunpack.c.l.b16 %v2949
        %v3238 = vunpack.c.l.b16 %v2950
        %v3239 = vunpack.c.l.b16 %v2951
        %v3240 = vunpack.c.l.b16 %v2952
        %v3241 = vunpack.c.l.b16 %v2953
        %v3242 = vunpack.c.l.b16 %v2954
        %v3243 = vunpack.c.l.b16 %v2955
        %v3244 = vunpack.c.l.b16 %v2956
        %v3245 = vunpack.c.l.b16 %v2957
        %v3246 = vunpack.c.l.b16 %v2958
        %v3247 = vunpack.c.l.b16 %v2959
        %v3248 = vunpack.c.l.b16 %v2960
        %v3249 = vunpack.c.l.b16 %v2961
        %v3250 = vunpack.c.l.b16 %v2962
        %v3251 = vunpack.c.l.b16 %v2963
        %v3252 = vunpack.c.l.b16 %v2964
        %v3253 = vunpack.c.l.b16 %v2965
        %v3254 = vunpack.c.l.b16 %v2966
        %v3255 = vunpack.c.l.b16 %v2967
        %v3256 = vunpack.c.l.b16 %v2968
        %v3257 = vunpack.c.l.b16 %v2969
        %v3258 = vunpack.c.l.b16 %v2970
        %v3259 = vunpack.c.l.b16 %v2971
        %v3260 = vunpack.c.l.b16 %v2972
        %v3261 = vunpack.c.l.b16 %v2973
        %v3262 = vunpack.c.l.b16 %v2974
        %v3263 = vunpack.c.l.b16 %v2975
        %v3264 = vunpack.c.l.b16 %v2976
        %v3265 = vunpack.c.l.b16 %v2977
        %v3266 = vunpack.c.l.b16 %v2978
        %v3267 = vunpack.c.l.b16 %v2979
        %v3268 = vunpack.c.l.b16 %v2980
        %v3269 = vunpack.c.l.b16 %v2981
        %v3270 = vunpack.c.l.b16 %v2982
        %v3271 = vunpack.c.l.b16 %v2983
        %v3272 = vunpack.c.l.b16 %v2984
        %v3273 = vunpack.c.l.b16 %v2985
        %v3274 = vunpack.c.l.b16 %v2986
        %v3275 = vunpack.c.l.b16 %v2987
        %v3276 = vunpack.c.l.b16 %v2988
        %v3277 = vunpack.c.l.b16 %v2989
        %v3278 = vunpack.c.l.b16 %v2990
        %v3279 = vunpack.c.l.b16 %v2991
        %v3280 = vunpack.c.l.b16 %v2992
        %v3281 = vunpack.c.l.b16 %v2993
        %v3282 = vunpack.c.l.b16 %v2994
        %v3283 = vunpack.c.l.b16 %v2995
        %v3284 = vunpack.c.l.b16 %v2996
        %v3285 = vunpack.c.l.b16 %v2997
        %v3286 = vunpack.c.l.b16 %v2998
        %v3287 = vunpack.c.l.b16 %v2999
        %v3288 = vunpack.c.l.b16 %v3000
        %v3289 = vunpack.c.l.b16 %v3001
        %v3290 = vunpack.c.l.b16 %v3002
        %v3291 = vunpack.c.l.b16 %v3003
        %v3292 = vunpack.c.l.b16 %v3004
        %v3293 = vunpack.c.l.b16 %v3005
        %v3294 = vunpack.c.l.b16 %v3006
        %v3295 = vunpack.c.l.b16 %v3007
        %v3296 = vunpack.c.l.b16 %v3008
        %v3297 = vunpack.c.l.b16 %v3009
        %v3298 = vunpack.c.l.b16 %v3010
        %v3299 = vunpack.c.l.b16 %v3011
        %v3300 = vunpack.c.l.b16 %v3012
        %v3301 = vunpack.c.l.b16 %v3013
        %v3302 = vunpack.c.l.b16 %v3014
        %v3303 = vunpack.c.l.b16 %v3015
        %v3304 = vunpack.c.l.b16 %v3016
        %v3305 = vunpack.c.l.b16 %v3017
        %v3306 = vunpack.c.l.b16 %v3018
        %v3307 = vunpack.c.l.b16 %v3019
        %v3308 = vunpack.c.l.b16 %v3020
        %v3309 = vunpack.c.l.b16 %v3021
        %v3310 = vunpack.c.l.b16 %v3022
        %v3311 = vpack.c.b16 %v3168, %v3167
        %v3312 = vpack.c.b16 %v3170, %v3169
        %v3313 = vpack.c.b16 %v3172, %v3171
        %v3314 = vpack.c.b16 %v3174, %v3173
        %v3315 = vpack.c.b16 %v3176, %v3175
        %v3316 = vpack.c.b16 %v3178, %v3177
        %v3317 = vpack.c.b16 %v3180, %v3179
        %v3318 = vpack.c.b16 %v3182, %v3181
        %v3319 = vpack.c.b16 %v3184, %v3183
        %v3320 = vpack.c.b16 %v3186, %v3185
        %v3321 = vpack.c.b16 %v3188, %v3187
        %v3322 = vpack.c.b16 %v3190, %v3189
        %v3323 = vpack.c.b16 %v3192, %v3191
        %v3324 = vpack.c.b16 %v3194, %v3193
        %v3325 = vpack.c.b16 %v3196, %v3195
        %v3326 = vpack.c.b16 %v3198, %v3197
        %v3327 = vpack.c.b16 %v3200, %v3199
        %v3328 = vpack.c.b16 %v3202, %v3201
        %v3329 = vpack.c.b16 %v3204, %v3203
        %v3330 = vpack.c.b16 %v3206, %v3205
        %v3331 = vpack.c.b16 %v3208, %v3207
        %v3332 = vpack.c.b16 %v3210, %v3209
        %v3333 = vpack.c.b16 %v3212, %v3211
        %v3334 = vpack.c.b16 %v3214, %v3213
        %v3335 = vpack.c.b16 %v3216, %v3215
        %v3336 = vpack.c.b16 %v3218, %v3217
        %v3337 = vpack.c.b16 %v3220, %v3219
        %v3338 = vpack.c.b16 %v3222, %v3221
        %v3339 = vpack.c.b16 %v3224, %v3223
        %v3340 = vpack.c.b16 %v3226, %v3225
        %v3341 = vpack.c.b16 %v3228, %v3227
        %v3342 = vpack.c.b16 %v3230, %v3229
        %v3343 = vpack.c.b16 %v3232, %v3231
        %v3344 = vpack.c.b16 %v3234, %v3233
        %v3345 = vpack.c.b16 %v3236, %v3235
        %v3346 = vpack.c.b16 %v3238, %v3237
        %v3347 = vpack.c.b16 %v3240, %v3239
        %v3348 = vpack.c.b16 %v3242, %v3241
        %v3349 = vpack.c.b16 %v3244, %v3243
        %v3350 = vpack.c.b16 %v3246, %v3245
        %v3351 = vpack.c.b16 %v3248, %v3247
        %v3352 = vpack.c.b16 %v3250, %v3249
        %v3353 = vpack.c.b16 %v3252, %v3251
        %v3354 = vpack.c.b16 %v3254, %v3253
        %v3355 = vpack.c.b16 %v3256, %v3255
        %v3356 = vpack.c.b16 %v3258, %v3257
        %v3357 = vpack.c.b16 %v3260, %v3259
        %v3358 = vpack.c.b16 %v3262, %v3261
        %v3359 = vpack.c.b16 %v3264, %v3263
        %v3360 = vpack.c.b16 %v3266, %v3265
        %v3361 = vpack.c.b16 %v3268, %v3267
        %v3362 = vpack.c.b16 %v3270, %v3269
        %v3363 = vpack.c.b16 %v3272, %v3271
        %v3364 = vpack.c.b16 %v3274, %v3273
        %v3365 = vpack.c.b16 %v3276, %v3275
        %v3366 = vpack.c.b16 %v3278, %v3277
        %v3367 = vpack.c.b16 %v3280, %v3279
        %v3368 = vpack.c.b16 %v3282, %v3281
        %v3369 = vpack.c.b16 %v3284, %v3283
        %v3370 = vpack.c.b16 %v3286, %v3285
        %v3371 = vpack.c.b16 %v3288, %v3287
        %v3372 = vpack.c.b16 %v3290, %v3289
        %v3373 = vpack.c.b16 %v3292, %v3291
        %v3374 = vpack.c.b16 %v3294, %v3293
        %v3375 = vpack.c.b16 %v3296, %v3295
        %v3376 = vpack.c.b16 %v3298, %v3297
        %v3377 = vpack.c.b16 %v3300, %v3299
        %v3378 = vpack.c.b16 %v3302, %v3301
        %v3379 = vpack.c.b16 %v3304, %v3303
        %v3380 = vpack.c.b16 %v3306, %v3305
        %v3381 = vpack.c.b16 %v3308, %v3307
        %v3382 = vpack.c.b16 %v3310, %v3309
        %3455 = vmatprep.subr.bf16.mxu0 0
        %3456 = vmatpush1.bf16.msra.mxu0 %v3311
        %3457 = vmatprep.subr.bf16.mxu0 0
        %3458 = vmatpush1.bf16.msra.mxu0 %v3312
        %3459 = vmatprep.subr.bf16.mxu0 0
        %3460 = vmatpush1.bf16.msra.mxu0 %v3313
        %3461 = vmatprep.subr.bf16.mxu0 0
        %3462 = vmatpush1.bf16.msra.mxu0 %v3314
        %3463 = vmatprep.subr.bf16.mxu0 0
        %3464 = vmatpush1.bf16.msra.mxu0 %v3315
        %3465 = vmatprep.subr.bf16.mxu0 0
        %3466 = vmatpush1.bf16.msra.mxu0 %v3316
        %3467 = vmatprep.subr.bf16.mxu0 0
        %3468 = vmatpush1.bf16.msra.mxu0 %v3317
        %3469 = vmatprep.subr.bf16.mxu0 0
        %3470 = vmatpush1.bf16.msra.mxu0 %v3318
        %3471 = vmatprep.subr.bf16.mxu0 0
        %3472 = vmatpush1.bf16.msra.mxu0 %v3319
        %3473 = vmatprep.subr.bf16.mxu0 0
        %3474 = vmatpush1.bf16.msra.mxu0 %v3320
        %3475 = vmatprep.subr.bf16.mxu0 0
        %3476 = vmatpush1.bf16.msra.mxu0 %v3321
        %3477 = vmatprep.subr.bf16.mxu0 0
        %3478 = vmatpush1.bf16.msra.mxu0 %v3322
        %3479 = vmatprep.subr.bf16.mxu0 0
        %3480 = vmatpush1.bf16.msra.mxu0 %v3323
        %3481 = vmatprep.subr.bf16.mxu0 0
        %3482 = vmatpush1.bf16.msra.mxu0 %v3324
        %3483 = vmatprep.subr.bf16.mxu0 0
        %3484 = vmatpush1.bf16.msra.mxu0 %v3325
        %3485 = vmatprep.subr.bf16.mxu0 0
        %3486 = vmatpush1.bf16.msra.mxu0 %v3326
        %3487 = vmatprep.mubr.bf16.mxu0 %v2736
        %3488 = vmatmul.mubr.bf16.gmra.mrb[0].mxu0 %v2735
        %v3489 = vpop.f32.mrb[0].mxu0
        %v3490 = vadd.f32 0.0, %v3489
        %v3491 = vpop.f32.mrb[0].mxu0
        %v3492 = vpop.f32.mrb[0].mxu0
        %v3493 = vadd.f32 0.0, %v3492
        %v3494 = vpop.f32.mrb[0].mxu0
        %3495 = vmatprep.mubr.bf16.mxu0 %v2745
        %3496 = vmatmul.mubr.bf16.gmra.mrb[0].mxu0 %v2744
        %v3497 = vpop.f32.mrb[0].mxu0
        %v3498 = vadd.f32 0.0, %v3497
        %v3499 = vpop.f32.mrb[0].mxu0
        %v3500 = vpop.f32.mrb[0].mxu0
        %v3501 = vadd.f32 0.0, %v3500
        %v3502 = vpop.f32.mrb[0].mxu0
        %3503 = vmatprep.mubr.bf16.mxu0 %v2754
        %3504 = vmatmul.mubr.bf16.gmra.mrb[0].mxu0 %v2753
        %v3505 = vpop.f32.mrb[0].mxu0
        %v3506 = vadd.f32 0.0, %v3505
        %v3507 = vpop.f32.mrb[0].mxu0
        %v3508 = vpop.f32.mrb[0].mxu0
        %v3509 = vadd.f32 0.0, %v3508
        %v3510 = vpop.f32.mrb[0].mxu0
        %3511 = vmatprep.mubr.bf16.mxu0 %v2763
        %3512 = vmatmul.mubr.bf16.gmra.mrb[0].mxu0 %v2762
        %v3513 = vpop.f32.mrb[0].mxu0
        %v3514 = vadd.f32 0.0, %v3513
        %v3515 = vpop.f32.mrb[0].mxu0
        %v3516 = vpop.f32.mrb[0].mxu0
        %v3517 = vadd.f32 0.0, %v3516
        %v3518 = vpop.f32.mrb[0].mxu0
        %3519 = vmatprep.mubr.bf16.mxu0 %v2772
        %3520 = vmatmul.mubr.bf16.gmra.mrb[0].mxu0 %v2771
        %v3521 = vpop.f32.mrb[0].mxu0
        %v3522 = vadd.f32 0.0, %v3521
        %v3523 = vpop.f32.mrb[0].mxu0
        %v3524 = vpop.f32.mrb[0].mxu0
        %v3525 = vadd.f32 0.0, %v3524
        %v3526 = vpop.f32.mrb[0].mxu0
        %3527 = vmatprep.mubr.bf16.mxu0 %v2781
        %3528 = vmatmul.mubr.bf16.gmra.mrb[0].mxu0 %v2780
        %v3529 = vpop.f32.mrb[0].mxu0
        %v3530 = vadd.f32 0.0, %v3529
        %v3531 = vpop.f32.mrb[0].mxu0
        %v3532 = vpop.f32.mrb[0].mxu0
        %v3533 = vadd.f32 0.0, %v3532
        %v3534 = vpop.f32.mrb[0].mxu0
        %3535 = vmatprep.mubr.bf16.mxu0 %v2790
        %3536 = vmatmul.mubr.bf16.gmra.mrb[0].mxu0 %v2789
        %v3537 = vpop.f32.mrb[0].mxu0
        %v3538 = vadd.f32 0.0, %v3537
        %v3539 = vpop.f32.mrb[0].mxu0
        %v3540 = vpop.f32.mrb[0].mxu0
        %v3541 = vadd.f32 0.0, %v3540
        %v3542 = vpop.f32.mrb[0].mxu0
        %3543 = vmatprep.mubr.bf16.mxu0 %v2799
        %3544 = vmatmul.mubr.bf16.gmra.mrb[0].mxu0 %v2798
        %v3545 = vpop.f32.mrb[0].mxu0
        %v3546 = vadd.f32 0.0, %v3545
        %v3547 = vpop.f32.mrb[0].mxu0
        %v3548 = vpop.f32.mrb[0].mxu0
        %v3549 = vadd.f32 0.0, %v3548
        %v3550 = vpop.f32.mrb[0].mxu0
        %3551 = vmatprep.mubr.bf16.mxu0 %v2808
        %3552 = vmatmul.mubr.bf16.gmra.mrb[0].mxu0 %v2807
        %v3553 = vpop.f32.mrb[0].mxu0
        %v3554 = vadd.f32 0.0, %v3553
        %v3555 = vpop.f32.mrb[0].mxu0
        %v3556 = vpop.f32.mrb[0].mxu0
        %v3557 = vadd.f32 0.0, %v3556
        %v3558 = vpop.f32.mrb[0].mxu0
        %3559 = vmatprep.mubr.bf16.mxu0 %v2817
        %3560 = vmatmul.mubr.bf16.gmra.mrb[0].mxu0 %v2816
        %v3561 = vpop.f32.mrb[0].mxu0
        %v3562 = vadd.f32 0.0, %v3561
        %v3563 = vpop.f32.mrb[0].mxu0
        %v3564 = vpop.f32.mrb[0].mxu0
        %v3565 = vadd.f32 0.0, %v3564
        %v3566 = vpop.f32.mrb[0].mxu0
        %3567 = vmatprep.mubr.bf16.mxu0 %v2826
        %3568 = vmatmul.mubr.bf16.gmra.mrb[0].mxu0 %v2825
        %v3569 = vpop.f32.mrb[0].mxu0
        %v3570 = vadd.f32 0.0, %v3569
        %v3571 = vpop.f32.mrb[0].mxu0
        %v3572 = vpop.f32.mrb[0].mxu0
        %v3573 = vadd.f32 0.0, %v3572
        %v3574 = vpop.f32.mrb[0].mxu0
        %3575 = vmatprep.mubr.bf16.mxu0 %v2835
        %3576 = vmatmul.mubr.bf16.gmra.mrb[0].mxu0 %v2834
        %v3577 = vpop.f32.mrb[0].mxu0
        %v3578 = vadd.f32 0.0, %v3577
        %v3579 = vpop.f32.mrb[0].mxu0
        %v3580 = vpop.f32.mrb[0].mxu0
        %v3581 = vadd.f32 0.0, %v3580
        %v3582 = vpop.f32.mrb[0].mxu0
        %3583 = vmatprep.mubr.bf16.mxu0 %v2844
        %3584 = vmatmul.mubr.bf16.gmra.mrb[0].mxu0 %v2843
        %v3585 = vpop.f32.mrb[0].mxu0
        %v3586 = vadd.f32 0.0, %v3585
        %v3587 = vpop.f32.mrb[0].mxu0
        %v3588 = vpop.f32.mrb[0].mxu0
        %v3589 = vadd.f32 0.0, %v3588
        %v3590 = vpop.f32.mrb[0].mxu0
        %3591 = vmatprep.mubr.bf16.mxu0 %v2853
        %3592 = vmatmul.mubr.bf16.gmra.mrb[0].mxu0 %v2852
        %v3593 = vpop.f32.mrb[0].mxu0
        %v3594 = vadd.f32 0.0, %v3593
        %v3595 = vpop.f32.mrb[0].mxu0
        %v3596 = vpop.f32.mrb[0].mxu0
        %v3597 = vadd.f32 0.0, %v3596
        %v3598 = vpop.f32.mrb[0].mxu0
        %3599 = vmatprep.mubr.bf16.mxu0 %v2862
        %3600 = vmatmul.mubr.bf16.gmra.mrb[0].mxu0 %v2861
        %v3601 = vpop.f32.mrb[0].mxu0
        %v3602 = vadd.f32 0.0, %v3601
        %v3603 = vpop.f32.mrb[0].mxu0
        %v3604 = vpop.f32.mrb[0].mxu0
        %v3605 = vadd.f32 0.0, %v3604
        %v3606 = vpop.f32.mrb[0].mxu0
        %3607 = vmatprep.mubr.bf16.mxu0 %v2871
        %3608 = vmatmul.mubr.bf16.gmra.mrb[0].mxu0 %v2870
        %v3609 = vpop.f32.mrb[0].mxu0
        %v3610 = vadd.f32 0.0, %v3609
        %v3611 = vpop.f32.mrb[0].mxu0
        %v3612 = vpop.f32.mrb[0].mxu0
        %v3613 = vadd.f32 0.0, %v3612
        %v3614 = vpop.f32.mrb[0].mxu0
        %3615 = vdwg.mxu0
        %3616 = vmatprep.subr.bf16.mxu0 0
        %3617 = vmatpush1.bf16.msra.mxu0 %v3327
        %3618 = vmatprep.subr.bf16.mxu0 0
        %3619 = vmatpush1.bf16.msra.mxu0 %v3328
        %3620 = vmatprep.subr.bf16.mxu0 0
        %3621 = vmatpush1.bf16.msra.mxu0 %v3329
        %3622 = vmatprep.subr.bf16.mxu0 0
        %3623 = vmatpush1.bf16.msra.mxu0 %v3330
        %3624 = vmatprep.subr.bf16.mxu0 0
        %3625 = vmatpush1.bf16.msra.mxu0 %v3331
        %3626 = vmatprep.subr.bf16.mxu0 0
        %3627 = vmatpush1.bf16.msra.mxu0 %v3332
        %3628 = vmatprep.subr.bf16.mxu0 0
        %3629 = vmatpush1.bf16.msra.mxu0 %v3333
        %3630 = vmatprep.subr.bf16.mxu0 0
        %3631 = vmatpush1.bf16.msra.mxu0 %v3334
        %3632 = vmatprep.subr.bf16.mxu0 0
        %3633 = vmatpush1.bf16.msra.mxu0 %v3335
        %3634 = vmatprep.subr.bf16.mxu0 0
        %3635 = vmatpush1.bf16.msra.mxu0 %v3336
        %3636 = vmatprep.subr.bf16.mxu0 0
        %3637 = vmatpush1.bf16.msra.mxu0 %v3337
        %3638 = vmatprep.subr.bf16.mxu0 0
        %3639 = vmatpush1.bf16.msra.mxu0 %v3338
        %3640 = vmatprep.subr.bf16.mxu0 0
        %3641 = vmatpush1.bf16.msra.mxu0 %v3339
        %3642 = vmatprep.subr.bf16.mxu0 0
        %3643 = vmatpush1.bf16.msra.mxu0 %v3340
        %3644 = vmatprep.subr.bf16.mxu0 0
        %3645 = vmatpush1.bf16.msra.mxu0 %v3341
        %3646 = vmatprep.subr.bf16.mxu0 0
        %3647 = vmatpush1.bf16.msra.mxu0 %v3342
        %3648 = vmatprep.mubr.bf16.mxu0 %v2738
        %3649 = vmatmul.mubr.bf16.gmra.mrb[0].mxu0 %v2737
        %v3650 = vpop.f32.mrb[0].mxu0
        %v3651 = vadd.f32 %v3490, %v3650
        %v3652 = vpop.f32.mrb[0].mxu0
        %v3653 = vpop.f32.mrb[0].mxu0
        %v3654 = vadd.f32 %v3493, %v3653
        %v3655 = vpop.f32.mrb[0].mxu0
        %3656 = vmatprep.mubr.bf16.mxu0 %v2747
        %3657 = vmatmul.mubr.bf16.gmra.mrb[0].mxu0 %v2746
        %v3658 = vpop.f32.mrb[0].mxu0
        %v3659 = vadd.f32 %v3498, %v3658
        %v3660 = vpop.f32.mrb[0].mxu0
        %v3661 = vpop.f32.mrb[0].mxu0
        %v3662 = vadd.f32 %v3501, %v3661
        %v3663 = vpop.f32.mrb[0].mxu0
        %3664 = vmatprep.mubr.bf16.mxu0 %v2756
        %3665 = vmatmul.mubr.bf16.gmra.mrb[0].mxu0 %v2755
        %v3666 = vpop.f32.mrb[0].mxu0
        %v3667 = vadd.f32 %v3506, %v3666
        %v3668 = vpop.f32.mrb[0].mxu0
        %v3669 = vpop.f32.mrb[0].mxu0
        %v3670 = vadd.f32 %v3509, %v3669
        %v3671 = vpop.f32.mrb[0].mxu0
        %3672 = vmatprep.mubr.bf16.mxu0 %v2765
        %3673 = vmatmul.mubr.bf16.gmra.mrb[0].mxu0 %v2764
        %v3674 = vpop.f32.mrb[0].mxu0
        %v3675 = vadd.f32 %v3514, %v3674
        %v3676 = vpop.f32.mrb[0].mxu0
        %v3677 = vpop.f32.mrb[0].mxu0
        %v3678 = vadd.f32 %v3517, %v3677
        %v3679 = vpop.f32.mrb[0].mxu0
        %3680 = vmatprep.mubr.bf16.mxu0 %v2774
        %3681 = vmatmul.mubr.bf16.gmra.mrb[0].mxu0 %v2773
        %v3682 = vpop.f32.mrb[0].mxu0
        %v3683 = vadd.f32 %v3522, %v3682
        %v3684 = vpop.f32.mrb[0].mxu0
        %v3685 = vpop.f32.mrb[0].mxu0
        %v3686 = vadd.f32 %v3525, %v3685
        %v3687 = vpop.f32.mrb[0].mxu0
        %3688 = vmatprep.mubr.bf16.mxu0 %v2783
        %3689 = vmatmul.mubr.bf16.gmra.mrb[0].mxu0 %v2782
        %v3690 = vpop.f32.mrb[0].mxu0
        %v3691 = vadd.f32 %v3530, %v3690
        %v3692 = vpop.f32.mrb[0].mxu0
        %v3693 = vpop.f32.mrb[0].mxu0
        %v3694 = vadd.f32 %v3533, %v3693
        %v3695 = vpop.f32.mrb[0].mxu0
        %3696 = vmatprep.mubr.bf16.mxu0 %v2792
        %3697 = vmatmul.mubr.bf16.gmra.mrb[0].mxu0 %v2791
        %v3698 = vpop.f32.mrb[0].mxu0
        %v3699 = vadd.f32 %v3538, %v3698
        %v3700 = vpop.f32.mrb[0].mxu0
        %v3701 = vpop.f32.mrb[0].mxu0
        %v3702 = vadd.f32 %v3541, %v3701
        %v3703 = vpop.f32.mrb[0].mxu0
        %3704 = vmatprep.mubr.bf16.mxu0 %v2801
        %3705 = vmatmul.mubr.bf16.gmra.mrb[0].mxu0 %v2800
        %v3706 = vpop.f32.mrb[0].mxu0
        %v3707 = vadd.f32 %v3546, %v3706
        %v3708 = vpop.f32.mrb[0].mxu0
        %v3709 = vpop.f32.mrb[0].mxu0
        %v3710 = vadd.f32 %v3549, %v3709
        %v3711 = vpop.f32.mrb[0].mxu0
        %3712 = vmatprep.mubr.bf16.mxu0 %v2810
        %3713 = vmatmul.mubr.bf16.gmra.mrb[0].mxu0 %v2809
        %v3714 = vpop.f32.mrb[0].mxu0
        %v3715 = vadd.f32 %v3554, %v3714
        %v3716 = vpop.f32.mrb[0].mxu0
        %v3717 = vpop.f32.mrb[0].mxu0
        %v3718 = vadd.f32 %v3557, %v3717
        %v3719 = vpop.f32.mrb[0].mxu0
        %3720 = vmatprep.mubr.bf16.mxu0 %v2819
        %3721 = vmatmul.mubr.bf16.gmra.mrb[0].mxu0 %v2818
        %v3722 = vpop.f32.mrb[0].mxu0
        %v3723 = vadd.f32 %v3562, %v3722
        %v3724 = vpop.f32.mrb[0].mxu0
        %v3725 = vpop.f32.mrb[0].mxu0
        %v3726 = vadd.f32 %v3565, %v3725
        %v3727 = vpop.f32.mrb[0].mxu0
        %3728 = vmatprep.mubr.bf16.mxu0 %v2828
        %3729 = vmatmul.mubr.bf16.gmra.mrb[0].mxu0 %v2827
        %v3730 = vpop.f32.mrb[0].mxu0
        %v3731 = vadd.f32 %v3570, %v3730
        %v3732 = vpop.f32.mrb[0].mxu0
        %v3733 = vpop.f32.mrb[0].mxu0
        %v3734 = vadd.f32 %v3573, %v3733
        %v3735 = vpop.f32.mrb[0].mxu0
        %3736 = vmatprep.mubr.bf16.mxu0 %v2837
        %3737 = vmatmul.mubr.bf16.gmra.mrb[0].mxu0 %v2836
        %v3738 = vpop.f32.mrb[0].mxu0
        %v3739 = vadd.f32 %v3578, %v3738
        %v3740 = vpop.f32.mrb[0].mxu0
        %v3741 = vpop.f32.mrb[0].mxu0
        %v3742 = vadd.f32 %v3581, %v3741
        %v3743 = vpop.f32.mrb[0].mxu0
        %3744 = vmatprep.mubr.bf16.mxu0 %v2846
        %3745 = vmatmul.mubr.bf16.gmra.mrb[0].mxu0 %v2845
        %v3746 = vpop.f32.mrb[0].mxu0
        %v3747 = vadd.f32 %v3586, %v3746
        %v3748 = vpop.f32.mrb[0].mxu0
        %v3749 = vpop.f32.mrb[0].mxu0
        %v3750 = vadd.f32 %v3589, %v3749
        %v3751 = vpop.f32.mrb[0].mxu0
        %3752 = vmatprep.mubr.bf16.mxu0 %v2855
        %3753 = vmatmul.mubr.bf16.gmra.mrb[0].mxu0 %v2854
        %v3754 = vpop.f32.mrb[0].mxu0
        %v3755 = vadd.f32 %v3594, %v3754
        %v3756 = vpop.f32.mrb[0].mxu0
        %v3757 = vpop.f32.mrb[0].mxu0
        %v3758 = vadd.f32 %v3597, %v3757
        %v3759 = vpop.f32.mrb[0].mxu0
        %3760 = vmatprep.mubr.bf16.mxu0 %v2864
        %3761 = vmatmul.mubr.bf16.gmra.mrb[0].mxu0 %v2863
        %v3762 = vpop.f32.mrb[0].mxu0
        %v3763 = vadd.f32 %v3602, %v3762
        %v3764 = vpop.f32.mrb[0].mxu0
        %v3765 = vpop.f32.mrb[0].mxu0
        %v3766 = vadd.f32 %v3605, %v3765
        %v3767 = vpop.f32.mrb[0].mxu0
        %3768 = vmatprep.mubr.bf16.mxu0 %v2873
        %3769 = vmatmul.mubr.bf16.gmra.mrb[0].mxu0 %v2872
        %v3770 = vpop.f32.mrb[0].mxu0
        %v3771 = vadd.f32 %v3610, %v3770
        %v3772 = vpop.f32.mrb[0].mxu0
        %v3773 = vpop.f32.mrb[0].mxu0
        %v3774 = vadd.f32 %v3613, %v3773
        %v3775 = vpop.f32.mrb[0].mxu0
        %3776 = vdwg.mxu0
        %3777 = vmatprep.subr.bf16.mxu0 0
        %3778 = vmatpush1.bf16.msra.mxu0 %v3343
        %3779 = vmatprep.subr.bf16.mxu0 0
        %3780 = vmatpush1.bf16.msra.mxu0 %v3344
        %3781 = vmatprep.subr.bf16.mxu0 0
        %3782 = vmatpush1.bf16.msra.mxu0 %v3345
        %3783 = vmatprep.subr.bf16.mxu0 0
        %3784 = vmatpush1.bf16.msra.mxu0 %v3346
        %3785 = vmatprep.subr.bf16.mxu0 0
        %3786 = vmatpush1.bf16.msra.mxu0 %v3347
        %3787 = vmatprep.subr.bf16.mxu0 0
        %3788 = vmatpush1.bf16.msra.mxu0 %v3348
        %3789 = vmatprep.subr.bf16.mxu0 0
        %3790 = vmatpush1.bf16.msra.mxu0 %v3349
        %3791 = vmatprep.subr.bf16.mxu0 0
        %3792 = vmatpush1.bf16.msra.mxu0 %v3350
        %3793 = vmatprep.subr.bf16.mxu0 0
        %3794 = vmatpush1.bf16.msra.mxu0 %v3351
        %3795 = vmatprep.subr.bf16.mxu0 0
        %3796 = vmatpush1.bf16.msra.mxu0 %v3352
        %3797 = vmatprep.subr.bf16.mxu0 0
        %3798 = vmatpush1.bf16.msra.mxu0 %v3353
        %3799 = vmatprep.subr.bf16.mxu0 0
        %3800 = vmatpush1.bf16.msra.mxu0 %v3354
        %3801 = vmatprep.subr.bf16.mxu0 0
        %3802 = vmatpush1.bf16.msra.mxu0 %v3355
        %3803 = vmatprep.subr.bf16.mxu0 0
        %3804 = vmatpush1.bf16.msra.mxu0 %v3356
        %3805 = vmatprep.subr.bf16.mxu0 0
        %3806 = vmatpush1.bf16.msra.mxu0 %v3357
        %3807 = vmatprep.subr.bf16.mxu0 0
        %3808 = vmatpush1.bf16.msra.mxu0 %v3358
        %3809 = vmatprep.mubr.bf16.mxu0 %v2740
        %3810 = vmatmul.mubr.bf16.gmra.mrb[0].mxu0 %v2739
        %v3811 = vpop.f32.mrb[0].mxu0
        %v3812 = vadd.f32 %v3651, %v3811
        %v3813 = vpop.f32.mrb[0].mxu0
        %v3814 = vpop.f32.mrb[0].mxu0
        %v3815 = vadd.f32 %v3654, %v3814
        %v3816 = vpop.f32.mrb[0].mxu0
        %3817 = vmatprep.mubr.bf16.mxu0 %v2749
        %3818 = vmatmul.mubr.bf16.gmra.mrb[0].mxu0 %v2748
        %v3819 = vpop.f32.mrb[0].mxu0
        %v3820 = vadd.f32 %v3659, %v3819
        %v3821 = vpop.f32.mrb[0].mxu0
        %v3822 = vpop.f32.mrb[0].mxu0
        %v3823 = vadd.f32 %v3662, %v3822
        %v3824 = vpop.f32.mrb[0].mxu0
        %3825 = vmatprep.mubr.bf16.mxu0 %v2758
        %3826 = vmatmul.mubr.bf16.gmra.mrb[0].mxu0 %v2757
        %v3827 = vpop.f32.mrb[0].mxu0
        %v3828 = vadd.f32 %v3667, %v3827
        %v3829 = vpop.f32.mrb[0].mxu0
        %v3830 = vpop.f32.mrb[0].mxu0
        %v3831 = vadd.f32 %v3670, %v3830
        %v3832 = vpop.f32.mrb[0].mxu0
        %3833 = vmatprep.mubr.bf16.mxu0 %v2767
        %3834 = vmatmul.mubr.bf16.gmra.mrb[0].mxu0 %v2766
        %v3835 = vpop.f32.mrb[0].mxu0
        %v3836 = vadd.f32 %v3675, %v3835
        %v3837 = vpop.f32.mrb[0].mxu0
        %v3838 = vpop.f32.mrb[0].mxu0
        %v3839 = vadd.f32 %v3678, %v3838
        %v3840 = vpop.f32.mrb[0].mxu0
        %3841 = vmatprep.mubr.bf16.mxu0 %v2776
        %3842 = vmatmul.mubr.bf16.gmra.mrb[0].mxu0 %v2775
        %v3843 = vpop.f32.mrb[0].mxu0
        %v3844 = vadd.f32 %v3683, %v3843
        %v3845 = vpop.f32.mrb[0].mxu0
        %v3846 = vpop.f32.mrb[0].mxu0
        %v3847 = vadd.f32 %v3686, %v3846
        %v3848 = vpop.f32.mrb[0].mxu0
        %3849 = vmatprep.mubr.bf16.mxu0 %v2785
        %3850 = vmatmul.mubr.bf16.gmra.mrb[0].mxu0 %v2784
        %v3851 = vpop.f32.mrb[0].mxu0
        %v3852 = vadd.f32 %v3691, %v3851
        %v3853 = vpop.f32.mrb[0].mxu0
        %v3854 = vpop.f32.mrb[0].mxu0
        %v3855 = vadd.f32 %v3694, %v3854
        %v3856 = vpop.f32.mrb[0].mxu0
        %3857 = vmatprep.mubr.bf16.mxu0 %v2794
        %3858 = vmatmul.mubr.bf16.gmra.mrb[0].mxu0 %v2793
        %v3859 = vpop.f32.mrb[0].mxu0
        %v3860 = vadd.f32 %v3699, %v3859
        %v3861 = vpop.f32.mrb[0].mxu0
        %v3862 = vpop.f32.mrb[0].mxu0
        %v3863 = vadd.f32 %v3702, %v3862
        %v3864 = vpop.f32.mrb[0].mxu0
        %3865 = vmatprep.mubr.bf16.mxu0 %v2803
        %3866 = vmatmul.mubr.bf16.gmra.mrb[0].mxu0 %v2802
        %v3867 = vpop.f32.mrb[0].mxu0
        %v3868 = vadd.f32 %v3707, %v3867
        %v3869 = vpop.f32.mrb[0].mxu0
        %v3870 = vpop.f32.mrb[0].mxu0
        %v3871 = vadd.f32 %v3710, %v3870
        %v3872 = vpop.f32.mrb[0].mxu0
        %3873 = vmatprep.mubr.bf16.mxu0 %v2812
        %3874 = vmatmul.mubr.bf16.gmra.mrb[0].mxu0 %v2811
        %v3875 = vpop.f32.mrb[0].mxu0
        %v3876 = vadd.f32 %v3715, %v3875
        %v3877 = vpop.f32.mrb[0].mxu0
        %v3878 = vpop.f32.mrb[0].mxu0
        %v3879 = vadd.f32 %v3718, %v3878
        %v3880 = vpop.f32.mrb[0].mxu0
        %3881 = vmatprep.mubr.bf16.mxu0 %v2821
        %3882 = vmatmul.mubr.bf16.gmra.mrb[0].mxu0 %v2820
        %v3883 = vpop.f32.mrb[0].mxu0
        %v3884 = vadd.f32 %v3723, %v3883
        %v3885 = vpop.f32.mrb[0].mxu0
        %v3886 = vpop.f32.mrb[0].mxu0
        %v3887 = vadd.f32 %v3726, %v3886
        %v3888 = vpop.f32.mrb[0].mxu0
        %3889 = vmatprep.mubr.bf16.mxu0 %v2830
        %3890 = vmatmul.mubr.bf16.gmra.mrb[0].mxu0 %v2829
        %v3891 = vpop.f32.mrb[0].mxu0
        %v3892 = vadd.f32 %v3731, %v3891
        %v3893 = vpop.f32.mrb[0].mxu0
        %v3894 = vpop.f32.mrb[0].mxu0
        %v3895 = vadd.f32 %v3734, %v3894
        %v3896 = vpop.f32.mrb[0].mxu0
        %3897 = vmatprep.mubr.bf16.mxu0 %v2839
        %3898 = vmatmul.mubr.bf16.gmra.mrb[0].mxu0 %v2838
        %v3899 = vpop.f32.mrb[0].mxu0
        %v3900 = vadd.f32 %v3739, %v3899
        %v3901 = vpop.f32.mrb[0].mxu0
        %v3902 = vpop.f32.mrb[0].mxu0
        %v3903 = vadd.f32 %v3742, %v3902
        %v3904 = vpop.f32.mrb[0].mxu0
        %3905 = vmatprep.mubr.bf16.mxu0 %v2848
        %3906 = vmatmul.mubr.bf16.gmra.mrb[0].mxu0 %v2847
        %v3907 = vpop.f32.mrb[0].mxu0
        %v3908 = vadd.f32 %v3747, %v3907
        %v3909 = vpop.f32.mrb[0].mxu0
        %v3910 = vpop.f32.mrb[0].mxu0
        %v3911 = vadd.f32 %v3750, %v3910
        %v3912 = vpop.f32.mrb[0].mxu0
        %3913 = vmatprep.mubr.bf16.mxu0 %v2857
        %3914 = vmatmul.mubr.bf16.gmra.mrb[0].mxu0 %v2856
        %v3915 = vpop.f32.mrb[0].mxu0
        %v3916 = vadd.f32 %v3755, %v3915
        %v3917 = vpop.f32.mrb[0].mxu0
        %v3918 = vpop.f32.mrb[0].mxu0
        %v3919 = vadd.f32 %v3758, %v3918
        %v3920 = vpop.f32.mrb[0].mxu0
        %3921 = vmatprep.mubr.bf16.mxu0 %v2866
        %3922 = vmatmul.mubr.bf16.gmra.mrb[0].mxu0 %v2865
        %v3923 = vpop.f32.mrb[0].mxu0
        %v3924 = vadd.f32 %v3763, %v3923
        %v3925 = vpop.f32.mrb[0].mxu0
        %v3926 = vpop.f32.mrb[0].mxu0
        %v3927 = vadd.f32 %v3766, %v3926
        %v3928 = vpop.f32.mrb[0].mxu0
        %3929 = vmatprep.mubr.bf16.mxu0 %v2875
        %3930 = vmatmul.mubr.bf16.gmra.mrb[0].mxu0 %v2874
        %v3931 = vpop.f32.mrb[0].mxu0
        %v3932 = vadd.f32 %v3771, %v3931
        %v3933 = vpop.f32.mrb[0].mxu0
        %v3934 = vpop.f32.mrb[0].mxu0
        %v3935 = vadd.f32 %v3774, %v3934
        %v3936 = vpop.f32.mrb[0].mxu0
        %3937 = vdwg.mxu0
        %3938 = vmatprep.subr.bf16.mxu0 0
        %3939 = vmatpush1.bf16.msra.mxu0 %v3359
        %3940 = vmatprep.subr.bf16.mxu0 0
        %3941 = vmatpush1.bf16.msra.mxu0 %v3360
        %3942 = vmatprep.subr.bf16.mxu0 0
        %3943 = vmatpush1.bf16.msra.mxu0 %v3361
        %3944 = vmatprep.subr.bf16.mxu0 0
        %3945 = vmatpush1.bf16.msra.mxu0 %v3362
        %3946 = vmatprep.subr.bf16.mxu0 0
        %3947 = vmatpush1.bf16.msra.mxu0 %v3363
        %3948 = vmatprep.subr.bf16.mxu0 0
        %3949 = vmatpush1.bf16.msra.mxu0 %v3364
        %3950 = vmatprep.subr.bf16.mxu0 0
        %3951 = vmatpush1.bf16.msra.mxu0 %v3365
        %3952 = vmatprep.subr.bf16.mxu0 0
        %3953 = vmatpush1.bf16.msra.mxu0 %v3366
        %3954 = vmatprep.subr.bf16.mxu0 0
        %3955 = vmatpush1.bf16.msra.mxu0 %v3367
        %3956 = vmatprep.subr.bf16.mxu0 0
        %3957 = vmatpush1.bf16.msra.mxu0 %v3368
        %3958 = vmatprep.subr.bf16.mxu0 0
        %3959 = vmatpush1.bf16.msra.mxu0 %v3369
        %3960 = vmatprep.subr.bf16.mxu0 0
        %3961 = vmatpush1.bf16.msra.mxu0 %v3370
        %3962 = vmatprep.subr.bf16.mxu0 0
        %3963 = vmatpush1.bf16.msra.mxu0 %v3371
        %3964 = vmatprep.subr.bf16.mxu0 0
        %3965 = vmatpush1.bf16.msra.mxu0 %v3372
        %3966 = vmatprep.subr.bf16.mxu0 0
        %3967 = vmatpush1.bf16.msra.mxu0 %v3373
        %3968 = vmatprep.subr.bf16.mxu0 0
        %3969 = vmatpush1.bf16.msra.mxu0 %v3374
        %3970 = vmatprep.mubr.bf16.mxu0 %v2742
        %3971 = vmatmul.mubr.bf16.gmra.mrb[0].mxu0 %v2741
        %v3972 = vpop.f32.mrb[0].mxu0
        %v3973 = vadd.f32 %v3812, %v3972
        %v3974 = vpop.f32.mrb[0].mxu0
        %v3975 = vpop.f32.mrb[0].mxu0
        %v3976 = vadd.f32 %v3815, %v3975
        %v3977 = vpop.f32.mrb[0].mxu0
        %3978 = vmatprep.mubr.bf16.mxu0 %v2751
        %3979 = vmatmul.mubr.bf16.gmra.mrb[0].mxu0 %v2750
        %v3980 = vpop.f32.mrb[0].mxu0
        %v3981 = vadd.f32 %v3820, %v3980
        %v3982 = vpop.f32.mrb[0].mxu0
        %v3983 = vpop.f32.mrb[0].mxu0
        %v3984 = vadd.f32 %v3823, %v3983
        %v3985 = vpop.f32.mrb[0].mxu0
        %3986 = vmatprep.mubr.bf16.mxu0 %v2760
        %3987 = vmatmul.mubr.bf16.gmra.mrb[0].mxu0 %v2759
        %v3988 = vpop.f32.mrb[0].mxu0
        %v3989 = vadd.f32 %v3828, %v3988
        %v3990 = vpop.f32.mrb[0].mxu0
        %v3991 = vpop.f32.mrb[0].mxu0
        %v3992 = vadd.f32 %v3831, %v3991
        %v3993 = vpop.f32.mrb[0].mxu0
        %3994 = vmatprep.mubr.bf16.mxu0 %v2769
        %3995 = vmatmul.mubr.bf16.gmra.mrb[0].mxu0 %v2768
        %v3996 = vpop.f32.mrb[0].mxu0
        %v3997 = vadd.f32 %v3836, %v3996
        %v3998 = vpop.f32.mrb[0].mxu0
        %v3999 = vpop.f32.mrb[0].mxu0
        %v4000 = vadd.f32 %v3839, %v3999
        %v4001 = vpop.f32.mrb[0].mxu0
        %4002 = vmatprep.mubr.bf16.mxu0 %v2778
        %4003 = vmatmul.mubr.bf16.gmra.mrb[0].mxu0 %v2777
        %v4004 = vpop.f32.mrb[0].mxu0
        %v4005 = vadd.f32 %v3844, %v4004
        %v4006 = vpop.f32.mrb[0].mxu0
        %v4007 = vpop.f32.mrb[0].mxu0
        %v4008 = vadd.f32 %v3847, %v4007
        %v4009 = vpop.f32.mrb[0].mxu0
        %4010 = vmatprep.mubr.bf16.mxu0 %v2787
        %4011 = vmatmul.mubr.bf16.gmra.mrb[0].mxu0 %v2786
        %v4012 = vpop.f32.mrb[0].mxu0
        %v4013 = vadd.f32 %v3852, %v4012
        %v4014 = vpop.f32.mrb[0].mxu0
        %v4015 = vpop.f32.mrb[0].mxu0
        %v4016 = vadd.f32 %v3855, %v4015
        %v4017 = vpop.f32.mrb[0].mxu0
        %4018 = vmatprep.mubr.bf16.mxu0 %v2796
        %4019 = vmatmul.mubr.bf16.gmra.mrb[0].mxu0 %v2795
        %v4020 = vpop.f32.mrb[0].mxu0
        %v4021 = vadd.f32 %v3860, %v4020
        %v4022 = vpop.f32.mrb[0].mxu0
        %v4023 = vpop.f32.mrb[0].mxu0
        %v4024 = vadd.f32 %v3863, %v4023
        %v4025 = vpop.f32.mrb[0].mxu0
        %4026 = vmatprep.mubr.bf16.mxu0 %v2805
        %4027 = vmatmul.mubr.bf16.gmra.mrb[0].mxu0 %v2804
        %v4028 = vpop.f32.mrb[0].mxu0
        %v4029 = vadd.f32 %v3868, %v4028
        %v4030 = vpop.f32.mrb[0].mxu0
        %v4031 = vpop.f32.mrb[0].mxu0
        %v4032 = vadd.f32 %v3871, %v4031
        %v4033 = vpop.f32.mrb[0].mxu0
        %4034 = vmatprep.mubr.bf16.mxu0 %v2814
        %4035 = vmatmul.mubr.bf16.gmra.mrb[0].mxu0 %v2813
        %v4036 = vpop.f32.mrb[0].mxu0
        %v4037 = vadd.f32 %v3876, %v4036
        %v4038 = vpop.f32.mrb[0].mxu0
        %v4039 = vpop.f32.mrb[0].mxu0
        %v4040 = vadd.f32 %v3879, %v4039
        %v4041 = vpop.f32.mrb[0].mxu0
        %4042 = vmatprep.mubr.bf16.mxu0 %v2823
        %4043 = vmatmul.mubr.bf16.gmra.mrb[0].mxu0 %v2822
        %v4044 = vpop.f32.mrb[0].mxu0
        %v4045 = vadd.f32 %v3884, %v4044
        %v4046 = vpop.f32.mrb[0].mxu0
        %v4047 = vpop.f32.mrb[0].mxu0
        %v4048 = vadd.f32 %v3887, %v4047
        %v4049 = vpop.f32.mrb[0].mxu0
        %4050 = vmatprep.mubr.bf16.mxu0 %v2832
        %4051 = vmatmul.mubr.bf16.gmra.mrb[0].mxu0 %v2831
        %v4052 = vpop.f32.mrb[0].mxu0
        %v4053 = vadd.f32 %v3892, %v4052
        %v4054 = vpop.f32.mrb[0].mxu0
        %v4055 = vpop.f32.mrb[0].mxu0
        %v4056 = vadd.f32 %v3895, %v4055
        %v4057 = vpop.f32.mrb[0].mxu0
        %4058 = vmatprep.mubr.bf16.mxu0 %v2841
        %4059 = vmatmul.mubr.bf16.gmra.mrb[0].mxu0 %v2840
        %v4060 = vpop.f32.mrb[0].mxu0
        %v4061 = vadd.f32 %v3900, %v4060
        %v4062 = vpop.f32.mrb[0].mxu0
        %v4063 = vpop.f32.mrb[0].mxu0
        %v4064 = vadd.f32 %v3903, %v4063
        %v4065 = vpop.f32.mrb[0].mxu0
        %4066 = vmatprep.mubr.bf16.mxu0 %v2850
        %4067 = vmatmul.mubr.bf16.gmra.mrb[0].mxu0 %v2849
        %v4068 = vpop.f32.mrb[0].mxu0
        %v4069 = vadd.f32 %v3908, %v4068
        %v4070 = vpop.f32.mrb[0].mxu0
        %v4071 = vpop.f32.mrb[0].mxu0
        %v4072 = vadd.f32 %v3911, %v4071
        %v4073 = vpop.f32.mrb[0].mxu0
        %4074 = vmatprep.mubr.bf16.mxu0 %v2859
        %4075 = vmatmul.mubr.bf16.gmra.mrb[0].mxu0 %v2858
        %v4076 = vpop.f32.mrb[0].mxu0
        %v4077 = vadd.f32 %v3916, %v4076
        %v4078 = vpop.f32.mrb[0].mxu0
        %v4079 = vpop.f32.mrb[0].mxu0
        %v4080 = vadd.f32 %v3919, %v4079
        %v4081 = vpop.f32.mrb[0].mxu0
        %4082 = vmatprep.mubr.bf16.mxu0 %v2868
        %4083 = vmatmul.mubr.bf16.gmra.mrb[0].mxu0 %v2867
        %v4084 = vpop.f32.mrb[0].mxu0
        %v4085 = vadd.f32 %v3924, %v4084
        %v4086 = vpop.f32.mrb[0].mxu0
        %v4087 = vpop.f32.mrb[0].mxu0
        %v4088 = vadd.f32 %v3927, %v4087
        %v4089 = vpop.f32.mrb[0].mxu0
        %4090 = vmatprep.mubr.bf16.mxu0 %v2877
        %4091 = vmatmul.mubr.bf16.gmra.mrb[0].mxu0 %v2876
        %v4092 = vpop.f32.mrb[0].mxu0
        %v4093 = vadd.f32 %v3932, %v4092
        %v4094 = vpop.f32.mrb[0].mxu0
        %v4095 = vpop.f32.mrb[0].mxu0
        %v4096 = vadd.f32 %v3935, %v4095
        %v4097 = vpop.f32.mrb[0].mxu0
        %4098 = vdwg.mxu0
        %4099 = vmatprep.subr.bf16.mxu0 0
        %4100 = vmatpush1.bf16.msra.mxu0 %v3375
        %4101 = vmatprep.subr.bf16.mxu0 0
        %4102 = vmatpush1.bf16.msra.mxu0 %v3376
        %4103 = vmatprep.subr.bf16.mxu0 0
        %4104 = vmatpush1.bf16.msra.mxu0 %v3377
        %4105 = vmatprep.subr.bf16.mxu0 0
        %4106 = vmatpush1.bf16.msra.mxu0 %v3378
        %4107 = vmatprep.subr.bf16.mxu0 0
        %4108 = vmatpush1.bf16.msra.mxu0 %v3379
        %4109 = vmatprep.subr.bf16.mxu0 0
        %4110 = vmatpush1.bf16.msra.mxu0 %v3380
        %4111 = vmatprep.subr.bf16.mxu0 0
        %4112 = vmatpush1.bf16.msra.mxu0 %v3381
        %4113 = vmatprep.subr.bf16.mxu0 0
        %4114 = vmatpush1.bf16.msra.mxu0 %v3382
        %4115 = vmatprep.subr.bf16.mxu0 0
        %4116 = vmatpush1.bf16.msra.mxu0 0
        %4117 = vmatprep.subr.bf16.mxu0 0
        %4118 = vmatpush1.bf16.msra.mxu0 0
        %4119 = vmatprep.subr.bf16.mxu0 0
        %4120 = vmatpush1.bf16.msra.mxu0 0
        %4121 = vmatprep.subr.bf16.mxu0 0
        %4122 = vmatpush1.bf16.msra.mxu0 0
        %4123 = vmatprep.subr.bf16.mxu0 0
        %4124 = vmatpush1.bf16.msra.mxu0 0
        %4125 = vmatprep.subr.bf16.mxu0 0
        %4126 = vmatpush1.bf16.msra.mxu0 0
        %4127 = vmatprep.subr.bf16.mxu0 0
        %4128 = vmatpush1.bf16.msra.mxu0 0
        %4129 = vmatprep.subr.bf16.mxu0 0
        %4130 = vmatpush1.bf16.msra.mxu0 0
        %4131 = vmatprep.mubr.bf16.mxu0 0
        %4132 = vmatmul.mubr.bf16.gmra.mrb[0].mxu0 %v2743
        %v4133 = vpop.f32.mrb[0].mxu0
        %v4134 = vadd.f32 %v3973, %v4133
        %v4135 = vpop.f32.mrb[0].mxu0
        %v4136 = vpop.f32.mrb[0].mxu0
        %v4137 = vadd.f32 %v3976, %v4136
        %v4138 = vpop.f32.mrb[0].mxu0
        %4139 = vmatprep.mubr.bf16.mxu0 0
        %4140 = vmatmul.mubr.bf16.gmra.mrb[0].mxu0 %v2752
        %v4141 = vpop.f32.mrb[0].mxu0
        %v4142 = vadd.f32 %v3981, %v4141
        %v4143 = vpop.f32.mrb[0].mxu0
        %v4144 = vpop.f32.mrb[0].mxu0
        %v4145 = vadd.f32 %v3984, %v4144
        %v4146 = vpop.f32.mrb[0].mxu0
        %4147 = vmatprep.mubr.bf16.mxu0 0
        %4148 = vmatmul.mubr.bf16.gmra.mrb[0].mxu0 %v2761
        %v4149 = vpop.f32.mrb[0].mxu0
        %v4150 = vadd.f32 %v3989, %v4149
        %v4151 = vpop.f32.mrb[0].mxu0
        %v4152 = vpop.f32.mrb[0].mxu0
        %v4153 = vadd.f32 %v3992, %v4152
        %v4154 = vpop.f32.mrb[0].mxu0
        %4155 = vmatprep.mubr.bf16.mxu0 0
        %4156 = vmatmul.mubr.bf16.gmra.mrb[0].mxu0 %v2770
        %v4157 = vpop.f32.mrb[0].mxu0
        %v4158 = vadd.f32 %v3997, %v4157
        %v4159 = vpop.f32.mrb[0].mxu0
        %v4160 = vpop.f32.mrb[0].mxu0
        %v4161 = vadd.f32 %v4000, %v4160
        %v4162 = vpop.f32.mrb[0].mxu0
        %4163 = vmatprep.mubr.bf16.mxu0 0
        %4164 = vmatmul.mubr.bf16.gmra.mrb[0].mxu0 %v2779
        %v4165 = vpop.f32.mrb[0].mxu0
        %v4166 = vadd.f32 %v4005, %v4165
        %v4167 = vpop.f32.mrb[0].mxu0
        %v4168 = vpop.f32.mrb[0].mxu0
        %v4169 = vadd.f32 %v4008, %v4168
        %v4170 = vpop.f32.mrb[0].mxu0
        %4171 = vmatprep.mubr.bf16.mxu0 0
        %4172 = vmatmul.mubr.bf16.gmra.mrb[0].mxu0 %v2788
        %v4173 = vpop.f32.mrb[0].mxu0
        %v4174 = vadd.f32 %v4013, %v4173
        %v4175 = vpop.f32.mrb[0].mxu0
        %v4176 = vpop.f32.mrb[0].mxu0
        %v4177 = vadd.f32 %v4016, %v4176
        %v4178 = vpop.f32.mrb[0].mxu0
        %4179 = vmatprep.mubr.bf16.mxu0 0
        %4180 = vmatmul.mubr.bf16.gmra.mrb[0].mxu0 %v2797
        %v4181 = vpop.f32.mrb[0].mxu0
        %v4182 = vadd.f32 %v4021, %v4181
        %v4183 = vpop.f32.mrb[0].mxu0
        %v4184 = vpop.f32.mrb[0].mxu0
        %v4185 = vadd.f32 %v4024, %v4184
        %v4186 = vpop.f32.mrb[0].mxu0
        %4187 = vmatprep.mubr.bf16.mxu0 0
        %4188 = vmatmul.mubr.bf16.gmra.mrb[0].mxu0 %v2806
        %v4189 = vpop.f32.mrb[0].mxu0
        %v4190 = vadd.f32 %v4029, %v4189
        %v4191 = vpop.f32.mrb[0].mxu0
        %v4192 = vpop.f32.mrb[0].mxu0
        %v4193 = vadd.f32 %v4032, %v4192
        %v4194 = vpop.f32.mrb[0].mxu0
        %4195 = vmatprep.mubr.bf16.mxu0 0
        %4196 = vmatmul.mubr.bf16.gmra.mrb[0].mxu0 %v2815
        %v4197 = vpop.f32.mrb[0].mxu0
        %v4198 = vadd.f32 %v4037, %v4197
        %v4199 = vpop.f32.mrb[0].mxu0
        %v4200 = vpop.f32.mrb[0].mxu0
        %v4201 = vadd.f32 %v4040, %v4200
        %v4202 = vpop.f32.mrb[0].mxu0
        %4203 = vmatprep.mubr.bf16.mxu0 0
        %4204 = vmatmul.mubr.bf16.gmra.mrb[0].mxu0 %v2824
        %v4205 = vpop.f32.mrb[0].mxu0
        %v4206 = vadd.f32 %v4045, %v4205
        %v4207 = vpop.f32.mrb[0].mxu0
        %v4208 = vpop.f32.mrb[0].mxu0
        %v4209 = vadd.f32 %v4048, %v4208
        %v4210 = vpop.f32.mrb[0].mxu0
        %4211 = vmatprep.mubr.bf16.mxu0 0
        %4212 = vmatmul.mubr.bf16.gmra.mrb[0].mxu0 %v2833
        %v4213 = vpop.f32.mrb[0].mxu0
        %v4214 = vadd.f32 %v4053, %v4213
        %v4215 = vpop.f32.mrb[0].mxu0
        %v4216 = vpop.f32.mrb[0].mxu0
        %v4217 = vadd.f32 %v4056, %v4216
        %v4218 = vpop.f32.mrb[0].mxu0
        %4219 = vmatprep.mubr.bf16.mxu0 0
        %4220 = vmatmul.mubr.bf16.gmra.mrb[0].mxu0 %v2842
        %v4221 = vpop.f32.mrb[0].mxu0
        %v4222 = vadd.f32 %v4061, %v4221
        %v4223 = vpop.f32.mrb[0].mxu0
        %v4224 = vpop.f32.mrb[0].mxu0
        %v4225 = vadd.f32 %v4064, %v4224
        %v4226 = vpop.f32.mrb[0].mxu0
        %4227 = vmatprep.mubr.bf16.mxu0 0
        %4228 = vmatmul.mubr.bf16.gmra.mrb[0].mxu0 %v2851
        %v4229 = vpop.f32.mrb[0].mxu0
        %v4230 = vadd.f32 %v4069, %v4229
        %v4231 = vpop.f32.mrb[0].mxu0
        %v4232 = vpop.f32.mrb[0].mxu0
        %v4233 = vadd.f32 %v4072, %v4232
        %v4234 = vpop.f32.mrb[0].mxu0
        %4235 = vmatprep.mubr.bf16.mxu0 0
        %4236 = vmatmul.mubr.bf16.gmra.mrb[0].mxu0 %v2860
        %v4237 = vpop.f32.mrb[0].mxu0
        %v4238 = vadd.f32 %v4077, %v4237
        %v4239 = vpop.f32.mrb[0].mxu0
        %v4240 = vpop.f32.mrb[0].mxu0
        %v4241 = vadd.f32 %v4080, %v4240
        %v4242 = vpop.f32.mrb[0].mxu0
        %4243 = vmatprep.mubr.bf16.mxu0 0
        %4244 = vmatmul.mubr.bf16.gmra.mrb[0].mxu0 %v2869
        %v4245 = vpop.f32.mrb[0].mxu0
        %v4246 = vadd.f32 %v4085, %v4245
        %v4247 = vpop.f32.mrb[0].mxu0
        %v4248 = vpop.f32.mrb[0].mxu0
        %v4249 = vadd.f32 %v4088, %v4248
        %v4250 = vpop.f32.mrb[0].mxu0
        %4251 = vmatprep.mubr.bf16.mxu0 0
        %4252 = vmatmul.mubr.bf16.gmra.mrb[0].mxu0 %v2878
        %v4253 = vpop.f32.mrb[0].mxu0
        %v4254 = vadd.f32 %v4093, %v4253
        %v4255 = vpop.f32.mrb[0].mxu0
        %v4256 = vpop.f32.mrb[0].mxu0
        %v4257 = vadd.f32 %v4096, %v4256
        %v4258 = vpop.f32.mrb[0].mxu0
        %4259 = vdwg.mxu0
        %v4260 = vld [vmem:[#allocation6] sm:$0xff]
        %v4261 = vld [vmem:[#allocation6 + $0x8] sm:$0xff]
        %v4262 = vld [vmem:[#allocation6 + $0x10] sm:$0xff]
        %v4263 = vld [vmem:[#allocation6 + $0x18] sm:$0xff]
        %v4264 = vld [vmem:[#allocation6 + $0x20] sm:$0xff]
        %v4265 = vld [vmem:[#allocation6 + $0x28] sm:$0xff]
        %v4266 = vld [vmem:[#allocation6 + $0x30] sm:$0xff]
        %v4267 = vld [vmem:[#allocation6 + $0x38] sm:$0xff]
        %v4268 = vld [vmem:[#allocation6 + $0x40] sm:$0xff]
        %v4269 = vld [vmem:[#allocation6 + $0x48] sm:$0xff]
        %v4270 = vld [vmem:[#allocation6 + $0x50] sm:$0xff]
        %v4271 = vld [vmem:[#allocation6 + $0x58] sm:$0xff]
        %v4272 = vld [vmem:[#allocation6 + $0x60] sm:$0xff]
        %v4273 = vld [vmem:[#allocation6 + $0x68] sm:$0xff]
        %v4274 = vld [vmem:[#allocation6 + $0x70] sm:$0xff]
        %v4275 = vld [vmem:[#allocation6 + $0x78] sm:$0xff]
        %v4276 = vld [vmem:[%s6] sm:$0x1]
        %v4278 = vlaneseq
        %v4279 = vshrl.u32 %v4278, 7
        %v4280 = vsub.s32 0, %v4279
        %v4281 = vrot.slane %v4276, %v4280
        %4283 = vmatprep.subr.mxu0 0.0
        %4284 = vmatpush1.msra.mxu0 %v4260
        %4285 = vmatprep.subr.mxu0 0.0
        %4286 = vmatpush1.msra.mxu0 %v4261
        %4287 = vmatprep.subr.mxu0 0.0
        %4288 = vmatpush1.msra.mxu0 %v4262
        %4289 = vmatprep.subr.mxu0 0.0
        %4290 = vmatpush1.msra.mxu0 %v4263
        %4291 = vmatprep.subr.mxu0 0.0
        %4292 = vmatpush1.msra.mxu0 %v4264
        %4293 = vmatprep.subr.mxu0 0.0
        %4294 = vmatpush1.msra.mxu0 %v4265
        %4295 = vmatprep.subr.mxu0 0.0
        %4296 = vmatpush1.msra.mxu0 %v4266
        %4297 = vmatprep.subr.mxu0 0.0
        %4298 = vmatpush1.msra.mxu0 %v4267
        %4299 = vmatprep.subr.mxu0 0.0
        %4300 = vmatpush1.msra.mxu0 %v4268
        %4301 = vmatprep.subr.mxu0 0.0
        %4302 = vmatpush1.msra.mxu0 %v4269
        %4303 = vmatprep.subr.mxu0 0.0
        %4304 = vmatpush1.msra.mxu0 %v4270
        %4305 = vmatprep.subr.mxu0 0.0
        %4306 = vmatpush1.msra.mxu0 %v4271
        %4307 = vmatprep.subr.mxu0 0.0
        %4308 = vmatpush1.msra.mxu0 %v4272
        %4309 = vmatprep.subr.mxu0 0.0
        %4310 = vmatpush1.msra.mxu0 %v4273
        %4311 = vmatprep.subr.mxu0 0.0
        %4312 = vmatpush1.msra.mxu0 %v4274
        %4313 = vmatprep.subr.mxu0 0.0
        %4314 = vmatpush1.msra.mxu0 %v4275
        %4315 = vmatprep.subr.mxu0 0.0
        %4316 = vmatpush1.msra.mxu0 0.0
        %4317 = vmatprep.subr.mxu0 0.0
        %4318 = vmatpush1.msra.mxu0 0.0
        %4319 = vmatprep.subr.mxu0 0.0
        %4320 = vmatpush1.msra.mxu0 0.0
        %4321 = vmatprep.subr.mxu0 0.0
        %4322 = vmatpush1.msra.mxu0 0.0
        %4323 = vmatprep.subr.mxu0 0.0
        %4324 = vmatpush1.msra.mxu0 0.0
        %4325 = vmatprep.subr.mxu0 0.0
        %4326 = vmatpush1.msra.mxu0 0.0
        %4327 = vmatprep.subr.mxu0 0.0
        %4328 = vmatpush1.msra.mxu0 0.0
        %4329 = vmatprep.subr.mxu0 0.0
        %4330 = vmatpush1.msra.mxu0 0.0
        %4331 = vmatprep.subr.mxu0 0.0
        %4332 = vmatpush1.msra.mxu0 0.0
        %4333 = vmatprep.subr.mxu0 0.0
        %4334 = vmatpush1.msra.mxu0 0.0
        %4335 = vmatprep.subr.mxu0 0.0
        %4336 = vmatpush1.msra.mxu0 0.0
        %4337 = vmatprep.subr.mxu0 0.0
        %4338 = vmatpush1.msra.mxu0 0.0
        %4339 = vmatprep.subr.mxu0 0.0
        %4340 = vmatpush1.msra.mxu0 0.0
        %4341 = vmatprep.subr.mxu0 0.0
        %4342 = vmatpush1.msra.mxu0 0.0
        %4343 = vmatprep.subr.mxu0 0.0
        %4344 = vmatpush1.msra.mxu0 0.0
        %4345 = vmatprep.subr.mxu0 0.0
        %4346 = vmatpush1.msra.mxu0 0.0
        %4347 = vmatprep.mubr.f32.mxu0 0.0
        %4348 = vmatmul.mubr.f32.gmra.mrb[0].mxu0 %v4134
        %v4349 = vpop.f32.mrb[0].mxu0
        %v4350 = vadd.f32 %v4281, %v4349
        %v4351 = vpop.f32.mrb[0].mxu0
        %4352 = vmatprep.mubr.f32.mxu0 0.0
        %4353 = vmatmul.mubr.f32.gmra.mrb[0].mxu0 %v4137
        %v4354 = vpop.f32.mrb[0].mxu0
        %v4355 = vadd.f32 %v4281, %v4354
        %v4356 = vpop.f32.mrb[0].mxu0
        %4357 = vmatprep.mubr.f32.mxu0 0.0
        %4358 = vmatmul.mubr.f32.gmra.mrb[0].mxu0 %v4142
        %v4359 = vpop.f32.mrb[0].mxu0
        %v4360 = vadd.f32 %v4281, %v4359
        %v4361 = vpop.f32.mrb[0].mxu0
        %4362 = vmatprep.mubr.f32.mxu0 0.0
        %4363 = vmatmul.mubr.f32.gmra.mrb[0].mxu0 %v4145
        %v4364 = vpop.f32.mrb[0].mxu0
        %v4365 = vadd.f32 %v4281, %v4364
        %v4366 = vpop.f32.mrb[0].mxu0
        %4367 = vmatprep.mubr.f32.mxu0 0.0
        %4368 = vmatmul.mubr.f32.gmra.mrb[0].mxu0 %v4150
        %v4369 = vpop.f32.mrb[0].mxu0
        %v4370 = vadd.f32 %v4281, %v4369
        %v4371 = vpop.f32.mrb[0].mxu0
        %4372 = vmatprep.mubr.f32.mxu0 0.0
        %4373 = vmatmul.mubr.f32.gmra.mrb[0].mxu0 %v4153
        %v4374 = vpop.f32.mrb[0].mxu0
        %v4375 = vadd.f32 %v4281, %v4374
        %v4376 = vpop.f32.mrb[0].mxu0
        %4377 = vmatprep.mubr.f32.mxu0 0.0
        %4378 = vmatmul.mubr.f32.gmra.mrb[0].mxu0 %v4158
        %v4379 = vpop.f32.mrb[0].mxu0
        %v4380 = vadd.f32 %v4281, %v4379
        %v4381 = vpop.f32.mrb[0].mxu0
        %4382 = vmatprep.mubr.f32.mxu0 0.0
        %4383 = vmatmul.mubr.f32.gmra.mrb[0].mxu0 %v4161
        %v4384 = vpop.f32.mrb[0].mxu0
        %v4385 = vadd.f32 %v4281, %v4384
        %v4386 = vpop.f32.mrb[0].mxu0
        %4387 = vmatprep.mubr.f32.mxu0 0.0
        %4388 = vmatmul.mubr.f32.gmra.mrb[0].mxu0 %v4166
        %v4389 = vpop.f32.mrb[0].mxu0
        %v4390 = vadd.f32 %v4281, %v4389
        %v4391 = vpop.f32.mrb[0].mxu0
        %4392 = vmatprep.mubr.f32.mxu0 0.0
        %4393 = vmatmul.mubr.f32.gmra.mrb[0].mxu0 %v4169
        %v4394 = vpop.f32.mrb[0].mxu0
        %v4395 = vadd.f32 %v4281, %v4394
        %v4396 = vpop.f32.mrb[0].mxu0
        %4397 = vmatprep.mubr.f32.mxu0 0.0
        %4398 = vmatmul.mubr.f32.gmra.mrb[0].mxu0 %v4174
        %v4399 = vpop.f32.mrb[0].mxu0
        %v4400 = vadd.f32 %v4281, %v4399
        %v4401 = vpop.f32.mrb[0].mxu0
        %4402 = vmatprep.mubr.f32.mxu0 0.0
        %4403 = vmatmul.mubr.f32.gmra.mrb[0].mxu0 %v4177
        %v4404 = vpop.f32.mrb[0].mxu0
        %v4405 = vadd.f32 %v4281, %v4404
        %v4406 = vpop.f32.mrb[0].mxu0
        %4407 = vmatprep.mubr.f32.mxu0 0.0
        %4408 = vmatmul.mubr.f32.gmra.mrb[0].mxu0 %v4182
        %v4409 = vpop.f32.mrb[0].mxu0
        %v4410 = vadd.f32 %v4281, %v4409
        %v4411 = vpop.f32.mrb[0].mxu0
        %4412 = vmatprep.mubr.f32.mxu0 0.0
        %4413 = vmatmul.mubr.f32.gmra.mrb[0].mxu0 %v4185
        %v4414 = vpop.f32.mrb[0].mxu0
        %v4415 = vadd.f32 %v4281, %v4414
        %v4416 = vpop.f32.mrb[0].mxu0
        %4417 = vmatprep.mubr.f32.mxu0 0.0
        %4418 = vmatmul.mubr.f32.gmra.mrb[0].mxu0 %v4190
        %v4419 = vpop.f32.mrb[0].mxu0
        %v4420 = vadd.f32 %v4281, %v4419
        %v4421 = vpop.f32.mrb[0].mxu0
        %4422 = vmatprep.mubr.f32.mxu0 0.0
        %4423 = vmatmul.mubr.f32.gmra.mrb[0].mxu0 %v4193
        %v4424 = vpop.f32.mrb[0].mxu0
        %v4425 = vadd.f32 %v4281, %v4424
        %v4426 = vpop.f32.mrb[0].mxu0
        %4427 = vmatprep.mubr.f32.mxu0 0.0
        %4428 = vmatmul.mubr.f32.gmra.mrb[0].mxu0 %v4198
        %v4429 = vpop.f32.mrb[0].mxu0
        %v4430 = vadd.f32 %v4281, %v4429
        %v4431 = vpop.f32.mrb[0].mxu0
        %4432 = vmatprep.mubr.f32.mxu0 0.0
        %4433 = vmatmul.mubr.f32.gmra.mrb[0].mxu0 %v4201
        %v4434 = vpop.f32.mrb[0].mxu0
        %v4435 = vadd.f32 %v4281, %v4434
        %v4436 = vpop.f32.mrb[0].mxu0
        %4437 = vmatprep.mubr.f32.mxu0 0.0
        %4438 = vmatmul.mubr.f32.gmra.mrb[0].mxu0 %v4206
        %v4439 = vpop.f32.mrb[0].mxu0
        %v4440 = vadd.f32 %v4281, %v4439
        %v4441 = vpop.f32.mrb[0].mxu0
        %4442 = vmatprep.mubr.f32.mxu0 0.0
        %4443 = vmatmul.mubr.f32.gmra.mrb[0].mxu0 %v4209
        %v4444 = vpop.f32.mrb[0].mxu0
        %v4445 = vadd.f32 %v4281, %v4444
        %v4446 = vpop.f32.mrb[0].mxu0
        %4447 = vmatprep.mubr.f32.mxu0 0.0
        %4448 = vmatmul.mubr.f32.gmra.mrb[0].mxu0 %v4214
        %v4449 = vpop.f32.mrb[0].mxu0
        %v4450 = vadd.f32 %v4281, %v4449
        %v4451 = vpop.f32.mrb[0].mxu0
        %4452 = vmatprep.mubr.f32.mxu0 0.0
        %4453 = vmatmul.mubr.f32.gmra.mrb[0].mxu0 %v4217
        %v4454 = vpop.f32.mrb[0].mxu0
        %v4455 = vadd.f32 %v4281, %v4454
        %v4456 = vpop.f32.mrb[0].mxu0
        %4457 = vmatprep.mubr.f32.mxu0 0.0
        %4458 = vmatmul.mubr.f32.gmra.mrb[0].mxu0 %v4222
        %v4459 = vpop.f32.mrb[0].mxu0
        %v4460 = vadd.f32 %v4281, %v4459
        %v4461 = vpop.f32.mrb[0].mxu0
        %4462 = vmatprep.mubr.f32.mxu0 0.0
        %4463 = vmatmul.mubr.f32.gmra.mrb[0].mxu0 %v4225
        %v4464 = vpop.f32.mrb[0].mxu0
        %v4465 = vadd.f32 %v4281, %v4464
        %v4466 = vpop.f32.mrb[0].mxu0
        %4467 = vmatprep.mubr.f32.mxu0 0.0
        %4468 = vmatmul.mubr.f32.gmra.mrb[0].mxu0 %v4230
        %v4469 = vpop.f32.mrb[0].mxu0
        %v4470 = vadd.f32 %v4281, %v4469
        %v4471 = vpop.f32.mrb[0].mxu0
        %4472 = vmatprep.mubr.f32.mxu0 0.0
        %4473 = vmatmul.mubr.f32.gmra.mrb[0].mxu0 %v4233
        %v4474 = vpop.f32.mrb[0].mxu0
        %v4475 = vadd.f32 %v4281, %v4474
        %v4476 = vpop.f32.mrb[0].mxu0
        %4477 = vmatprep.mubr.f32.mxu0 0.0
        %4478 = vmatmul.mubr.f32.gmra.mrb[0].mxu0 %v4238
        %v4479 = vpop.f32.mrb[0].mxu0
        %v4480 = vadd.f32 %v4281, %v4479
        %v4481 = vpop.f32.mrb[0].mxu0
        %4482 = vmatprep.mubr.f32.mxu0 0.0
        %4483 = vmatmul.mubr.f32.gmra.mrb[0].mxu0 %v4241
        %v4484 = vpop.f32.mrb[0].mxu0
        %v4485 = vadd.f32 %v4281, %v4484
        %v4486 = vpop.f32.mrb[0].mxu0
        %4487 = vmatprep.mubr.f32.mxu0 0.0
        %4488 = vmatmul.mubr.f32.gmra.mrb[0].mxu0 %v4246
        %v4489 = vpop.f32.mrb[0].mxu0
        %v4490 = vadd.f32 %v4281, %v4489
        %v4491 = vpop.f32.mrb[0].mxu0
        %4492 = vmatprep.mubr.f32.mxu0 0.0
        %4493 = vmatmul.mubr.f32.gmra.mrb[0].mxu0 %v4249
        %v4494 = vpop.f32.mrb[0].mxu0
        %v4495 = vadd.f32 %v4281, %v4494
        %v4496 = vpop.f32.mrb[0].mxu0
        %4497 = vmatprep.mubr.f32.mxu0 0.0
        %4498 = vmatmul.mubr.f32.gmra.mrb[0].mxu0 %v4254
        %v4499 = vpop.f32.mrb[0].mxu0
        %v4500 = vadd.f32 %v4281, %v4499
        %v4501 = vpop.f32.mrb[0].mxu0
        %4502 = vmatprep.mubr.f32.mxu0 0.0
        %4503 = vmatmul.mubr.f32.gmra.mrb[0].mxu0 %v4257
        %v4504 = vpop.f32.mrb[0].mxu0
        %v4505 = vadd.f32 %v4281, %v4504
        %v4506 = vpop.f32.mrb[0].mxu0
        %4507 = vdwg.mxu0
        %v4508 = vmax.f32 %v4350, 0.0
        %v4509 = vmax.f32 %v4355, 0.0
        %v4510 = vmax.f32 %v4360, 0.0
        %v4511 = vmax.f32 %v4365, 0.0
        %v4512 = vmax.f32 %v4370, 0.0
        %v4513 = vmax.f32 %v4375, 0.0
        %v4514 = vmax.f32 %v4380, 0.0
        %v4515 = vmax.f32 %v4385, 0.0
        %v4516 = vmax.f32 %v4390, 0.0
        %v4517 = vmax.f32 %v4395, 0.0
        %v4518 = vmax.f32 %v4400, 0.0
        %v4519 = vmax.f32 %v4405, 0.0
        %v4520 = vmax.f32 %v4410, 0.0
        %v4521 = vmax.f32 %v4415, 0.0
        %v4522 = vmax.f32 %v4420, 0.0
        %v4523 = vmax.f32 %v4425, 0.0
        %v4524 = vmax.f32 %v4430, 0.0
        %v4525 = vmax.f32 %v4435, 0.0
        %v4526 = vmax.f32 %v4440, 0.0
        %v4527 = vmax.f32 %v4445, 0.0
        %v4528 = vmax.f32 %v4450, 0.0
        %v4529 = vmax.f32 %v4455, 0.0
        %v4530 = vmax.f32 %v4460, 0.0
        %v4531 = vmax.f32 %v4465, 0.0
        %v4532 = vmax.f32 %v4470, 0.0
        %v4533 = vmax.f32 %v4475, 0.0
        %v4534 = vmax.f32 %v4480, 0.0
        %v4535 = vmax.f32 %v4485, 0.0
        %v4536 = vmax.f32 %v4490, 0.0
        %v4537 = vmax.f32 %v4495, 0.0
        %v4538 = vmax.f32 %v4500, 0.0
        %v4539 = vmax.f32 %v4505, 0.0
        %v4540 = vld [vmem:[#allocation8] sm:$0xff]
        %v4541 = vld [vmem:[#allocation8 + $0x8] sm:$0xff]
        %v4542 = vld [vmem:[#allocation8 + $0x10] sm:$0xff]
        %v4543 = vld [vmem:[#allocation8 + $0x18] sm:$0xff]
        %v4544 = vld [vmem:[#allocation8 + $0x20] sm:$0xff]
        %v4545 = vld [vmem:[#allocation8 + $0x28] sm:$0xff]
        %v4546 = vld [vmem:[#allocation8 + $0x30] sm:$0xff]
        %v4547 = vld [vmem:[#allocation8 + $0x38] sm:$0xff]
        %v4548 = vld [vmem:[#allocation8 + $0x40] sm:$0xff]
        %v4549 = vld [vmem:[#allocation8 + $0x48] sm:$0xff]
        %v4550 = vld [vmem:[#allocation8 + $0x50] sm:$0xff]
        %v4551 = vld [vmem:[#allocation8 + $0x58] sm:$0xff]
        %v4552 = vld [vmem:[#allocation8 + $0x60] sm:$0xff]
        %v4553 = vld [vmem:[#allocation8 + $0x68] sm:$0xff]
        %v4554 = vld [vmem:[#allocation8 + $0x70] sm:$0xff]
        %v4555 = vld [vmem:[#allocation8 + $0x78] sm:$0xff]
        %v4556 = vld [vmem:[%s8] sm:$0x1]
        %v4558 = vlaneseq
        %v4559 = vshrl.u32 %v4558, 7
        %v4560 = vsub.s32 0, %v4559
        %v4561 = vrot.slane %v4556, %v4560
        %4563 = vmatprep.subr.mxu0 0.0
        %4564 = vmatpush1.msra.mxu0 %v4540
        %4565 = vmatprep.subr.mxu0 0.0
        %4566 = vmatpush1.msra.mxu0 %v4541
        %4567 = vmatprep.subr.mxu0 0.0
        %4568 = vmatpush1.msra.mxu0 %v4542
        %4569 = vmatprep.subr.mxu0 0.0
        %4570 = vmatpush1.msra.mxu0 %v4543
        %4571 = vmatprep.subr.mxu0 0.0
        %4572 = vmatpush1.msra.mxu0 %v4544
        %4573 = vmatprep.subr.mxu0 0.0
        %4574 = vmatpush1.msra.mxu0 %v4545
        %4575 = vmatprep.subr.mxu0 0.0
        %4576 = vmatpush1.msra.mxu0 %v4546
        %4577 = vmatprep.subr.mxu0 0.0
        %4578 = vmatpush1.msra.mxu0 %v4547
        %4579 = vmatprep.subr.mxu0 0.0
        %4580 = vmatpush1.msra.mxu0 %v4548
        %4581 = vmatprep.subr.mxu0 0.0
        %4582 = vmatpush1.msra.mxu0 %v4549
        %4583 = vmatprep.subr.mxu0 0.0
        %4584 = vmatpush1.msra.mxu0 %v4550
        %4585 = vmatprep.subr.mxu0 0.0
        %4586 = vmatpush1.msra.mxu0 %v4551
        %4587 = vmatprep.subr.mxu0 0.0
        %4588 = vmatpush1.msra.mxu0 %v4552
        %4589 = vmatprep.subr.mxu0 0.0
        %4590 = vmatpush1.msra.mxu0 %v4553
        %4591 = vmatprep.subr.mxu0 0.0
        %4592 = vmatpush1.msra.mxu0 %v4554
        %4593 = vmatprep.subr.mxu0 0.0
        %4594 = vmatpush1.msra.mxu0 %v4555
        %4595 = vmatprep.subr.mxu0 0.0
        %4596 = vmatpush1.msra.mxu0 0.0
        %4597 = vmatprep.subr.mxu0 0.0
        %4598 = vmatpush1.msra.mxu0 0.0
        %4599 = vmatprep.subr.mxu0 0.0
        %4600 = vmatpush1.msra.mxu0 0.0
        %4601 = vmatprep.subr.mxu0 0.0
        %4602 = vmatpush1.msra.mxu0 0.0
        %4603 = vmatprep.subr.mxu0 0.0
        %4604 = vmatpush1.msra.mxu0 0.0
        %4605 = vmatprep.subr.mxu0 0.0
        %4606 = vmatpush1.msra.mxu0 0.0
        %4607 = vmatprep.subr.mxu0 0.0
        %4608 = vmatpush1.msra.mxu0 0.0
        %4609 = vmatprep.subr.mxu0 0.0
        %4610 = vmatpush1.msra.mxu0 0.0
        %4611 = vmatprep.subr.mxu0 0.0
        %4612 = vmatpush1.msra.mxu0 0.0
        %4613 = vmatprep.subr.mxu0 0.0
        %4614 = vmatpush1.msra.mxu0 0.0
        %4615 = vmatprep.subr.mxu0 0.0
        %4616 = vmatpush1.msra.mxu0 0.0
        %4617 = vmatprep.subr.mxu0 0.0
        %4618 = vmatpush1.msra.mxu0 0.0
        %4619 = vmatprep.subr.mxu0 0.0
        %4620 = vmatpush1.msra.mxu0 0.0
        %4621 = vmatprep.subr.mxu0 0.0
        %4622 = vmatpush1.msra.mxu0 0.0
        %4623 = vmatprep.subr.mxu0 0.0
        %4624 = vmatpush1.msra.mxu0 0.0
        %4625 = vmatprep.subr.mxu0 0.0
        %4626 = vmatpush1.msra.mxu0 0.0
        %4627 = vmatprep.mubr.f32.mxu0 0.0
        %4628 = vmatmul.mubr.f32.gmra.mrb[0].mxu0 %v4508
        %v4629 = vpop.f32.mrb[0].mxu0
        %v4630 = vadd.f32 %v4561, %v4629
        %v4631 = vpop.f32.mrb[0].mxu0
        %4632 = vmatprep.mubr.f32.mxu0 0.0
        %4633 = vmatmul.mubr.f32.gmra.mrb[0].mxu0 %v4509
        %v4634 = vpop.f32.mrb[0].mxu0
        %v4635 = vadd.f32 %v4561, %v4634
        %v4636 = vpop.f32.mrb[0].mxu0
        %4637 = vmatprep.mubr.f32.mxu0 0.0
        %4638 = vmatmul.mubr.f32.gmra.mrb[0].mxu0 %v4510
        %v4639 = vpop.f32.mrb[0].mxu0
        %v4640 = vadd.f32 %v4561, %v4639
        %v4641 = vpop.f32.mrb[0].mxu0
        %4642 = vmatprep.mubr.f32.mxu0 0.0
        %4643 = vmatmul.mubr.f32.gmra.mrb[0].mxu0 %v4511
        %v4644 = vpop.f32.mrb[0].mxu0
        %v4645 = vadd.f32 %v4561, %v4644
        %v4646 = vpop.f32.mrb[0].mxu0
        %4647 = vmatprep.mubr.f32.mxu0 0.0
        %4648 = vmatmul.mubr.f32.gmra.mrb[0].mxu0 %v4512
        %v4649 = vpop.f32.mrb[0].mxu0
        %v4650 = vadd.f32 %v4561, %v4649
        %v4651 = vpop.f32.mrb[0].mxu0
        %4652 = vmatprep.mubr.f32.mxu0 0.0
        %4653 = vmatmul.mubr.f32.gmra.mrb[0].mxu0 %v4513
        %v4654 = vpop.f32.mrb[0].mxu0
        %v4655 = vadd.f32 %v4561, %v4654
        %v4656 = vpop.f32.mrb[0].mxu0
        %4657 = vmatprep.mubr.f32.mxu0 0.0
        %4658 = vmatmul.mubr.f32.gmra.mrb[0].mxu0 %v4514
        %v4659 = vpop.f32.mrb[0].mxu0
        %v4660 = vadd.f32 %v4561, %v4659
        %v4661 = vpop.f32.mrb[0].mxu0
        %4662 = vmatprep.mubr.f32.mxu0 0.0
        %4663 = vmatmul.mubr.f32.gmra.mrb[0].mxu0 %v4515
        %v4664 = vpop.f32.mrb[0].mxu0
        %v4665 = vadd.f32 %v4561, %v4664
        %v4666 = vpop.f32.mrb[0].mxu0
        %4667 = vmatprep.mubr.f32.mxu0 0.0
        %4668 = vmatmul.mubr.f32.gmra.mrb[0].mxu0 %v4516
        %v4669 = vpop.f32.mrb[0].mxu0
        %v4670 = vadd.f32 %v4561, %v4669
        %v4671 = vpop.f32.mrb[0].mxu0
        %4672 = vmatprep.mubr.f32.mxu0 0.0
        %4673 = vmatmul.mubr.f32.gmra.mrb[0].mxu0 %v4517
        %v4674 = vpop.f32.mrb[0].mxu0
        %v4675 = vadd.f32 %v4561, %v4674
        %v4676 = vpop.f32.mrb[0].mxu0
        %4677 = vmatprep.mubr.f32.mxu0 0.0
        %4678 = vmatmul.mubr.f32.gmra.mrb[0].mxu0 %v4518
        %v4679 = vpop.f32.mrb[0].mxu0
        %v4680 = vadd.f32 %v4561, %v4679
        %v4681 = vpop.f32.mrb[0].mxu0
        %4682 = vmatprep.mubr.f32.mxu0 0.0
        %4683 = vmatmul.mubr.f32.gmra.mrb[0].mxu0 %v4519
        %v4684 = vpop.f32.mrb[0].mxu0
        %v4685 = vadd.f32 %v4561, %v4684
        %v4686 = vpop.f32.mrb[0].mxu0
        %4687 = vmatprep.mubr.f32.mxu0 0.0
        %4688 = vmatmul.mubr.f32.gmra.mrb[0].mxu0 %v4520
        %v4689 = vpop.f32.mrb[0].mxu0
        %v4690 = vadd.f32 %v4561, %v4689
        %v4691 = vpop.f32.mrb[0].mxu0
        %4692 = vmatprep.mubr.f32.mxu0 0.0
        %4693 = vmatmul.mubr.f32.gmra.mrb[0].mxu0 %v4521
        %v4694 = vpop.f32.mrb[0].mxu0
        %v4695 = vadd.f32 %v4561, %v4694
        %v4696 = vpop.f32.mrb[0].mxu0
        %4697 = vmatprep.mubr.f32.mxu0 0.0
        %4698 = vmatmul.mubr.f32.gmra.mrb[0].mxu0 %v4522
        %v4699 = vpop.f32.mrb[0].mxu0
        %v4700 = vadd.f32 %v4561, %v4699
        %v4701 = vpop.f32.mrb[0].mxu0
        %4702 = vmatprep.mubr.f32.mxu0 0.0
        %4703 = vmatmul.mubr.f32.gmra.mrb[0].mxu0 %v4523
        %v4704 = vpop.f32.mrb[0].mxu0
        %v4705 = vadd.f32 %v4561, %v4704
        %v4706 = vpop.f32.mrb[0].mxu0
        %4707 = vmatprep.mubr.f32.mxu0 0.0
        %4708 = vmatmul.mubr.f32.gmra.mrb[0].mxu0 %v4524
        %v4709 = vpop.f32.mrb[0].mxu0
        %v4710 = vadd.f32 %v4561, %v4709
        %v4711 = vpop.f32.mrb[0].mxu0
        %4712 = vmatprep.mubr.f32.mxu0 0.0
        %4713 = vmatmul.mubr.f32.gmra.mrb[0].mxu0 %v4525
        %v4714 = vpop.f32.mrb[0].mxu0
        %v4715 = vadd.f32 %v4561, %v4714
        %v4716 = vpop.f32.mrb[0].mxu0
        %4717 = vmatprep.mubr.f32.mxu0 0.0
        %4718 = vmatmul.mubr.f32.gmra.mrb[0].mxu0 %v4526
        %v4719 = vpop.f32.mrb[0].mxu0
        %v4720 = vadd.f32 %v4561, %v4719
        %v4721 = vpop.f32.mrb[0].mxu0
        %4722 = vmatprep.mubr.f32.mxu0 0.0
        %4723 = vmatmul.mubr.f32.gmra.mrb[0].mxu0 %v4527
        %v4724 = vpop.f32.mrb[0].mxu0
        %v4725 = vadd.f32 %v4561, %v4724
        %v4726 = vpop.f32.mrb[0].mxu0
        %4727 = vmatprep.mubr.f32.mxu0 0.0
        %4728 = vmatmul.mubr.f32.gmra.mrb[0].mxu0 %v4528
        %v4729 = vpop.f32.mrb[0].mxu0
        %v4730 = vadd.f32 %v4561, %v4729
        %v4731 = vpop.f32.mrb[0].mxu0
        %4732 = vmatprep.mubr.f32.mxu0 0.0
        %4733 = vmatmul.mubr.f32.gmra.mrb[0].mxu0 %v4529
        %v4734 = vpop.f32.mrb[0].mxu0
        %v4735 = vadd.f32 %v4561, %v4734
        %v4736 = vpop.f32.mrb[0].mxu0
        %4737 = vmatprep.mubr.f32.mxu0 0.0
        %4738 = vmatmul.mubr.f32.gmra.mrb[0].mxu0 %v4530
        %v4739 = vpop.f32.mrb[0].mxu0
        %v4740 = vadd.f32 %v4561, %v4739
        %v4741 = vpop.f32.mrb[0].mxu0
        %4742 = vmatprep.mubr.f32.mxu0 0.0
        %4743 = vmatmul.mubr.f32.gmra.mrb[0].mxu0 %v4531
        %v4744 = vpop.f32.mrb[0].mxu0
        %v4745 = vadd.f32 %v4561, %v4744
        %v4746 = vpop.f32.mrb[0].mxu0
        %4747 = vmatprep.mubr.f32.mxu0 0.0
        %4748 = vmatmul.mubr.f32.gmra.mrb[0].mxu0 %v4532
        %v4749 = vpop.f32.mrb[0].mxu0
        %v4750 = vadd.f32 %v4561, %v4749
        %v4751 = vpop.f32.mrb[0].mxu0
        %4752 = vmatprep.mubr.f32.mxu0 0.0
        %4753 = vmatmul.mubr.f32.gmra.mrb[0].mxu0 %v4533
        %v4754 = vpop.f32.mrb[0].mxu0
        %v4755 = vadd.f32 %v4561, %v4754
        %v4756 = vpop.f32.mrb[0].mxu0
        %4757 = vmatprep.mubr.f32.mxu0 0.0
        %4758 = vmatmul.mubr.f32.gmra.mrb[0].mxu0 %v4534
        %v4759 = vpop.f32.mrb[0].mxu0
        %v4760 = vadd.f32 %v4561, %v4759
        %v4761 = vpop.f32.mrb[0].mxu0
        %4762 = vmatprep.mubr.f32.mxu0 0.0
        %4763 = vmatmul.mubr.f32.gmra.mrb[0].mxu0 %v4535
        %v4764 = vpop.f32.mrb[0].mxu0
        %v4765 = vadd.f32 %v4561, %v4764
        %v4766 = vpop.f32.mrb[0].mxu0
        %4767 = vmatprep.mubr.f32.mxu0 0.0
        %4768 = vmatmul.mubr.f32.gmra.mrb[0].mxu0 %v4536
        %v4769 = vpop.f32.mrb[0].mxu0
        %v4770 = vadd.f32 %v4561, %v4769
        %v4771 = vpop.f32.mrb[0].mxu0
        %4772 = vmatprep.mubr.f32.mxu0 0.0
        %4773 = vmatmul.mubr.f32.gmra.mrb[0].mxu0 %v4537
        %v4774 = vpop.f32.mrb[0].mxu0
        %v4775 = vadd.f32 %v4561, %v4774
        %v4776 = vpop.f32.mrb[0].mxu0
        %4777 = vmatprep.mubr.f32.mxu0 0.0
        %4778 = vmatmul.mubr.f32.gmra.mrb[0].mxu0 %v4538
        %v4779 = vpop.f32.mrb[0].mxu0
        %v4780 = vadd.f32 %v4561, %v4779
        %v4781 = vpop.f32.mrb[0].mxu0
        %4782 = vmatprep.mubr.f32.mxu0 0.0
        %4783 = vmatmul.mubr.f32.gmra.mrb[0].mxu0 %v4539
        %v4784 = vpop.f32.mrb[0].mxu0
        %v4785 = vadd.f32 %v4561, %v4784
        %v4786 = vpop.f32.mrb[0].mxu0
        %4787 = vdwg.mxu0
        %v4788 = vmax.f32 %v4630, 0.0
        %v4789 = vmax.f32 %v4635, 0.0
        %v4790 = vmax.f32 %v4640, 0.0
        %v4791 = vmax.f32 %v4645, 0.0
        %v4792 = vmax.f32 %v4650, 0.0
        %v4793 = vmax.f32 %v4655, 0.0
        %v4794 = vmax.f32 %v4660, 0.0
        %v4795 = vmax.f32 %v4665, 0.0
        %v4796 = vmax.f32 %v4670, 0.0
        %v4797 = vmax.f32 %v4675, 0.0
        %v4798 = vmax.f32 %v4680, 0.0
        %v4799 = vmax.f32 %v4685, 0.0
        %v4800 = vmax.f32 %v4690, 0.0
        %v4801 = vmax.f32 %v4695, 0.0
        %v4802 = vmax.f32 %v4700, 0.0
        %v4803 = vmax.f32 %v4705, 0.0
        %v4804 = vmax.f32 %v4710, 0.0
        %v4805 = vmax.f32 %v4715, 0.0
        %v4806 = vmax.f32 %v4720, 0.0
        %v4807 = vmax.f32 %v4725, 0.0
        %v4808 = vmax.f32 %v4730, 0.0
        %v4809 = vmax.f32 %v4735, 0.0
        %v4810 = vmax.f32 %v4740, 0.0
        %v4811 = vmax.f32 %v4745, 0.0
        %v4812 = vmax.f32 %v4750, 0.0
        %v4813 = vmax.f32 %v4755, 0.0
        %v4814 = vmax.f32 %v4760, 0.0
        %v4815 = vmax.f32 %v4765, 0.0
        %v4816 = vmax.f32 %v4770, 0.0
        %v4817 = vmax.f32 %v4775, 0.0
        %v4818 = vmax.f32 %v4780, 0.0
        %v4819 = vmax.f32 %v4785, 0.0
        %4820 = vst [vmem:[%s2125 + $0x1] sm:$0xff] %v4788
        %4821 = vst [vmem:[%s2125 + $0x9] sm:$0xff] %v4789
        %4822 = vst [vmem:[%s2125 + $0x19] sm:$0xff] %v4790
        %4823 = vst [vmem:[%s2125 + $0x21] sm:$0xff] %v4791
        %4824 = vst [vmem:[%s2125 + $0x31] sm:$0xff] %v4792
        %4825 = vst [vmem:[%s2125 + $0x39] sm:$0xff] %v4793
        %4826 = vst [vmem:[%s2125 + $0x49] sm:$0xff] %v4794
        %4827 = vst [vmem:[%s2125 + $0x51] sm:$0xff] %v4795
        %4828 = vst [vmem:[%s2125 + $0x61] sm:$0xff] %v4796
        %4829 = vst [vmem:[%s2125 + $0x69] sm:$0xff] %v4797
        %4830 = vst [vmem:[%s2125 + $0x79] sm:$0xff] %v4798
        %4831 = vst [vmem:[%s2125 + $0x81] sm:$0xff] %v4799
        %4832 = vst [vmem:[%s2125 + $0x91] sm:$0xff] %v4800
        %4833 = vst [vmem:[%s2125 + $0x99] sm:$0xff] %v4801
        %4834 = vst [vmem:[%s2125 + $0xa9] sm:$0xff] %v4802
        %4835 = vst [vmem:[%s2125 + $0xb1] sm:$0xff] %v4803
        %4836 = vst [vmem:[%s2125 + $0xc1] sm:$0xff] %v4804
        %4837 = vst [vmem:[%s2125 + $0xc9] sm:$0xff] %v4805
        %4838 = vst [vmem:[%s2125 + $0xd9] sm:$0xff] %v4806
        %4839 = vst [vmem:[%s2125 + $0xe1] sm:$0xff] %v4807
        %4840 = vst [vmem:[%s2125 + $0xf1] sm:$0xff] %v4808
        %4841 = vst [vmem:[%s2125 + $0xf9] sm:$0xff] %v4809
        %4842 = vst [vmem:[%s2125 + $0x109] sm:$0xff] %v4810
        %4843 = vst [vmem:[%s2125 + $0x111] sm:$0xff] %v4811
        %4844 = vst [vmem:[%s2125 + $0x121] sm:$0xff] %v4812
        %4845 = vst [vmem:[%s2125 + $0x129] sm:$0xff] %v4813
        %4846 = vst [vmem:[%s2125 + $0x139] sm:$0xff] %v4814
        %4847 = vst [vmem:[%s2125 + $0x141] sm:$0xff] %v4815
        %4848 = vst [vmem:[%s2125 + $0x151] sm:$0xff] %v4816
        %4849 = vst [vmem:[%s2125 + $0x159] sm:$0xff] %v4817
        %4850 = vst [vmem:[%s2125 + $0x169] sm:$0xff] %v4818
        %4851 = vst [vmem:[%s2125 + $0x171] sm:$0xff] %v4819
        %v4852 = vld [vmem:[#allocation2] sm:$0xff]
        %v4853 = vld [vmem:[#allocation2 + $0x8] sm:$0xff]
        %v4854 = vld [vmem:[#allocation2 + $0x18] sm:$0xff]
        %v4855 = vld [vmem:[#allocation2 + $0x20] sm:$0xff]
        %v4856 = vld [vmem:[#allocation2 + $0x30] sm:$0xff]
        %v4857 = vld [vmem:[#allocation2 + $0x38] sm:$0xff]
        %v4858 = vld [vmem:[#allocation2 + $0x48] sm:$0xff]
        %v4859 = vld [vmem:[#allocation2 + $0x50] sm:$0xff]
        %v4860 = vld [vmem:[#allocation2 + $0x60] sm:$0xff]
        %v4861 = vld [vmem:[#allocation2 + $0x68] sm:$0xff]
        %v4862 = vld [vmem:[#allocation2 + $0x78] sm:$0xff]
        %v4863 = vld [vmem:[#allocation2 + $0x80] sm:$0xff]
        %v4864 = vld [vmem:[#allocation2 + $0x90] sm:$0xff]
        %v4865 = vld [vmem:[#allocation2 + $0x98] sm:$0xff]
        %v4866 = vld [vmem:[#allocation2 + $0xa8] sm:$0xff]
        %v4867 = vld [vmem:[#allocation2 + $0xb0] sm:$0xff]
        %v4868 = vld [vmem:[#allocation2 + $0xc0] sm:$0xff]
        %v4869 = vld [vmem:[#allocation2 + $0xc8] sm:$0xff]
        %v4870 = vld [vmem:[#allocation2 + $0xd8] sm:$0xff]
        %v4871 = vld [vmem:[#allocation2 + $0xe0] sm:$0xff]
        %v4872 = vld [vmem:[#allocation2 + $0xf0] sm:$0xff]
        %v4873 = vld [vmem:[#allocation2 + $0xf8] sm:$0xff]
        %v4874 = vld [vmem:[#allocation2 + $0x108] sm:$0xff]
        %v4875 = vld [vmem:[#allocation2 + $0x110] sm:$0xff]
        %v4876 = vld [vmem:[#allocation2 + $0x120] sm:$0xff]
        %v4877 = vld [vmem:[#allocation2 + $0x128] sm:$0xff]
        %v4878 = vld [vmem:[#allocation2 + $0x138] sm:$0xff]
        %v4879 = vld [vmem:[#allocation2 + $0x140] sm:$0xff]
        %v4880 = vld [vmem:[#allocation2 + $0x150] sm:$0xff]
        %v4881 = vld [vmem:[#allocation2 + $0x158] sm:$0xff]
        %v4882 = vld [vmem:[#allocation2 + $0x168] sm:$0xff]
        %v4883 = vld [vmem:[#allocation2 + $0x170] sm:$0xff]
        %v4884 = vpack.c.bf16 %v4853, %v4852
        %v4885 = vpack.c.bf16 %v4855, %v4854
        %v4886 = vpack.c.bf16 %v4857, %v4856
        %v4887 = vpack.c.bf16 %v4859, %v4858
        %v4888 = vpack.c.bf16 %v4861, %v4860
        %v4889 = vpack.c.bf16 %v4863, %v4862
        %v4890 = vpack.c.bf16 %v4865, %v4864
        %v4891 = vpack.c.bf16 %v4867, %v4866
        %v4892 = vpack.c.bf16 %v4869, %v4868
        %v4893 = vpack.c.bf16 %v4871, %v4870
        %v4894 = vpack.c.bf16 %v4873, %v4872
        %v4895 = vpack.c.bf16 %v4875, %v4874
        %v4896 = vpack.c.bf16 %v4877, %v4876
        %v4897 = vpack.c.bf16 %v4879, %v4878
        %v4898 = vpack.c.bf16 %v4881, %v4880
        %v4899 = vpack.c.bf16 %v4883, %v4882
        %4900 = vst [vmem:[#allocation3] sm:$0xff] %v4884
        %4901 = vst [vmem:[#allocation3 + $0x48] sm:$0xff] %v4885
        %4902 = vst [vmem:[#allocation3 + $0x90] sm:$0xff] %v4886
        %4903 = vst [vmem:[#allocation3 + $0xd8] sm:$0xff] %v4887
        %4904 = vst [vmem:[#allocation3 + $0x120] sm:$0xff] %v4888
        %4905 = vst [vmem:[#allocation3 + $0x168] sm:$0xff] %v4889
        %4906 = vst [vmem:[#allocation3 + $0x1b0] sm:$0xff] %v4890
        %4907 = vst [vmem:[#allocation3 + $0x1f8] sm:$0xff] %v4891
        %4908 = vst [vmem:[#allocation3 + $0x240] sm:$0xff] %v4892
        %4909 = vst [vmem:[#allocation3 + $0x288] sm:$0xff] %v4893
        %4910 = vst [vmem:[#allocation3 + $0x2d0] sm:$0xff] %v4894
        %4911 = vst [vmem:[#allocation3 + $0x318] sm:$0xff] %v4895
        %4912 = vst [vmem:[#allocation3 + $0x360] sm:$0xff] %v4896
        %4913 = vst [vmem:[#allocation3 + $0x3a8] sm:$0xff] %v4897
        %4914 = vst [vmem:[#allocation3 + $0x3f0] sm:$0xff] %v4898
        %4915 = vst [vmem:[#allocation3 + $0x438] sm:$0xff] %v4899
        %v4916 = vld [vmem:[#allocation2 + $0x1] sm:$0xff]
        %v4917 = vld [vmem:[#allocation2 + $0x9] sm:$0xff]
        %v4918 = vld [vmem:[#allocation2 + $0x19] sm:$0xff]
        %v4919 = vld [vmem:[#allocation2 + $0x21] sm:$0xff]
        %v4920 = vld [vmem:[#allocation2 + $0x31] sm:$0xff]
        %v4921 = vld [vmem:[#allocation2 + $0x39] sm:$0xff]
        %v4922 = vld [vmem:[#allocation2 + $0x49] sm:$0xff]
        %v4923 = vld [vmem:[#allocation2 + $0x51] sm:$0xff]
        %v4924 = vld [vmem:[#allocation2 + $0x61] sm:$0xff]
        %v4925 = vld [vmem:[#allocation2 + $0x69] sm:$0xff]
        %v4926 = vld [vmem:[#allocation2 + $0x79] sm:$0xff]
        %v4927 = vld [vmem:[#allocation2 + $0x81] sm:$0xff]
        %v4928 = vld [vmem:[#allocation2 + $0x91] sm:$0xff]
        %v4929 = vld [vmem:[#allocation2 + $0x99] sm:$0xff]
        %v4930 = vld [vmem:[#allocation2 + $0xa9] sm:$0xff]
        %v4931 = vld [vmem:[#allocation2 + $0xb1] sm:$0xff]
        %v4932 = vld [vmem:[#allocation2 + $0xc1] sm:$0xff]
        %v4933 = vld [vmem:[#allocation2 + $0xc9] sm:$0xff]
        %v4934 = vld [vmem:[#allocation2 + $0xd9] sm:$0xff]
        %v4935 = vld [vmem:[#allocation2 + $0xe1] sm:$0xff]
        %v4936 = vld [vmem:[#allocation2 + $0xf1] sm:$0xff]
        %v4937 = vld [vmem:[#allocation2 + $0xf9] sm:$0xff]
        %v4938 = vld [vmem:[#allocation2 + $0x109] sm:$0xff]
        %v4939 = vld [vmem:[#allocation2 + $0x111] sm:$0xff]
        %v4940 = vld [vmem:[#allocation2 + $0x121] sm:$0xff]
        %v4941 = vld [vmem:[#allocation2 + $0x129] sm:$0xff]
        %v4942 = vld [vmem:[#allocation2 + $0x139] sm:$0xff]
        %v4943 = vld [vmem:[#allocation2 + $0x141] sm:$0xff]
        %v4944 = vld [vmem:[#allocation2 + $0x151] sm:$0xff]
        %v4945 = vld [vmem:[#allocation2 + $0x159] sm:$0xff]
        %v4946 = vld [vmem:[#allocation2 + $0x169] sm:$0xff]
        %v4947 = vld [vmem:[#allocation2 + $0x171] sm:$0xff]
        %v4948 = vpack.c.bf16 %v4917, %v4916
        %v4949 = vpack.c.bf16 %v4919, %v4918
        %v4950 = vpack.c.bf16 %v4921, %v4920
        %v4951 = vpack.c.bf16 %v4923, %v4922
        %v4952 = vpack.c.bf16 %v4925, %v4924
        %v4953 = vpack.c.bf16 %v4927, %v4926
        %v4954 = vpack.c.bf16 %v4929, %v4928
        %v4955 = vpack.c.bf16 %v4931, %v4930
        %v4956 = vpack.c.bf16 %v4933, %v4932
        %v4957 = vpack.c.bf16 %v4935, %v4934
        %v4958 = vpack.c.bf16 %v4937, %v4936
        %v4959 = vpack.c.bf16 %v4939, %v4938
        %v4960 = vpack.c.bf16 %v4941, %v4940
        %v4961 = vpack.c.bf16 %v4943, %v4942
        %v4962 = vpack.c.bf16 %v4945, %v4944
        %v4963 = vpack.c.bf16 %v4947, %v4946
        %4964 = vst [vmem:[#allocation3 + $0x8] sm:$0xff] %v4948
        %4965 = vst [vmem:[#allocation3 + $0x50] sm:$0xff] %v4949
        %4966 = vst [vmem:[#allocation3 + $0x98] sm:$0xff] %v4950
        %4967 = vst [vmem:[#allocation3 + $0xe0] sm:$0xff] %v4951
        %4968 = vst [vmem:[#allocation3 + $0x128] sm:$0xff] %v4952
        %4969 = vst [vmem:[#allocation3 + $0x170] sm:$0xff] %v4953
        %4970 = vst [vmem:[#allocation3 + $0x1b8] sm:$0xff] %v4954
        %4971 = vst [vmem:[#allocation3 + $0x200] sm:$0xff] %v4955
        %4972 = vst [vmem:[#allocation3 + $0x248] sm:$0xff] %v4956
        %4973 = vst [vmem:[#allocation3 + $0x290] sm:$0xff] %v4957
        %4974 = vst [vmem:[#allocation3 + $0x2d8] sm:$0xff] %v4958
        %4975 = vst [vmem:[#allocation3 + $0x320] sm:$0xff] %v4959
        %4976 = vst [vmem:[#allocation3 + $0x368] sm:$0xff] %v4960
        %4977 = vst [vmem:[#allocation3 + $0x3b0] sm:$0xff] %v4961
        %4978 = vst [vmem:[#allocation3 + $0x3f8] sm:$0xff] %v4962
        %4979 = vst [vmem:[#allocation3 + $0x440] sm:$0xff] %v4963
        %v4980 = vld [vmem:[#allocation2 + $0x2] sm:$0xff]
        %v4981 = vld [vmem:[#allocation2 + $0xa] sm:$0xff]
        %v4982 = vld [vmem:[#allocation2 + $0x1a] sm:$0xff]
        %v4983 = vld [vmem:[#allocation2 + $0x22] sm:$0xff]
        %v4984 = vld [vmem:[#allocation2 + $0x32] sm:$0xff]
        %v4985 = vld [vmem:[#allocation2 + $0x3a] sm:$0xff]
        %v4986 = vld [vmem:[#allocation2 + $0x4a] sm:$0xff]
        %v4987 = vld [vmem:[#allocation2 + $0x52] sm:$0xff]
        %v4988 = vld [vmem:[#allocation2 + $0x62] sm:$0xff]
        %v4989 = vld [vmem:[#allocation2 + $0x6a] sm:$0xff]
        %v4990 = vld [vmem:[#allocation2 + $0x7a] sm:$0xff]
        %v4991 = vld [vmem:[#allocation2 + $0x82] sm:$0xff]
        %v4992 = vld [vmem:[#allocation2 + $0x92] sm:$0xff]
        %v4993 = vld [vmem:[#allocation2 + $0x9a] sm:$0xff]
        %v4994 = vld [vmem:[#allocation2 + $0xaa] sm:$0xff]
        %v4995 = vld [vmem:[#allocation2 + $0xb2] sm:$0xff]
        %v4996 = vld [vmem:[#allocation2 + $0xc2] sm:$0xff]
        %v4997 = vld [vmem:[#allocation2 + $0xca] sm:$0xff]
        %v4998 = vld [vmem:[#allocation2 + $0xda] sm:$0xff]
        %v4999 = vld [vmem:[#allocation2 + $0xe2] sm:$0xff]
        %v5000 = vld [vmem:[#allocation2 + $0xf2] sm:$0xff]
        %v5001 = vld [vmem:[#allocation2 + $0xfa] sm:$0xff]
        %v5002 = vld [vmem:[#allocation2 + $0x10a] sm:$0xff]
        %v5003 = vld [vmem:[#allocation2 + $0x112] sm:$0xff]
        %v5004 = vld [vmem:[#allocation2 + $0x122] sm:$0xff]
        %v5005 = vld [vmem:[#allocation2 + $0x12a] sm:$0xff]
        %v5006 = vld [vmem:[#allocation2 + $0x13a] sm:$0xff]
        %v5007 = vld [vmem:[#allocation2 + $0x142] sm:$0xff]
        %v5008 = vld [vmem:[#allocation2 + $0x152] sm:$0xff]
        %v5009 = vld [vmem:[#allocation2 + $0x15a] sm:$0xff]
        %v5010 = vld [vmem:[#allocation2 + $0x16a] sm:$0xff]
        %v5011 = vld [vmem:[#allocation2 + $0x172] sm:$0xff]
        %v5012 = vpack.c.bf16 %v4981, %v4980
        %v5013 = vpack.c.bf16 %v4983, %v4982
        %v5014 = vpack.c.bf16 %v4985, %v4984
        %v5015 = vpack.c.bf16 %v4987, %v4986
        %v5016 = vpack.c.bf16 %v4989, %v4988
        %v5017 = vpack.c.bf16 %v4991, %v4990
        %v5018 = vpack.c.bf16 %v4993, %v4992
        %v5019 = vpack.c.bf16 %v4995, %v4994
        %v5020 = vpack.c.bf16 %v4997, %v4996
        %v5021 = vpack.c.bf16 %v4999, %v4998
        %v5022 = vpack.c.bf16 %v5001, %v5000
        %v5023 = vpack.c.bf16 %v5003, %v5002
        %v5024 = vpack.c.bf16 %v5005, %v5004
        %v5025 = vpack.c.bf16 %v5007, %v5006
        %v5026 = vpack.c.bf16 %v5009, %v5008
        %v5027 = vpack.c.bf16 %v5011, %v5010
        %5028 = vst [vmem:[#allocation3 + $0x10] sm:$0xff] %v5012
        %5029 = vst [vmem:[#allocation3 + $0x58] sm:$0xff] %v5013
        %5030 = vst [vmem:[#allocation3 + $0xa0] sm:$0xff] %v5014
        %5031 = vst [vmem:[#allocation3 + $0xe8] sm:$0xff] %v5015
        %5032 = vst [vmem:[#allocation3 + $0x130] sm:$0xff] %v5016
        %5033 = vst [vmem:[#allocation3 + $0x178] sm:$0xff] %v5017
        %5034 = vst [vmem:[#allocation3 + $0x1c0] sm:$0xff] %v5018
        %5035 = vst [vmem:[#allocation3 + $0x208] sm:$0xff] %v5019
        %5036 = vst [vmem:[#allocation3 + $0x250] sm:$0xff] %v5020
        %5037 = vst [vmem:[#allocation3 + $0x298] sm:$0xff] %v5021
        %5038 = vst [vmem:[#allocation3 + $0x2e0] sm:$0xff] %v5022
        %5039 = vst [vmem:[#allocation3 + $0x328] sm:$0xff] %v5023
        %5040 = vst [vmem:[#allocation3 + $0x370] sm:$0xff] %v5024
        %5041 = vst [vmem:[#allocation3 + $0x3b8] sm:$0xff] %v5025
        %5042 = vst [vmem:[#allocation3 + $0x400] sm:$0xff] %v5026
        %5043 = vst [vmem:[#allocation3 + $0x448] sm:$0xff] %v5027
        %v5044 = vld [vmem:[%s2125] sm:$0xff]
        %v5045 = vld [vmem:[%s2125 + $0x8] sm:$0xff]
        %v5046 = vld [vmem:[%s2125 + $0x18] sm:$0xff]
        %v5047 = vld [vmem:[%s2125 + $0x20] sm:$0xff]
        %v5048 = vld [vmem:[%s2125 + $0x30] sm:$0xff]
        %v5049 = vld [vmem:[%s2125 + $0x38] sm:$0xff]
        %v5050 = vld [vmem:[%s2125 + $0x48] sm:$0xff]
        %v5051 = vld [vmem:[%s2125 + $0x50] sm:$0xff]
        %v5052 = vld [vmem:[%s2125 + $0x60] sm:$0xff]
        %v5053 = vld [vmem:[%s2125 + $0x68] sm:$0xff]
        %v5054 = vld [vmem:[%s2125 + $0x78] sm:$0xff]
        %v5055 = vld [vmem:[%s2125 + $0x80] sm:$0xff]
        %v5056 = vld [vmem:[%s2125 + $0x90] sm:$0xff]
        %v5057 = vld [vmem:[%s2125 + $0x98] sm:$0xff]
        %v5058 = vld [vmem:[%s2125 + $0xa8] sm:$0xff]
        %v5059 = vld [vmem:[%s2125 + $0xb0] sm:$0xff]
        %v5060 = vld [vmem:[%s2125 + $0xc0] sm:$0xff]
        %v5061 = vld [vmem:[%s2125 + $0xc8] sm:$0xff]
        %v5062 = vld [vmem:[%s2125 + $0xd8] sm:$0xff]
        %v5063 = vld [vmem:[%s2125 + $0xe0] sm:$0xff]
        %v5064 = vld [vmem:[%s2125 + $0xf0] sm:$0xff]
        %v5065 = vld [vmem:[%s2125 + $0xf8] sm:$0xff]
        %v5066 = vld [vmem:[%s2125 + $0x108] sm:$0xff]
        %v5067 = vld [vmem:[%s2125 + $0x110] sm:$0xff]
        %v5068 = vld [vmem:[%s2125 + $0x120] sm:$0xff]
        %v5069 = vld [vmem:[%s2125 + $0x128] sm:$0xff]
        %v5070 = vld [vmem:[%s2125 + $0x138] sm:$0xff]
        %v5071 = vld [vmem:[%s2125 + $0x140] sm:$0xff]
        %v5072 = vld [vmem:[%s2125 + $0x150] sm:$0xff]
        %v5073 = vld [vmem:[%s2125 + $0x158] sm:$0xff]
        %v5074 = vld [vmem:[%s2125 + $0x168] sm:$0xff]
        %v5075 = vld [vmem:[%s2125 + $0x170] sm:$0xff]
        %v5076 = vpack.c.bf16 %v5045, %v5044
        %v5077 = vpack.c.bf16 %v5047, %v5046
        %v5078 = vpack.c.bf16 %v5049, %v5048
        %v5079 = vpack.c.bf16 %v5051, %v5050
        %v5080 = vpack.c.bf16 %v5053, %v5052
        %v5081 = vpack.c.bf16 %v5055, %v5054
        %v5082 = vpack.c.bf16 %v5057, %v5056
        %v5083 = vpack.c.bf16 %v5059, %v5058
        %v5084 = vpack.c.bf16 %v5061, %v5060
        %v5085 = vpack.c.bf16 %v5063, %v5062
        %v5086 = vpack.c.bf16 %v5065, %v5064
        %v5087 = vpack.c.bf16 %v5067, %v5066
        %v5088 = vpack.c.bf16 %v5069, %v5068
        %v5089 = vpack.c.bf16 %v5071, %v5070
        %v5090 = vpack.c.bf16 %v5073, %v5072
        %v5091 = vpack.c.bf16 %v5075, %v5074
        %5092 = vst [vmem:[#allocation3 + $0x18] sm:$0xff] %v5076
        %5093 = vst [vmem:[#allocation3 + $0x60] sm:$0xff] %v5077
        %5094 = vst [vmem:[#allocation3 + $0xa8] sm:$0xff] %v5078
        %5095 = vst [vmem:[#allocation3 + $0xf0] sm:$0xff] %v5079
        %5096 = vst [vmem:[#allocation3 + $0x138] sm:$0xff] %v5080
        %5097 = vst [vmem:[#allocation3 + $0x180] sm:$0xff] %v5081
        %5098 = vst [vmem:[#allocation3 + $0x1c8] sm:$0xff] %v5082
        %5099 = vst [vmem:[#allocation3 + $0x210] sm:$0xff] %v5083
        %5100 = vst [vmem:[#allocation3 + $0x258] sm:$0xff] %v5084
        %5101 = vst [vmem:[#allocation3 + $0x2a0] sm:$0xff] %v5085
        %5102 = vst [vmem:[#allocation3 + $0x2e8] sm:$0xff] %v5086
        %5103 = vst [vmem:[#allocation3 + $0x330] sm:$0xff] %v5087
        %5104 = vst [vmem:[#allocation3 + $0x378] sm:$0xff] %v5088
        %5105 = vst [vmem:[#allocation3 + $0x3c0] sm:$0xff] %v5089
        %5106 = vst [vmem:[#allocation3 + $0x408] sm:$0xff] %v5090
        %5107 = vst [vmem:[#allocation3 + $0x450] sm:$0xff] %v5091
        %v5108 = vld [vmem:[%s2125 + $0x1] sm:$0xff]
        %v5109 = vld [vmem:[%s2125 + $0x9] sm:$0xff]
        %v5110 = vld [vmem:[%s2125 + $0x19] sm:$0xff]
        %v5111 = vld [vmem:[%s2125 + $0x21] sm:$0xff]
        %v5112 = vld [vmem:[%s2125 + $0x31] sm:$0xff]
        %v5113 = vld [vmem:[%s2125 + $0x39] sm:$0xff]
        %v5114 = vld [vmem:[%s2125 + $0x49] sm:$0xff]
        %v5115 = vld [vmem:[%s2125 + $0x51] sm:$0xff]
        %v5116 = vld [vmem:[%s2125 + $0x61] sm:$0xff]
        %v5117 = vld [vmem:[%s2125 + $0x69] sm:$0xff]
        %v5118 = vld [vmem:[%s2125 + $0x79] sm:$0xff]
        %v5119 = vld [vmem:[%s2125 + $0x81] sm:$0xff]
        %v5120 = vld [vmem:[%s2125 + $0x91] sm:$0xff]
        %v5121 = vld [vmem:[%s2125 + $0x99] sm:$0xff]
        %v5122 = vld [vmem:[%s2125 + $0xa9] sm:$0xff]
        %v5123 = vld [vmem:[%s2125 + $0xb1] sm:$0xff]
        %v5124 = vld [vmem:[%s2125 + $0xc1] sm:$0xff]
        %v5125 = vld [vmem:[%s2125 + $0xc9] sm:$0xff]
        %v5126 = vld [vmem:[%s2125 + $0xd9] sm:$0xff]
        %v5127 = vld [vmem:[%s2125 + $0xe1] sm:$0xff]
        %v5128 = vld [vmem:[%s2125 + $0xf1] sm:$0xff]
        %v5129 = vld [vmem:[%s2125 + $0xf9] sm:$0xff]
        %v5130 = vld [vmem:[%s2125 + $0x109] sm:$0xff]
        %v5131 = vld [vmem:[%s2125 + $0x111] sm:$0xff]
        %v5132 = vld [vmem:[%s2125 + $0x121] sm:$0xff]
        %v5133 = vld [vmem:[%s2125 + $0x129] sm:$0xff]
        %v5134 = vld [vmem:[%s2125 + $0x139] sm:$0xff]
        %v5135 = vld [vmem:[%s2125 + $0x141] sm:$0xff]
        %v5136 = vld [vmem:[%s2125 + $0x151] sm:$0xff]
        %v5137 = vld [vmem:[%s2125 + $0x159] sm:$0xff]
        %v5138 = vld [vmem:[%s2125 + $0x169] sm:$0xff]
        %v5139 = vld [vmem:[%s2125 + $0x171] sm:$0xff]
        %v5140 = vpack.c.bf16 %v5109, %v5108
        %v5141 = vpack.c.bf16 %v5111, %v5110
        %v5142 = vpack.c.bf16 %v5113, %v5112
        %v5143 = vpack.c.bf16 %v5115, %v5114
        %v5144 = vpack.c.bf16 %v5117, %v5116
        %v5145 = vpack.c.bf16 %v5119, %v5118
        %v5146 = vpack.c.bf16 %v5121, %v5120
        %v5147 = vpack.c.bf16 %v5123, %v5122
        %v5148 = vpack.c.bf16 %v5125, %v5124
        %v5149 = vpack.c.bf16 %v5127, %v5126
        %v5150 = vpack.c.bf16 %v5129, %v5128
        %v5151 = vpack.c.bf16 %v5131, %v5130
        %v5152 = vpack.c.bf16 %v5133, %v5132
        %v5153 = vpack.c.bf16 %v5135, %v5134
        %v5154 = vpack.c.bf16 %v5137, %v5136
        %v5155 = vpack.c.bf16 %v5139, %v5138
        %5156 = vst [vmem:[#allocation3 + $0x20] sm:$0xff] %v5140
        %5157 = vst [vmem:[#allocation3 + $0x68] sm:$0xff] %v5141
        %5158 = vst [vmem:[#allocation3 + $0xb0] sm:$0xff] %v5142
        %5159 = vst [vmem:[#allocation3 + $0xf8] sm:$0xff] %v5143
        %5160 = vst [vmem:[#allocation3 + $0x140] sm:$0xff] %v5144
        %5161 = vst [vmem:[#allocation3 + $0x188] sm:$0xff] %v5145
        %5162 = vst [vmem:[#allocation3 + $0x1d0] sm:$0xff] %v5146
        %5163 = vst [vmem:[#allocation3 + $0x218] sm:$0xff] %v5147
        %5164 = vst [vmem:[#allocation3 + $0x260] sm:$0xff] %v5148
        %5165 = vst [vmem:[#allocation3 + $0x2a8] sm:$0xff] %v5149
        %5166 = vst [vmem:[#allocation3 + $0x2f0] sm:$0xff] %v5150
        %5167 = vst [vmem:[#allocation3 + $0x338] sm:$0xff] %v5151
        %5168 = vst [vmem:[#allocation3 + $0x380] sm:$0xff] %v5152
        %5169 = vst [vmem:[#allocation3 + $0x3c8] sm:$0xff] %v5153
        %5170 = vst [vmem:[#allocation3 + $0x410] sm:$0xff] %v5154
        %5171 = vst [vmem:[#allocation3 + $0x458] sm:$0xff] %v5155
        %v5172 = vld [vmem:[%s2125 + $0x2] sm:$0xff]
        %v5173 = vld [vmem:[%s2125 + $0xa] sm:$0xff]
        %v5174 = vld [vmem:[%s2125 + $0x1a] sm:$0xff]
        %v5175 = vld [vmem:[%s2125 + $0x22] sm:$0xff]
        %v5176 = vld [vmem:[%s2125 + $0x32] sm:$0xff]
        %v5177 = vld [vmem:[%s2125 + $0x3a] sm:$0xff]
        %v5178 = vld [vmem:[%s2125 + $0x4a] sm:$0xff]
        %v5179 = vld [vmem:[%s2125 + $0x52] sm:$0xff]
        %v5180 = vld [vmem:[%s2125 + $0x62] sm:$0xff]
        %v5181 = vld [vmem:[%s2125 + $0x6a] sm:$0xff]
        %v5182 = vld [vmem:[%s2125 + $0x7a] sm:$0xff]
        %v5183 = vld [vmem:[%s2125 + $0x82] sm:$0xff]
        %v5184 = vld [vmem:[%s2125 + $0x92] sm:$0xff]
        %v5185 = vld [vmem:[%s2125 + $0x9a] sm:$0xff]
        %v5186 = vld [vmem:[%s2125 + $0xaa] sm:$0xff]
        %v5187 = vld [vmem:[%s2125 + $0xb2] sm:$0xff]
        %v5188 = vld [vmem:[%s2125 + $0xc2] sm:$0xff]
        %v5189 = vld [vmem:[%s2125 + $0xca] sm:$0xff]
        %v5190 = vld [vmem:[%s2125 + $0xda] sm:$0xff]
        %v5191 = vld [vmem:[%s2125 + $0xe2] sm:$0xff]
        %v5192 = vld [vmem:[%s2125 + $0xf2] sm:$0xff]
        %v5193 = vld [vmem:[%s2125 + $0xfa] sm:$0xff]
        %v5194 = vld [vmem:[%s2125 + $0x10a] sm:$0xff]
        %v5195 = vld [vmem:[%s2125 + $0x112] sm:$0xff]
        %v5196 = vld [vmem:[%s2125 + $0x122] sm:$0xff]
        %v5197 = vld [vmem:[%s2125 + $0x12a] sm:$0xff]
        %v5198 = vld [vmem:[%s2125 + $0x13a] sm:$0xff]
        %v5199 = vld [vmem:[%s2125 + $0x142] sm:$0xff]
        %v5200 = vld [vmem:[%s2125 + $0x152] sm:$0xff]
        %v5201 = vld [vmem:[%s2125 + $0x15a] sm:$0xff]
        %v5202 = vld [vmem:[%s2125 + $0x16a] sm:$0xff]
        %v5203 = vld [vmem:[%s2125 + $0x172] sm:$0xff]
        %v5204 = vpack.c.bf16 %v5173, %v5172
        %v5205 = vpack.c.bf16 %v5175, %v5174
        %v5206 = vpack.c.bf16 %v5177, %v5176
        %v5207 = vpack.c.bf16 %v5179, %v5178
        %v5208 = vpack.c.bf16 %v5181, %v5180
        %v5209 = vpack.c.bf16 %v5183, %v5182
        %v5210 = vpack.c.bf16 %v5185, %v5184
        %v5211 = vpack.c.bf16 %v5187, %v5186
        %v5212 = vpack.c.bf16 %v5189, %v5188
        %v5213 = vpack.c.bf16 %v5191, %v5190
        %v5214 = vpack.c.bf16 %v5193, %v5192
        %v5215 = vpack.c.bf16 %v5195, %v5194
        %v5216 = vpack.c.bf16 %v5197, %v5196
        %v5217 = vpack.c.bf16 %v5199, %v5198
        %v5218 = vpack.c.bf16 %v5201, %v5200
        %v5219 = vpack.c.bf16 %v5203, %v5202
        %5220 = vst [vmem:[#allocation3 + $0x28] sm:$0xff] %v5204
        %5221 = vst [vmem:[#allocation3 + $0x70] sm:$0xff] %v5205
        %5222 = vst [vmem:[#allocation3 + $0xb8] sm:$0xff] %v5206
        %5223 = vst [vmem:[#allocation3 + $0x100] sm:$0xff] %v5207
        %5224 = vst [vmem:[#allocation3 + $0x148] sm:$0xff] %v5208
        %5225 = vst [vmem:[#allocation3 + $0x190] sm:$0xff] %v5209
        %5226 = vst [vmem:[#allocation3 + $0x1d8] sm:$0xff] %v5210
        %5227 = vst [vmem:[#allocation3 + $0x220] sm:$0xff] %v5211
        %5228 = vst [vmem:[#allocation3 + $0x268] sm:$0xff] %v5212
        %5229 = vst [vmem:[#allocation3 + $0x2b0] sm:$0xff] %v5213
        %5230 = vst [vmem:[#allocation3 + $0x2f8] sm:$0xff] %v5214
        %5231 = vst [vmem:[#allocation3 + $0x340] sm:$0xff] %v5215
        %5232 = vst [vmem:[#allocation3 + $0x388] sm:$0xff] %v5216
        %5233 = vst [vmem:[#allocation3 + $0x3d0] sm:$0xff] %v5217
        %5234 = vst [vmem:[#allocation3 + $0x418] sm:$0xff] %v5218
        %5235 = vst [vmem:[#allocation3 + $0x460] sm:$0xff] %v5219
        %v5236 = vld [vmem:[%s2542] sm:$0xff]
        %v5237 = vld [vmem:[%s2542 + $0x8] sm:$0xff]
        %v5238 = vld [vmem:[%s2542 + $0x18] sm:$0xff]
        %v5239 = vld [vmem:[%s2542 + $0x20] sm:$0xff]
        %v5240 = vld [vmem:[%s2542 + $0x30] sm:$0xff]
        %v5241 = vld [vmem:[%s2542 + $0x38] sm:$0xff]
        %v5242 = vld [vmem:[%s2542 + $0x48] sm:$0xff]
        %v5243 = vld [vmem:[%s2542 + $0x50] sm:$0xff]
        %v5244 = vld [vmem:[%s2542 + $0x60] sm:$0xff]
        %v5245 = vld [vmem:[%s2542 + $0x68] sm:$0xff]
        %v5246 = vld [vmem:[%s2542 + $0x78] sm:$0xff]
        %v5247 = vld [vmem:[%s2542 + $0x80] sm:$0xff]
        %v5248 = vld [vmem:[%s2542 + $0x90] sm:$0xff]
        %v5249 = vld [vmem:[%s2542 + $0x98] sm:$0xff]
        %v5250 = vld [vmem:[%s2542 + $0xa8] sm:$0xff]
        %v5251 = vld [vmem:[%s2542 + $0xb0] sm:$0xff]
        %v5252 = vld [vmem:[%s2542 + $0xc0] sm:$0xff]
        %v5253 = vld [vmem:[%s2542 + $0xc8] sm:$0xff]
        %v5254 = vld [vmem:[%s2542 + $0xd8] sm:$0xff]
        %v5255 = vld [vmem:[%s2542 + $0xe0] sm:$0xff]
        %v5256 = vld [vmem:[%s2542 + $0xf0] sm:$0xff]
        %v5257 = vld [vmem:[%s2542 + $0xf8] sm:$0xff]
        %v5258 = vld [vmem:[%s2542 + $0x108] sm:$0xff]
        %v5259 = vld [vmem:[%s2542 + $0x110] sm:$0xff]
        %v5260 = vld [vmem:[%s2542 + $0x120] sm:$0xff]
        %v5261 = vld [vmem:[%s2542 + $0x128] sm:$0xff]
        %v5262 = vld [vmem:[%s2542 + $0x138] sm:$0xff]
        %v5263 = vld [vmem:[%s2542 + $0x140] sm:$0xff]
        %v5264 = vld [vmem:[%s2542 + $0x150] sm:$0xff]
        %v5265 = vld [vmem:[%s2542 + $0x158] sm:$0xff]
        %v5266 = vld [vmem:[%s2542 + $0x168] sm:$0xff]
        %v5267 = vld [vmem:[%s2542 + $0x170] sm:$0xff]
        %v5268 = vpack.c.bf16 %v5237, %v5236
        %v5269 = vpack.c.bf16 %v5239, %v5238
        %v5270 = vpack.c.bf16 %v5241, %v5240
        %v5271 = vpack.c.bf16 %v5243, %v5242
        %v5272 = vpack.c.bf16 %v5245, %v5244
        %v5273 = vpack.c.bf16 %v5247, %v5246
        %v5274 = vpack.c.bf16 %v5249, %v5248
        %v5275 = vpack.c.bf16 %v5251, %v5250
        %v5276 = vpack.c.bf16 %v5253, %v5252
        %v5277 = vpack.c.bf16 %v5255, %v5254
        %v5278 = vpack.c.bf16 %v5257, %v5256
        %v5279 = vpack.c.bf16 %v5259, %v5258
        %v5280 = vpack.c.bf16 %v5261, %v5260
        %v5281 = vpack.c.bf16 %v5263, %v5262
        %v5282 = vpack.c.bf16 %v5265, %v5264
        %v5283 = vpack.c.bf16 %v5267, %v5266
        %5284 = vst [vmem:[#allocation3 + $0x30] sm:$0xff] %v5268
        %5285 = vst [vmem:[#allocation3 + $0x78] sm:$0xff] %v5269
        %5286 = vst [vmem:[#allocation3 + $0xc0] sm:$0xff] %v5270
        %5287 = vst [vmem:[#allocation3 + $0x108] sm:$0xff] %v5271
        %5288 = vst [vmem:[#allocation3 + $0x150] sm:$0xff] %v5272
        %5289 = vst [vmem:[#allocation3 + $0x198] sm:$0xff] %v5273
        %5290 = vst [vmem:[#allocation3 + $0x1e0] sm:$0xff] %v5274
        %5291 = vst [vmem:[#allocation3 + $0x228] sm:$0xff] %v5275
        %5292 = vst [vmem:[#allocation3 + $0x270] sm:$0xff] %v5276
        %5293 = vst [vmem:[#allocation3 + $0x2b8] sm:$0xff] %v5277
        %5294 = vst [vmem:[#allocation3 + $0x300] sm:$0xff] %v5278
        %5295 = vst [vmem:[#allocation3 + $0x348] sm:$0xff] %v5279
        %5296 = vst [vmem:[#allocation3 + $0x390] sm:$0xff] %v5280
        %5297 = vst [vmem:[#allocation3 + $0x3d8] sm:$0xff] %v5281
        %5298 = vst [vmem:[#allocation3 + $0x420] sm:$0xff] %v5282
        %5299 = vst [vmem:[#allocation3 + $0x468] sm:$0xff] %v5283
        %v5300 = vld [vmem:[%s2542 + $0x1] sm:$0xff]
        %v5301 = vld [vmem:[%s2542 + $0x9] sm:$0xff]
        %v5302 = vld [vmem:[%s2542 + $0x19] sm:$0xff]
        %v5303 = vld [vmem:[%s2542 + $0x21] sm:$0xff]
        %v5304 = vld [vmem:[%s2542 + $0x31] sm:$0xff]
        %v5305 = vld [vmem:[%s2542 + $0x39] sm:$0xff]
        %v5306 = vld [vmem:[%s2542 + $0x49] sm:$0xff]
        %v5307 = vld [vmem:[%s2542 + $0x51] sm:$0xff]
        %v5308 = vld [vmem:[%s2542 + $0x61] sm:$0xff]
        %v5309 = vld [vmem:[%s2542 + $0x69] sm:$0xff]
        %v5310 = vld [vmem:[%s2542 + $0x79] sm:$0xff]
        %v5311 = vld [vmem:[%s2542 + $0x81] sm:$0xff]
        %v5312 = vld [vmem:[%s2542 + $0x91] sm:$0xff]
        %v5313 = vld [vmem:[%s2542 + $0x99] sm:$0xff]
        %v5314 = vld [vmem:[%s2542 + $0xa9] sm:$0xff]
        %v5315 = vld [vmem:[%s2542 + $0xb1] sm:$0xff]
        %v5316 = vld [vmem:[%s2542 + $0xc1] sm:$0xff]
        %v5317 = vld [vmem:[%s2542 + $0xc9] sm:$0xff]
        %v5318 = vld [vmem:[%s2542 + $0xd9] sm:$0xff]
        %v5319 = vld [vmem:[%s2542 + $0xe1] sm:$0xff]
        %v5320 = vld [vmem:[%s2542 + $0xf1] sm:$0xff]
        %v5321 = vld [vmem:[%s2542 + $0xf9] sm:$0xff]
        %v5322 = vld [vmem:[%s2542 + $0x109] sm:$0xff]
        %v5323 = vld [vmem:[%s2542 + $0x111] sm:$0xff]
        %v5324 = vld [vmem:[%s2542 + $0x121] sm:$0xff]
        %v5325 = vld [vmem:[%s2542 + $0x129] sm:$0xff]
        %v5326 = vld [vmem:[%s2542 + $0x139] sm:$0xff]
        %v5327 = vld [vmem:[%s2542 + $0x141] sm:$0xff]
        %v5328 = vld [vmem:[%s2542 + $0x151] sm:$0xff]
        %v5329 = vld [vmem:[%s2542 + $0x159] sm:$0xff]
        %v5330 = vld [vmem:[%s2542 + $0x169] sm:$0xff]
        %v5331 = vld [vmem:[%s2542 + $0x171] sm:$0xff]
        %v5332 = vpack.c.bf16 %v5301, %v5300
        %v5333 = vpack.c.bf16 %v5303, %v5302
        %v5334 = vpack.c.bf16 %v5305, %v5304
        %v5335 = vpack.c.bf16 %v5307, %v5306
        %v5336 = vpack.c.bf16 %v5309, %v5308
        %v5337 = vpack.c.bf16 %v5311, %v5310
        %v5338 = vpack.c.bf16 %v5313, %v5312
        %v5339 = vpack.c.bf16 %v5315, %v5314
        %v5340 = vpack.c.bf16 %v5317, %v5316
        %v5341 = vpack.c.bf16 %v5319, %v5318
        %v5342 = vpack.c.bf16 %v5321, %v5320
        %v5343 = vpack.c.bf16 %v5323, %v5322
        %v5344 = vpack.c.bf16 %v5325, %v5324
        %v5345 = vpack.c.bf16 %v5327, %v5326
        %v5346 = vpack.c.bf16 %v5329, %v5328
        %v5347 = vpack.c.bf16 %v5331, %v5330
        %5348 = vst [vmem:[#allocation3 + $0x38] sm:$0xff] %v5332
        %5349 = vst [vmem:[#allocation3 + $0x80] sm:$0xff] %v5333
        %5350 = vst [vmem:[#allocation3 + $0xc8] sm:$0xff] %v5334
        %5351 = vst [vmem:[#allocation3 + $0x110] sm:$0xff] %v5335
        %5352 = vst [vmem:[#allocation3 + $0x158] sm:$0xff] %v5336
        %5353 = vst [vmem:[#allocation3 + $0x1a0] sm:$0xff] %v5337
        %5354 = vst [vmem:[#allocation3 + $0x1e8] sm:$0xff] %v5338
        %5355 = vst [vmem:[#allocation3 + $0x230] sm:$0xff] %v5339
        %5356 = vst [vmem:[#allocation3 + $0x278] sm:$0xff] %v5340
        %5357 = vst [vmem:[#allocation3 + $0x2c0] sm:$0xff] %v5341
        %5358 = vst [vmem:[#allocation3 + $0x308] sm:$0xff] %v5342
        %5359 = vst [vmem:[#allocation3 + $0x350] sm:$0xff] %v5343
        %5360 = vst [vmem:[#allocation3 + $0x398] sm:$0xff] %v5344
        %5361 = vst [vmem:[#allocation3 + $0x3e0] sm:$0xff] %v5345
        %5362 = vst [vmem:[#allocation3 + $0x428] sm:$0xff] %v5346
        %5363 = vst [vmem:[#allocation3 + $0x470] sm:$0xff] %v5347
        %v5364 = vld [vmem:[%s2542 + $0x2] sm:$0xff]
        %v5365 = vld [vmem:[%s2542 + $0xa] sm:$0xff]
        %v5366 = vld [vmem:[%s2542 + $0x1a] sm:$0xff]
        %v5367 = vld [vmem:[%s2542 + $0x22] sm:$0xff]
        %v5368 = vld [vmem:[%s2542 + $0x32] sm:$0xff]
        %v5369 = vld [vmem:[%s2542 + $0x3a] sm:$0xff]
        %v5370 = vld [vmem:[%s2542 + $0x4a] sm:$0xff]
        %v5371 = vld [vmem:[%s2542 + $0x52] sm:$0xff]
        %v5372 = vld [vmem:[%s2542 + $0x62] sm:$0xff]
        %v5373 = vld [vmem:[%s2542 + $0x6a] sm:$0xff]
        %v5374 = vld [vmem:[%s2542 + $0x7a] sm:$0xff]
        %v5375 = vld [vmem:[%s2542 + $0x82] sm:$0xff]
        %v5376 = vld [vmem:[%s2542 + $0x92] sm:$0xff]
        %v5377 = vld [vmem:[%s2542 + $0x9a] sm:$0xff]
        %v5378 = vld [vmem:[%s2542 + $0xaa] sm:$0xff]
        %v5379 = vld [vmem:[%s2542 + $0xb2] sm:$0xff]
        %v5380 = vld [vmem:[%s2542 + $0xc2] sm:$0xff]
        %v5381 = vld [vmem:[%s2542 + $0xca] sm:$0xff]
        %v5382 = vld [vmem:[%s2542 + $0xda] sm:$0xff]
        %v5383 = vld [vmem:[%s2542 + $0xe2] sm:$0xff]
        %v5384 = vld [vmem:[%s2542 + $0xf2] sm:$0xff]
        %v5385 = vld [vmem:[%s2542 + $0xfa] sm:$0xff]
        %v5386 = vld [vmem:[%s2542 + $0x10a] sm:$0xff]
        %v5387 = vld [vmem:[%s2542 + $0x112] sm:$0xff]
        %v5388 = vld [vmem:[%s2542 + $0x122] sm:$0xff]
        %v5389 = vld [vmem:[%s2542 + $0x12a] sm:$0xff]
        %v5390 = vld [vmem:[%s2542 + $0x13a] sm:$0xff]
        %v5391 = vld [vmem:[%s2542 + $0x142] sm:$0xff]
        %v5392 = vld [vmem:[%s2542 + $0x152] sm:$0xff]
        %v5393 = vld [vmem:[%s2542 + $0x15a] sm:$0xff]
        %v5394 = vld [vmem:[%s2542 + $0x16a] sm:$0xff]
        %v5395 = vld [vmem:[%s2542 + $0x172] sm:$0xff]
        %v5396 = vpack.c.bf16 %v5365, %v5364
        %v5397 = vpack.c.bf16 %v5367, %v5366
        %v5398 = vpack.c.bf16 %v5369, %v5368
        %v5399 = vpack.c.bf16 %v5371, %v5370
        %v5400 = vpack.c.bf16 %v5373, %v5372
        %v5401 = vpack.c.bf16 %v5375, %v5374
        %v5402 = vpack.c.bf16 %v5377, %v5376
        %v5403 = vpack.c.bf16 %v5379, %v5378
        %v5404 = vpack.c.bf16 %v5381, %v5380
        %v5405 = vpack.c.bf16 %v5383, %v5382
        %v5406 = vpack.c.bf16 %v5385, %v5384
        %v5407 = vpack.c.bf16 %v5387, %v5386
        %v5408 = vpack.c.bf16 %v5389, %v5388
        %v5409 = vpack.c.bf16 %v5391, %v5390
        %v5410 = vpack.c.bf16 %v5393, %v5392
        %v5411 = vpack.c.bf16 %v5395, %v5394
        %5412 = vst [vmem:[#allocation3 + $0x40] sm:$0xff] %v5396
        %5413 = vst [vmem:[#allocation3 + $0x88] sm:$0xff] %v5397
        %5414 = vst [vmem:[#allocation3 + $0xd0] sm:$0xff] %v5398
        %5415 = vst [vmem:[#allocation3 + $0x118] sm:$0xff] %v5399
        %5416 = vst [vmem:[#allocation3 + $0x160] sm:$0xff] %v5400
        %5417 = vst [vmem:[#allocation3 + $0x1a8] sm:$0xff] %v5401
        %5418 = vst [vmem:[#allocation3 + $0x1f0] sm:$0xff] %v5402
        %5419 = vst [vmem:[#allocation3 + $0x238] sm:$0xff] %v5403
        %5420 = vst [vmem:[#allocation3 + $0x280] sm:$0xff] %v5404
        %5421 = vst [vmem:[#allocation3 + $0x2c8] sm:$0xff] %v5405
        %5422 = vst [vmem:[#allocation3 + $0x310] sm:$0xff] %v5406
        %5423 = vst [vmem:[#allocation3 + $0x358] sm:$0xff] %v5407
        %5424 = vst [vmem:[#allocation3 + $0x3a0] sm:$0xff] %v5408
        %5425 = vst [vmem:[#allocation3 + $0x3e8] sm:$0xff] %v5409
        %5426 = vst [vmem:[#allocation3 + $0x430] sm:$0xff] %v5410
        %5427 = vst [vmem:[#allocation3 + $0x478] sm:$0xff] %v5411
        %v5428 = vld [vmem:[#allocation3] sm:$0xff]
        %v5429 = vld [vmem:[#allocation3 + $0x8] sm:$0xff]
        %v5430 = vld [vmem:[#allocation3 + $0x10] sm:$0xff]
        %v5431 = vld [vmem:[#allocation3 + $0x18] sm:$0xff]
        %v5432 = vld [vmem:[#allocation3 + $0x20] sm:$0xff]
        %v5433 = vld [vmem:[#allocation3 + $0x28] sm:$0xff]
        %v5434 = vld [vmem:[#allocation3 + $0x30] sm:$0xff]
        %v5435 = vld [vmem:[#allocation3 + $0x38] sm:$0xff]
        %v5436 = vld [vmem:[#allocation3 + $0x40] sm:$0xff]
        %v5437 = vld [vmem:[#allocation3 + $0x48] sm:$0xff]
        %v5438 = vld [vmem:[#allocation3 + $0x50] sm:$0xff]
        %v5439 = vld [vmem:[#allocation3 + $0x58] sm:$0xff]
        %v5440 = vld [vmem:[#allocation3 + $0x60] sm:$0xff]
        %v5441 = vld [vmem:[#allocation3 + $0x68] sm:$0xff]
        %v5442 = vld [vmem:[#allocation3 + $0x70] sm:$0xff]
        %v5443 = vld [vmem:[#allocation3 + $0x78] sm:$0xff]
        %v5444 = vld [vmem:[#allocation3 + $0x80] sm:$0xff]
        %v5445 = vld [vmem:[#allocation3 + $0x88] sm:$0xff]
        %v5446 = vld [vmem:[#allocation3 + $0x90] sm:$0xff]
        %v5447 = vld [vmem:[#allocation3 + $0x98] sm:$0xff]
        %v5448 = vld [vmem:[#allocation3 + $0xa0] sm:$0xff]
        %v5449 = vld [vmem:[#allocation3 + $0xa8] sm:$0xff]
        %v5450 = vld [vmem:[#allocation3 + $0xb0] sm:$0xff]
        %v5451 = vld [vmem:[#allocation3 + $0xb8] sm:$0xff]
        %v5452 = vld [vmem:[#allocation3 + $0xc0] sm:$0xff]
        %v5453 = vld [vmem:[#allocation3 + $0xc8] sm:$0xff]
        %v5454 = vld [vmem:[#allocation3 + $0xd0] sm:$0xff]
        %v5455 = vld [vmem:[#allocation3 + $0xd8] sm:$0xff]
        %v5456 = vld [vmem:[#allocation3 + $0xe0] sm:$0xff]
        %v5457 = vld [vmem:[#allocation3 + $0xe8] sm:$0xff]
        %v5458 = vld [vmem:[#allocation3 + $0xf0] sm:$0xff]
        %v5459 = vld [vmem:[#allocation3 + $0xf8] sm:$0xff]
        %v5460 = vld [vmem:[#allocation3 + $0x100] sm:$0xff]
        %v5461 = vld [vmem:[#allocation3 + $0x108] sm:$0xff]
        %v5462 = vld [vmem:[#allocation3 + $0x110] sm:$0xff]
        %v5463 = vld [vmem:[#allocation3 + $0x118] sm:$0xff]
        %v5464 = vld [vmem:[#allocation3 + $0x120] sm:$0xff]
        %v5465 = vld [vmem:[#allocation3 + $0x128] sm:$0xff]
        %v5466 = vld [vmem:[#allocation3 + $0x130] sm:$0xff]
        %v5467 = vld [vmem:[#allocation3 + $0x138] sm:$0xff]
        %v5468 = vld [vmem:[#allocation3 + $0x140] sm:$0xff]
        %v5469 = vld [vmem:[#allocation3 + $0x148] sm:$0xff]
        %v5470 = vld [vmem:[#allocation3 + $0x150] sm:$0xff]
        %v5471 = vld [vmem:[#allocation3 + $0x158] sm:$0xff]
        %v5472 = vld [vmem:[#allocation3 + $0x160] sm:$0xff]
        %v5473 = vld [vmem:[#allocation3 + $0x168] sm:$0xff]
        %v5474 = vld [vmem:[#allocation3 + $0x170] sm:$0xff]
        %v5475 = vld [vmem:[#allocation3 + $0x178] sm:$0xff]
        %v5476 = vld [vmem:[#allocation3 + $0x180] sm:$0xff]
        %v5477 = vld [vmem:[#allocation3 + $0x188] sm:$0xff]
        %v5478 = vld [vmem:[#allocation3 + $0x190] sm:$0xff]
        %v5479 = vld [vmem:[#allocation3 + $0x198] sm:$0xff]
        %v5480 = vld [vmem:[#allocation3 + $0x1a0] sm:$0xff]
        %v5481 = vld [vmem:[#allocation3 + $0x1a8] sm:$0xff]
        %v5482 = vld [vmem:[#allocation3 + $0x1b0] sm:$0xff]
        %v5483 = vld [vmem:[#allocation3 + $0x1b8] sm:$0xff]
        %v5484 = vld [vmem:[#allocation3 + $0x1c0] sm:$0xff]
        %v5485 = vld [vmem:[#allocation3 + $0x1c8] sm:$0xff]
        %v5486 = vld [vmem:[#allocation3 + $0x1d0] sm:$0xff]
        %v5487 = vld [vmem:[#allocation3 + $0x1d8] sm:$0xff]
        %v5488 = vld [vmem:[#allocation3 + $0x1e0] sm:$0xff]
        %v5489 = vld [vmem:[#allocation3 + $0x1e8] sm:$0xff]
        %v5490 = vld [vmem:[#allocation3 + $0x1f0] sm:$0xff]
        %v5491 = vld [vmem:[#allocation3 + $0x1f8] sm:$0xff]
        %v5492 = vld [vmem:[#allocation3 + $0x200] sm:$0xff]
        %v5493 = vld [vmem:[#allocation3 + $0x208] sm:$0xff]
        %v5494 = vld [vmem:[#allocation3 + $0x210] sm:$0xff]
        %v5495 = vld [vmem:[#allocation3 + $0x218] sm:$0xff]
        %v5496 = vld [vmem:[#allocation3 + $0x220] sm:$0xff]
        %v5497 = vld [vmem:[#allocation3 + $0x228] sm:$0xff]
        %v5498 = vld [vmem:[#allocation3 + $0x230] sm:$0xff]
        %v5499 = vld [vmem:[#allocation3 + $0x238] sm:$0xff]
        %v5500 = vld [vmem:[#allocation3 + $0x240] sm:$0xff]
        %v5501 = vld [vmem:[#allocation3 + $0x248] sm:$0xff]
        %v5502 = vld [vmem:[#allocation3 + $0x250] sm:$0xff]
        %v5503 = vld [vmem:[#allocation3 + $0x258] sm:$0xff]
        %v5504 = vld [vmem:[#allocation3 + $0x260] sm:$0xff]
        %v5505 = vld [vmem:[#allocation3 + $0x268] sm:$0xff]
        %v5506 = vld [vmem:[#allocation3 + $0x270] sm:$0xff]
        %v5507 = vld [vmem:[#allocation3 + $0x278] sm:$0xff]
        %v5508 = vld [vmem:[#allocation3 + $0x280] sm:$0xff]
        %v5509 = vld [vmem:[#allocation3 + $0x288] sm:$0xff]
        %v5510 = vld [vmem:[#allocation3 + $0x290] sm:$0xff]
        %v5511 = vld [vmem:[#allocation3 + $0x298] sm:$0xff]
        %v5512 = vld [vmem:[#allocation3 + $0x2a0] sm:$0xff]
        %v5513 = vld [vmem:[#allocation3 + $0x2a8] sm:$0xff]
        %v5514 = vld [vmem:[#allocation3 + $0x2b0] sm:$0xff]
        %v5515 = vld [vmem:[#allocation3 + $0x2b8] sm:$0xff]
        %v5516 = vld [vmem:[#allocation3 + $0x2c0] sm:$0xff]
        %v5517 = vld [vmem:[#allocation3 + $0x2c8] sm:$0xff]
        %v5518 = vld [vmem:[#allocation3 + $0x2d0] sm:$0xff]
        %v5519 = vld [vmem:[#allocation3 + $0x2d8] sm:$0xff]
        %v5520 = vld [vmem:[#allocation3 + $0x2e0] sm:$0xff]
        %v5521 = vld [vmem:[#allocation3 + $0x2e8] sm:$0xff]
        %v5522 = vld [vmem:[#allocation3 + $0x2f0] sm:$0xff]
        %v5523 = vld [vmem:[#allocation3 + $0x2f8] sm:$0xff]
        %v5524 = vld [vmem:[#allocation3 + $0x300] sm:$0xff]
        %v5525 = vld [vmem:[#allocation3 + $0x308] sm:$0xff]
        %v5526 = vld [vmem:[#allocation3 + $0x310] sm:$0xff]
        %v5527 = vld [vmem:[#allocation3 + $0x318] sm:$0xff]
        %v5528 = vld [vmem:[#allocation3 + $0x320] sm:$0xff]
        %v5529 = vld [vmem:[#allocation3 + $0x328] sm:$0xff]
        %v5530 = vld [vmem:[#allocation3 + $0x330] sm:$0xff]
        %v5531 = vld [vmem:[#allocation3 + $0x338] sm:$0xff]
        %v5532 = vld [vmem:[#allocation3 + $0x340] sm:$0xff]
        %v5533 = vld [vmem:[#allocation3 + $0x348] sm:$0xff]
        %v5534 = vld [vmem:[#allocation3 + $0x350] sm:$0xff]
        %v5535 = vld [vmem:[#allocation3 + $0x358] sm:$0xff]
        %v5536 = vld [vmem:[#allocation3 + $0x360] sm:$0xff]
        %v5537 = vld [vmem:[#allocation3 + $0x368] sm:$0xff]
        %v5538 = vld [vmem:[#allocation3 + $0x370] sm:$0xff]
        %v5539 = vld [vmem:[#allocation3 + $0x378] sm:$0xff]
        %v5540 = vld [vmem:[#allocation3 + $0x380] sm:$0xff]
        %v5541 = vld [vmem:[#allocation3 + $0x388] sm:$0xff]
        %v5542 = vld [vmem:[#allocation3 + $0x390] sm:$0xff]
        %v5543 = vld [vmem:[#allocation3 + $0x398] sm:$0xff]
        %v5544 = vld [vmem:[#allocation3 + $0x3a0] sm:$0xff]
        %v5545 = vld [vmem:[#allocation3 + $0x3a8] sm:$0xff]
        %v5546 = vld [vmem:[#allocation3 + $0x3b0] sm:$0xff]
        %v5547 = vld [vmem:[#allocation3 + $0x3b8] sm:$0xff]
        %v5548 = vld [vmem:[#allocation3 + $0x3c0] sm:$0xff]
        %v5549 = vld [vmem:[#allocation3 + $0x3c8] sm:$0xff]
        %v5550 = vld [vmem:[#allocation3 + $0x3d0] sm:$0xff]
        %v5551 = vld [vmem:[#allocation3 + $0x3d8] sm:$0xff]
        %v5552 = vld [vmem:[#allocation3 + $0x3e0] sm:$0xff]
        %v5553 = vld [vmem:[#allocation3 + $0x3e8] sm:$0xff]
        %v5554 = vld [vmem:[#allocation3 + $0x3f0] sm:$0xff]
        %v5555 = vld [vmem:[#allocation3 + $0x3f8] sm:$0xff]
        %v5556 = vld [vmem:[#allocation3 + $0x400] sm:$0xff]
        %v5557 = vld [vmem:[#allocation3 + $0x408] sm:$0xff]
        %v5558 = vld [vmem:[#allocation3 + $0x410] sm:$0xff]
        %v5559 = vld [vmem:[#allocation3 + $0x418] sm:$0xff]
        %v5560 = vld [vmem:[#allocation3 + $0x420] sm:$0xff]
        %v5561 = vld [vmem:[#allocation3 + $0x428] sm:$0xff]
        %v5562 = vld [vmem:[#allocation3 + $0x430] sm:$0xff]
        %v5563 = vld [vmem:[#allocation3 + $0x438] sm:$0xff]
        %v5564 = vld [vmem:[#allocation3 + $0x440] sm:$0xff]
        %v5565 = vld [vmem:[#allocation3 + $0x448] sm:$0xff]
        %v5566 = vld [vmem:[#allocation3 + $0x450] sm:$0xff]
        %v5567 = vld [vmem:[#allocation3 + $0x458] sm:$0xff]
        %v5568 = vld [vmem:[#allocation3 + $0x460] sm:$0xff]
        %v5569 = vld [vmem:[#allocation3 + $0x468] sm:$0xff]
        %v5570 = vld [vmem:[#allocation3 + $0x470] sm:$0xff]
        %v5571 = vld [vmem:[#allocation3 + $0x478] sm:$0xff]
        %v5572 = vld [vmem:[#allocation9] sm:$0xf]
        %v5573 = vld [vmem:[#allocation9 + $0x4] sm:$0xf]
        %v5574 = vld [vmem:[#allocation9 + $0x8] sm:$0xf]
        %v5575 = vld [vmem:[#allocation9 + $0xc] sm:$0xf]
        %v5576 = vld [vmem:[#allocation9 + $0x10] sm:$0xf]
        %v5577 = vld [vmem:[#allocation9 + $0x14] sm:$0xf]
        %v5578 = vld [vmem:[#allocation9 + $0x18] sm:$0xf]
        %v5579 = vld [vmem:[#allocation9 + $0x1c] sm:$0xf]
        %v5580 = vld [vmem:[#allocation9 + $0x20] sm:$0xf]
        %v5581 = vld [vmem:[#allocation9 + $0x24] sm:$0xf]
        %v5582 = vld [vmem:[#allocation9 + $0x28] sm:$0xf]
        %v5583 = vld [vmem:[#allocation9 + $0x2c] sm:$0xf]
        %v5584 = vld [vmem:[#allocation9 + $0x30] sm:$0xf]
        %v5585 = vld [vmem:[#allocation9 + $0x34] sm:$0xf]
        %v5586 = vld [vmem:[#allocation9 + $0x38] sm:$0xf]
        %v5587 = vld [vmem:[#allocation9 + $0x3c] sm:$0xf]
        %v5588 = vld [vmem:[#allocation9 + $0x40] sm:$0xf]
        %v5589 = vld [vmem:[#allocation9 + $0x44] sm:$0xf]
        %v5590 = vld [vmem:[#allocation9 + $0x48] sm:$0xf]
        %v5591 = vld [vmem:[#allocation9 + $0x4c] sm:$0xf]
        %v5592 = vld [vmem:[#allocation9 + $0x50] sm:$0xf]
        %v5593 = vld [vmem:[#allocation9 + $0x54] sm:$0xf]
        %v5594 = vld [vmem:[#allocation9 + $0x58] sm:$0xf]
        %v5595 = vld [vmem:[#allocation9 + $0x5c] sm:$0xf]
        %v5596 = vld [vmem:[#allocation9 + $0x60] sm:$0xf]
        %v5597 = vld [vmem:[#allocation9 + $0x64] sm:$0xf]
        %v5598 = vld [vmem:[#allocation9 + $0x68] sm:$0xf]
        %v5599 = vld [vmem:[#allocation9 + $0x6c] sm:$0xf]
        %v5600 = vld [vmem:[#allocation9 + $0x70] sm:$0xf]
        %v5601 = vld [vmem:[#allocation9 + $0x74] sm:$0xf]
        %v5602 = vld [vmem:[#allocation9 + $0x78] sm:$0xf]
        %v5603 = vld [vmem:[#allocation9 + $0x7c] sm:$0xf]
        %v5604 = vld [vmem:[#allocation9 + $0x80] sm:$0xf]
        %v5605 = vld [vmem:[#allocation9 + $0x84] sm:$0xf]
        %v5606 = vld [vmem:[#allocation9 + $0x88] sm:$0xf]
        %v5607 = vld [vmem:[#allocation9 + $0x8c] sm:$0xf]
        %v5608 = vld [vmem:[#allocation9 + $0x90] sm:$0xf]
        %v5609 = vld [vmem:[#allocation9 + $0x94] sm:$0xf]
        %v5610 = vld [vmem:[#allocation9 + $0x98] sm:$0xf]
        %v5611 = vld [vmem:[#allocation9 + $0x9c] sm:$0xf]
        %v5612 = vld [vmem:[#allocation9 + $0xa0] sm:$0xf]
        %v5613 = vld [vmem:[#allocation9 + $0xa4] sm:$0xf]
        %v5614 = vld [vmem:[#allocation9 + $0xa8] sm:$0xf]
        %v5615 = vld [vmem:[#allocation9 + $0xac] sm:$0xf]
        %v5616 = vld [vmem:[#allocation9 + $0xb0] sm:$0xf]
        %v5617 = vld [vmem:[#allocation9 + $0xb4] sm:$0xf]
        %v5618 = vld [vmem:[#allocation9 + $0xb8] sm:$0xf]
        %v5619 = vld [vmem:[#allocation9 + $0xbc] sm:$0xf]
        %v5620 = vld [vmem:[#allocation9 + $0xc0] sm:$0xf]
        %v5621 = vld [vmem:[#allocation9 + $0xc4] sm:$0xf]
        %v5622 = vld [vmem:[#allocation9 + $0xc8] sm:$0xf]
        %v5623 = vld [vmem:[#allocation9 + $0xcc] sm:$0xf]
        %v5624 = vld [vmem:[#allocation9 + $0xd0] sm:$0xf]
        %v5625 = vld [vmem:[#allocation9 + $0xd4] sm:$0xf]
        %v5626 = vld [vmem:[#allocation9 + $0xd8] sm:$0xf]
        %v5627 = vld [vmem:[#allocation9 + $0xdc] sm:$0xf]
        %v5628 = vld [vmem:[#allocation9 + $0xe0] sm:$0xf]
        %v5629 = vld [vmem:[#allocation9 + $0xe4] sm:$0xf]
        %v5630 = vld [vmem:[#allocation9 + $0xe8] sm:$0xf]
        %v5631 = vld [vmem:[#allocation9 + $0xec] sm:$0xf]
        %v5632 = vld [vmem:[#allocation9 + $0xf0] sm:$0xf]
        %v5633 = vld [vmem:[#allocation9 + $0xf4] sm:$0xf]
        %v5634 = vld [vmem:[#allocation9 + $0xf8] sm:$0xf]
        %v5635 = vld [vmem:[#allocation9 + $0xfc] sm:$0xf]
        %v5636 = vld [vmem:[#allocation9 + $0x100] sm:$0xf]
        %v5637 = vld [vmem:[#allocation9 + $0x104] sm:$0xf]
        %v5638 = vld [vmem:[#allocation9 + $0x108] sm:$0xf]
        %v5639 = vld [vmem:[#allocation9 + $0x10c] sm:$0xf]
        %v5640 = vld [vmem:[#allocation9 + $0x110] sm:$0xf]
        %v5641 = vld [vmem:[#allocation9 + $0x114] sm:$0xf]
        %v5642 = vld [vmem:[#allocation9 + $0x118] sm:$0xf]
        %v5643 = vld [vmem:[#allocation9 + $0x11c] sm:$0xf]
        %v5644 = vld [vmem:[#allocation9 + $0x120] sm:$0xf]
        %v5645 = vld [vmem:[#allocation9 + $0x124] sm:$0xf]
        %v5646 = vld [vmem:[#allocation9 + $0x128] sm:$0xf]
        %v5647 = vld [vmem:[#allocation9 + $0x12c] sm:$0xf]
        %v5648 = vld [vmem:[#allocation9 + $0x130] sm:$0xf]
        %v5649 = vld [vmem:[#allocation9 + $0x134] sm:$0xf]
        %v5650 = vld [vmem:[#allocation9 + $0x138] sm:$0xf]
        %v5651 = vld [vmem:[#allocation9 + $0x13c] sm:$0xf]
        %v5652 = vld [vmem:[#allocation9 + $0x140] sm:$0xf]
        %v5653 = vld [vmem:[#allocation9 + $0x144] sm:$0xf]
        %v5654 = vld [vmem:[#allocation9 + $0x148] sm:$0xf]
        %v5655 = vld [vmem:[#allocation9 + $0x14c] sm:$0xf]
        %v5656 = vld [vmem:[#allocation9 + $0x150] sm:$0xf]
        %v5657 = vld [vmem:[#allocation9 + $0x154] sm:$0xf]
        %v5658 = vld [vmem:[#allocation9 + $0x158] sm:$0xf]
        %v5659 = vld [vmem:[#allocation9 + $0x15c] sm:$0xf]
        %v5660 = vld [vmem:[#allocation9 + $0x160] sm:$0xf]
        %v5661 = vld [vmem:[#allocation9 + $0x164] sm:$0xf]
        %v5662 = vld [vmem:[#allocation9 + $0x168] sm:$0xf]
        %v5663 = vld [vmem:[#allocation9 + $0x16c] sm:$0xf]
        %v5664 = vld [vmem:[#allocation9 + $0x170] sm:$0xf]
        %v5665 = vld [vmem:[#allocation9 + $0x174] sm:$0xf]
        %v5666 = vld [vmem:[#allocation9 + $0x178] sm:$0xf]
        %v5667 = vld [vmem:[#allocation9 + $0x17c] sm:$0xf]
        %v5668 = vld [vmem:[#allocation9 + $0x180] sm:$0xf]
        %v5669 = vld [vmem:[#allocation9 + $0x184] sm:$0xf]
        %v5670 = vld [vmem:[#allocation9 + $0x188] sm:$0xf]
        %v5671 = vld [vmem:[#allocation9 + $0x18c] sm:$0xf]
        %v5672 = vld [vmem:[#allocation9 + $0x190] sm:$0xf]
        %v5673 = vld [vmem:[#allocation9 + $0x194] sm:$0xf]
        %v5674 = vld [vmem:[#allocation9 + $0x198] sm:$0xf]
        %v5675 = vld [vmem:[#allocation9 + $0x19c] sm:$0xf]
        %v5676 = vld [vmem:[#allocation9 + $0x1a0] sm:$0xf]
        %v5677 = vld [vmem:[#allocation9 + $0x1a4] sm:$0xf]
        %v5678 = vld [vmem:[#allocation9 + $0x1a8] sm:$0xf]
        %v5679 = vld [vmem:[#allocation9 + $0x1ac] sm:$0xf]
        %v5680 = vld [vmem:[#allocation9 + $0x1b0] sm:$0xf]
        %v5681 = vld [vmem:[#allocation9 + $0x1b4] sm:$0xf]
        %v5682 = vld [vmem:[#allocation9 + $0x1b8] sm:$0xf]
        %v5683 = vld [vmem:[#allocation9 + $0x1bc] sm:$0xf]
        %v5684 = vld [vmem:[#allocation9 + $0x1c0] sm:$0xf]
        %v5685 = vld [vmem:[#allocation9 + $0x1c4] sm:$0xf]
        %v5686 = vld [vmem:[#allocation9 + $0x1c8] sm:$0xf]
        %v5687 = vld [vmem:[#allocation9 + $0x1cc] sm:$0xf]
        %v5688 = vld [vmem:[#allocation9 + $0x1d0] sm:$0xf]
        %v5689 = vld [vmem:[#allocation9 + $0x1d4] sm:$0xf]
        %v5690 = vld [vmem:[#allocation9 + $0x1d8] sm:$0xf]
        %v5691 = vld [vmem:[#allocation9 + $0x1dc] sm:$0xf]
        %v5692 = vld [vmem:[#allocation9 + $0x1e0] sm:$0xf]
        %v5693 = vld [vmem:[#allocation9 + $0x1e4] sm:$0xf]
        %v5694 = vld [vmem:[#allocation9 + $0x1e8] sm:$0xf]
        %v5695 = vld [vmem:[#allocation9 + $0x1ec] sm:$0xf]
        %v5696 = vld [vmem:[#allocation9 + $0x1f0] sm:$0xf]
        %v5697 = vld [vmem:[#allocation9 + $0x1f4] sm:$0xf]
        %v5698 = vld [vmem:[#allocation9 + $0x1f8] sm:$0xf]
        %v5699 = vld [vmem:[#allocation9 + $0x1fc] sm:$0xf]
        %v5700 = vld [vmem:[#allocation9 + $0x200] sm:$0xf]
        %v5701 = vld [vmem:[#allocation9 + $0x204] sm:$0xf]
        %v5702 = vld [vmem:[#allocation9 + $0x208] sm:$0xf]
        %v5703 = vld [vmem:[#allocation9 + $0x20c] sm:$0xf]
        %v5704 = vld [vmem:[#allocation9 + $0x210] sm:$0xf]
        %v5705 = vld [vmem:[#allocation9 + $0x214] sm:$0xf]
        %v5706 = vld [vmem:[#allocation9 + $0x218] sm:$0xf]
        %v5707 = vld [vmem:[#allocation9 + $0x21c] sm:$0xf]
        %v5708 = vld [vmem:[#allocation9 + $0x220] sm:$0xf]
        %v5709 = vld [vmem:[#allocation9 + $0x224] sm:$0xf]
        %v5710 = vld [vmem:[#allocation9 + $0x228] sm:$0xf]
        %v5711 = vld [vmem:[#allocation9 + $0x22c] sm:$0xf]
        %v5712 = vld [vmem:[#allocation9 + $0x230] sm:$0xf]
        %v5713 = vld [vmem:[#allocation9 + $0x234] sm:$0xf]
        %v5714 = vld [vmem:[#allocation9 + $0x238] sm:$0xf]
        %v5715 = vld [vmem:[#allocation9 + $0x23c] sm:$0xf]
        %v5860 = vunpack.c.l.b16 %v5572
        %v5861 = vunpack.c.l.b16 %v5573
        %v5862 = vunpack.c.l.b16 %v5574
        %v5863 = vunpack.c.l.b16 %v5575
        %v5864 = vunpack.c.l.b16 %v5576
        %v5865 = vunpack.c.l.b16 %v5577
        %v5866 = vunpack.c.l.b16 %v5578
        %v5867 = vunpack.c.l.b16 %v5579
        %v5868 = vunpack.c.l.b16 %v5580
        %v5869 = vunpack.c.l.b16 %v5581
        %v5870 = vunpack.c.l.b16 %v5582
        %v5871 = vunpack.c.l.b16 %v5583
        %v5872 = vunpack.c.l.b16 %v5584
        %v5873 = vunpack.c.l.b16 %v5585
        %v5874 = vunpack.c.l.b16 %v5586
        %v5875 = vunpack.c.l.b16 %v5587
        %v5876 = vunpack.c.l.b16 %v5588
        %v5877 = vunpack.c.l.b16 %v5589
        %v5878 = vunpack.c.l.b16 %v5590
        %v5879 = vunpack.c.l.b16 %v5591
        %v5880 = vunpack.c.l.b16 %v5592
        %v5881 = vunpack.c.l.b16 %v5593
        %v5882 = vunpack.c.l.b16 %v5594
        %v5883 = vunpack.c.l.b16 %v5595
        %v5884 = vunpack.c.l.b16 %v5596
        %v5885 = vunpack.c.l.b16 %v5597
        %v5886 = vunpack.c.l.b16 %v5598
        %v5887 = vunpack.c.l.b16 %v5599
        %v5888 = vunpack.c.l.b16 %v5600
        %v5889 = vunpack.c.l.b16 %v5601
        %v5890 = vunpack.c.l.b16 %v5602
        %v5891 = vunpack.c.l.b16 %v5603
        %v5892 = vunpack.c.l.b16 %v5604
        %v5893 = vunpack.c.l.b16 %v5605
        %v5894 = vunpack.c.l.b16 %v5606
        %v5895 = vunpack.c.l.b16 %v5607
        %v5896 = vunpack.c.l.b16 %v5608
        %v5897 = vunpack.c.l.b16 %v5609
        %v5898 = vunpack.c.l.b16 %v5610
        %v5899 = vunpack.c.l.b16 %v5611
        %v5900 = vunpack.c.l.b16 %v5612
        %v5901 = vunpack.c.l.b16 %v5613
        %v5902 = vunpack.c.l.b16 %v5614
        %v5903 = vunpack.c.l.b16 %v5615
        %v5904 = vunpack.c.l.b16 %v5616
        %v5905 = vunpack.c.l.b16 %v5617
        %v5906 = vunpack.c.l.b16 %v5618
        %v5907 = vunpack.c.l.b16 %v5619
        %v5908 = vunpack.c.l.b16 %v5620
        %v5909 = vunpack.c.l.b16 %v5621
        %v5910 = vunpack.c.l.b16 %v5622
        %v5911 = vunpack.c.l.b16 %v5623
        %v5912 = vunpack.c.l.b16 %v5624
        %v5913 = vunpack.c.l.b16 %v5625
        %v5914 = vunpack.c.l.b16 %v5626
        %v5915 = vunpack.c.l.b16 %v5627
        %v5916 = vunpack.c.l.b16 %v5628
        %v5917 = vunpack.c.l.b16 %v5629
        %v5918 = vunpack.c.l.b16 %v5630
        %v5919 = vunpack.c.l.b16 %v5631
        %v5920 = vunpack.c.l.b16 %v5632
        %v5921 = vunpack.c.l.b16 %v5633
        %v5922 = vunpack.c.l.b16 %v5634
        %v5923 = vunpack.c.l.b16 %v5635
        %v5924 = vunpack.c.l.b16 %v5636
        %v5925 = vunpack.c.l.b16 %v5637
        %v5926 = vunpack.c.l.b16 %v5638
        %v5927 = vunpack.c.l.b16 %v5639
        %v5928 = vunpack.c.l.b16 %v5640
        %v5929 = vunpack.c.l.b16 %v5641
        %v5930 = vunpack.c.l.b16 %v5642
        %v5931 = vunpack.c.l.b16 %v5643
        %v5932 = vunpack.c.l.b16 %v5644
        %v5933 = vunpack.c.l.b16 %v5645
        %v5934 = vunpack.c.l.b16 %v5646
        %v5935 = vunpack.c.l.b16 %v5647
        %v5936 = vunpack.c.l.b16 %v5648
        %v5937 = vunpack.c.l.b16 %v5649
        %v5938 = vunpack.c.l.b16 %v5650
        %v5939 = vunpack.c.l.b16 %v5651
        %v5940 = vunpack.c.l.b16 %v5652
        %v5941 = vunpack.c.l.b16 %v5653
        %v5942 = vunpack.c.l.b16 %v5654
        %v5943 = vunpack.c.l.b16 %v5655
        %v5944 = vunpack.c.l.b16 %v5656
        %v5945 = vunpack.c.l.b16 %v5657
        %v5946 = vunpack.c.l.b16 %v5658
        %v5947 = vunpack.c.l.b16 %v5659
        %v5948 = vunpack.c.l.b16 %v5660
        %v5949 = vunpack.c.l.b16 %v5661
        %v5950 = vunpack.c.l.b16 %v5662
        %v5951 = vunpack.c.l.b16 %v5663
        %v5952 = vunpack.c.l.b16 %v5664
        %v5953 = vunpack.c.l.b16 %v5665
        %v5954 = vunpack.c.l.b16 %v5666
        %v5955 = vunpack.c.l.b16 %v5667
        %v5956 = vunpack.c.l.b16 %v5668
        %v5957 = vunpack.c.l.b16 %v5669
        %v5958 = vunpack.c.l.b16 %v5670
        %v5959 = vunpack.c.l.b16 %v5671
        %v5960 = vunpack.c.l.b16 %v5672
        %v5961 = vunpack.c.l.b16 %v5673
        %v5962 = vunpack.c.l.b16 %v5674
        %v5963 = vunpack.c.l.b16 %v5675
        %v5964 = vunpack.c.l.b16 %v5676
        %v5965 = vunpack.c.l.b16 %v5677
        %v5966 = vunpack.c.l.b16 %v5678
        %v5967 = vunpack.c.l.b16 %v5679
        %v5968 = vunpack.c.l.b16 %v5680
        %v5969 = vunpack.c.l.b16 %v5681
        %v5970 = vunpack.c.l.b16 %v5682
        %v5971 = vunpack.c.l.b16 %v5683
        %v5972 = vunpack.c.l.b16 %v5684
        %v5973 = vunpack.c.l.b16 %v5685
        %v5974 = vunpack.c.l.b16 %v5686
        %v5975 = vunpack.c.l.b16 %v5687
        %v5976 = vunpack.c.l.b16 %v5688
        %v5977 = vunpack.c.l.b16 %v5689
        %v5978 = vunpack.c.l.b16 %v5690
        %v5979 = vunpack.c.l.b16 %v5691
        %v5980 = vunpack.c.l.b16 %v5692
        %v5981 = vunpack.c.l.b16 %v5693
        %v5982 = vunpack.c.l.b16 %v5694
        %v5983 = vunpack.c.l.b16 %v5695
        %v5984 = vunpack.c.l.b16 %v5696
        %v5985 = vunpack.c.l.b16 %v5697
        %v5986 = vunpack.c.l.b16 %v5698
        %v5987 = vunpack.c.l.b16 %v5699
        %v5988 = vunpack.c.l.b16 %v5700
        %v5989 = vunpack.c.l.b16 %v5701
        %v5990 = vunpack.c.l.b16 %v5702
        %v5991 = vunpack.c.l.b16 %v5703
        %v5992 = vunpack.c.l.b16 %v5704
        %v5993 = vunpack.c.l.b16 %v5705
        %v5994 = vunpack.c.l.b16 %v5706
        %v5995 = vunpack.c.l.b16 %v5707
        %v5996 = vunpack.c.l.b16 %v5708
        %v5997 = vunpack.c.l.b16 %v5709
        %v5998 = vunpack.c.l.b16 %v5710
        %v5999 = vunpack.c.l.b16 %v5711
        %v6000 = vunpack.c.l.b16 %v5712
        %v6001 = vunpack.c.l.b16 %v5713
        %v6002 = vunpack.c.l.b16 %v5714
        %v6003 = vunpack.c.l.b16 %v5715
        %v6004 = vpack.c.b16 %v5861, %v5860
        %v6005 = vpack.c.b16 %v5863, %v5862
        %v6006 = vpack.c.b16 %v5865, %v5864
        %v6007 = vpack.c.b16 %v5867, %v5866
        %v6008 = vpack.c.b16 %v5869, %v5868
        %v6009 = vpack.c.b16 %v5871, %v5870
        %v6010 = vpack.c.b16 %v5873, %v5872
        %v6011 = vpack.c.b16 %v5875, %v5874
        %v6012 = vpack.c.b16 %v5877, %v5876
        %v6013 = vpack.c.b16 %v5879, %v5878
        %v6014 = vpack.c.b16 %v5881, %v5880
        %v6015 = vpack.c.b16 %v5883, %v5882
        %v6016 = vpack.c.b16 %v5885, %v5884
        %v6017 = vpack.c.b16 %v5887, %v5886
        %v6018 = vpack.c.b16 %v5889, %v5888
        %v6019 = vpack.c.b16 %v5891, %v5890
        %v6020 = vpack.c.b16 %v5893, %v5892
        %v6021 = vpack.c.b16 %v5895, %v5894
        %v6022 = vpack.c.b16 %v5897, %v5896
        %v6023 = vpack.c.b16 %v5899, %v5898
        %v6024 = vpack.c.b16 %v5901, %v5900
        %v6025 = vpack.c.b16 %v5903, %v5902
        %v6026 = vpack.c.b16 %v5905, %v5904
        %v6027 = vpack.c.b16 %v5907, %v5906
        %v6028 = vpack.c.b16 %v5909, %v5908
        %v6029 = vpack.c.b16 %v5911, %v5910
        %v6030 = vpack.c.b16 %v5913, %v5912
        %v6031 = vpack.c.b16 %v5915, %v5914
        %v6032 = vpack.c.b16 %v5917, %v5916
        %v6033 = vpack.c.b16 %v5919, %v5918
        %v6034 = vpack.c.b16 %v5921, %v5920
        %v6035 = vpack.c.b16 %v5923, %v5922
        %v6036 = vpack.c.b16 %v5925, %v5924
        %v6037 = vpack.c.b16 %v5927, %v5926
        %v6038 = vpack.c.b16 %v5929, %v5928
        %v6039 = vpack.c.b16 %v5931, %v5930
        %v6040 = vpack.c.b16 %v5933, %v5932
        %v6041 = vpack.c.b16 %v5935, %v5934
        %v6042 = vpack.c.b16 %v5937, %v5936
        %v6043 = vpack.c.b16 %v5939, %v5938
        %v6044 = vpack.c.b16 %v5941, %v5940
        %v6045 = vpack.c.b16 %v5943, %v5942
        %v6046 = vpack.c.b16 %v5945, %v5944
        %v6047 = vpack.c.b16 %v5947, %v5946
        %v6048 = vpack.c.b16 %v5949, %v5948
        %v6049 = vpack.c.b16 %v5951, %v5950
        %v6050 = vpack.c.b16 %v5953, %v5952
        %v6051 = vpack.c.b16 %v5955, %v5954
        %v6052 = vpack.c.b16 %v5957, %v5956
        %v6053 = vpack.c.b16 %v5959, %v5958
        %v6054 = vpack.c.b16 %v5961, %v5960
        %v6055 = vpack.c.b16 %v5963, %v5962
        %v6056 = vpack.c.b16 %v5965, %v5964
        %v6057 = vpack.c.b16 %v5967, %v5966
        %v6058 = vpack.c.b16 %v5969, %v5968
        %v6059 = vpack.c.b16 %v5971, %v5970
        %v6060 = vpack.c.b16 %v5973, %v5972
        %v6061 = vpack.c.b16 %v5975, %v5974
        %v6062 = vpack.c.b16 %v5977, %v5976
        %v6063 = vpack.c.b16 %v5979, %v5978
        %v6064 = vpack.c.b16 %v5981, %v5980
        %v6065 = vpack.c.b16 %v5983, %v5982
        %v6066 = vpack.c.b16 %v5985, %v5984
        %v6067 = vpack.c.b16 %v5987, %v5986
        %v6068 = vpack.c.b16 %v5989, %v5988
        %v6069 = vpack.c.b16 %v5991, %v5990
        %v6070 = vpack.c.b16 %v5993, %v5992
        %v6071 = vpack.c.b16 %v5995, %v5994
        %v6072 = vpack.c.b16 %v5997, %v5996
        %v6073 = vpack.c.b16 %v5999, %v5998
        %v6074 = vpack.c.b16 %v6001, %v6000
        %v6075 = vpack.c.b16 %v6003, %v6002
        %6148 = vmatprep.subr.bf16.mxu0 0
        %6149 = vmatpush1.bf16.msra.mxu0 %v6004
        %6150 = vmatprep.subr.bf16.mxu0 0
        %6151 = vmatpush1.bf16.msra.mxu0 %v6005
        %6152 = vmatprep.subr.bf16.mxu0 0
        %6153 = vmatpush1.bf16.msra.mxu0 %v6006
        %6154 = vmatprep.subr.bf16.mxu0 0
        %6155 = vmatpush1.bf16.msra.mxu0 %v6007
        %6156 = vmatprep.subr.bf16.mxu0 0
        %6157 = vmatpush1.bf16.msra.mxu0 %v6008
        %6158 = vmatprep.subr.bf16.mxu0 0
        %6159 = vmatpush1.bf16.msra.mxu0 %v6009
        %6160 = vmatprep.subr.bf16.mxu0 0
        %6161 = vmatpush1.bf16.msra.mxu0 %v6010
        %6162 = vmatprep.subr.bf16.mxu0 0
        %6163 = vmatpush1.bf16.msra.mxu0 %v6011
        %6164 = vmatprep.subr.bf16.mxu0 0
        %6165 = vmatpush1.bf16.msra.mxu0 %v6012
        %6166 = vmatprep.subr.bf16.mxu0 0
        %6167 = vmatpush1.bf16.msra.mxu0 %v6013
        %6168 = vmatprep.subr.bf16.mxu0 0
        %6169 = vmatpush1.bf16.msra.mxu0 %v6014
        %6170 = vmatprep.subr.bf16.mxu0 0
        %6171 = vmatpush1.bf16.msra.mxu0 %v6015
        %6172 = vmatprep.subr.bf16.mxu0 0
        %6173 = vmatpush1.bf16.msra.mxu0 %v6016
        %6174 = vmatprep.subr.bf16.mxu0 0
        %6175 = vmatpush1.bf16.msra.mxu0 %v6017
        %6176 = vmatprep.subr.bf16.mxu0 0
        %6177 = vmatpush1.bf16.msra.mxu0 %v6018
        %6178 = vmatprep.subr.bf16.mxu0 0
        %6179 = vmatpush1.bf16.msra.mxu0 %v6019
        %6180 = vmatprep.mubr.bf16.mxu0 %v5429
        %6181 = vmatmul.mubr.bf16.gmra.mrb[0].mxu0 %v5428
        %v6182 = vpop.f32.mrb[0].mxu0
        %v6183 = vadd.f32 0.0, %v6182
        %v6184 = vpop.f32.mrb[0].mxu0
        %v6185 = vpop.f32.mrb[0].mxu0
        %v6186 = vadd.f32 0.0, %v6185
        %v6187 = vpop.f32.mrb[0].mxu0
        %6188 = vmatprep.mubr.bf16.mxu0 %v5438
        %6189 = vmatmul.mubr.bf16.gmra.mrb[0].mxu0 %v5437
        %v6190 = vpop.f32.mrb[0].mxu0
        %v6191 = vadd.f32 0.0, %v6190
        %v6192 = vpop.f32.mrb[0].mxu0
        %v6193 = vpop.f32.mrb[0].mxu0
        %v6194 = vadd.f32 0.0, %v6193
        %v6195 = vpop.f32.mrb[0].mxu0
        %6196 = vmatprep.mubr.bf16.mxu0 %v5447
        %6197 = vmatmul.mubr.bf16.gmra.mrb[0].mxu0 %v5446
        %v6198 = vpop.f32.mrb[0].mxu0
        %v6199 = vadd.f32 0.0, %v6198
        %v6200 = vpop.f32.mrb[0].mxu0
        %v6201 = vpop.f32.mrb[0].mxu0
        %v6202 = vadd.f32 0.0, %v6201
        %v6203 = vpop.f32.mrb[0].mxu0
        %6204 = vmatprep.mubr.bf16.mxu0 %v5456
        %6205 = vmatmul.mubr.bf16.gmra.mrb[0].mxu0 %v5455
        %v6206 = vpop.f32.mrb[0].mxu0
        %v6207 = vadd.f32 0.0, %v6206
        %v6208 = vpop.f32.mrb[0].mxu0
        %v6209 = vpop.f32.mrb[0].mxu0
        %v6210 = vadd.f32 0.0, %v6209
        %v6211 = vpop.f32.mrb[0].mxu0
        %6212 = vmatprep.mubr.bf16.mxu0 %v5465
        %6213 = vmatmul.mubr.bf16.gmra.mrb[0].mxu0 %v5464
        %v6214 = vpop.f32.mrb[0].mxu0
        %v6215 = vadd.f32 0.0, %v6214
        %v6216 = vpop.f32.mrb[0].mxu0
        %v6217 = vpop.f32.mrb[0].mxu0
        %v6218 = vadd.f32 0.0, %v6217
        %v6219 = vpop.f32.mrb[0].mxu0
        %6220 = vmatprep.mubr.bf16.mxu0 %v5474
        %6221 = vmatmul.mubr.bf16.gmra.mrb[0].mxu0 %v5473
        %v6222 = vpop.f32.mrb[0].mxu0
        %v6223 = vadd.f32 0.0, %v6222
        %v6224 = vpop.f32.mrb[0].mxu0
        %v6225 = vpop.f32.mrb[0].mxu0
        %v6226 = vadd.f32 0.0, %v6225
        %v6227 = vpop.f32.mrb[0].mxu0
        %6228 = vmatprep.mubr.bf16.mxu0 %v5483
        %6229 = vmatmul.mubr.bf16.gmra.mrb[0].mxu0 %v5482
        %v6230 = vpop.f32.mrb[0].mxu0
        %v6231 = vadd.f32 0.0, %v6230
        %v6232 = vpop.f32.mrb[0].mxu0
        %v6233 = vpop.f32.mrb[0].mxu0
        %v6234 = vadd.f32 0.0, %v6233
        %v6235 = vpop.f32.mrb[0].mxu0
        %6236 = vmatprep.mubr.bf16.mxu0 %v5492
        %6237 = vmatmul.mubr.bf16.gmra.mrb[0].mxu0 %v5491
        %v6238 = vpop.f32.mrb[0].mxu0
        %v6239 = vadd.f32 0.0, %v6238
        %v6240 = vpop.f32.mrb[0].mxu0
        %v6241 = vpop.f32.mrb[0].mxu0
        %v6242 = vadd.f32 0.0, %v6241
        %v6243 = vpop.f32.mrb[0].mxu0
        %6244 = vmatprep.mubr.bf16.mxu0 %v5501
        %6245 = vmatmul.mubr.bf16.gmra.mrb[0].mxu0 %v5500
        %v6246 = vpop.f32.mrb[0].mxu0
        %v6247 = vadd.f32 0.0, %v6246
        %v6248 = vpop.f32.mrb[0].mxu0
        %v6249 = vpop.f32.mrb[0].mxu0
        %v6250 = vadd.f32 0.0, %v6249
        %v6251 = vpop.f32.mrb[0].mxu0
        %6252 = vmatprep.mubr.bf16.mxu0 %v5510
        %6253 = vmatmul.mubr.bf16.gmra.mrb[0].mxu0 %v5509
        %v6254 = vpop.f32.mrb[0].mxu0
        %v6255 = vadd.f32 0.0, %v6254
        %v6256 = vpop.f32.mrb[0].mxu0
        %v6257 = vpop.f32.mrb[0].mxu0
        %v6258 = vadd.f32 0.0, %v6257
        %v6259 = vpop.f32.mrb[0].mxu0
        %6260 = vmatprep.mubr.bf16.mxu0 %v5519
        %6261 = vmatmul.mubr.bf16.gmra.mrb[0].mxu0 %v5518
        %v6262 = vpop.f32.mrb[0].mxu0
        %v6263 = vadd.f32 0.0, %v6262
        %v6264 = vpop.f32.mrb[0].mxu0
        %v6265 = vpop.f32.mrb[0].mxu0
        %v6266 = vadd.f32 0.0, %v6265
        %v6267 = vpop.f32.mrb[0].mxu0
        %6268 = vmatprep.mubr.bf16.mxu0 %v5528
        %6269 = vmatmul.mubr.bf16.gmra.mrb[0].mxu0 %v5527
        %v6270 = vpop.f32.mrb[0].mxu0
        %v6271 = vadd.f32 0.0, %v6270
        %v6272 = vpop.f32.mrb[0].mxu0
        %v6273 = vpop.f32.mrb[0].mxu0
        %v6274 = vadd.f32 0.0, %v6273
        %v6275 = vpop.f32.mrb[0].mxu0
        %6276 = vmatprep.mubr.bf16.mxu0 %v5537
        %6277 = vmatmul.mubr.bf16.gmra.mrb[0].mxu0 %v5536
        %v6278 = vpop.f32.mrb[0].mxu0
        %v6279 = vadd.f32 0.0, %v6278
        %v6280 = vpop.f32.mrb[0].mxu0
        %v6281 = vpop.f32.mrb[0].mxu0
        %v6282 = vadd.f32 0.0, %v6281
        %v6283 = vpop.f32.mrb[0].mxu0
        %6284 = vmatprep.mubr.bf16.mxu0 %v5546
        %6285 = vmatmul.mubr.bf16.gmra.mrb[0].mxu0 %v5545
        %v6286 = vpop.f32.mrb[0].mxu0
        %v6287 = vadd.f32 0.0, %v6286
        %v6288 = vpop.f32.mrb[0].mxu0
        %v6289 = vpop.f32.mrb[0].mxu0
        %v6290 = vadd.f32 0.0, %v6289
        %v6291 = vpop.f32.mrb[0].mxu0
        %6292 = vmatprep.mubr.bf16.mxu0 %v5555
        %6293 = vmatmul.mubr.bf16.gmra.mrb[0].mxu0 %v5554
        %v6294 = vpop.f32.mrb[0].mxu0
        %v6295 = vadd.f32 0.0, %v6294
        %v6296 = vpop.f32.mrb[0].mxu0
        %v6297 = vpop.f32.mrb[0].mxu0
        %v6298 = vadd.f32 0.0, %v6297
        %v6299 = vpop.f32.mrb[0].mxu0
        %6300 = vmatprep.mubr.bf16.mxu0 %v5564
        %6301 = vmatmul.mubr.bf16.gmra.mrb[0].mxu0 %v5563
        %v6302 = vpop.f32.mrb[0].mxu0
        %v6303 = vadd.f32 0.0, %v6302
        %v6304 = vpop.f32.mrb[0].mxu0
        %v6305 = vpop.f32.mrb[0].mxu0
        %v6306 = vadd.f32 0.0, %v6305
        %v6307 = vpop.f32.mrb[0].mxu0
        %6308 = vdwg.mxu0
        %6309 = vmatprep.subr.bf16.mxu0 0
        %6310 = vmatpush1.bf16.msra.mxu0 %v6020
        %6311 = vmatprep.subr.bf16.mxu0 0
        %6312 = vmatpush1.bf16.msra.mxu0 %v6021
        %6313 = vmatprep.subr.bf16.mxu0 0
        %6314 = vmatpush1.bf16.msra.mxu0 %v6022
        %6315 = vmatprep.subr.bf16.mxu0 0
        %6316 = vmatpush1.bf16.msra.mxu0 %v6023
        %6317 = vmatprep.subr.bf16.mxu0 0
        %6318 = vmatpush1.bf16.msra.mxu0 %v6024
        %6319 = vmatprep.subr.bf16.mxu0 0
        %6320 = vmatpush1.bf16.msra.mxu0 %v6025
        %6321 = vmatprep.subr.bf16.mxu0 0
        %6322 = vmatpush1.bf16.msra.mxu0 %v6026
        %6323 = vmatprep.subr.bf16.mxu0 0
        %6324 = vmatpush1.bf16.msra.mxu0 %v6027
        %6325 = vmatprep.subr.bf16.mxu0 0
        %6326 = vmatpush1.bf16.msra.mxu0 %v6028
        %6327 = vmatprep.subr.bf16.mxu0 0
        %6328 = vmatpush1.bf16.msra.mxu0 %v6029
        %6329 = vmatprep.subr.bf16.mxu0 0
        %6330 = vmatpush1.bf16.msra.mxu0 %v6030
        %6331 = vmatprep.subr.bf16.mxu0 0
        %6332 = vmatpush1.bf16.msra.mxu0 %v6031
        %6333 = vmatprep.subr.bf16.mxu0 0
        %6334 = vmatpush1.bf16.msra.mxu0 %v6032
        %6335 = vmatprep.subr.bf16.mxu0 0
        %6336 = vmatpush1.bf16.msra.mxu0 %v6033
        %6337 = vmatprep.subr.bf16.mxu0 0
        %6338 = vmatpush1.bf16.msra.mxu0 %v6034
        %6339 = vmatprep.subr.bf16.mxu0 0
        %6340 = vmatpush1.bf16.msra.mxu0 %v6035
        %6341 = vmatprep.mubr.bf16.mxu0 %v5431
        %6342 = vmatmul.mubr.bf16.gmra.mrb[0].mxu0 %v5430
        %v6343 = vpop.f32.mrb[0].mxu0
        %v6344 = vadd.f32 %v6183, %v6343
        %v6345 = vpop.f32.mrb[0].mxu0
        %v6346 = vpop.f32.mrb[0].mxu0
        %v6347 = vadd.f32 %v6186, %v6346
        %v6348 = vpop.f32.mrb[0].mxu0
        %6349 = vmatprep.mubr.bf16.mxu0 %v5440
        %6350 = vmatmul.mubr.bf16.gmra.mrb[0].mxu0 %v5439
        %v6351 = vpop.f32.mrb[0].mxu0
        %v6352 = vadd.f32 %v6191, %v6351
        %v6353 = vpop.f32.mrb[0].mxu0
        %v6354 = vpop.f32.mrb[0].mxu0
        %v6355 = vadd.f32 %v6194, %v6354
        %v6356 = vpop.f32.mrb[0].mxu0
        %6357 = vmatprep.mubr.bf16.mxu0 %v5449
        %6358 = vmatmul.mubr.bf16.gmra.mrb[0].mxu0 %v5448
        %v6359 = vpop.f32.mrb[0].mxu0
        %v6360 = vadd.f32 %v6199, %v6359
        %v6361 = vpop.f32.mrb[0].mxu0
        %v6362 = vpop.f32.mrb[0].mxu0
        %v6363 = vadd.f32 %v6202, %v6362
        %v6364 = vpop.f32.mrb[0].mxu0
        %6365 = vmatprep.mubr.bf16.mxu0 %v5458
        %6366 = vmatmul.mubr.bf16.gmra.mrb[0].mxu0 %v5457
        %v6367 = vpop.f32.mrb[0].mxu0
        %v6368 = vadd.f32 %v6207, %v6367
        %v6369 = vpop.f32.mrb[0].mxu0
        %v6370 = vpop.f32.mrb[0].mxu0
        %v6371 = vadd.f32 %v6210, %v6370
        %v6372 = vpop.f32.mrb[0].mxu0
        %6373 = vmatprep.mubr.bf16.mxu0 %v5467
        %6374 = vmatmul.mubr.bf16.gmra.mrb[0].mxu0 %v5466
        %v6375 = vpop.f32.mrb[0].mxu0
        %v6376 = vadd.f32 %v6215, %v6375
        %v6377 = vpop.f32.mrb[0].mxu0
        %v6378 = vpop.f32.mrb[0].mxu0
        %v6379 = vadd.f32 %v6218, %v6378
        %v6380 = vpop.f32.mrb[0].mxu0
        %6381 = vmatprep.mubr.bf16.mxu0 %v5476
        %6382 = vmatmul.mubr.bf16.gmra.mrb[0].mxu0 %v5475
        %v6383 = vpop.f32.mrb[0].mxu0
        %v6384 = vadd.f32 %v6223, %v6383
        %v6385 = vpop.f32.mrb[0].mxu0
        %v6386 = vpop.f32.mrb[0].mxu0
        %v6387 = vadd.f32 %v6226, %v6386
        %v6388 = vpop.f32.mrb[0].mxu0
        %6389 = vmatprep.mubr.bf16.mxu0 %v5485
        %6390 = vmatmul.mubr.bf16.gmra.mrb[0].mxu0 %v5484
        %v6391 = vpop.f32.mrb[0].mxu0
        %v6392 = vadd.f32 %v6231, %v6391
        %v6393 = vpop.f32.mrb[0].mxu0
        %v6394 = vpop.f32.mrb[0].mxu0
        %v6395 = vadd.f32 %v6234, %v6394
        %v6396 = vpop.f32.mrb[0].mxu0
        %6397 = vmatprep.mubr.bf16.mxu0 %v5494
        %6398 = vmatmul.mubr.bf16.gmra.mrb[0].mxu0 %v5493
        %v6399 = vpop.f32.mrb[0].mxu0
        %v6400 = vadd.f32 %v6239, %v6399
        %v6401 = vpop.f32.mrb[0].mxu0
        %v6402 = vpop.f32.mrb[0].mxu0
        %v6403 = vadd.f32 %v6242, %v6402
        %v6404 = vpop.f32.mrb[0].mxu0
        %6405 = vmatprep.mubr.bf16.mxu0 %v5503
        %6406 = vmatmul.mubr.bf16.gmra.mrb[0].mxu0 %v5502
        %v6407 = vpop.f32.mrb[0].mxu0
        %v6408 = vadd.f32 %v6247, %v6407
        %v6409 = vpop.f32.mrb[0].mxu0
        %v6410 = vpop.f32.mrb[0].mxu0
        %v6411 = vadd.f32 %v6250, %v6410
        %v6412 = vpop.f32.mrb[0].mxu0
        %6413 = vmatprep.mubr.bf16.mxu0 %v5512
        %6414 = vmatmul.mubr.bf16.gmra.mrb[0].mxu0 %v5511
        %v6415 = vpop.f32.mrb[0].mxu0
        %v6416 = vadd.f32 %v6255, %v6415
        %v6417 = vpop.f32.mrb[0].mxu0
        %v6418 = vpop.f32.mrb[0].mxu0
        %v6419 = vadd.f32 %v6258, %v6418
        %v6420 = vpop.f32.mrb[0].mxu0
        %6421 = vmatprep.mubr.bf16.mxu0 %v5521
        %6422 = vmatmul.mubr.bf16.gmra.mrb[0].mxu0 %v5520
        %v6423 = vpop.f32.mrb[0].mxu0
        %v6424 = vadd.f32 %v6263, %v6423
        %v6425 = vpop.f32.mrb[0].mxu0
        %v6426 = vpop.f32.mrb[0].mxu0
        %v6427 = vadd.f32 %v6266, %v6426
        %v6428 = vpop.f32.mrb[0].mxu0
        %6429 = vmatprep.mubr.bf16.mxu0 %v5530
        %6430 = vmatmul.mubr.bf16.gmra.mrb[0].mxu0 %v5529
        %v6431 = vpop.f32.mrb[0].mxu0
        %v6432 = vadd.f32 %v6271, %v6431
        %v6433 = vpop.f32.mrb[0].mxu0
        %v6434 = vpop.f32.mrb[0].mxu0
        %v6435 = vadd.f32 %v6274, %v6434
        %v6436 = vpop.f32.mrb[0].mxu0
        %6437 = vmatprep.mubr.bf16.mxu0 %v5539
        %6438 = vmatmul.mubr.bf16.gmra.mrb[0].mxu0 %v5538
        %v6439 = vpop.f32.mrb[0].mxu0
        %v6440 = vadd.f32 %v6279, %v6439
        %v6441 = vpop.f32.mrb[0].mxu0
        %v6442 = vpop.f32.mrb[0].mxu0
        %v6443 = vadd.f32 %v6282, %v6442
        %v6444 = vpop.f32.mrb[0].mxu0
        %6445 = vmatprep.mubr.bf16.mxu0 %v5548
        %6446 = vmatmul.mubr.bf16.gmra.mrb[0].mxu0 %v5547
        %v6447 = vpop.f32.mrb[0].mxu0
        %v6448 = vadd.f32 %v6287, %v6447
        %v6449 = vpop.f32.mrb[0].mxu0
        %v6450 = vpop.f32.mrb[0].mxu0
        %v6451 = vadd.f32 %v6290, %v6450
        %v6452 = vpop.f32.mrb[0].mxu0
        %6453 = vmatprep.mubr.bf16.mxu0 %v5557
        %6454 = vmatmul.mubr.bf16.gmra.mrb[0].mxu0 %v5556
        %v6455 = vpop.f32.mrb[0].mxu0
        %v6456 = vadd.f32 %v6295, %v6455
        %v6457 = vpop.f32.mrb[0].mxu0
        %v6458 = vpop.f32.mrb[0].mxu0
        %v6459 = vadd.f32 %v6298, %v6458
        %v6460 = vpop.f32.mrb[0].mxu0
        %6461 = vmatprep.mubr.bf16.mxu0 %v5566
        %6462 = vmatmul.mubr.bf16.gmra.mrb[0].mxu0 %v5565
        %v6463 = vpop.f32.mrb[0].mxu0
        %v6464 = vadd.f32 %v6303, %v6463
        %v6465 = vpop.f32.mrb[0].mxu0
        %v6466 = vpop.f32.mrb[0].mxu0
        %v6467 = vadd.f32 %v6306, %v6466
        %v6468 = vpop.f32.mrb[0].mxu0
        %6469 = vdwg.mxu0
        %6470 = vmatprep.subr.bf16.mxu0 0
        %6471 = vmatpush1.bf16.msra.mxu0 %v6036
        %6472 = vmatprep.subr.bf16.mxu0 0
        %6473 = vmatpush1.bf16.msra.mxu0 %v6037
        %6474 = vmatprep.subr.bf16.mxu0 0
        %6475 = vmatpush1.bf16.msra.mxu0 %v6038
        %6476 = vmatprep.subr.bf16.mxu0 0
        %6477 = vmatpush1.bf16.msra.mxu0 %v6039
        %6478 = vmatprep.subr.bf16.mxu0 0
        %6479 = vmatpush1.bf16.msra.mxu0 %v6040
        %6480 = vmatprep.subr.bf16.mxu0 0
        %6481 = vmatpush1.bf16.msra.mxu0 %v6041
        %6482 = vmatprep.subr.bf16.mxu0 0
        %6483 = vmatpush1.bf16.msra.mxu0 %v6042
        %6484 = vmatprep.subr.bf16.mxu0 0
        %6485 = vmatpush1.bf16.msra.mxu0 %v6043
        %6486 = vmatprep.subr.bf16.mxu0 0
        %6487 = vmatpush1.bf16.msra.mxu0 %v6044
        %6488 = vmatprep.subr.bf16.mxu0 0
        %6489 = vmatpush1.bf16.msra.mxu0 %v6045
        %6490 = vmatprep.subr.bf16.mxu0 0
        %6491 = vmatpush1.bf16.msra.mxu0 %v6046
        %6492 = vmatprep.subr.bf16.mxu0 0
        %6493 = vmatpush1.bf16.msra.mxu0 %v6047
        %6494 = vmatprep.subr.bf16.mxu0 0
        %6495 = vmatpush1.bf16.msra.mxu0 %v6048
        %6496 = vmatprep.subr.bf16.mxu0 0
        %6497 = vmatpush1.bf16.msra.mxu0 %v6049
        %6498 = vmatprep.subr.bf16.mxu0 0
        %6499 = vmatpush1.bf16.msra.mxu0 %v6050
        %6500 = vmatprep.subr.bf16.mxu0 0
        %6501 = vmatpush1.bf16.msra.mxu0 %v6051
        %6502 = vmatprep.mubr.bf16.mxu0 %v5433
        %6503 = vmatmul.mubr.bf16.gmra.mrb[0].mxu0 %v5432
        %v6504 = vpop.f32.mrb[0].mxu0
        %v6505 = vadd.f32 %v6344, %v6504
        %v6506 = vpop.f32.mrb[0].mxu0
        %v6507 = vpop.f32.mrb[0].mxu0
        %v6508 = vadd.f32 %v6347, %v6507
        %v6509 = vpop.f32.mrb[0].mxu0
        %6510 = vmatprep.mubr.bf16.mxu0 %v5442
        %6511 = vmatmul.mubr.bf16.gmra.mrb[0].mxu0 %v5441
        %v6512 = vpop.f32.mrb[0].mxu0
        %v6513 = vadd.f32 %v6352, %v6512
        %v6514 = vpop.f32.mrb[0].mxu0
        %v6515 = vpop.f32.mrb[0].mxu0
        %v6516 = vadd.f32 %v6355, %v6515
        %v6517 = vpop.f32.mrb[0].mxu0
        %6518 = vmatprep.mubr.bf16.mxu0 %v5451
        %6519 = vmatmul.mubr.bf16.gmra.mrb[0].mxu0 %v5450
        %v6520 = vpop.f32.mrb[0].mxu0
        %v6521 = vadd.f32 %v6360, %v6520
        %v6522 = vpop.f32.mrb[0].mxu0
        %v6523 = vpop.f32.mrb[0].mxu0
        %v6524 = vadd.f32 %v6363, %v6523
        %v6525 = vpop.f32.mrb[0].mxu0
        %6526 = vmatprep.mubr.bf16.mxu0 %v5460
        %6527 = vmatmul.mubr.bf16.gmra.mrb[0].mxu0 %v5459
        %v6528 = vpop.f32.mrb[0].mxu0
        %v6529 = vadd.f32 %v6368, %v6528
        %v6530 = vpop.f32.mrb[0].mxu0
        %v6531 = vpop.f32.mrb[0].mxu0
        %v6532 = vadd.f32 %v6371, %v6531
        %v6533 = vpop.f32.mrb[0].mxu0
        %6534 = vmatprep.mubr.bf16.mxu0 %v5469
        %6535 = vmatmul.mubr.bf16.gmra.mrb[0].mxu0 %v5468
        %v6536 = vpop.f32.mrb[0].mxu0
        %v6537 = vadd.f32 %v6376, %v6536
        %v6538 = vpop.f32.mrb[0].mxu0
        %v6539 = vpop.f32.mrb[0].mxu0
        %v6540 = vadd.f32 %v6379, %v6539
        %v6541 = vpop.f32.mrb[0].mxu0
        %6542 = vmatprep.mubr.bf16.mxu0 %v5478
        %6543 = vmatmul.mubr.bf16.gmra.mrb[0].mxu0 %v5477
        %v6544 = vpop.f32.mrb[0].mxu0
        %v6545 = vadd.f32 %v6384, %v6544
        %v6546 = vpop.f32.mrb[0].mxu0
        %v6547 = vpop.f32.mrb[0].mxu0
        %v6548 = vadd.f32 %v6387, %v6547
        %v6549 = vpop.f32.mrb[0].mxu0
        %6550 = vmatprep.mubr.bf16.mxu0 %v5487
        %6551 = vmatmul.mubr.bf16.gmra.mrb[0].mxu0 %v5486
        %v6552 = vpop.f32.mrb[0].mxu0
        %v6553 = vadd.f32 %v6392, %v6552
        %v6554 = vpop.f32.mrb[0].mxu0
        %v6555 = vpop.f32.mrb[0].mxu0
        %v6556 = vadd.f32 %v6395, %v6555
        %v6557 = vpop.f32.mrb[0].mxu0
        %6558 = vmatprep.mubr.bf16.mxu0 %v5496
        %6559 = vmatmul.mubr.bf16.gmra.mrb[0].mxu0 %v5495
        %v6560 = vpop.f32.mrb[0].mxu0
        %v6561 = vadd.f32 %v6400, %v6560
        %v6562 = vpop.f32.mrb[0].mxu0
        %v6563 = vpop.f32.mrb[0].mxu0
        %v6564 = vadd.f32 %v6403, %v6563
        %v6565 = vpop.f32.mrb[0].mxu0
        %6566 = vmatprep.mubr.bf16.mxu0 %v5505
        %6567 = vmatmul.mubr.bf16.gmra.mrb[0].mxu0 %v5504
        %v6568 = vpop.f32.mrb[0].mxu0
        %v6569 = vadd.f32 %v6408, %v6568
        %v6570 = vpop.f32.mrb[0].mxu0
        %v6571 = vpop.f32.mrb[0].mxu0
        %v6572 = vadd.f32 %v6411, %v6571
        %v6573 = vpop.f32.mrb[0].mxu0
        %6574 = vmatprep.mubr.bf16.mxu0 %v5514
        %6575 = vmatmul.mubr.bf16.gmra.mrb[0].mxu0 %v5513
        %v6576 = vpop.f32.mrb[0].mxu0
        %v6577 = vadd.f32 %v6416, %v6576
        %v6578 = vpop.f32.mrb[0].mxu0
        %v6579 = vpop.f32.mrb[0].mxu0
        %v6580 = vadd.f32 %v6419, %v6579
        %v6581 = vpop.f32.mrb[0].mxu0
        %6582 = vmatprep.mubr.bf16.mxu0 %v5523
        %6583 = vmatmul.mubr.bf16.gmra.mrb[0].mxu0 %v5522
        %v6584 = vpop.f32.mrb[0].mxu0
        %v6585 = vadd.f32 %v6424, %v6584
        %v6586 = vpop.f32.mrb[0].mxu0
        %v6587 = vpop.f32.mrb[0].mxu0
        %v6588 = vadd.f32 %v6427, %v6587
        %v6589 = vpop.f32.mrb[0].mxu0
        %6590 = vmatprep.mubr.bf16.mxu0 %v5532
        %6591 = vmatmul.mubr.bf16.gmra.mrb[0].mxu0 %v5531
        %v6592 = vpop.f32.mrb[0].mxu0
        %v6593 = vadd.f32 %v6432, %v6592
        %v6594 = vpop.f32.mrb[0].mxu0
        %v6595 = vpop.f32.mrb[0].mxu0
        %v6596 = vadd.f32 %v6435, %v6595
        %v6597 = vpop.f32.mrb[0].mxu0
        %6598 = vmatprep.mubr.bf16.mxu0 %v5541
        %6599 = vmatmul.mubr.bf16.gmra.mrb[0].mxu0 %v5540
        %v6600 = vpop.f32.mrb[0].mxu0
        %v6601 = vadd.f32 %v6440, %v6600
        %v6602 = vpop.f32.mrb[0].mxu0
        %v6603 = vpop.f32.mrb[0].mxu0
        %v6604 = vadd.f32 %v6443, %v6603
        %v6605 = vpop.f32.mrb[0].mxu0
        %6606 = vmatprep.mubr.bf16.mxu0 %v5550
        %6607 = vmatmul.mubr.bf16.gmra.mrb[0].mxu0 %v5549
        %v6608 = vpop.f32.mrb[0].mxu0
        %v6609 = vadd.f32 %v6448, %v6608
        %v6610 = vpop.f32.mrb[0].mxu0
        %v6611 = vpop.f32.mrb[0].mxu0
        %v6612 = vadd.f32 %v6451, %v6611
        %v6613 = vpop.f32.mrb[0].mxu0
        %6614 = vmatprep.mubr.bf16.mxu0 %v5559
        %6615 = vmatmul.mubr.bf16.gmra.mrb[0].mxu0 %v5558
        %v6616 = vpop.f32.mrb[0].mxu0
        %v6617 = vadd.f32 %v6456, %v6616
        %v6618 = vpop.f32.mrb[0].mxu0
        %v6619 = vpop.f32.mrb[0].mxu0
        %v6620 = vadd.f32 %v6459, %v6619
        %v6621 = vpop.f32.mrb[0].mxu0
        %6622 = vmatprep.mubr.bf16.mxu0 %v5568
        %6623 = vmatmul.mubr.bf16.gmra.mrb[0].mxu0 %v5567
        %v6624 = vpop.f32.mrb[0].mxu0
        %v6625 = vadd.f32 %v6464, %v6624
        %v6626 = vpop.f32.mrb[0].mxu0
        %v6627 = vpop.f32.mrb[0].mxu0
        %v6628 = vadd.f32 %v6467, %v6627
        %v6629 = vpop.f32.mrb[0].mxu0
        %6630 = vdwg.mxu0
        %6631 = vmatprep.subr.bf16.mxu0 0
        %6632 = vmatpush1.bf16.msra.mxu0 %v6052
        %6633 = vmatprep.subr.bf16.mxu0 0
        %6634 = vmatpush1.bf16.msra.mxu0 %v6053
        %6635 = vmatprep.subr.bf16.mxu0 0
        %6636 = vmatpush1.bf16.msra.mxu0 %v6054
        %6637 = vmatprep.subr.bf16.mxu0 0
        %6638 = vmatpush1.bf16.msra.mxu0 %v6055
        %6639 = vmatprep.subr.bf16.mxu0 0
        %6640 = vmatpush1.bf16.msra.mxu0 %v6056
        %6641 = vmatprep.subr.bf16.mxu0 0
        %6642 = vmatpush1.bf16.msra.mxu0 %v6057
        %6643 = vmatprep.subr.bf16.mxu0 0
        %6644 = vmatpush1.bf16.msra.mxu0 %v6058
        %6645 = vmatprep.subr.bf16.mxu0 0
        %6646 = vmatpush1.bf16.msra.mxu0 %v6059
        %6647 = vmatprep.subr.bf16.mxu0 0
        %6648 = vmatpush1.bf16.msra.mxu0 %v6060
        %6649 = vmatprep.subr.bf16.mxu0 0
        %6650 = vmatpush1.bf16.msra.mxu0 %v6061
        %6651 = vmatprep.subr.bf16.mxu0 0
        %6652 = vmatpush1.bf16.msra.mxu0 %v6062
        %6653 = vmatprep.subr.bf16.mxu0 0
        %6654 = vmatpush1.bf16.msra.mxu0 %v6063
        %6655 = vmatprep.subr.bf16.mxu0 0
        %6656 = vmatpush1.bf16.msra.mxu0 %v6064
        %6657 = vmatprep.subr.bf16.mxu0 0
        %6658 = vmatpush1.bf16.msra.mxu0 %v6065
        %6659 = vmatprep.subr.bf16.mxu0 0
        %6660 = vmatpush1.bf16.msra.mxu0 %v6066
        %6661 = vmatprep.subr.bf16.mxu0 0
        %6662 = vmatpush1.bf16.msra.mxu0 %v6067
        %6663 = vmatprep.mubr.bf16.mxu0 %v5435
        %6664 = vmatmul.mubr.bf16.gmra.mrb[0].mxu0 %v5434
        %v6665 = vpop.f32.mrb[0].mxu0
        %v6666 = vadd.f32 %v6505, %v6665
        %v6667 = vpop.f32.mrb[0].mxu0
        %v6668 = vpop.f32.mrb[0].mxu0
        %v6669 = vadd.f32 %v6508, %v6668
        %v6670 = vpop.f32.mrb[0].mxu0
        %6671 = vmatprep.mubr.bf16.mxu0 %v5444
        %6672 = vmatmul.mubr.bf16.gmra.mrb[0].mxu0 %v5443
        %v6673 = vpop.f32.mrb[0].mxu0
        %v6674 = vadd.f32 %v6513, %v6673
        %v6675 = vpop.f32.mrb[0].mxu0
        %v6676 = vpop.f32.mrb[0].mxu0
        %v6677 = vadd.f32 %v6516, %v6676
        %v6678 = vpop.f32.mrb[0].mxu0
        %6679 = vmatprep.mubr.bf16.mxu0 %v5453
        %6680 = vmatmul.mubr.bf16.gmra.mrb[0].mxu0 %v5452
        %v6681 = vpop.f32.mrb[0].mxu0
        %v6682 = vadd.f32 %v6521, %v6681
        %v6683 = vpop.f32.mrb[0].mxu0
        %v6684 = vpop.f32.mrb[0].mxu0
        %v6685 = vadd.f32 %v6524, %v6684
        %v6686 = vpop.f32.mrb[0].mxu0
        %6687 = vmatprep.mubr.bf16.mxu0 %v5462
        %6688 = vmatmul.mubr.bf16.gmra.mrb[0].mxu0 %v5461
        %v6689 = vpop.f32.mrb[0].mxu0
        %v6690 = vadd.f32 %v6529, %v6689
        %v6691 = vpop.f32.mrb[0].mxu0
        %v6692 = vpop.f32.mrb[0].mxu0
        %v6693 = vadd.f32 %v6532, %v6692
        %v6694 = vpop.f32.mrb[0].mxu0
        %6695 = vmatprep.mubr.bf16.mxu0 %v5471
        %6696 = vmatmul.mubr.bf16.gmra.mrb[0].mxu0 %v5470
        %v6697 = vpop.f32.mrb[0].mxu0
        %v6698 = vadd.f32 %v6537, %v6697
        %v6699 = vpop.f32.mrb[0].mxu0
        %v6700 = vpop.f32.mrb[0].mxu0
        %v6701 = vadd.f32 %v6540, %v6700
        %v6702 = vpop.f32.mrb[0].mxu0
        %6703 = vmatprep.mubr.bf16.mxu0 %v5480
        %6704 = vmatmul.mubr.bf16.gmra.mrb[0].mxu0 %v5479
        %v6705 = vpop.f32.mrb[0].mxu0
        %v6706 = vadd.f32 %v6545, %v6705
        %v6707 = vpop.f32.mrb[0].mxu0
        %v6708 = vpop.f32.mrb[0].mxu0
        %v6709 = vadd.f32 %v6548, %v6708
        %v6710 = vpop.f32.mrb[0].mxu0
        %6711 = vmatprep.mubr.bf16.mxu0 %v5489
        %6712 = vmatmul.mubr.bf16.gmra.mrb[0].mxu0 %v5488
        %v6713 = vpop.f32.mrb[0].mxu0
        %v6714 = vadd.f32 %v6553, %v6713
        %v6715 = vpop.f32.mrb[0].mxu0
        %v6716 = vpop.f32.mrb[0].mxu0
        %v6717 = vadd.f32 %v6556, %v6716
        %v6718 = vpop.f32.mrb[0].mxu0
        %6719 = vmatprep.mubr.bf16.mxu0 %v5498
        %6720 = vmatmul.mubr.bf16.gmra.mrb[0].mxu0 %v5497
        %v6721 = vpop.f32.mrb[0].mxu0
        %v6722 = vadd.f32 %v6561, %v6721
        %v6723 = vpop.f32.mrb[0].mxu0
        %v6724 = vpop.f32.mrb[0].mxu0
        %v6725 = vadd.f32 %v6564, %v6724
        %v6726 = vpop.f32.mrb[0].mxu0
        %6727 = vmatprep.mubr.bf16.mxu0 %v5507
        %6728 = vmatmul.mubr.bf16.gmra.mrb[0].mxu0 %v5506
        %v6729 = vpop.f32.mrb[0].mxu0
        %v6730 = vadd.f32 %v6569, %v6729
        %v6731 = vpop.f32.mrb[0].mxu0
        %v6732 = vpop.f32.mrb[0].mxu0
        %v6733 = vadd.f32 %v6572, %v6732
        %v6734 = vpop.f32.mrb[0].mxu0
        %6735 = vmatprep.mubr.bf16.mxu0 %v5516
        %6736 = vmatmul.mubr.bf16.gmra.mrb[0].mxu0 %v5515
        %v6737 = vpop.f32.mrb[0].mxu0
        %v6738 = vadd.f32 %v6577, %v6737
        %v6739 = vpop.f32.mrb[0].mxu0
        %v6740 = vpop.f32.mrb[0].mxu0
        %v6741 = vadd.f32 %v6580, %v6740
        %v6742 = vpop.f32.mrb[0].mxu0
        %6743 = vmatprep.mubr.bf16.mxu0 %v5525
        %6744 = vmatmul.mubr.bf16.gmra.mrb[0].mxu0 %v5524
        %v6745 = vpop.f32.mrb[0].mxu0
        %v6746 = vadd.f32 %v6585, %v6745
        %v6747 = vpop.f32.mrb[0].mxu0
        %v6748 = vpop.f32.mrb[0].mxu0
        %v6749 = vadd.f32 %v6588, %v6748
        %v6750 = vpop.f32.mrb[0].mxu0
        %6751 = vmatprep.mubr.bf16.mxu0 %v5534
        %6752 = vmatmul.mubr.bf16.gmra.mrb[0].mxu0 %v5533
        %v6753 = vpop.f32.mrb[0].mxu0
        %v6754 = vadd.f32 %v6593, %v6753
        %v6755 = vpop.f32.mrb[0].mxu0
        %v6756 = vpop.f32.mrb[0].mxu0
        %v6757 = vadd.f32 %v6596, %v6756
        %v6758 = vpop.f32.mrb[0].mxu0
        %6759 = vmatprep.mubr.bf16.mxu0 %v5543
        %6760 = vmatmul.mubr.bf16.gmra.mrb[0].mxu0 %v5542
        %v6761 = vpop.f32.mrb[0].mxu0
        %v6762 = vadd.f32 %v6601, %v6761
        %v6763 = vpop.f32.mrb[0].mxu0
        %v6764 = vpop.f32.mrb[0].mxu0
        %v6765 = vadd.f32 %v6604, %v6764
        %v6766 = vpop.f32.mrb[0].mxu0
        %6767 = vmatprep.mubr.bf16.mxu0 %v5552
        %6768 = vmatmul.mubr.bf16.gmra.mrb[0].mxu0 %v5551
        %v6769 = vpop.f32.mrb[0].mxu0
        %v6770 = vadd.f32 %v6609, %v6769
        %v6771 = vpop.f32.mrb[0].mxu0
        %v6772 = vpop.f32.mrb[0].mxu0
        %v6773 = vadd.f32 %v6612, %v6772
        %v6774 = vpop.f32.mrb[0].mxu0
        %6775 = vmatprep.mubr.bf16.mxu0 %v5561
        %6776 = vmatmul.mubr.bf16.gmra.mrb[0].mxu0 %v5560
        %v6777 = vpop.f32.mrb[0].mxu0
        %v6778 = vadd.f32 %v6617, %v6777
        %v6779 = vpop.f32.mrb[0].mxu0
        %v6780 = vpop.f32.mrb[0].mxu0
        %v6781 = vadd.f32 %v6620, %v6780
        %v6782 = vpop.f32.mrb[0].mxu0
        %6783 = vmatprep.mubr.bf16.mxu0 %v5570
        %6784 = vmatmul.mubr.bf16.gmra.mrb[0].mxu0 %v5569
        %v6785 = vpop.f32.mrb[0].mxu0
        %v6786 = vadd.f32 %v6625, %v6785
        %v6787 = vpop.f32.mrb[0].mxu0
        %v6788 = vpop.f32.mrb[0].mxu0
        %v6789 = vadd.f32 %v6628, %v6788
        %v6790 = vpop.f32.mrb[0].mxu0
        %6791 = vdwg.mxu0
        %6792 = vmatprep.subr.bf16.mxu0 0
        %6793 = vmatpush1.bf16.msra.mxu0 %v6068
        %6794 = vmatprep.subr.bf16.mxu0 0
        %6795 = vmatpush1.bf16.msra.mxu0 %v6069
        %6796 = vmatprep.subr.bf16.mxu0 0
        %6797 = vmatpush1.bf16.msra.mxu0 %v6070
        %6798 = vmatprep.subr.bf16.mxu0 0
        %6799 = vmatpush1.bf16.msra.mxu0 %v6071
        %6800 = vmatprep.subr.bf16.mxu0 0
        %6801 = vmatpush1.bf16.msra.mxu0 %v6072
        %6802 = vmatprep.subr.bf16.mxu0 0
        %6803 = vmatpush1.bf16.msra.mxu0 %v6073
        %6804 = vmatprep.subr.bf16.mxu0 0
        %6805 = vmatpush1.bf16.msra.mxu0 %v6074
        %6806 = vmatprep.subr.bf16.mxu0 0
        %6807 = vmatpush1.bf16.msra.mxu0 %v6075
        %6808 = vmatprep.subr.bf16.mxu0 0
        %6809 = vmatpush1.bf16.msra.mxu0 0
        %6810 = vmatprep.subr.bf16.mxu0 0
        %6811 = vmatpush1.bf16.msra.mxu0 0
        %6812 = vmatprep.subr.bf16.mxu0 0
        %6813 = vmatpush1.bf16.msra.mxu0 0
        %6814 = vmatprep.subr.bf16.mxu0 0
        %6815 = vmatpush1.bf16.msra.mxu0 0
        %6816 = vmatprep.subr.bf16.mxu0 0
        %6817 = vmatpush1.bf16.msra.mxu0 0
        %6818 = vmatprep.subr.bf16.mxu0 0
        %6819 = vmatpush1.bf16.msra.mxu0 0
        %6820 = vmatprep.subr.bf16.mxu0 0
        %6821 = vmatpush1.bf16.msra.mxu0 0
        %6822 = vmatprep.subr.bf16.mxu0 0
        %6823 = vmatpush1.bf16.msra.mxu0 0
        %6824 = vmatprep.mubr.bf16.mxu0 0
        %6825 = vmatmul.mubr.bf16.gmra.mrb[0].mxu0 %v5436
        %v6826 = vpop.f32.mrb[0].mxu0
        %v6827 = vadd.f32 %v6666, %v6826
        %v6828 = vpop.f32.mrb[0].mxu0
        %v6829 = vpop.f32.mrb[0].mxu0
        %v6830 = vadd.f32 %v6669, %v6829
        %v6831 = vpop.f32.mrb[0].mxu0
        %6832 = vmatprep.mubr.bf16.mxu0 0
        %6833 = vmatmul.mubr.bf16.gmra.mrb[0].mxu0 %v5445
        %v6834 = vpop.f32.mrb[0].mxu0
        %v6835 = vadd.f32 %v6674, %v6834
        %v6836 = vpop.f32.mrb[0].mxu0
        %v6837 = vpop.f32.mrb[0].mxu0
        %v6838 = vadd.f32 %v6677, %v6837
        %v6839 = vpop.f32.mrb[0].mxu0
        %6840 = vmatprep.mubr.bf16.mxu0 0
        %6841 = vmatmul.mubr.bf16.gmra.mrb[0].mxu0 %v5454
        %v6842 = vpop.f32.mrb[0].mxu0
        %v6843 = vadd.f32 %v6682, %v6842
        %v6844 = vpop.f32.mrb[0].mxu0
        %v6845 = vpop.f32.mrb[0].mxu0
        %v6846 = vadd.f32 %v6685, %v6845
        %v6847 = vpop.f32.mrb[0].mxu0
        %6848 = vmatprep.mubr.bf16.mxu0 0
        %6849 = vmatmul.mubr.bf16.gmra.mrb[0].mxu0 %v5463
        %v6850 = vpop.f32.mrb[0].mxu0
        %v6851 = vadd.f32 %v6690, %v6850
        %v6852 = vpop.f32.mrb[0].mxu0
        %v6853 = vpop.f32.mrb[0].mxu0
        %v6854 = vadd.f32 %v6693, %v6853
        %v6855 = vpop.f32.mrb[0].mxu0
        %6856 = vmatprep.mubr.bf16.mxu0 0
        %6857 = vmatmul.mubr.bf16.gmra.mrb[0].mxu0 %v5472
        %v6858 = vpop.f32.mrb[0].mxu0
        %v6859 = vadd.f32 %v6698, %v6858
        %v6860 = vpop.f32.mrb[0].mxu0
        %v6861 = vpop.f32.mrb[0].mxu0
        %v6862 = vadd.f32 %v6701, %v6861
        %v6863 = vpop.f32.mrb[0].mxu0
        %6864 = vmatprep.mubr.bf16.mxu0 0
        %6865 = vmatmul.mubr.bf16.gmra.mrb[0].mxu0 %v5481
        %v6866 = vpop.f32.mrb[0].mxu0
        %v6867 = vadd.f32 %v6706, %v6866
        %v6868 = vpop.f32.mrb[0].mxu0
        %v6869 = vpop.f32.mrb[0].mxu0
        %v6870 = vadd.f32 %v6709, %v6869
        %v6871 = vpop.f32.mrb[0].mxu0
        %6872 = vmatprep.mubr.bf16.mxu0 0
        %6873 = vmatmul.mubr.bf16.gmra.mrb[0].mxu0 %v5490
        %v6874 = vpop.f32.mrb[0].mxu0
        %v6875 = vadd.f32 %v6714, %v6874
        %v6876 = vpop.f32.mrb[0].mxu0
        %v6877 = vpop.f32.mrb[0].mxu0
        %v6878 = vadd.f32 %v6717, %v6877
        %v6879 = vpop.f32.mrb[0].mxu0
        %6880 = vmatprep.mubr.bf16.mxu0 0
        %6881 = vmatmul.mubr.bf16.gmra.mrb[0].mxu0 %v5499
        %v6882 = vpop.f32.mrb[0].mxu0
        %v6883 = vadd.f32 %v6722, %v6882
        %v6884 = vpop.f32.mrb[0].mxu0
        %v6885 = vpop.f32.mrb[0].mxu0
        %v6886 = vadd.f32 %v6725, %v6885
        %v6887 = vpop.f32.mrb[0].mxu0
        %6888 = vmatprep.mubr.bf16.mxu0 0
        %6889 = vmatmul.mubr.bf16.gmra.mrb[0].mxu0 %v5508
        %v6890 = vpop.f32.mrb[0].mxu0
        %v6891 = vadd.f32 %v6730, %v6890
        %v6892 = vpop.f32.mrb[0].mxu0
        %v6893 = vpop.f32.mrb[0].mxu0
        %v6894 = vadd.f32 %v6733, %v6893
        %v6895 = vpop.f32.mrb[0].mxu0
        %6896 = vmatprep.mubr.bf16.mxu0 0
        %6897 = vmatmul.mubr.bf16.gmra.mrb[0].mxu0 %v5517
        %v6898 = vpop.f32.mrb[0].mxu0
        %v6899 = vadd.f32 %v6738, %v6898
        %v6900 = vpop.f32.mrb[0].mxu0
        %v6901 = vpop.f32.mrb[0].mxu0
        %v6902 = vadd.f32 %v6741, %v6901
        %v6903 = vpop.f32.mrb[0].mxu0
        %6904 = vmatprep.mubr.bf16.mxu0 0
        %6905 = vmatmul.mubr.bf16.gmra.mrb[0].mxu0 %v5526
        %v6906 = vpop.f32.mrb[0].mxu0
        %v6907 = vadd.f32 %v6746, %v6906
        %v6908 = vpop.f32.mrb[0].mxu0
        %v6909 = vpop.f32.mrb[0].mxu0
        %v6910 = vadd.f32 %v6749, %v6909
        %v6911 = vpop.f32.mrb[0].mxu0
        %6912 = vmatprep.mubr.bf16.mxu0 0
        %6913 = vmatmul.mubr.bf16.gmra.mrb[0].mxu0 %v5535
        %v6914 = vpop.f32.mrb[0].mxu0
        %v6915 = vadd.f32 %v6754, %v6914
        %v6916 = vpop.f32.mrb[0].mxu0
        %v6917 = vpop.f32.mrb[0].mxu0
        %v6918 = vadd.f32 %v6757, %v6917
        %v6919 = vpop.f32.mrb[0].mxu0
        %6920 = vmatprep.mubr.bf16.mxu0 0
        %6921 = vmatmul.mubr.bf16.gmra.mrb[0].mxu0 %v5544
        %v6922 = vpop.f32.mrb[0].mxu0
        %v6923 = vadd.f32 %v6762, %v6922
        %v6924 = vpop.f32.mrb[0].mxu0
        %v6925 = vpop.f32.mrb[0].mxu0
        %v6926 = vadd.f32 %v6765, %v6925
        %v6927 = vpop.f32.mrb[0].mxu0
        %6928 = vmatprep.mubr.bf16.mxu0 0
        %6929 = vmatmul.mubr.bf16.gmra.mrb[0].mxu0 %v5553
        %v6930 = vpop.f32.mrb[0].mxu0
        %v6931 = vadd.f32 %v6770, %v6930
        %v6932 = vpop.f32.mrb[0].mxu0
        %v6933 = vpop.f32.mrb[0].mxu0
        %v6934 = vadd.f32 %v6773, %v6933
        %v6935 = vpop.f32.mrb[0].mxu0
        %6936 = vmatprep.mubr.bf16.mxu0 0
        %6937 = vmatmul.mubr.bf16.gmra.mrb[0].mxu0 %v5562
        %v6938 = vpop.f32.mrb[0].mxu0
        %v6939 = vadd.f32 %v6778, %v6938
        %v6940 = vpop.f32.mrb[0].mxu0
        %v6941 = vpop.f32.mrb[0].mxu0
        %v6942 = vadd.f32 %v6781, %v6941
        %v6943 = vpop.f32.mrb[0].mxu0
        %6944 = vmatprep.mubr.bf16.mxu0 0
        %6945 = vmatmul.mubr.bf16.gmra.mrb[0].mxu0 %v5571
        %v6946 = vpop.f32.mrb[0].mxu0
        %v6947 = vadd.f32 %v6786, %v6946
        %v6948 = vpop.f32.mrb[0].mxu0
        %v6949 = vpop.f32.mrb[0].mxu0
        %v6950 = vadd.f32 %v6789, %v6949
        %v6951 = vpop.f32.mrb[0].mxu0
        %6952 = vdwg.mxu0
        %v6953 = vld [vmem:[#allocation11] sm:$0xff]
        %v6954 = vld [vmem:[#allocation11 + $0x8] sm:$0xff]
        %v6955 = vld [vmem:[#allocation11 + $0x10] sm:$0xff]
        %v6956 = vld [vmem:[#allocation11 + $0x18] sm:$0xff]
        %v6957 = vld [vmem:[#allocation11 + $0x20] sm:$0xff]
        %v6958 = vld [vmem:[#allocation11 + $0x28] sm:$0xff]
        %v6959 = vld [vmem:[#allocation11 + $0x30] sm:$0xff]
        %v6960 = vld [vmem:[#allocation11 + $0x38] sm:$0xff]
        %v6961 = vld [vmem:[#allocation11 + $0x40] sm:$0xff]
        %v6962 = vld [vmem:[#allocation11 + $0x48] sm:$0xff]
        %v6963 = vld [vmem:[#allocation11 + $0x50] sm:$0xff]
        %v6964 = vld [vmem:[#allocation11 + $0x58] sm:$0xff]
        %v6965 = vld [vmem:[#allocation11 + $0x60] sm:$0xff]
        %v6966 = vld [vmem:[#allocation11 + $0x68] sm:$0xff]
        %v6967 = vld [vmem:[#allocation11 + $0x70] sm:$0xff]
        %v6968 = vld [vmem:[#allocation11 + $0x78] sm:$0xff]
        %v6969 = vld [vmem:[%s11] sm:$0x1]
        %v6971 = vlaneseq
        %v6972 = vshrl.u32 %v6971, 7
        %v6973 = vsub.s32 0, %v6972
        %v6974 = vrot.slane %v6969, %v6973
        %6976 = vmatprep.subr.mxu0 0.0
        %6977 = vmatpush1.msra.mxu0 %v6953
        %6978 = vmatprep.subr.mxu0 0.0
        %6979 = vmatpush1.msra.mxu0 %v6954
        %6980 = vmatprep.subr.mxu0 0.0
        %6981 = vmatpush1.msra.mxu0 %v6955
        %6982 = vmatprep.subr.mxu0 0.0
        %6983 = vmatpush1.msra.mxu0 %v6956
        %6984 = vmatprep.subr.mxu0 0.0
        %6985 = vmatpush1.msra.mxu0 %v6957
        %6986 = vmatprep.subr.mxu0 0.0
        %6987 = vmatpush1.msra.mxu0 %v6958
        %6988 = vmatprep.subr.mxu0 0.0
        %6989 = vmatpush1.msra.mxu0 %v6959
        %6990 = vmatprep.subr.mxu0 0.0
        %6991 = vmatpush1.msra.mxu0 %v6960
        %6992 = vmatprep.subr.mxu0 0.0
        %6993 = vmatpush1.msra.mxu0 %v6961
        %6994 = vmatprep.subr.mxu0 0.0
        %6995 = vmatpush1.msra.mxu0 %v6962
        %6996 = vmatprep.subr.mxu0 0.0
        %6997 = vmatpush1.msra.mxu0 %v6963
        %6998 = vmatprep.subr.mxu0 0.0
        %6999 = vmatpush1.msra.mxu0 %v6964
        %7000 = vmatprep.subr.mxu0 0.0
        %7001 = vmatpush1.msra.mxu0 %v6965
        %7002 = vmatprep.subr.mxu0 0.0
        %7003 = vmatpush1.msra.mxu0 %v6966
        %7004 = vmatprep.subr.mxu0 0.0
        %7005 = vmatpush1.msra.mxu0 %v6967
        %7006 = vmatprep.subr.mxu0 0.0
        %7007 = vmatpush1.msra.mxu0 %v6968
        %7008 = vmatprep.subr.mxu0 0.0
        %7009 = vmatpush1.msra.mxu0 0.0
        %7010 = vmatprep.subr.mxu0 0.0
        %7011 = vmatpush1.msra.mxu0 0.0
        %7012 = vmatprep.subr.mxu0 0.0
        %7013 = vmatpush1.msra.mxu0 0.0
        %7014 = vmatprep.subr.mxu0 0.0
        %7015 = vmatpush1.msra.mxu0 0.0
        %7016 = vmatprep.subr.mxu0 0.0
        %7017 = vmatpush1.msra.mxu0 0.0
        %7018 = vmatprep.subr.mxu0 0.0
        %7019 = vmatpush1.msra.mxu0 0.0
        %7020 = vmatprep.subr.mxu0 0.0
        %7021 = vmatpush1.msra.mxu0 0.0
        %7022 = vmatprep.subr.mxu0 0.0
        %7023 = vmatpush1.msra.mxu0 0.0
        %7024 = vmatprep.subr.mxu0 0.0
        %7025 = vmatpush1.msra.mxu0 0.0
        %7026 = vmatprep.subr.mxu0 0.0
        %7027 = vmatpush1.msra.mxu0 0.0
        %7028 = vmatprep.subr.mxu0 0.0
        %7029 = vmatpush1.msra.mxu0 0.0
        %7030 = vmatprep.subr.mxu0 0.0
        %7031 = vmatpush1.msra.mxu0 0.0
        %7032 = vmatprep.subr.mxu0 0.0
        %7033 = vmatpush1.msra.mxu0 0.0
        %7034 = vmatprep.subr.mxu0 0.0
        %7035 = vmatpush1.msra.mxu0 0.0
        %7036 = vmatprep.subr.mxu0 0.0
        %7037 = vmatpush1.msra.mxu0 0.0
        %7038 = vmatprep.subr.mxu0 0.0
        %7039 = vmatpush1.msra.mxu0 0.0
        %7040 = vmatprep.mubr.f32.mxu0 0.0
        %7041 = vmatmul.mubr.f32.gmra.mrb[0].mxu0 %v6827
        %v7042 = vpop.f32.mrb[0].mxu0
        %v7043 = vadd.f32 %v6974, %v7042
        %v7044 = vpop.f32.mrb[0].mxu0
        %7045 = vmatprep.mubr.f32.mxu0 0.0
        %7046 = vmatmul.mubr.f32.gmra.mrb[0].mxu0 %v6830
        %v7047 = vpop.f32.mrb[0].mxu0
        %v7048 = vadd.f32 %v6974, %v7047
        %v7049 = vpop.f32.mrb[0].mxu0
        %7050 = vmatprep.mubr.f32.mxu0 0.0
        %7051 = vmatmul.mubr.f32.gmra.mrb[0].mxu0 %v6835
        %v7052 = vpop.f32.mrb[0].mxu0
        %v7053 = vadd.f32 %v6974, %v7052
        %v7054 = vpop.f32.mrb[0].mxu0
        %7055 = vmatprep.mubr.f32.mxu0 0.0
        %7056 = vmatmul.mubr.f32.gmra.mrb[0].mxu0 %v6838
        %v7057 = vpop.f32.mrb[0].mxu0
        %v7058 = vadd.f32 %v6974, %v7057
        %v7059 = vpop.f32.mrb[0].mxu0
        %7060 = vmatprep.mubr.f32.mxu0 0.0
        %7061 = vmatmul.mubr.f32.gmra.mrb[0].mxu0 %v6843
        %v7062 = vpop.f32.mrb[0].mxu0
        %v7063 = vadd.f32 %v6974, %v7062
        %v7064 = vpop.f32.mrb[0].mxu0
        %7065 = vmatprep.mubr.f32.mxu0 0.0
        %7066 = vmatmul.mubr.f32.gmra.mrb[0].mxu0 %v6846
        %v7067 = vpop.f32.mrb[0].mxu0
        %v7068 = vadd.f32 %v6974, %v7067
        %v7069 = vpop.f32.mrb[0].mxu0
        %7070 = vmatprep.mubr.f32.mxu0 0.0
        %7071 = vmatmul.mubr.f32.gmra.mrb[0].mxu0 %v6851
        %v7072 = vpop.f32.mrb[0].mxu0
        %v7073 = vadd.f32 %v6974, %v7072
        %v7074 = vpop.f32.mrb[0].mxu0
        %7075 = vmatprep.mubr.f32.mxu0 0.0
        %7076 = vmatmul.mubr.f32.gmra.mrb[0].mxu0 %v6854
        %v7077 = vpop.f32.mrb[0].mxu0
        %v7078 = vadd.f32 %v6974, %v7077
        %v7079 = vpop.f32.mrb[0].mxu0
        %7080 = vmatprep.mubr.f32.mxu0 0.0
        %7081 = vmatmul.mubr.f32.gmra.mrb[0].mxu0 %v6859
        %v7082 = vpop.f32.mrb[0].mxu0
        %v7083 = vadd.f32 %v6974, %v7082
        %v7084 = vpop.f32.mrb[0].mxu0
        %7085 = vmatprep.mubr.f32.mxu0 0.0
        %7086 = vmatmul.mubr.f32.gmra.mrb[0].mxu0 %v6862
        %v7087 = vpop.f32.mrb[0].mxu0
        %v7088 = vadd.f32 %v6974, %v7087
        %v7089 = vpop.f32.mrb[0].mxu0
        %7090 = vmatprep.mubr.f32.mxu0 0.0
        %7091 = vmatmul.mubr.f32.gmra.mrb[0].mxu0 %v6867
        %v7092 = vpop.f32.mrb[0].mxu0
        %v7093 = vadd.f32 %v6974, %v7092
        %v7094 = vpop.f32.mrb[0].mxu0
        %7095 = vmatprep.mubr.f32.mxu0 0.0
        %7096 = vmatmul.mubr.f32.gmra.mrb[0].mxu0 %v6870
        %v7097 = vpop.f32.mrb[0].mxu0
        %v7098 = vadd.f32 %v6974, %v7097
        %v7099 = vpop.f32.mrb[0].mxu0
        %7100 = vmatprep.mubr.f32.mxu0 0.0
        %7101 = vmatmul.mubr.f32.gmra.mrb[0].mxu0 %v6875
        %v7102 = vpop.f32.mrb[0].mxu0
        %v7103 = vadd.f32 %v6974, %v7102
        %v7104 = vpop.f32.mrb[0].mxu0
        %7105 = vmatprep.mubr.f32.mxu0 0.0
        %7106 = vmatmul.mubr.f32.gmra.mrb[0].mxu0 %v6878
        %v7107 = vpop.f32.mrb[0].mxu0
        %v7108 = vadd.f32 %v6974, %v7107
        %v7109 = vpop.f32.mrb[0].mxu0
        %7110 = vmatprep.mubr.f32.mxu0 0.0
        %7111 = vmatmul.mubr.f32.gmra.mrb[0].mxu0 %v6883
        %v7112 = vpop.f32.mrb[0].mxu0
        %v7113 = vadd.f32 %v6974, %v7112
        %v7114 = vpop.f32.mrb[0].mxu0
        %7115 = vmatprep.mubr.f32.mxu0 0.0
        %7116 = vmatmul.mubr.f32.gmra.mrb[0].mxu0 %v6886
        %v7117 = vpop.f32.mrb[0].mxu0
        %v7118 = vadd.f32 %v6974, %v7117
        %v7119 = vpop.f32.mrb[0].mxu0
        %7120 = vmatprep.mubr.f32.mxu0 0.0
        %7121 = vmatmul.mubr.f32.gmra.mrb[0].mxu0 %v6891
        %v7122 = vpop.f32.mrb[0].mxu0
        %v7123 = vadd.f32 %v6974, %v7122
        %v7124 = vpop.f32.mrb[0].mxu0
        %7125 = vmatprep.mubr.f32.mxu0 0.0
        %7126 = vmatmul.mubr.f32.gmra.mrb[0].mxu0 %v6894
        %v7127 = vpop.f32.mrb[0].mxu0
        %v7128 = vadd.f32 %v6974, %v7127
        %v7129 = vpop.f32.mrb[0].mxu0
        %7130 = vmatprep.mubr.f32.mxu0 0.0
        %7131 = vmatmul.mubr.f32.gmra.mrb[0].mxu0 %v6899
        %v7132 = vpop.f32.mrb[0].mxu0
        %v7133 = vadd.f32 %v6974, %v7132
        %v7134 = vpop.f32.mrb[0].mxu0
        %7135 = vmatprep.mubr.f32.mxu0 0.0
        %7136 = vmatmul.mubr.f32.gmra.mrb[0].mxu0 %v6902
        %v7137 = vpop.f32.mrb[0].mxu0
        %v7138 = vadd.f32 %v6974, %v7137
        %v7139 = vpop.f32.mrb[0].mxu0
        %7140 = vmatprep.mubr.f32.mxu0 0.0
        %7141 = vmatmul.mubr.f32.gmra.mrb[0].mxu0 %v6907
        %v7142 = vpop.f32.mrb[0].mxu0
        %v7143 = vadd.f32 %v6974, %v7142
        %v7144 = vpop.f32.mrb[0].mxu0
        %7145 = vmatprep.mubr.f32.mxu0 0.0
        %7146 = vmatmul.mubr.f32.gmra.mrb[0].mxu0 %v6910
        %v7147 = vpop.f32.mrb[0].mxu0
        %v7148 = vadd.f32 %v6974, %v7147
        %v7149 = vpop.f32.mrb[0].mxu0
        %7150 = vmatprep.mubr.f32.mxu0 0.0
        %7151 = vmatmul.mubr.f32.gmra.mrb[0].mxu0 %v6915
        %v7152 = vpop.f32.mrb[0].mxu0
        %v7153 = vadd.f32 %v6974, %v7152
        %v7154 = vpop.f32.mrb[0].mxu0
        %7155 = vmatprep.mubr.f32.mxu0 0.0
        %7156 = vmatmul.mubr.f32.gmra.mrb[0].mxu0 %v6918
        %v7157 = vpop.f32.mrb[0].mxu0
        %v7158 = vadd.f32 %v6974, %v7157
        %v7159 = vpop.f32.mrb[0].mxu0
        %7160 = vmatprep.mubr.f32.mxu0 0.0
        %7161 = vmatmul.mubr.f32.gmra.mrb[0].mxu0 %v6923
        %v7162 = vpop.f32.mrb[0].mxu0
        %v7163 = vadd.f32 %v6974, %v7162
        %v7164 = vpop.f32.mrb[0].mxu0
        %7165 = vmatprep.mubr.f32.mxu0 0.0
        %7166 = vmatmul.mubr.f32.gmra.mrb[0].mxu0 %v6926
        %v7167 = vpop.f32.mrb[0].mxu0
        %v7168 = vadd.f32 %v6974, %v7167
        %v7169 = vpop.f32.mrb[0].mxu0
        %7170 = vmatprep.mubr.f32.mxu0 0.0
        %7171 = vmatmul.mubr.f32.gmra.mrb[0].mxu0 %v6931
        %v7172 = vpop.f32.mrb[0].mxu0
        %v7173 = vadd.f32 %v6974, %v7172
        %v7174 = vpop.f32.mrb[0].mxu0
        %7175 = vmatprep.mubr.f32.mxu0 0.0
        %7176 = vmatmul.mubr.f32.gmra.mrb[0].mxu0 %v6934
        %v7177 = vpop.f32.mrb[0].mxu0
        %v7178 = vadd.f32 %v6974, %v7177
        %v7179 = vpop.f32.mrb[0].mxu0
        %7180 = vmatprep.mubr.f32.mxu0 0.0
        %7181 = vmatmul.mubr.f32.gmra.mrb[0].mxu0 %v6939
        %v7182 = vpop.f32.mrb[0].mxu0
        %v7183 = vadd.f32 %v6974, %v7182
        %v7184 = vpop.f32.mrb[0].mxu0
        %7185 = vmatprep.mubr.f32.mxu0 0.0
        %7186 = vmatmul.mubr.f32.gmra.mrb[0].mxu0 %v6942
        %v7187 = vpop.f32.mrb[0].mxu0
        %v7188 = vadd.f32 %v6974, %v7187
        %v7189 = vpop.f32.mrb[0].mxu0
        %7190 = vmatprep.mubr.f32.mxu0 0.0
        %7191 = vmatmul.mubr.f32.gmra.mrb[0].mxu0 %v6947
        %v7192 = vpop.f32.mrb[0].mxu0
        %v7193 = vadd.f32 %v6974, %v7192
        %v7194 = vpop.f32.mrb[0].mxu0
        %7195 = vmatprep.mubr.f32.mxu0 0.0
        %7196 = vmatmul.mubr.f32.gmra.mrb[0].mxu0 %v6950
        %v7197 = vpop.f32.mrb[0].mxu0
        %v7198 = vadd.f32 %v6974, %v7197
        %v7199 = vpop.f32.mrb[0].mxu0
        %7200 = vdwg.mxu0
        %v7201 = vmax.f32 %v7043, 0.0
        %v7202 = vmax.f32 %v7048, 0.0
        %v7203 = vmax.f32 %v7053, 0.0
        %v7204 = vmax.f32 %v7058, 0.0
        %v7205 = vmax.f32 %v7063, 0.0
        %v7206 = vmax.f32 %v7068, 0.0
        %v7207 = vmax.f32 %v7073, 0.0
        %v7208 = vmax.f32 %v7078, 0.0
        %v7209 = vmax.f32 %v7083, 0.0
        %v7210 = vmax.f32 %v7088, 0.0
        %v7211 = vmax.f32 %v7093, 0.0
        %v7212 = vmax.f32 %v7098, 0.0
        %v7213 = vmax.f32 %v7103, 0.0
        %v7214 = vmax.f32 %v7108, 0.0
        %v7215 = vmax.f32 %v7113, 0.0
        %v7216 = vmax.f32 %v7118, 0.0
        %v7217 = vmax.f32 %v7123, 0.0
        %v7218 = vmax.f32 %v7128, 0.0
        %v7219 = vmax.f32 %v7133, 0.0
        %v7220 = vmax.f32 %v7138, 0.0
        %v7221 = vmax.f32 %v7143, 0.0
        %v7222 = vmax.f32 %v7148, 0.0
        %v7223 = vmax.f32 %v7153, 0.0
        %v7224 = vmax.f32 %v7158, 0.0
        %v7225 = vmax.f32 %v7163, 0.0
        %v7226 = vmax.f32 %v7168, 0.0
        %v7227 = vmax.f32 %v7173, 0.0
        %v7228 = vmax.f32 %v7178, 0.0
        %v7229 = vmax.f32 %v7183, 0.0
        %v7230 = vmax.f32 %v7188, 0.0
        %v7231 = vmax.f32 %v7193, 0.0
        %v7232 = vmax.f32 %v7198, 0.0
        %v7233 = vld [vmem:[#allocation12] sm:$0xff]
        %v7234 = vld [vmem:[#allocation12 + $0x8] sm:$0xff]
        %v7235 = vld [vmem:[#allocation12 + $0x10] sm:$0xff]
        %v7236 = vld [vmem:[#allocation12 + $0x18] sm:$0xff]
        %v7237 = vld [vmem:[#allocation12 + $0x20] sm:$0xff]
        %v7238 = vld [vmem:[#allocation12 + $0x28] sm:$0xff]
        %v7239 = vld [vmem:[#allocation12 + $0x30] sm:$0xff]
        %v7240 = vld [vmem:[#allocation12 + $0x38] sm:$0xff]
        %v7241 = vld [vmem:[#allocation12 + $0x40] sm:$0xff]
        %v7242 = vld [vmem:[#allocation12 + $0x48] sm:$0xff]
        %v7243 = vld [vmem:[#allocation12 + $0x50] sm:$0xff]
        %v7244 = vld [vmem:[#allocation12 + $0x58] sm:$0xff]
        %v7245 = vld [vmem:[#allocation12 + $0x60] sm:$0xff]
        %v7246 = vld [vmem:[#allocation12 + $0x68] sm:$0xff]
        %v7247 = vld [vmem:[#allocation12 + $0x70] sm:$0xff]
        %v7248 = vld [vmem:[#allocation12 + $0x78] sm:$0xff]
        %v7249 = vld [vmem:[%s13] sm:$0x1]
        %v7251 = vlaneseq
        %v7252 = vshrl.u32 %v7251, 7
        %v7253 = vsub.s32 0, %v7252
        %v7254 = vrot.slane %v7249, %v7253
        %7256 = vmatprep.subr.mxu0 0.0
        %7257 = vmatpush1.msra.mxu0 %v7233
        %7258 = vmatprep.subr.mxu0 0.0
        %7259 = vmatpush1.msra.mxu0 %v7234
        %7260 = vmatprep.subr.mxu0 0.0
        %7261 = vmatpush1.msra.mxu0 %v7235
        %7262 = vmatprep.subr.mxu0 0.0
        %7263 = vmatpush1.msra.mxu0 %v7236
        %7264 = vmatprep.subr.mxu0 0.0
        %7265 = vmatpush1.msra.mxu0 %v7237
        %7266 = vmatprep.subr.mxu0 0.0
        %7267 = vmatpush1.msra.mxu0 %v7238
        %7268 = vmatprep.subr.mxu0 0.0
        %7269 = vmatpush1.msra.mxu0 %v7239
        %7270 = vmatprep.subr.mxu0 0.0
        %7271 = vmatpush1.msra.mxu0 %v7240
        %7272 = vmatprep.subr.mxu0 0.0
        %7273 = vmatpush1.msra.mxu0 %v7241
        %7274 = vmatprep.subr.mxu0 0.0
        %7275 = vmatpush1.msra.mxu0 %v7242
        %7276 = vmatprep.subr.mxu0 0.0
        %7277 = vmatpush1.msra.mxu0 %v7243
        %7278 = vmatprep.subr.mxu0 0.0
        %7279 = vmatpush1.msra.mxu0 %v7244
        %7280 = vmatprep.subr.mxu0 0.0
        %7281 = vmatpush1.msra.mxu0 %v7245
        %7282 = vmatprep.subr.mxu0 0.0
        %7283 = vmatpush1.msra.mxu0 %v7246
        %7284 = vmatprep.subr.mxu0 0.0
        %7285 = vmatpush1.msra.mxu0 %v7247
        %7286 = vmatprep.subr.mxu0 0.0
        %7287 = vmatpush1.msra.mxu0 %v7248
        %7288 = vmatprep.subr.mxu0 0.0
        %7289 = vmatpush1.msra.mxu0 0.0
        %7290 = vmatprep.subr.mxu0 0.0
        %7291 = vmatpush1.msra.mxu0 0.0
        %7292 = vmatprep.subr.mxu0 0.0
        %7293 = vmatpush1.msra.mxu0 0.0
        %7294 = vmatprep.subr.mxu0 0.0
        %7295 = vmatpush1.msra.mxu0 0.0
        %7296 = vmatprep.subr.mxu0 0.0
        %7297 = vmatpush1.msra.mxu0 0.0
        %7298 = vmatprep.subr.mxu0 0.0
        %7299 = vmatpush1.msra.mxu0 0.0
        %7300 = vmatprep.subr.mxu0 0.0
        %7301 = vmatpush1.msra.mxu0 0.0
        %7302 = vmatprep.subr.mxu0 0.0
        %7303 = vmatpush1.msra.mxu0 0.0
        %7304 = vmatprep.subr.mxu0 0.0
        %7305 = vmatpush1.msra.mxu0 0.0
        %7306 = vmatprep.subr.mxu0 0.0
        %7307 = vmatpush1.msra.mxu0 0.0
        %7308 = vmatprep.subr.mxu0 0.0
        %7309 = vmatpush1.msra.mxu0 0.0
        %7310 = vmatprep.subr.mxu0 0.0
        %7311 = vmatpush1.msra.mxu0 0.0
        %7312 = vmatprep.subr.mxu0 0.0
        %7313 = vmatpush1.msra.mxu0 0.0
        %7314 = vmatprep.subr.mxu0 0.0
        %7315 = vmatpush1.msra.mxu0 0.0
        %7316 = vmatprep.subr.mxu0 0.0
        %7317 = vmatpush1.msra.mxu0 0.0
        %7318 = vmatprep.subr.mxu0 0.0
        %7319 = vmatpush1.msra.mxu0 0.0
        %7320 = vmatprep.mubr.f32.mxu0 0.0
        %7321 = vmatmul.mubr.f32.gmra.mrb[0].mxu0 %v7201
        %v7322 = vpop.f32.mrb[0].mxu0
        %v7323 = vadd.f32 %v7254, %v7322
        %v7324 = vpop.f32.mrb[0].mxu0
        %7325 = vmatprep.mubr.f32.mxu0 0.0
        %7326 = vmatmul.mubr.f32.gmra.mrb[0].mxu0 %v7202
        %v7327 = vpop.f32.mrb[0].mxu0
        %v7328 = vadd.f32 %v7254, %v7327
        %v7329 = vpop.f32.mrb[0].mxu0
        %7330 = vmatprep.mubr.f32.mxu0 0.0
        %7331 = vmatmul.mubr.f32.gmra.mrb[0].mxu0 %v7203
        %v7332 = vpop.f32.mrb[0].mxu0
        %v7333 = vadd.f32 %v7254, %v7332
        %v7334 = vpop.f32.mrb[0].mxu0
        %7335 = vmatprep.mubr.f32.mxu0 0.0
        %7336 = vmatmul.mubr.f32.gmra.mrb[0].mxu0 %v7204
        %v7337 = vpop.f32.mrb[0].mxu0
        %v7338 = vadd.f32 %v7254, %v7337
        %v7339 = vpop.f32.mrb[0].mxu0
        %7340 = vmatprep.mubr.f32.mxu0 0.0
        %7341 = vmatmul.mubr.f32.gmra.mrb[0].mxu0 %v7205
        %v7342 = vpop.f32.mrb[0].mxu0
        %v7343 = vadd.f32 %v7254, %v7342
        %v7344 = vpop.f32.mrb[0].mxu0
        %7345 = vmatprep.mubr.f32.mxu0 0.0
        %7346 = vmatmul.mubr.f32.gmra.mrb[0].mxu0 %v7206
        %v7347 = vpop.f32.mrb[0].mxu0
        %v7348 = vadd.f32 %v7254, %v7347
        %v7349 = vpop.f32.mrb[0].mxu0
        %7350 = vmatprep.mubr.f32.mxu0 0.0
        %7351 = vmatmul.mubr.f32.gmra.mrb[0].mxu0 %v7207
        %v7352 = vpop.f32.mrb[0].mxu0
        %v7353 = vadd.f32 %v7254, %v7352
        %v7354 = vpop.f32.mrb[0].mxu0
        %7355 = vmatprep.mubr.f32.mxu0 0.0
        %7356 = vmatmul.mubr.f32.gmra.mrb[0].mxu0 %v7208
        %v7357 = vpop.f32.mrb[0].mxu0
        %v7358 = vadd.f32 %v7254, %v7357
        %v7359 = vpop.f32.mrb[0].mxu0
        %7360 = vmatprep.mubr.f32.mxu0 0.0
        %7361 = vmatmul.mubr.f32.gmra.mrb[0].mxu0 %v7209
        %v7362 = vpop.f32.mrb[0].mxu0
        %v7363 = vadd.f32 %v7254, %v7362
        %v7364 = vpop.f32.mrb[0].mxu0
        %7365 = vmatprep.mubr.f32.mxu0 0.0
        %7366 = vmatmul.mubr.f32.gmra.mrb[0].mxu0 %v7210
        %v7367 = vpop.f32.mrb[0].mxu0
        %v7368 = vadd.f32 %v7254, %v7367
        %v7369 = vpop.f32.mrb[0].mxu0
        %7370 = vmatprep.mubr.f32.mxu0 0.0
        %7371 = vmatmul.mubr.f32.gmra.mrb[0].mxu0 %v7211
        %v7372 = vpop.f32.mrb[0].mxu0
        %v7373 = vadd.f32 %v7254, %v7372
        %v7374 = vpop.f32.mrb[0].mxu0
        %7375 = vmatprep.mubr.f32.mxu0 0.0
        %7376 = vmatmul.mubr.f32.gmra.mrb[0].mxu0 %v7212
        %v7377 = vpop.f32.mrb[0].mxu0
        %v7378 = vadd.f32 %v7254, %v7377
        %v7379 = vpop.f32.mrb[0].mxu0
        %7380 = vmatprep.mubr.f32.mxu0 0.0
        %7381 = vmatmul.mubr.f32.gmra.mrb[0].mxu0 %v7213
        %v7382 = vpop.f32.mrb[0].mxu0
        %v7383 = vadd.f32 %v7254, %v7382
        %v7384 = vpop.f32.mrb[0].mxu0
        %7385 = vmatprep.mubr.f32.mxu0 0.0
        %7386 = vmatmul.mubr.f32.gmra.mrb[0].mxu0 %v7214
        %v7387 = vpop.f32.mrb[0].mxu0
        %v7388 = vadd.f32 %v7254, %v7387
        %v7389 = vpop.f32.mrb[0].mxu0
        %7390 = vmatprep.mubr.f32.mxu0 0.0
        %7391 = vmatmul.mubr.f32.gmra.mrb[0].mxu0 %v7215
        %v7392 = vpop.f32.mrb[0].mxu0
        %v7393 = vadd.f32 %v7254, %v7392
        %v7394 = vpop.f32.mrb[0].mxu0
        %7395 = vmatprep.mubr.f32.mxu0 0.0
        %7396 = vmatmul.mubr.f32.gmra.mrb[0].mxu0 %v7216
        %v7397 = vpop.f32.mrb[0].mxu0
        %v7398 = vadd.f32 %v7254, %v7397
        %v7399 = vpop.f32.mrb[0].mxu0
        %7400 = vmatprep.mubr.f32.mxu0 0.0
        %7401 = vmatmul.mubr.f32.gmra.mrb[0].mxu0 %v7217
        %v7402 = vpop.f32.mrb[0].mxu0
        %v7403 = vadd.f32 %v7254, %v7402
        %v7404 = vpop.f32.mrb[0].mxu0
        %7405 = vmatprep.mubr.f32.mxu0 0.0
        %7406 = vmatmul.mubr.f32.gmra.mrb[0].mxu0 %v7218
        %v7407 = vpop.f32.mrb[0].mxu0
        %v7408 = vadd.f32 %v7254, %v7407
        %v7409 = vpop.f32.mrb[0].mxu0
        %7410 = vmatprep.mubr.f32.mxu0 0.0
        %7411 = vmatmul.mubr.f32.gmra.mrb[0].mxu0 %v7219
        %v7412 = vpop.f32.mrb[0].mxu0
        %v7413 = vadd.f32 %v7254, %v7412
        %v7414 = vpop.f32.mrb[0].mxu0
        %7415 = vmatprep.mubr.f32.mxu0 0.0
        %7416 = vmatmul.mubr.f32.gmra.mrb[0].mxu0 %v7220
        %v7417 = vpop.f32.mrb[0].mxu0
        %v7418 = vadd.f32 %v7254, %v7417
        %v7419 = vpop.f32.mrb[0].mxu0
        %7420 = vmatprep.mubr.f32.mxu0 0.0
        %7421 = vmatmul.mubr.f32.gmra.mrb[0].mxu0 %v7221
        %v7422 = vpop.f32.mrb[0].mxu0
        %v7423 = vadd.f32 %v7254, %v7422
        %v7424 = vpop.f32.mrb[0].mxu0
        %7425 = vmatprep.mubr.f32.mxu0 0.0
        %7426 = vmatmul.mubr.f32.gmra.mrb[0].mxu0 %v7222
        %v7427 = vpop.f32.mrb[0].mxu0
        %v7428 = vadd.f32 %v7254, %v7427
        %v7429 = vpop.f32.mrb[0].mxu0
        %7430 = vmatprep.mubr.f32.mxu0 0.0
        %7431 = vmatmul.mubr.f32.gmra.mrb[0].mxu0 %v7223
        %v7432 = vpop.f32.mrb[0].mxu0
        %v7433 = vadd.f32 %v7254, %v7432
        %v7434 = vpop.f32.mrb[0].mxu0
        %7435 = vmatprep.mubr.f32.mxu0 0.0
        %7436 = vmatmul.mubr.f32.gmra.mrb[0].mxu0 %v7224
        %v7437 = vpop.f32.mrb[0].mxu0
        %v7438 = vadd.f32 %v7254, %v7437
        %v7439 = vpop.f32.mrb[0].mxu0
        %7440 = vmatprep.mubr.f32.mxu0 0.0
        %7441 = vmatmul.mubr.f32.gmra.mrb[0].mxu0 %v7225
        %v7442 = vpop.f32.mrb[0].mxu0
        %v7443 = vadd.f32 %v7254, %v7442
        %v7444 = vpop.f32.mrb[0].mxu0
        %7445 = vmatprep.mubr.f32.mxu0 0.0
        %7446 = vmatmul.mubr.f32.gmra.mrb[0].mxu0 %v7226
        %v7447 = vpop.f32.mrb[0].mxu0
        %v7448 = vadd.f32 %v7254, %v7447
        %v7449 = vpop.f32.mrb[0].mxu0
        %7450 = vmatprep.mubr.f32.mxu0 0.0
        %7451 = vmatmul.mubr.f32.gmra.mrb[0].mxu0 %v7227
        %v7452 = vpop.f32.mrb[0].mxu0
        %v7453 = vadd.f32 %v7254, %v7452
        %v7454 = vpop.f32.mrb[0].mxu0
        %7455 = vmatprep.mubr.f32.mxu0 0.0
        %7456 = vmatmul.mubr.f32.gmra.mrb[0].mxu0 %v7228
        %v7457 = vpop.f32.mrb[0].mxu0
        %v7458 = vadd.f32 %v7254, %v7457
        %v7459 = vpop.f32.mrb[0].mxu0
        %7460 = vmatprep.mubr.f32.mxu0 0.0
        %7461 = vmatmul.mubr.f32.gmra.mrb[0].mxu0 %v7229
        %v7462 = vpop.f32.mrb[0].mxu0
        %v7463 = vadd.f32 %v7254, %v7462
        %v7464 = vpop.f32.mrb[0].mxu0
        %7465 = vmatprep.mubr.f32.mxu0 0.0
        %7466 = vmatmul.mubr.f32.gmra.mrb[0].mxu0 %v7230
        %v7467 = vpop.f32.mrb[0].mxu0
        %v7468 = vadd.f32 %v7254, %v7467
        %v7469 = vpop.f32.mrb[0].mxu0
        %7470 = vmatprep.mubr.f32.mxu0 0.0
        %7471 = vmatmul.mubr.f32.gmra.mrb[0].mxu0 %v7231
        %v7472 = vpop.f32.mrb[0].mxu0
        %v7473 = vadd.f32 %v7254, %v7472
        %v7474 = vpop.f32.mrb[0].mxu0
        %7475 = vmatprep.mubr.f32.mxu0 0.0
        %7476 = vmatmul.mubr.f32.gmra.mrb[0].mxu0 %v7232
        %v7477 = vpop.f32.mrb[0].mxu0
        %v7478 = vadd.f32 %v7254, %v7477
        %v7479 = vpop.f32.mrb[0].mxu0
        %7480 = vdwg.mxu0
        %v7481 = vmax.f32 %v7323, 0.0
        %v7482 = vmax.f32 %v7328, 0.0
        %v7483 = vmax.f32 %v7333, 0.0
        %v7484 = vmax.f32 %v7338, 0.0
        %v7485 = vmax.f32 %v7343, 0.0
        %v7486 = vmax.f32 %v7348, 0.0
        %v7487 = vmax.f32 %v7353, 0.0
        %v7488 = vmax.f32 %v7358, 0.0
        %v7489 = vmax.f32 %v7363, 0.0
        %v7490 = vmax.f32 %v7368, 0.0
        %v7491 = vmax.f32 %v7373, 0.0
        %v7492 = vmax.f32 %v7378, 0.0
        %v7493 = vmax.f32 %v7383, 0.0
        %v7494 = vmax.f32 %v7388, 0.0
        %v7495 = vmax.f32 %v7393, 0.0
        %v7496 = vmax.f32 %v7398, 0.0
        %v7497 = vmax.f32 %v7403, 0.0
        %v7498 = vmax.f32 %v7408, 0.0
        %v7499 = vmax.f32 %v7413, 0.0
        %v7500 = vmax.f32 %v7418, 0.0
        %v7501 = vmax.f32 %v7423, 0.0
        %v7502 = vmax.f32 %v7428, 0.0
        %v7503 = vmax.f32 %v7433, 0.0
        %v7504 = vmax.f32 %v7438, 0.0
        %v7505 = vmax.f32 %v7443, 0.0
        %v7506 = vmax.f32 %v7448, 0.0
        %v7507 = vmax.f32 %v7453, 0.0
        %v7508 = vmax.f32 %v7458, 0.0
        %v7509 = vmax.f32 %v7463, 0.0
        %v7510 = vmax.f32 %v7468, 0.0
        %v7511 = vmax.f32 %v7473, 0.0
        %v7512 = vmax.f32 %v7478, 0.0
        %v7513 = vmax.f32 %v7481, %v7485
        %v7514 = vmax.f32 %v7482, %v7486
        %v7515 = vmax.f32 %v7483, %v7487
        %v7516 = vmax.f32 %v7484, %v7488
        %v7517 = vmax.f32 %v7513, %v7489
        %v7518 = vmax.f32 %v7514, %v7490
        %v7519 = vmax.f32 %v7515, %v7491
        %v7520 = vmax.f32 %v7516, %v7492
        %v7521 = vmax.f32 %v7517, %v7493
        %v7522 = vmax.f32 %v7518, %v7494
        %v7523 = vmax.f32 %v7519, %v7495
        %v7524 = vmax.f32 %v7520, %v7496
        %v7525 = vmax.f32 %v7521, %v7497
        %v7526 = vmax.f32 %v7522, %v7498
        %v7527 = vmax.f32 %v7523, %v7499
        %v7528 = vmax.f32 %v7524, %v7500
        %v7529 = vmax.f32 %v7525, %v7501
        %v7530 = vmax.f32 %v7526, %v7502
        %v7531 = vmax.f32 %v7527, %v7503
        %v7532 = vmax.f32 %v7528, %v7504
        %v7533 = vmax.f32 %v7529, %v7505
        %v7534 = vmax.f32 %v7530, %v7506
        %v7535 = vmax.f32 %v7531, %v7507
        %v7536 = vmax.f32 %v7532, %v7508
        %v7537 = vmax.f32 %v7533, %v7509
        %v7538 = vmax.f32 %v7534, %v7510
        %v7539 = vmax.f32 %v7535, %v7511
        %v7540 = vmax.f32 %v7536, %v7512
        %v7541 = vmax.f32 %v7537, %v7538
        %v7542 = vmax.f32 %v7539, %v7540
        %v7543 = vmax.f32 %v7541, %v7542
        %v7544 = vrot.slane %v7543, 4
        %v7545 = vmax.f32 %v7543, %v7544
        %v7546 = vrot.slane %v7545, 2
        %v7547 = vmax.f32 %v7545, %v7546
        %v7548 = vrot.slane %v7547, 1
        %v7549 = vmax.f32 %v7547, %v7548
        %v7550 = vld [vmem:[#allocation14] sm:$0xff]
        %v7551 = vld [vmem:[#allocation14 + $0x8] sm:$0xff]
        %v7552 = vld [vmem:[#allocation14 + $0x10] sm:$0xff]
        %v7553 = vld [vmem:[#allocation14 + $0x18] sm:$0xff]
        %v7554 = vld [vmem:[#allocation14 + $0x20] sm:$0xff]
        %v7555 = vld [vmem:[#allocation14 + $0x28] sm:$0xff]
        %v7556 = vld [vmem:[#allocation14 + $0x30] sm:$0xff]
        %v7557 = vld [vmem:[#allocation14 + $0x38] sm:$0xff]
        %v7558 = vld [vmem:[#allocation14 + $0x40] sm:$0xff]
        %v7559 = vld [vmem:[#allocation14 + $0x48] sm:$0xff]
        %v7560 = vld [vmem:[#allocation14 + $0x50] sm:$0xff]
        %v7561 = vld [vmem:[#allocation14 + $0x58] sm:$0xff]
        %v7562 = vld [vmem:[#allocation14 + $0x60] sm:$0xff]
        %v7563 = vld [vmem:[#allocation14 + $0x68] sm:$0xff]
        %v7564 = vld [vmem:[#allocation14 + $0x70] sm:$0xff]
        %v7565 = vld [vmem:[#allocation14 + $0x78] sm:$0xff]
        %v7566 = vld [vmem:[%s15] sm:$0x1]
        %7567 = vmatprep.subr.mxu0 0.0
        %7568 = vmatpush1.msra.mxu0 %v7550
        %7569 = vmatprep.subr.mxu0 0.0
        %7570 = vmatpush1.msra.mxu0 %v7551
        %7571 = vmatprep.subr.mxu0 0.0
        %7572 = vmatpush1.msra.mxu0 %v7552
        %7573 = vmatprep.subr.mxu0 0.0
        %7574 = vmatpush1.msra.mxu0 %v7553
        %7575 = vmatprep.subr.mxu0 0.0
        %7576 = vmatpush1.msra.mxu0 %v7554
        %7577 = vmatprep.subr.mxu0 0.0
        %7578 = vmatpush1.msra.mxu0 %v7555
        %7579 = vmatprep.subr.mxu0 0.0
        %7580 = vmatpush1.msra.mxu0 %v7556
        %7581 = vmatprep.subr.mxu0 0.0
        %7582 = vmatpush1.msra.mxu0 %v7557
        %7583 = vmatprep.subr.mxu0 0.0
        %7584 = vmatpush1.msra.mxu0 %v7558
        %7585 = vmatprep.subr.mxu0 0.0
        %7586 = vmatpush1.msra.mxu0 %v7559
        %7587 = vmatprep.subr.mxu0 0.0
        %7588 = vmatpush1.msra.mxu0 %v7560
        %7589 = vmatprep.subr.mxu0 0.0
        %7590 = vmatpush1.msra.mxu0 %v7561
        %7591 = vmatprep.subr.mxu0 0.0
        %7592 = vmatpush1.msra.mxu0 %v7562
        %7593 = vmatprep.subr.mxu0 0.0
        %7594 = vmatpush1.msra.mxu0 %v7563
        %7595 = vmatprep.subr.mxu0 0.0
        %7596 = vmatpush1.msra.mxu0 %v7564
        %7597 = vmatprep.subr.mxu0 0.0
        %7598 = vmatpush1.msra.mxu0 %v7565
        %7599 = vmatprep.subr.mxu0 0.0
        %7600 = vmatpush1.msra.mxu0 0.0
        %7601 = vmatprep.subr.mxu0 0.0
        %7602 = vmatpush1.msra.mxu0 0.0
        %7603 = vmatprep.subr.mxu0 0.0
        %7604 = vmatpush1.msra.mxu0 0.0
        %7605 = vmatprep.subr.mxu0 0.0
        %7606 = vmatpush1.msra.mxu0 0.0
        %7607 = vmatprep.subr.mxu0 0.0
        %7608 = vmatpush1.msra.mxu0 0.0
        %7609 = vmatprep.subr.mxu0 0.0
        %7610 = vmatpush1.msra.mxu0 0.0
        %7611 = vmatprep.subr.mxu0 0.0
        %7612 = vmatpush1.msra.mxu0 0.0
        %7613 = vmatprep.subr.mxu0 0.0
        %7614 = vmatpush1.msra.mxu0 0.0
        %7615 = vmatprep.subr.mxu0 0.0
        %7616 = vmatpush1.msra.mxu0 0.0
        %7617 = vmatprep.subr.mxu0 0.0
        %7618 = vmatpush1.msra.mxu0 0.0
        %7619 = vmatprep.subr.mxu0 0.0
        %7620 = vmatpush1.msra.mxu0 0.0
        %7621 = vmatprep.subr.mxu0 0.0
        %7622 = vmatpush1.msra.mxu0 0.0
        %7623 = vmatprep.subr.mxu0 0.0
        %7624 = vmatpush1.msra.mxu0 0.0
        %7625 = vmatprep.subr.mxu0 0.0
        %7626 = vmatpush1.msra.mxu0 0.0
        %7627 = vmatprep.subr.mxu0 0.0
        %7628 = vmatpush1.msra.mxu0 0.0
        %7629 = vmatprep.subr.mxu0 0.0
        %7630 = vmatpush1.msra.mxu0 0.0
        %7631 = vmatprep.mubr.f32.mxu0 0.0
        %7632 = vmatmul.mubr.f32.gmra.mrb[0].mxu0 %v7549
        %v7633 = vpop.f32.mrb[0].mxu0
        %v7634 = vadd.f32 %v7566, %v7633
        %v7635 = vpop.f32.mrb[0].mxu0
        %7636 = vdwg.mxu0
        %v7637 = vmax.f32 %v7634, 0.0
        %v7638 = vld [vmem:[#allocation15] sm:$0xff]
        %v7639 = vld [vmem:[#allocation15 + $0x8] sm:$0xff]
        %v7640 = vld [vmem:[#allocation15 + $0x10] sm:$0xff]
        %v7641 = vld [vmem:[#allocation15 + $0x18] sm:$0xff]
        %v7642 = vld [vmem:[#allocation15 + $0x20] sm:$0xff]
        %v7643 = vld [vmem:[#allocation15 + $0x28] sm:$0xff]
        %v7644 = vld [vmem:[#allocation15 + $0x30] sm:$0xff]
        %v7645 = vld [vmem:[#allocation15 + $0x38] sm:$0xff]
        %v7646 = vld [vmem:[#allocation15 + $0x40] sm:$0xff]
        %v7647 = vld [vmem:[#allocation15 + $0x48] sm:$0xff]
        %v7648 = vld [vmem:[#allocation15 + $0x50] sm:$0xff]
        %v7649 = vld [vmem:[#allocation15 + $0x58] sm:$0xff]
        %v7650 = vld [vmem:[#allocation15 + $0x60] sm:$0xff]
        %v7651 = vld [vmem:[#allocation15 + $0x68] sm:$0xff]
        %v7652 = vld [vmem:[#allocation15 + $0x70] sm:$0xff]
        %v7653 = vld [vmem:[#allocation15 + $0x78] sm:$0xff]
        %v7654 = vld [vmem:[%s17] sm:$0x1]
        %7655 = vmatprep.subr.mxu0 0.0
        %7656 = vmatpush1.msra.mxu0 %v7638
        %7657 = vmatprep.subr.mxu0 0.0
        %7658 = vmatpush1.msra.mxu0 %v7639
        %7659 = vmatprep.subr.mxu0 0.0
        %7660 = vmatpush1.msra.mxu0 %v7640
        %7661 = vmatprep.subr.mxu0 0.0
        %7662 = vmatpush1.msra.mxu0 %v7641
        %7663 = vmatprep.subr.mxu0 0.0
        %7664 = vmatpush1.msra.mxu0 %v7642
        %7665 = vmatprep.subr.mxu0 0.0
        %7666 = vmatpush1.msra.mxu0 %v7643
        %7667 = vmatprep.subr.mxu0 0.0
        %7668 = vmatpush1.msra.mxu0 %v7644
        %7669 = vmatprep.subr.mxu0 0.0
        %7670 = vmatpush1.msra.mxu0 %v7645
        %7671 = vmatprep.subr.mxu0 0.0
        %7672 = vmatpush1.msra.mxu0 %v7646
        %7673 = vmatprep.subr.mxu0 0.0
        %7674 = vmatpush1.msra.mxu0 %v7647
        %7675 = vmatprep.subr.mxu0 0.0
        %7676 = vmatpush1.msra.mxu0 %v7648
        %7677 = vmatprep.subr.mxu0 0.0
        %7678 = vmatpush1.msra.mxu0 %v7649
        %7679 = vmatprep.subr.mxu0 0.0
        %7680 = vmatpush1.msra.mxu0 %v7650
        %7681 = vmatprep.subr.mxu0 0.0
        %7682 = vmatpush1.msra.mxu0 %v7651
        %7683 = vmatprep.subr.mxu0 0.0
        %7684 = vmatpush1.msra.mxu0 %v7652
        %7685 = vmatprep.subr.mxu0 0.0
        %7686 = vmatpush1.msra.mxu0 %v7653
        %7687 = vmatprep.subr.mxu0 0.0
        %7688 = vmatpush1.msra.mxu0 0.0
        %7689 = vmatprep.subr.mxu0 0.0
        %7690 = vmatpush1.msra.mxu0 0.0
        %7691 = vmatprep.subr.mxu0 0.0
        %7692 = vmatpush1.msra.mxu0 0.0
        %7693 = vmatprep.subr.mxu0 0.0
        %7694 = vmatpush1.msra.mxu0 0.0
        %7695 = vmatprep.subr.mxu0 0.0
        %7696 = vmatpush1.msra.mxu0 0.0
        %7697 = vmatprep.subr.mxu0 0.0
        %7698 = vmatpush1.msra.mxu0 0.0
        %7699 = vmatprep.subr.mxu0 0.0
        %7700 = vmatpush1.msra.mxu0 0.0
        %7701 = vmatprep.subr.mxu0 0.0
        %7702 = vmatpush1.msra.mxu0 0.0
        %7703 = vmatprep.subr.mxu0 0.0
        %7704 = vmatpush1.msra.mxu0 0.0
        %7705 = vmatprep.subr.mxu0 0.0
        %7706 = vmatpush1.msra.mxu0 0.0
        %7707 = vmatprep.subr.mxu0 0.0
        %7708 = vmatpush1.msra.mxu0 0.0
        %7709 = vmatprep.subr.mxu0 0.0
        %7710 = vmatpush1.msra.mxu0 0.0
        %7711 = vmatprep.subr.mxu0 0.0
        %7712 = vmatpush1.msra.mxu0 0.0
        %7713 = vmatprep.subr.mxu0 0.0
        %7714 = vmatpush1.msra.mxu0 0.0
        %7715 = vmatprep.subr.mxu0 0.0
        %7716 = vmatpush1.msra.mxu0 0.0
        %7717 = vmatprep.subr.mxu0 0.0
        %7718 = vmatpush1.msra.mxu0 0.0
        %7719 = vmatprep.mubr.f32.mxu0 0.0
        %7720 = vmatmul.mubr.f32.gmra.mrb[0].mxu0 %v7637
        %v7721 = vpop.f32.mrb[0].mxu0
        %v7722 = vadd.f32 %v7654, %v7721
        %v7723 = vpop.f32.mrb[0].mxu0
        %7724 = vdwg.mxu0
        %v7725 = vmax.f32 %v7722, 0.0
        %v7726 = vld [vmem:[#allocation17] sm:$0xff]
        %v7727 = vld [vmem:[#allocation17 + $0x8] sm:$0xff]
        %v7728 = vld [vmem:[#allocation17 + $0x10] sm:$0xff]
        %v7729 = vld [vmem:[#allocation17 + $0x18] sm:$0xff]
        %v7730 = vld [vmem:[#allocation17 + $0x20] sm:$0xff]
        %v7731 = vld [vmem:[#allocation17 + $0x28] sm:$0xff]
        %v7732 = vld [vmem:[#allocation17 + $0x30] sm:$0xff]
        %v7733 = vld [vmem:[#allocation17 + $0x38] sm:$0xff]
        %v7734 = vld [vmem:[#allocation17 + $0x40] sm:$0xff]
        %v7735 = vld [vmem:[#allocation17 + $0x48] sm:$0xff]
        %v7736 = vld [vmem:[#allocation17 + $0x50] sm:$0xff]
        %v7737 = vld [vmem:[#allocation17 + $0x58] sm:$0xff]
        %v7738 = vld [vmem:[#allocation17 + $0x60] sm:$0xff]
        %v7739 = vld [vmem:[#allocation17 + $0x68] sm:$0xff]
        %v7740 = vld [vmem:[#allocation17 + $0x70] sm:$0xff]
        %v7741 = vld [vmem:[#allocation17 + $0x78] sm:$0xff]
        %v7742 = vld [vmem:[%s19] sm:$0x1]
        %7743 = vmatprep.subr.mxu0 0.0
        %7744 = vmatpush1.msra.mxu0 %v7726
        %7745 = vmatprep.subr.mxu0 0.0
        %7746 = vmatpush1.msra.mxu0 %v7727
        %7747 = vmatprep.subr.mxu0 0.0
        %7748 = vmatpush1.msra.mxu0 %v7728
        %7749 = vmatprep.subr.mxu0 0.0
        %7750 = vmatpush1.msra.mxu0 %v7729
        %7751 = vmatprep.subr.mxu0 0.0
        %7752 = vmatpush1.msra.mxu0 %v7730
        %7753 = vmatprep.subr.mxu0 0.0
        %7754 = vmatpush1.msra.mxu0 %v7731
        %7755 = vmatprep.subr.mxu0 0.0
        %7756 = vmatpush1.msra.mxu0 %v7732
        %7757 = vmatprep.subr.mxu0 0.0
        %7758 = vmatpush1.msra.mxu0 %v7733
        %7759 = vmatprep.subr.mxu0 0.0
        %7760 = vmatpush1.msra.mxu0 %v7734
        %7761 = vmatprep.subr.mxu0 0.0
        %7762 = vmatpush1.msra.mxu0 %v7735
        %7763 = vmatprep.subr.mxu0 0.0
        %7764 = vmatpush1.msra.mxu0 %v7736
        %7765 = vmatprep.subr.mxu0 0.0
        %7766 = vmatpush1.msra.mxu0 %v7737
        %7767 = vmatprep.subr.mxu0 0.0
        %7768 = vmatpush1.msra.mxu0 %v7738
        %7769 = vmatprep.subr.mxu0 0.0
        %7770 = vmatpush1.msra.mxu0 %v7739
        %7771 = vmatprep.subr.mxu0 0.0
        %7772 = vmatpush1.msra.mxu0 %v7740
        %7773 = vmatprep.subr.mxu0 0.0
        %7774 = vmatpush1.msra.mxu0 %v7741
        %7775 = vmatprep.subr.mxu0 0.0
        %7776 = vmatpush1.msra.mxu0 0.0
        %7777 = vmatprep.subr.mxu0 0.0
        %7778 = vmatpush1.msra.mxu0 0.0
        %7779 = vmatprep.subr.mxu0 0.0
        %7780 = vmatpush1.msra.mxu0 0.0
        %7781 = vmatprep.subr.mxu0 0.0
        %7782 = vmatpush1.msra.mxu0 0.0
        %7783 = vmatprep.subr.mxu0 0.0
        %7784 = vmatpush1.msra.mxu0 0.0
        %7785 = vmatprep.subr.mxu0 0.0
        %7786 = vmatpush1.msra.mxu0 0.0
        %7787 = vmatprep.subr.mxu0 0.0
        %7788 = vmatpush1.msra.mxu0 0.0
        %7789 = vmatprep.subr.mxu0 0.0
        %7790 = vmatpush1.msra.mxu0 0.0
        %7791 = vmatprep.subr.mxu0 0.0
        %7792 = vmatpush1.msra.mxu0 0.0
        %7793 = vmatprep.subr.mxu0 0.0
        %7794 = vmatpush1.msra.mxu0 0.0
        %7795 = vmatprep.subr.mxu0 0.0
        %7796 = vmatpush1.msra.mxu0 0.0
        %7797 = vmatprep.subr.mxu0 0.0
        %7798 = vmatpush1.msra.mxu0 0.0
        %7799 = vmatprep.subr.mxu0 0.0
        %7800 = vmatpush1.msra.mxu0 0.0
        %7801 = vmatprep.subr.mxu0 0.0
        %7802 = vmatpush1.msra.mxu0 0.0
        %7803 = vmatprep.subr.mxu0 0.0
        %7804 = vmatpush1.msra.mxu0 0.0
        %7805 = vmatprep.subr.mxu0 0.0
        %7806 = vmatpush1.msra.mxu0 0.0
        %7807 = vmatprep.mubr.f32.mxu0 0.0
        %7808 = vmatmul.mubr.f32.gmra.mrb[0].mxu0 %v7725
        %v7809 = vpop.f32.mrb[0].mxu0
        %v7810 = vadd.f32 %v7742, %v7809
        %v7811 = vpop.f32.mrb[0].mxu0
        %7812 = vdwg.mxu0
        %v7813 = vlaneseq
        %v7814 = vshrl.u32 %v7813, 7
        %v7815 = vsub.s32 0, %v7814
        %v7816 = vrot.slane %v7810, %v7815
        %7817 = vst [vmem:[%s758] sm:$0xff] %v7816
        %p7818 = scmp.lt.s32.totalorder %s36, 1
        %s7819 = scalar_select %p7818, %s36, 1
        %s7820 = smul.addr %s7819, 8
        %s7821 = scalar_lea.vmem %s20, %s7820
        // Predicated region
        $region137: #{_lambda_.1} parent=99 // pred_check
          %p7822 = pneg %p479
        $region138: #{_lambda_.1} parent=99 // pred_check_branch
          %7824 = sbr.rel (%p7822) target = $region140
        $region139: #{_lambda_.1} parent=99 // pred_region
          _
        $region140: #{_lambda_.1} parent=99 // pred_fallthru
          _
      $region100: #{_lambda_.1} parent=5 // pred_fallthru
        _
      %p7825 = scmp.le.s32.totalorder 2, %s31
      // Predicated region
      $region141: #{_lambda_.1} parent=5 // pred_check
        %p7826 = pneg %p7825
      $region142: #{_lambda_.1} parent=5 // pred_check_branch
        %7828 = sbr.rel (%p7826) target = $region144
      $region143: #{_lambda_.1} parent=5 // pred_region
        %s7829 = ssub.s32 %s31, 2
        // Predicated region
        $region145: #{_lambda_.1} parent=143 // pred_check
          %p7830 = pneg %p485
        $region146: #{_lambda_.1} parent=143 // pred_check_branch
          %7832 = sbr.rel (%p7830) target = $region148
        $region147: #{_lambda_.1} parent=143 // pred_region
          %p7833 = scmp.lt.s32.totalorder %s37, 1
          %s7834 = scalar_select %p7833, %s37, 1
          %s7835 = smul.addr %s7834, 8
          %s7836 = scalar_lea.vmem %s20, %s7835
        $region148: #{_lambda_.1} parent=143 // pred_fallthru
          _
      $region144: #{_lambda_.1} parent=5 // pred_fallthru
        _
    $region6: #{_lambda_.1} parent=1 // loop_footer
      %s35 = sadd.s32 1, %s31
    $region7: #{_lambda_.1} parent=1 // loop_footer_branch
      %30 = sbr.rel target = $region3
    $region8: #{_lambda_.1} parent=1 // loop_exit
      _
    %7837 = vsyncpa [#allocation5], 1
    %s7838 = scalar_lea.sflag [#allocation5], 1
    %7839 = vsyncpa %s7838, 1
    %7840 = vsyncpa [#allocation7], 1
    %7841 = vsyncpa [#allocation10], 1
    %7842 = vsyncpa [#allocation13], 1
    %7843 = vsyncpa [#allocation16], 1

</llo_original>
